<compile_context>
chip_gen: v7x
topology: tpu7x:2x2x1
jax: 0.10.0
libtpu: 0.0.40
codegen_flags: <defaults>
</compile_context>

<pallas_src>
import jax
import jax.numpy as jnp
from jax import lax
from jax.experimental import pallas as pl
from jax.experimental.pallas import tpu as pltpu


_TILE = 128          # target / source tile edge; N is zero-padded to a multiple
_NEG_INF = -1e30     # mask fill (kept in f32 on purpose)


# ------------------------------- kernels -----------------------------------


def _lin1_kernel(nf_ref, se_ref, w1a_ref, w1b_ref, b1_ref, o_ref):
    # x = cat([node_feat, send_embd], 1) @ W1 + b1, without materializing the
    # concat: W1 is split into its node_feat / send_embd halves on the host.
    nf = nf_ref[...].astype(jnp.bfloat16)
    se = se_ref[...].astype(jnp.bfloat16)
    o_ref[...] = (
        jnp.dot(nf, w1a_ref[...], preferred_element_type=jnp.float32)
        + jnp.dot(se, w1b_ref[...], preferred_element_type=jnp.float32)
        + b1_ref[...]
    )


def _genie_path_kernel(adj_ref, xq_ref, xs_ref, wg_ref, vsrc_ref, vdst_ref,
                       bg_ref, wih_ref, whh_ref, o_ref,
                       edst_sc, m_sc, l_sc, acc_sc):
    """Fused GeniePath-lazy: n_hops flash-style GAT breadths + LSTM depth chain.

    Grid axes: (i = target-row tile [parallel], k = source-col tile [arbitrary]).
    Scratch (per hop): e_dst [TQ,1], running max m [TQ,1], denom l [TQ,1],
    unnormalized accumulator acc [TQ,D].
    """
    i = pl.program_id(0)
    k = pl.program_id(1)
    nk = pl.num_programs(1)
    tq, d = xq_ref.shape
    tk = xs_ref.shape[0]
    n_hops = wg_ref.shape[0]

    # ---- first source tile for this row tile: init online-softmax state and
    #      compute per-hop target scores e_dst = (x W) . a_dst = x . (W a_dst)
    @pl.when(k == 0)
    def _init():
        m_sc[...] = jnp.full_like(m_sc, _NEG_INF)
        l_sc[...] = jnp.zeros_like(l_sc)
        acc_sc[...] = jnp.zeros_like(acc_sc)
        xq = xq_ref[...]                                          # [tq, d] f32
        for h in range(n_hops):
            edst_sc[h] = jnp.sum(xq * vdst_ref[h], axis=-1, keepdims=True)

    # ---- per (row tile, source tile): masked online-softmax accumulation ----
    # adjacency predicate built in-kernel: directed edge (src -> tgt) OR self loop
    row_g = i * tq + lax.broadcasted_iota(jnp.int32, (tq, tk), 0)
    col_g = k * tk + lax.broadcasted_iota(jnp.int32, (tq, tk), 1)
    mask = (adj_ref[...] > 0) | (row_g == col_g)

    xs = xs_ref[...].astype(jnp.bfloat16)                         # [tk, d]
    for h in range(n_hops):
        zs = jnp.dot(xs, wg_ref[h], preferred_element_type=jnp.float32)  # [tk, d]
        # e_src as a lane-dense row: (W a_src) . x_src  ->  [1, tk]
        es = jnp.einsum("od,kd->ok", vsrc_ref[h], xs,
                        preferred_element_type=jnp.float32)
        logits = edst_sc[h] + es                                   # [tq, tk]
        logits = jnp.where(logits > 0, logits, 0.2 * logits)       # LeakyReLU(0.2)
        logits = jnp.where(mask, logits, _NEG_INF)

        m_prev = m_sc[h]
        m_new = jnp.maximum(m_prev, jnp.max(logits, axis=-1, keepdims=True))
        p = jnp.where(mask, jnp.exp(logits - m_new), 0.0)          # f32
        corr = jnp.exp(m_prev - m_new)
        l_sc[h] = corr * l_sc[h] + jnp.sum(p, axis=-1, keepdims=True)
        acc_sc[h] = corr * acc_sc[h] + jnp.dot(
            p.astype(jnp.bfloat16), zs.astype(jnp.bfloat16),
            preferred_element_type=jnp.float32)
        m_sc[h] = m_new

    # ---- last source tile: finalize breadths, run LSTM depth chain, write ---
    @pl.when(k == nk - 1)
    def _fin():
        cur = xq_ref[...]                                          # x after lin1
        h_state = jnp.zeros((tq, d), jnp.float32)
        c_state = jnp.zeros((tq, d), jnp.float32)
        for hh in range(n_hops):
            inv_l = pl.reciprocal(l_sc[hh], approx=True)           # EUP
            breadth = jnp.tanh(acc_sc[hh] * inv_l + bg_ref[hh])    # tanh(GAT)

            wih_h = wih_ref[hh]                                    # [4, 2d, d] bf16
            whh_h = whh_ref[hh]                                    # [4, d, d]  bf16
            br = breadth.astype(jnp.bfloat16)
            cu = cur.astype(jnp.bfloat16)
            hb = h_state.astype(jnp.bfloat16)

            def gate(g):
                # input = cat([breadth, cur], 1); split weights instead of concat
                return (jnp.dot(br, wih_h[g, :d, :],
                                preferred_element_type=jnp.float32)
                        + jnp.dot(cu, wih_h[g, d:, :],
                                  preferred_element_type=jnp.float32)
                        + jnp.dot(hb, whh_h[g],
                                  preferred_element_type=jnp.float32))

            i_g = jax.nn.sigmoid(gate(0))                          # torch order i,f,g,o
            f_g = jax.nn.sigmoid(gate(1))
            g_g = jnp.tanh(gate(2))
            o_g = jax.nn.sigmoid(gate(3))
            c_state = f_g * c_state + i_g * g_g
            h_state = o_g * jnp.tanh(c_state)
            cur = h_state
        o_ref[...] = cur


# ---------------------------- kernel wrappers -------------------------------


def _lin1(nf, se, w1a, w1b, b1):
    n_pad, d = nf.shape
    return pl.pallas_call(
        _lin1_kernel,
        out_shape=jax.ShapeDtypeStruct((n_pad, d), jnp.float32),
        grid_spec=pltpu.PrefetchScalarGridSpec(
            num_scalar_prefetch=0,
            grid=(n_pad // _TILE,),
            in_specs=[
                pl.BlockSpec((_TILE, d), lambda i: (i, 0)),
                pl.BlockSpec((_TILE, d), lambda i: (i, 0)),
                pl.BlockSpec((d, d), lambda i: (0, 0)),
                pl.BlockSpec((d, d), lambda i: (0, 0)),
                pl.BlockSpec((1, d), lambda i: (0, 0)),
            ],
            out_specs=pl.BlockSpec((_TILE, d), lambda i: (i, 0)),
        ),
        compiler_params=pltpu.CompilerParams(
            dimension_semantics=("parallel",)),
    )(nf, se, w1a, w1b, b1)


def _genie_path_lazy(adj, x, wg, vsrc, vdst, bg, wih, whh):
    n_pad, d = x.shape
    n_hops = wg.shape[0]
    tq = tk = _TILE
    grid = (n_pad // tq, n_pad // tk)
    in_specs = [
        pl.BlockSpec((tq, tk), lambda i, k: (i, k)),                  # adj tile
        pl.BlockSpec((tq, d), lambda i, k: (i, 0)),                   # x (targets)
        pl.BlockSpec((tk, d), lambda i, k: (k, 0)),                   # x (sources)
        pl.BlockSpec((n_hops, d, d), lambda i, k: (0, 0, 0)),         # W_gat
        pl.BlockSpec((n_hops, 1, d), lambda i, k: (0, 0, 0)),         # W @ a_src
        pl.BlockSpec((n_hops, 1, d), lambda i, k: (0, 0, 0)),         # W @ a_dst
        pl.BlockSpec((n_hops, 1, d), lambda i, k: (0, 0, 0)),         # gat bias
        pl.BlockSpec((n_hops, 4, 2 * d, d), lambda i, k: (0, 0, 0, 0)),  # W_ih
        pl.BlockSpec((n_hops, 4, d, d), lambda i, k: (0, 0, 0, 0)),      # W_hh
    ]
    return pl.pallas_call(
        _genie_path_kernel,
        out_shape=jax.ShapeDtypeStruct((n_pad, d), jnp.float32),
        grid_spec=pltpu.PrefetchScalarGridSpec(
            num_scalar_prefetch=0,
            grid=grid,
            in_specs=in_specs,
            out_specs=pl.BlockSpec((tq, d), lambda i, k: (i, 0)),
            scratch_shapes=[
                pltpu.VMEM((n_hops, tq, 1), jnp.float32),   # e_dst per hop
                pltpu.VMEM((n_hops, tq, 1), jnp.float32),   # running max m
                pltpu.VMEM((n_hops, tq, 1), jnp.float32),   # running denom l
                pltpu.VMEM((n_hops, tq, d), jnp.float32),   # running acc
            ],
        ),
        compiler_params=pltpu.CompilerParams(
            dimension_semantics=("parallel", "arbitrary"),
            vmem_limit_bytes=32 * 1024 * 1024),
    )(adj, x, x, wg, vsrc, vdst, bg, wih, whh)


# ------------------------------- forward ------------------------------------


def pagnn_aggregation(params, node_feat, send_embd, edge_index, root_index,
                      agg_by_source=True):
    """PaGNNAggregation.forward (dense directed-adjacency formulation)."""
    n, d = node_feat.shape
    n_pad = ((n + _TILE - 1) // _TILE) * _TILE
    pad = n_pad - n

    nf = jnp.pad(node_feat, ((0, pad), (0, 0)))
    se = jnp.pad(send_embd, ((0, pad), (0, 0)))

    # Directed adjacency mask [target, source] (self loops added in-kernel),
    # stored bf16 to halve HBM traffic of the only O(N^2) array.
    adj = jnp.zeros((n_pad, n_pad), jnp.bfloat16)
    adj = adj.at[edge_index[1], edge_index[0]].set(1.0)

    # lin1 on the implicit concat [node_feat, send_embd]
    w1a = params["w1"][:d].astype(jnp.bfloat16)
    w1b = params["w1"][d:].astype(jnp.bfloat16)
    x = _lin1(nf, se, w1a, w1b, params["b1"])

    # host-precomputed GAT score vectors: v_src = W @ a_src, v_dst = W @ a_dst
    vsrc = jnp.einsum("hij,hj->hi", params["wg"], params["a_src"])[:, None, :]
    vdst = jnp.einsum("hij,hj->hi", params["wg"], params["a_dst"])[:, None, :]

    out_full = _genie_path_lazy(
        adj, x,
        params["wg"].astype(jnp.bfloat16),
        vsrc.astype(jnp.bfloat16),
        vdst.astype(jnp.float32),
        params["bg"],
        params["wih"].astype(jnp.bfloat16),
        params["whh"].astype(jnp.bfloat16))

    roots = root_index.reshape(-1, 2)
    sel = roots[:, 0] if agg_by_source else roots[:, 1]
    return out_full[sel]


# ----------------------------- parameter init -------------------------------


def init_pagnn_aggregation_params(key, d, n_hops):
    ks = jax.random.split(key, 8)
    return {
        "w1": jax.random.normal(ks[0], (2 * d, d), jnp.float32) * 0.1,
        "b1": jax.random.normal(ks[1], (1, d), jnp.float32) * 0.01,
        "wg": jax.random.normal(ks[2], (n_hops, d, d), jnp.float32) * 0.1,
        "a_src": jax.random.normal(ks[3], (n_hops, d), jnp.float32) * 0.1,
        "a_dst": jax.random.normal(ks[4], (n_hops, d), jnp.float32) * 0.1,
        "bg": jax.random.normal(ks[5], (n_hops, 1, d), jnp.float32) * 0.01,
        "wih": jax.random.normal(ks[6], (n_hops, 4, 2 * d, d), jnp.float32) * 0.1,
        "whh": jax.random.normal(ks[7], (n_hops, 4, d, d), jnp.float32) * 0.1,
    }


# ---------------------------------- main -------------------------------------


if __name__ == "__main__":
    N, D, HOPS, B = 200, 32, 2, 2          # 200 nodes -> padded to 256 (2x2 grid)
    key = jax.random.PRNGKey(0)
    k_nf, k_se, k_p = jax.random.split(key, 3)

    node_feat = jax.random.normal(k_nf, (N, D), jnp.float32)
    send_embd = jax.random.normal(k_se, (N, D), jnp.float32)

    # two 100-node samples: directed ring + one chord per sample
    e_src, e_dst = [], []
    for base in (0, 100):
        for i in range(99):
            e_src.append(base + i)
            e_dst.append(base + i + 1)
        e_src.append(base + 99)
        e_dst.append(base)
        e_src.append(base)
        e_dst.append(base + 50)
    edge_index = jnp.array([e_src, e_dst], jnp.int32)          # [2, 202]
    root_index = jnp.array([0, 1, 100, 101], jnp.int32)        # (src, tgt) per sample

    params = init_pagnn_aggregation_params(k_p, D, HOPS)

    fwd = jax.jit(pagnn_aggregation, static_argnames=("agg_by_source",))
    out = fwd(params, node_feat, send_embd, edge_index, root_index,
              agg_by_source=True)
    jax.block_until_ready(out)

    assert out.shape == (B, D), out.shape
    assert bool(jnp.all(jnp.isfinite(out)))
    print("KERNEL_OK")
</pallas_src>

<mosaic_0001>
module attributes {stable_mosaic.version = 11 : i64} {
  func.func @_lin1_kernel(%arg0: i32, %arg1: memref<128x32xf32, #tpu.memory_space<vmem>>, %arg2: memref<128x32xf32, #tpu.memory_space<vmem>>, %arg3: memref<32x32xbf16, #tpu.memory_space<vmem>>, %arg4: memref<32x32xbf16, #tpu.memory_space<vmem>>, %arg5: memref<1x32xf32, #tpu.memory_space<vmem>>, %arg6: memref<128x32xf32, #tpu.memory_space<vmem>>) attributes {dimension_semantics = [#tpu.dimension_semantics<parallel>], iteration_bounds = array<i64: 2>, scalar_prefetch = 0 : i64, scratch_operands = 0 : i64, tpu.core_type = #tpu.core_type<tc>, window_params = [{transform_indices = @transform_0, window_bounds = array<i64: 128, 32>}, {transform_indices = @transform_1, window_bounds = array<i64: 128, 32>}, {pipeline_mode = #tpu.pipeline_mode<synchronous>, transform_indices = @transform_2, window_bounds = array<i64: 32, 32>}, {pipeline_mode = #tpu.pipeline_mode<synchronous>, transform_indices = @transform_3, window_bounds = array<i64: 32, 32>}, {pipeline_mode = #tpu.pipeline_mode<synchronous>, transform_indices = @transform_4, window_bounds = array<i64: 1, 32>}, {transform_indices = @transform_5, window_bounds = array<i64: 128, 32>}]} {
    %c0 = arith.constant 0 : index
    %c0_0 = arith.constant 0 : index
    %0 = vector.load %arg1[%c0, %c0_0] : memref<128x32xf32, #tpu.memory_space<vmem>>, vector<128x32xf32>
    %1 = arith.truncf %0 : vector<128x32xf32> to vector<128x32xbf16>
    %c0_1 = arith.constant 0 : index
    %c0_2 = arith.constant 0 : index
    %2 = vector.load %arg2[%c0_1, %c0_2] : memref<128x32xf32, #tpu.memory_space<vmem>>, vector<128x32xf32>
    %3 = arith.truncf %2 : vector<128x32xf32> to vector<128x32xbf16>
    %c0_3 = arith.constant 0 : index
    %c0_4 = arith.constant 0 : index
    %4 = vector.load %arg3[%c0_3, %c0_4] : memref<32x32xbf16, #tpu.memory_space<vmem>>, vector<32x32xbf16>
    %cst = arith.constant dense<0.000000e+00> : vector<128x32xf32>
    %5 = tpu.matmul %1, %4, %cst {dimension_numbers = #tpu.dot_dimension_numbers<[1], [0], [0], [1], [0, 0, 1, 1], [], []>} : vector<128x32xbf16>, vector<32x32xbf16>, vector<128x32xf32> -> vector<128x32xf32>
    %c0_5 = arith.constant 0 : index
    %c0_6 = arith.constant 0 : index
    %6 = vector.load %arg4[%c0_5, %c0_6] : memref<32x32xbf16, #tpu.memory_space<vmem>>, vector<32x32xbf16>
    %cst_7 = arith.constant dense<0.000000e+00> : vector<128x32xf32>
    %7 = tpu.matmul %3, %6, %cst_7 {dimension_numbers = #tpu.dot_dimension_numbers<[1], [0], [0], [1], [0, 0, 1, 1], [], []>} : vector<128x32xbf16>, vector<32x32xbf16>, vector<128x32xf32> -> vector<128x32xf32>
    %8 = arith.addf %5, %7 : vector<128x32xf32>
    %c0_8 = arith.constant 0 : index
    %c0_9 = arith.constant 0 : index
    %9 = vector.load %arg5[%c0_8, %c0_9] : memref<1x32xf32, #tpu.memory_space<vmem>>, vector<1x32xf32>
    %10 = vector.broadcast %9 : vector<1x32xf32> to vector<128x32xf32>
    %11 = arith.addf %8, %10 : vector<128x32xf32>
    %c0_10 = arith.constant 0 : index
    %c0_11 = arith.constant 0 : index
    %12 = vector.load %arg6[%c0_10, %c0_11] : memref<128x32xf32, #tpu.memory_space<vmem>>, vector<128x32xf32>
    tpu.vector_store %arg6[%c0_10, %c0_11], %11 {strides = array<i32>} : memref<128x32xf32, #tpu.memory_space<vmem>>, vector<128x32xf32>,
    return
  }
  func.func @transform_0(%arg0: i32) -> (i32, i32) {
    %c0_i32 = arith.constant 0 : i32
    %c0_i32_0 = arith.constant 0 : i32
    return %arg0, %c0_i32 : i32, i32
  }
  func.func @transform_1(%arg0: i32) -> (i32, i32) {
    %c0_i32 = arith.constant 0 : i32
    %c0_i32_0 = arith.constant 0 : i32
    return %arg0, %c0_i32 : i32, i32
  }
  func.func @transform_2(%arg0: i32) -> (i32, i32) {
    %c0_i32 = arith.constant 0 : i32
    %c0_i32_0 = arith.constant 0 : i32
    %c0_i32_1 = arith.constant 0 : i32
    return %c0_i32, %c0_i32_0 : i32, i32
  }
  func.func @transform_3(%arg0: i32) -> (i32, i32) {
    %c0_i32 = arith.constant 0 : i32
    %c0_i32_0 = arith.constant 0 : i32
    %c0_i32_1 = arith.constant 0 : i32
    return %c0_i32, %c0_i32_0 : i32, i32
  }
  func.func @transform_4(%arg0: i32) -> (i32, i32) {
    %c0_i32 = arith.constant 0 : i32
    %c0_i32_0 = arith.constant 0 : i32
    %c0_i32_1 = arith.constant 0 : i32
    return %c0_i32, %c0_i32_0 : i32, i32
  }
  func.func @transform_5(%arg0: i32) -> (i32, i32) {
    %c0_i32 = arith.constant 0 : i32
    %c0_i32_0 = arith.constant 0 : i32
    return %arg0, %c0_i32 : i32, i32
  }
}

module attributes {stable_mosaic.version = 11 : i64} {
  func.func @_genie_path_kernel(%arg0: i32, %arg1: i32, %arg2: memref<128x128xbf16, #tpu.memory_space<vmem>>, %arg3: memref<128x32xf32, #tpu.memory_space<vmem>>, %arg4: memref<128x32xf32, #tpu.memory_space<vmem>>, %arg5: memref<2x32x32xbf16, #tpu.memory_space<vmem>>, %arg6: memref<2x1x32xbf16, #tpu.memory_space<vmem>>, %arg7: memref<2x1x32xf32, #tpu.memory_space<vmem>>, %arg8: memref<2x1x32xf32, #tpu.memory_space<vmem>>, %arg9: memref<2x4x64x32xbf16, #tpu.memory_space<vmem>>, %arg10: memref<2x4x32x32xbf16, #tpu.memory_space<vmem>>, %arg11: memref<128x32xf32, #tpu.memory_space<vmem>>, %arg12: memref<2x128x1xf32, #tpu.memory_space<vmem>>, %arg13: memref<2x128x1xf32, #tpu.memory_space<vmem>>, %arg14: memref<2x128x1xf32, #tpu.memory_space<vmem>>, %arg15: memref<2x128x32xf32, #tpu.memory_space<vmem>>) attributes {dimension_semantics = [#tpu.dimension_semantics<parallel>, #tpu.dimension_semantics<arbitrary>], iteration_bounds = array<i64: 2, 2>, scalar_prefetch = 0 : i64, scratch_operands = 4 : i64, tpu.core_type = #tpu.core_type<tc>, window_params = [{transform_indices = @transform_0, window_bounds = array<i64: 128, 128>}, {transform_indices = @transform_1, window_bounds = array<i64: 128, 32>}, {transform_indices = @transform_2, window_bounds = array<i64: 128, 32>}, {pipeline_mode = #tpu.pipeline_mode<synchronous>, transform_indices = @transform_3, window_bounds = array<i64: 2, 32, 32>}, {pipeline_mode = #tpu.pipeline_mode<synchronous>, transform_indices = @transform_4, window_bounds = array<i64: 2, 1, 32>}, {pipeline_mode = #tpu.pipeline_mode<synchronous>, transform_indices = @transform_5, window_bounds = array<i64: 2, 1, 32>}, {pipeline_mode = #tpu.pipeline_mode<synchronous>, transform_indices = @transform_6, window_bounds = array<i64: 2, 1, 32>}, {pipeline_mode = #tpu.pipeline_mode<synchronous>, transform_indices = @transform_7, window_bounds = array<i64: 2, 4, 64, 32>}, {pipeline_mode = #tpu.pipeline_mode<synchronous>, transform_indices = @transform_8, window_bounds = array<i64: 2, 4, 32, 32>}, {transform_indices = @transform_9, window_bounds = array<i64: 128, 32>}]} {
    %c0_i32 = arith.constant 0 : i32
    %0 = arith.cmpi eq, %arg1, %c0_i32 : i32
    %1 = arith.extui %0 : i1 to i32
    %c0_i32_0 = arith.constant 0 : i32
    %2 = arith.cmpi ne, %1, %c0_i32_0 : i32
    scf.if %2 {
      %cst_77 = arith.constant -1.000000e+30 : f32
      %127 = vector.broadcast %cst_77 : f32 to vector<2x128x1xf32>
      %c0_78 = arith.constant 0 : index
      %c0_79 = arith.constant 0 : index
      %c0_80 = arith.constant 0 : index
      %128 = vector.load %arg13[%c0_78, %c0_79, %c0_80] : memref<2x128x1xf32, #tpu.memory_space<vmem>>, vector<2x128x1xf32>
      tpu.vector_store %arg13[%c0_78, %c0_79, %c0_80], %127 {strides = array<i32>} : memref<2x128x1xf32, #tpu.memory_space<vmem>>, vector<2x128x1xf32>,
      %cst_81 = arith.constant 0.000000e+00 : f32
      %129 = vector.broadcast %cst_81 : f32 to vector<2x128x1xf32>
      %c0_82 = arith.constant 0 : index
      %c0_83 = arith.constant 0 : index
      %c0_84 = arith.constant 0 : index
      %130 = vector.load %arg14[%c0_82, %c0_83, %c0_84] : memref<2x128x1xf32, #tpu.memory_space<vmem>>, vector<2x128x1xf32>
      tpu.vector_store %arg14[%c0_82, %c0_83, %c0_84], %129 {strides = array<i32>} : memref<2x128x1xf32, #tpu.memory_space<vmem>>, vector<2x128x1xf32>,
      %cst_85 = arith.constant 0.000000e+00 : f32
      %131 = vector.broadcast %cst_85 : f32 to vector<2x128x32xf32>
      %c0_86 = arith.constant 0 : index
      %c0_87 = arith.constant 0 : index
      %c0_88 = arith.constant 0 : index
      %132 = vector.load %arg15[%c0_86, %c0_87, %c0_88] : memref<2x128x32xf32, #tpu.memory_space<vmem>>, vector<2x128x32xf32>
      tpu.vector_store %arg15[%c0_86, %c0_87, %c0_88], %131 {strides = array<i32>} : memref<2x128x32xf32, #tpu.memory_space<vmem>>, vector<2x128x32xf32>,
      %c0_89 = arith.constant 0 : index
      %c0_90 = arith.constant 0 : index
      %133 = vector.load %arg3[%c0_89, %c0_90] : memref<128x32xf32, #tpu.memory_space<vmem>>, vector<128x32xf32>
      %c0_91 = arith.constant 0 : index
      %c0_92 = arith.constant 0 : index
      %c0_93 = arith.constant 0 : index
      %134 = vector.load %arg7[%c0_91, %c0_92, %c0_93] : memref<2x1x32xf32, #tpu.memory_space<vmem>>, vector<1x1x32xf32>
      %135 = vector.shape_cast %134 : vector<1x1x32xf32> to vector<1x32xf32>
      %136 = vector.broadcast %135 : vector<1x32xf32> to vector<128x32xf32>
      %137 = arith.mulf %133, %136 : vector<128x32xf32>
      %cst_94 = arith.constant dense<0.000000e+00> : vector<128xf32>
      %138 = vector.multi_reduction <add>, %137, %cst_94 [1] : vector<128x32xf32> to vector<128xf32>
      %139 = vector.shape_cast %138 : vector<128xf32> to vector<128x1xf32>
      %c0_95 = arith.constant 0 : index
      %c0_96 = arith.constant 0 : index
      %c0_97 = arith.constant 0 : index
      %140 = vector.load %arg12[%c0_95, %c0_96, %c0_97] : memref<2x128x1xf32, #tpu.memory_space<vmem>>, vector<1x128x1xf32>
      %141 = vector.shape_cast %140 : vector<1x128x1xf32> to vector<128x1xf32>
      %142 = vector.shape_cast %139 : vector<128x1xf32> to vector<1x128x1xf32>
      tpu.vector_store %arg12[%c0_95, %c0_96, %c0_97], %142 {strides = array<i32>} : memref<2x128x1xf32, #tpu.memory_space<vmem>>, vector<1x128x1xf32>,
      %c1_98 = arith.constant 1 : index
      %c0_99 = arith.constant 0 : index
      %c0_100 = arith.constant 0 : index
      %143 = vector.load %arg7[%c1_98, %c0_99, %c0_100] : memref<2x1x32xf32, #tpu.memory_space<vmem>>, vector<1x1x32xf32>
      %144 = vector.shape_cast %143 : vector<1x1x32xf32> to vector<1x32xf32>
      %145 = vector.broadcast %144 : vector<1x32xf32> to vector<128x32xf32>
      %146 = arith.mulf %133, %145 : vector<128x32xf32>
      %cst_101 = arith.constant dense<0.000000e+00> : vector<128xf32>
      %147 = vector.multi_reduction <add>, %146, %cst_101 [1] : vector<128x32xf32> to vector<128xf32>
      %148 = vector.shape_cast %147 : vector<128xf32> to vector<128x1xf32>
      %c1_102 = arith.constant 1 : index
      %c0_103 = arith.constant 0 : index
      %c0_104 = arith.constant 0 : index
      %149 = vector.load %arg12[%c1_102, %c0_103, %c0_104] : memref<2x128x1xf32, #tpu.memory_space<vmem>>, vector<1x128x1xf32>
      %150 = vector.shape_cast %149 : vector<1x128x1xf32> to vector<128x1xf32>
      %151 = vector.shape_cast %148 : vector<128x1xf32> to vector<1x128x1xf32>
      tpu.vector_store %arg12[%c1_102, %c0_103, %c0_104], %151 {strides = array<i32>} : memref<2x128x1xf32, #tpu.memory_space<vmem>>, vector<1x128x1xf32>,
    } else {
    }
    %c128_i32 = arith.constant 128 : i32
    %3 = arith.muli %arg0, %c128_i32 : i32
    %4 = tpu.iota {dimensions = array<i32: 0>} : vector<128x128xi32>
    %5 = vector.broadcast %3 : i32 to vector<128x128xi32>
    %6 = arith.addi %5, %4 : vector<128x128xi32>
    %c128_i32_1 = arith.constant 128 : i32
    %7 = arith.muli %arg1, %c128_i32_1 : i32
    %8 = tpu.iota {dimensions = array<i32: 1>} : vector<128x128xi32>
    %9 = vector.broadcast %7 : i32 to vector<128x128xi32>
    %10 = arith.addi %9, %8 : vector<128x128xi32>
    %c0 = arith.constant 0 : index
    %c0_2 = arith.constant 0 : index
    %11 = vector.load %arg2[%c0, %c0_2] : memref<128x128xbf16, #tpu.memory_space<vmem>>, vector<128x128xbf16>
    %cst = arith.constant 0.000000e+00 : bf16
    %12 = vector.broadcast %cst : bf16 to vector<128x128xbf16>
    %13 = arith.cmpf ogt, %11, %12 : vector<128x128xbf16>
    %14 = arith.cmpi eq, %6, %10 : vector<128x128xi32>
    %15 = arith.ori %13, %14 : vector<128x128xi1>
    %c0_3 = arith.constant 0 : index
    %c0_4 = arith.constant 0 : index
    %16 = vector.load %arg4[%c0_3, %c0_4] : memref<128x32xf32, #tpu.memory_space<vmem>>, vector<128x32xf32>
    %17 = arith.truncf %16 : vector<128x32xf32> to vector<128x32xbf16>
    %c0_5 = arith.constant 0 : index
    %c0_6 = arith.constant 0 : index
    %c0_7 = arith.constant 0 : index
    %18 = vector.load %arg5[%c0_5, %c0_6, %c0_7] : memref<2x32x32xbf16, #tpu.memory_space<vmem>>, vector<1x32x32xbf16>
    %19 = vector.shape_cast %18 : vector<1x32x32xbf16> to vector<32x32xbf16>
    %cst_8 = arith.constant dense<0.000000e+00> : vector<128x32xf32>
    %20 = tpu.matmul %17, %19, %cst_8 {dimension_numbers = #tpu.dot_dimension_numbers<[1], [0], [0], [1], [0, 0, 1, 1], [], []>} : vector<128x32xbf16>, vector<32x32xbf16>, vector<128x32xf32> -> vector<128x32xf32>
    %c0_9 = arith.constant 0 : index
    %c0_10 = arith.constant 0 : index
    %c0_11 = arith.constant 0 : index
    %21 = vector.load %arg6[%c0_9, %c0_10, %c0_11] : memref<2x1x32xbf16, #tpu.memory_space<vmem>>, vector<1x1x32xbf16>
    %22 = vector.shape_cast %21 : vector<1x1x32xbf16> to vector<1x32xbf16>
    "tpu.trace_start"() <{level = 10 : i32, message = "od,kd->ok"}> : () -> ()
    %cst_12 = arith.constant dense<0.000000e+00> : vector<1x128xf32>
    %23 = tpu.matmul %22, %17, %cst_12 {dimension_numbers = #tpu.dot_dimension_numbers<[1], [1], [0], [0], [0, 0, 1, 0], [], []>} : vector<1x32xbf16>, vector<128x32xbf16>, vector<1x128xf32> -> vector<1x128xf32>
    "tpu.trace_stop"() : () -> ()
    %c0_13 = arith.constant 0 : index
    %c0_14 = arith.constant 0 : index
    %c0_15 = arith.constant 0 : index
    %24 = vector.load %arg12[%c0_13, %c0_14, %c0_15] : memref<2x128x1xf32, #tpu.memory_space<vmem>>, vector<1x128x1xf32>
    %25 = vector.shape_cast %24 : vector<1x128x1xf32> to vector<128x1xf32>
    %26 = vector.broadcast %25 : vector<128x1xf32> to vector<128x128xf32>
    %27 = vector.broadcast %23 : vector<1x128xf32> to vector<128x128xf32>
    %28 = arith.addf %26, %27 : vector<128x128xf32>
    %cst_16 = arith.constant 0.000000e+00 : f32
    %29 = vector.broadcast %cst_16 : f32 to vector<128x128xf32>
    %30 = arith.cmpf ogt, %28, %29 : vector<128x128xf32>
    %cst_17 = arith.constant 2.000000e-01 : f32
    %31 = vector.broadcast %cst_17 : f32 to vector<128x128xf32>
    %32 = arith.mulf %31, %28 : vector<128x128xf32>
    %33 = arith.select %30, %28, %32 : vector<128x128xi1>, vector<128x128xf32>
    %cst_18 = arith.constant -1.000000e+30 : f32
    %34 = vector.broadcast %cst_18 : f32 to vector<128x128xf32>
    %35 = arith.select %15, %33, %34 : vector<128x128xi1>, vector<128x128xf32>
    %c0_19 = arith.constant 0 : index
    %c0_20 = arith.constant 0 : index
    %c0_21 = arith.constant 0 : index
    %36 = vector.load %arg13[%c0_19, %c0_20, %c0_21] : memref<2x128x1xf32, #tpu.memory_space<vmem>>, vector<1x128x1xf32>
    %37 = vector.shape_cast %36 : vector<1x128x1xf32> to vector<128x1xf32>
    %cst_22 = arith.constant dense<0xFF800000> : vector<128xf32>
    %38 = vector.multi_reduction <maximumf>, %35, %cst_22 [1] : vector<128x128xf32> to vector<128xf32>
    %39 = vector.shape_cast %38 : vector<128xf32> to vector<128x1xf32>
    %40 = arith.maximumf %37, %39 : vector<128x1xf32>
    %41 = vector.broadcast %40 : vector<128x1xf32> to vector<128x128xf32>
    %42 = arith.subf %35, %41 : vector<128x128xf32>
    %43 = math.exp %42 : vector<128x128xf32>
    %cst_23 = arith.constant 0.000000e+00 : f32
    %44 = vector.broadcast %cst_23 : f32 to vector<128x128xf32>
    %45 = arith.select %15, %43, %44 : vector<128x128xi1>, vector<128x128xf32>
    %46 = arith.subf %37, %40 : vector<128x1xf32>
    %47 = math.exp %46 : vector<128x1xf32>
    %c0_24 = arith.constant 0 : index
    %c0_25 = arith.constant 0 : index
    %c0_26 = arith.constant 0 : index
    %48 = vector.load %arg14[%c0_24, %c0_25, %c0_26] : memref<2x128x1xf32, #tpu.memory_space<vmem>>, vector<1x128x1xf32>
    %49 = vector.shape_cast %48 : vector<1x128x1xf32> to vector<128x1xf32>
    %50 = arith.mulf %47, %49 : vector<128x1xf32>
    %cst_27 = arith.constant dense<0.000000e+00> : vector<128xf32>
    %51 = vector.multi_reduction <add>, %45, %cst_27 [1] : vector<128x128xf32> to vector<128xf32>
    %52 = vector.shape_cast %51 : vector<128xf32> to vector<128x1xf32>
    %53 = arith.addf %50, %52 : vector<128x1xf32>
    %c0_28 = arith.constant 0 : index
    %c0_29 = arith.constant 0 : index
    %c0_30 = arith.constant 0 : index
    %54 = vector.load %arg14[%c0_28, %c0_29, %c0_30] : memref<2x128x1xf32, #tpu.memory_space<vmem>>, vector<1x128x1xf32>
    %55 = vector.shape_cast %54 : vector<1x128x1xf32> to vector<128x1xf32>
    %56 = vector.shape_cast %53 : vector<128x1xf32> to vector<1x128x1xf32>
    tpu.vector_store %arg14[%c0_28, %c0_29, %c0_30], %56 {strides = array<i32>} : memref<2x128x1xf32, #tpu.memory_space<vmem>>, vector<1x128x1xf32>,
    %c0_31 = arith.constant 0 : index
    %c0_32 = arith.constant 0 : index
    %c0_33 = arith.constant 0 : index
    %57 = vector.load %arg15[%c0_31, %c0_32, %c0_33] : memref<2x128x32xf32, #tpu.memory_space<vmem>>, vector<1x128x32xf32>
    %58 = vector.shape_cast %57 : vector<1x128x32xf32> to vector<128x32xf32>
    %59 = vector.broadcast %47 : vector<128x1xf32> to vector<128x32xf32>
    %60 = arith.mulf %59, %58 : vector<128x32xf32>
    %61 = arith.truncf %45 : vector<128x128xf32> to vector<128x128xbf16>
    %62 = arith.truncf %20 : vector<128x32xf32> to vector<128x32xbf16>
    %cst_34 = arith.constant dense<0.000000e+00> : vector<128x32xf32>
    %63 = tpu.matmul %61, %62, %cst_34 {dimension_numbers = #tpu.dot_dimension_numbers<[1], [0], [0], [1], [0, 0, 1, 1], [], []>} : vector<128x128xbf16>, vector<128x32xbf16>, vector<128x32xf32> -> vector<128x32xf32>
    %64 = arith.addf %60, %63 : vector<128x32xf32>
    %c0_35 = arith.constant 0 : index
    %c0_36 = arith.constant 0 : index
    %c0_37 = arith.constant 0 : index
    %65 = vector.load %arg15[%c0_35, %c0_36, %c0_37] : memref<2x128x32xf32, #tpu.memory_space<vmem>>, vector<1x128x32xf32>
    %66 = vector.shape_cast %65 : vector<1x128x32xf32> to vector<128x32xf32>
    %67 = vector.shape_cast %64 : vector<128x32xf32> to vector<1x128x32xf32>
    tpu.vector_store %arg15[%c0_35, %c0_36, %c0_37], %67 {strides = array<i32>} : memref<2x128x32xf32, #tpu.memory_space<vmem>>, vector<1x128x32xf32>,
    %c0_38 = arith.constant 0 : index
    %c0_39 = arith.constant 0 : index
    %c0_40 = arith.constant 0 : index
    %68 = vector.load %arg13[%c0_38, %c0_39, %c0_40] : memref<2x128x1xf32, #tpu.memory_space<vmem>>, vector<1x128x1xf32>
    %69 = vector.shape_cast %68 : vector<1x128x1xf32> to vector<128x1xf32>
    %70 = vector.shape_cast %40 : vector<128x1xf32> to vector<1x128x1xf32>
    tpu.vector_store %arg13[%c0_38, %c0_39, %c0_40], %70 {strides = array<i32>} : memref<2x128x1xf32, #tpu.memory_space<vmem>>, vector<1x128x1xf32>,
    %c1 = arith.constant 1 : index
    %c0_41 = arith.constant 0 : index
    %c0_42 = arith.constant 0 : index
    %71 = vector.load %arg5[%c1, %c0_41, %c0_42] : memref<2x32x32xbf16, #tpu.memory_space<vmem>>, vector<1x32x32xbf16>
    %72 = vector.shape_cast %71 : vector<1x32x32xbf16> to vector<32x32xbf16>
    %cst_43 = arith.constant dense<0.000000e+00> : vector<128x32xf32>
    %73 = tpu.matmul %17, %72, %cst_43 {dimension_numbers = #tpu.dot_dimension_numbers<[1], [0], [0], [1], [0, 0, 1, 1], [], []>} : vector<128x32xbf16>, vector<32x32xbf16>, vector<128x32xf32> -> vector<128x32xf32>
    %c1_44 = arith.constant 1 : index
    %c0_45 = arith.constant 0 : index
    %c0_46 = arith.constant 0 : index
    %74 = vector.load %arg6[%c1_44, %c0_45, %c0_46] : memref<2x1x32xbf16, #tpu.memory_space<vmem>>, vector<1x1x32xbf16>
    %75 = vector.shape_cast %74 : vector<1x1x32xbf16> to vector<1x32xbf16>
    "tpu.trace_start"() <{level = 10 : i32, message = "od,kd->ok"}> : () -> ()
    %cst_47 = arith.constant dense<0.000000e+00> : vector<1x128xf32>
    %76 = tpu.matmul %75, %17, %cst_47 {dimension_numbers = #tpu.dot_dimension_numbers<[1], [1], [0], [0], [0, 0, 1, 0], [], []>} : vector<1x32xbf16>, vector<128x32xbf16>, vector<1x128xf32> -> vector<1x128xf32>
    "tpu.trace_stop"() : () -> ()
    %c1_48 = arith.constant 1 : index
    %c0_49 = arith.constant 0 : index
    %c0_50 = arith.constant 0 : index
    %77 = vector.load %arg12[%c1_48, %c0_49, %c0_50] : memref<2x128x1xf32, #tpu.memory_space<vmem>>, vector<1x128x1xf32>
    %78 = vector.shape_cast %77 : vector<1x128x1xf32> to vector<128x1xf32>
    %79 = vector.broadcast %78 : vector<128x1xf32> to vector<128x128xf32>
    %80 = vector.broadcast %76 : vector<1x128xf32> to vector<128x128xf32>
    %81 = arith.addf %79, %80 : vector<128x128xf32>
    %cst_51 = arith.constant 0.000000e+00 : f32
    %82 = vector.broadcast %cst_51 : f32 to vector<128x128xf32>
    %83 = arith.cmpf ogt, %81, %82 : vector<128x128xf32>
    %cst_52 = arith.constant 2.000000e-01 : f32
    %84 = vector.broadcast %cst_52 : f32 to vector<128x128xf32>
    %85 = arith.mulf %84, %81 : vector<128x128xf32>
    %86 = arith.select %83, %81, %85 : vector<128x128xi1>, vector<128x128xf32>
    %cst_53 = arith.constant -1.000000e+30 : f32
    %87 = vector.broadcast %cst_53 : f32 to vector<128x128xf32>
    %88 = arith.select %15, %86, %87 : vector<128x128xi1>, vector<128x128xf32>
    %c1_54 = arith.constant 1 : index
    %c0_55 = arith.constant 0 : index
    %c0_56 = arith.constant 0 : index
    %89 = vector.load %arg13[%c1_54, %c0_55, %c0_56] : memref<2x128x1xf32, #tpu.memory_space<vmem>>, vector<1x128x1xf32>
    %90 = vector.shape_cast %89 : vector<1x128x1xf32> to vector<128x1xf32>
    %cst_57 = arith.constant dense<0xFF800000> : vector<128xf32>
    %91 = vector.multi_reduction <maximumf>, %88, %cst_57 [1] : vector<128x128xf32> to vector<128xf32>
    %92 = vector.shape_cast %91 : vector<128xf32> to vector<128x1xf32>
    %93 = arith.maximumf %90, %92 : vector<128x1xf32>
    %94 = vector.broadcast %93 : vector<128x1xf32> to vector<128x128xf32>
    %95 = arith.subf %88, %94 : vector<128x128xf32>
    %96 = math.exp %95 : vector<128x128xf32>
    %cst_58 = arith.constant 0.000000e+00 : f32
    %97 = vector.broadcast %cst_58 : f32 to vector<128x128xf32>
    %98 = arith.select %15, %96, %97 : vector<128x128xi1>, vector<128x128xf32>
    %99 = arith.subf %90, %93 : vector<128x1xf32>
    %100 = math.exp %99 : vector<128x1xf32>
    %c1_59 = arith.constant 1 : index
    %c0_60 = arith.constant 0 : index
    %c0_61 = arith.constant 0 : index
    %101 = vector.load %arg14[%c1_59, %c0_60, %c0_61] : memref<2x128x1xf32, #tpu.memory_space<vmem>>, vector<1x128x1xf32>
    %102 = vector.shape_cast %101 : vector<1x128x1xf32> to vector<128x1xf32>
    %103 = arith.mulf %100, %102 : vector<128x1xf32>
    %cst_62 = arith.constant dense<0.000000e+00> : vector<128xf32>
    %104 = vector.multi_reduction <add>, %98, %cst_62 [1] : vector<128x128xf32> to vector<128xf32>
    %105 = vector.shape_cast %104 : vector<128xf32> to vector<128x1xf32>
    %106 = arith.addf %103, %105 : vector<128x1xf32>
    %c1_63 = arith.constant 1 : index
    %c0_64 = arith.constant 0 : index
    %c0_65 = arith.constant 0 : index
    %107 = vector.load %arg14[%c1_63, %c0_64, %c0_65] : memref<2x128x1xf32, #tpu.memory_space<vmem>>, vector<1x128x1xf32>
    %108 = vector.shape_cast %107 : vector<1x128x1xf32> to vector<128x1xf32>
    %109 = vector.shape_cast %106 : vector<128x1xf32> to vector<1x128x1xf32>
    tpu.vector_store %arg14[%c1_63, %c0_64, %c0_65], %109 {strides = array<i32>} : memref<2x128x1xf32, #tpu.memory_space<vmem>>, vector<1x128x1xf32>,
    %c1_66 = arith.constant 1 : index
    %c0_67 = arith.constant 0 : index
    %c0_68 = arith.constant 0 : index
    %110 = vector.load %arg15[%c1_66, %c0_67, %c0_68] : memref<2x128x32xf32, #tpu.memory_space<vmem>>, vector<1x128x32xf32>
    %111 = vector.shape_cast %110 : vector<1x128x32xf32> to vector<128x32xf32>
    %112 = vector.broadcast %100 : vector<128x1xf32> to vector<128x32xf32>
    %113 = arith.mulf %112, %111 : vector<128x32xf32>
    %114 = arith.truncf %98 : vector<128x128xf32> to vector<128x128xbf16>
    %115 = arith.truncf %73 : vector<128x32xf32> to vector<128x32xbf16>
    %cst_69 = arith.constant dense<0.000000e+00> : vector<128x32xf32>
    %116 = tpu.matmul %114, %115, %cst_69 {dimension_numbers = #tpu.dot_dimension_numbers<[1], [0], [0], [1], [0, 0, 1, 1], [], []>} : vector<128x128xbf16>, vector<128x32xbf16>, vector<128x32xf32> -> vector<128x32xf32>
    %117 = arith.addf %113, %116 : vector<128x32xf32>
    %c1_70 = arith.constant 1 : index
    %c0_71 = arith.constant 0 : index
    %c0_72 = arith.constant 0 : index
    %118 = vector.load %arg15[%c1_70, %c0_71, %c0_72] : memref<2x128x32xf32, #tpu.memory_space<vmem>>, vector<1x128x32xf32>
    %119 = vector.shape_cast %118 : vector<1x128x32xf32> to vector<128x32xf32>
    %120 = vector.shape_cast %117 : vector<128x32xf32> to vector<1x128x32xf32>
    tpu.vector_store %arg15[%c1_70, %c0_71, %c0_72], %120 {strides = array<i32>} : memref<2x128x32xf32, #tpu.memory_space<vmem>>, vector<1x128x32xf32>,
    %c1_73 = arith.constant 1 : index
    %c0_74 = arith.constant 0 : index
    %c0_75 = arith.constant 0 : index
    %121 = vector.load %arg13[%c1_73, %c0_74, %c0_75] : memref<2x128x1xf32, #tpu.memory_space<vmem>>, vector<1x128x1xf32>
    %122 = vector.shape_cast %121 : vector<1x128x1xf32> to vector<128x1xf32>
    %123 = vector.shape_cast %93 : vector<128x1xf32> to vector<1x128x1xf32>
    tpu.vector_store %arg13[%c1_73, %c0_74, %c0_75], %123 {strides = array<i32>} : memref<2x128x1xf32, #tpu.memory_space<vmem>>, vector<1x128x1xf32>,
    %c1_i32 = arith.constant 1 : i32
    %124 = arith.cmpi eq, %arg1, %c1_i32 : i32
    %125 = arith.extui %124 : i1 to i32
    %c0_i32_76 = arith.constant 0 : i32
    %126 = arith.cmpi ne, %125, %c0_i32_76 : i32
    scf.if %126 {
      %c0_77 = arith.constant 0 : index
      %c0_78 = arith.constant 0 : index
      %127 = vector.load %arg3[%c0_77, %c0_78] : memref<128x32xf32, #tpu.memory_space<vmem>>, vector<128x32xf32>
      %cst_79 = arith.constant 0.000000e+00 : f32
      %128 = vector.broadcast %cst_79 : f32 to vector<128x32xf32>
      %cst_80 = arith.constant 0.000000e+00 : f32
      %129 = vector.broadcast %cst_80 : f32 to vector<128x32xf32>
      %c0_81 = arith.constant 0 : index
      %c0_82 = arith.constant 0 : index
      %c0_83 = arith.constant 0 : index
      %130 = vector.load %arg14[%c0_81, %c0_82, %c0_83] : memref<2x128x1xf32, #tpu.memory_space<vmem>>, vector<1x128x1xf32>
      %131 = vector.shape_cast %130 : vector<1x128x1xf32> to vector<128x1xf32>
      %132 = tpu.reciprocal %131 {approx = true} : vector<128x1xf32> -> vector<128x1xf32>
      %c0_84 = arith.constant 0 : index
      %c0_85 = arith.constant 0 : index
      %c0_86 = arith.constant 0 : index
      %133 = vector.load %arg15[%c0_84, %c0_85, %c0_86] : memref<2x128x32xf32, #tpu.memory_space<vmem>>, vector<1x128x32xf32>
      %134 = vector.shape_cast %133 : vector<1x128x32xf32> to vector<128x32xf32>
      %135 = vector.broadcast %132 : vector<128x1xf32> to vector<128x32xf32>
      %136 = arith.mulf %134, %135 : vector<128x32xf32>
      %c0_87 = arith.constant 0 : index
      %c0_88 = arith.constant 0 : index
      %c0_89 = arith.constant 0 : index
      %137 = vector.load %arg8[%c0_87, %c0_88, %c0_89] : memref<2x1x32xf32, #tpu.memory_space<vmem>>, vector<1x1x32xf32>
      %138 = vector.shape_cast %137 : vector<1x1x32xf32> to vector<1x32xf32>
      %139 = vector.broadcast %138 : vector<1x32xf32> to vector<128x32xf32>
      %140 = arith.addf %136, %139 : vector<128x32xf32>
      %141 = math.tanh %140 : vector<128x32xf32>
      %c0_90 = arith.constant 0 : index
      %c0_91 = arith.constant 0 : index
      %c0_92 = arith.constant 0 : index
      %c0_93 = arith.constant 0 : index
      %142 = vector.load %arg9[%c0_90, %c0_91, %c0_92, %c0_93] : memref<2x4x64x32xbf16, #tpu.memory_space<vmem>>, vector<1x4x64x32xbf16>
      %143 = vector.shape_cast %142 : vector<1x4x64x32xbf16> to vector<4x64x32xbf16>
      %c0_94 = arith.constant 0 : index
      %c0_95 = arith.constant 0 : index
      %c0_96 = arith.constant 0 : index
      %c0_97 = arith.constant 0 : index
      %144 = vector.load %arg10[%c0_94, %c0_95, %c0_96, %c0_97] : memref<2x4x32x32xbf16, #tpu.memory_space<vmem>>, vector<1x4x32x32xbf16>
      %145 = vector.shape_cast %144 : vector<1x4x32x32xbf16> to vector<4x32x32xbf16>
      %146 = arith.truncf %141 : vector<128x32xf32> to vector<128x32xbf16>
      %147 = arith.truncf %127 : vector<128x32xf32> to vector<128x32xbf16>
      %148 = arith.truncf %128 : vector<128x32xf32> to vector<128x32xbf16>
      %149 = vector.extract_strided_slice %143 {offsets = [0, 0, 0], sizes = [1, 32, 32], strides = [1, 1, 1]} : vector<4x64x32xbf16> to vector<1x32x32xbf16>
      %150 = vector.shape_cast %149 : vector<1x32x32xbf16> to vector<32x32xbf16>
      %cst_98 = arith.constant dense<0.000000e+00> : vector<128x32xf32>
      %151 = tpu.matmul %146, %150, %cst_98 {dimension_numbers = #tpu.dot_dimension_numbers<[1], [0], [0], [1], [0, 0, 1, 1], [], []>} : vector<128x32xbf16>, vector<32x32xbf16>, vector<128x32xf32> -> vector<128x32xf32>
      %152 = vector.extract_strided_slice %143 {offsets = [0, 32, 0], sizes = [1, 32, 32], strides = [1, 1, 1]} : vector<4x64x32xbf16> to vector<1x32x32xbf16>
      %153 = vector.shape_cast %152 : vector<1x32x32xbf16> to vector<32x32xbf16>
      %cst_99 = arith.constant dense<0.000000e+00> : vector<128x32xf32>
      %154 = tpu.matmul %147, %153, %cst_99 {dimension_numbers = #tpu.dot_dimension_numbers<[1], [0], [0], [1], [0, 0, 1, 1], [], []>} : vector<128x32xbf16>, vector<32x32xbf16>, vector<128x32xf32> -> vector<128x32xf32>
      %155 = arith.addf %151, %154 : vector<128x32xf32>
      %156 = vector.extract_strided_slice %145 {offsets = [0, 0, 0], sizes = [1, 32, 32], strides = [1, 1, 1]} : vector<4x32x32xbf16> to vector<1x32x32xbf16>
      %157 = vector.shape_cast %156 : vector<1x32x32xbf16> to vector<32x32xbf16>
      %cst_100 = arith.constant dense<0.000000e+00> : vector<128x32xf32>
      %158 = tpu.matmul %148, %157, %cst_100 {dimension_numbers = #tpu.dot_dimension_numbers<[1], [0], [0], [1], [0, 0, 1, 1], [], []>} : vector<128x32xbf16>, vector<32x32xbf16>, vector<128x32xf32> -> vector<128x32xf32>
      %159 = arith.addf %155, %158 : vector<128x32xf32>
      %160 = arith.negf %159 : vector<128x32xf32>
      %161 = math.exp %160 : vector<128x32xf32>
      %cst_101 = arith.constant 1.000000e+00 : f32
      %162 = vector.broadcast %cst_101 : f32 to vector<128x32xf32>
      %163 = arith.addf %162, %161 : vector<128x32xf32>
      %164 = arith.divf %162, %163 : vector<128x32xf32>
      %165 = vector.extract_strided_slice %143 {offsets = [1, 0, 0], sizes = [1, 32, 32], strides = [1, 1, 1]} : vector<4x64x32xbf16> to vector<1x32x32xbf16>
      %166 = vector.shape_cast %165 : vector<1x32x32xbf16> to vector<32x32xbf16>
      %cst_102 = arith.constant dense<0.000000e+00> : vector<128x32xf32>
      %167 = tpu.matmul %146, %166, %cst_102 {dimension_numbers = #tpu.dot_dimension_numbers<[1], [0], [0], [1], [0, 0, 1, 1], [], []>} : vector<128x32xbf16>, vector<32x32xbf16>, vector<128x32xf32> -> vector<128x32xf32>
      %168 = vector.extract_strided_slice %143 {offsets = [1, 32, 0], sizes = [1, 32, 32], strides = [1, 1, 1]} : vector<4x64x32xbf16> to vector<1x32x32xbf16>
      %169 = vector.shape_cast %168 : vector<1x32x32xbf16> to vector<32x32xbf16>
      %cst_103 = arith.constant dense<0.000000e+00> : vector<128x32xf32>
      %170 = tpu.matmul %147, %169, %cst_103 {dimension_numbers = #tpu.dot_dimension_numbers<[1], [0], [0], [1], [0, 0, 1, 1], [], []>} : vector<128x32xbf16>, vector<32x32xbf16>, vector<128x32xf32> -> vector<128x32xf32>
      %171 = arith.addf %167, %170 : vector<128x32xf32>
      %172 = vector.extract_strided_slice %145 {offsets = [1, 0, 0], sizes = [1, 32, 32], strides = [1, 1, 1]} : vector<4x32x32xbf16> to vector<1x32x32xbf16>
      %173 = vector.shape_cast %172 : vector<1x32x32xbf16> to vector<32x32xbf16>
      %cst_104 = arith.constant dense<0.000000e+00> : vector<128x32xf32>
      %174 = tpu.matmul %148, %173, %cst_104 {dimension_numbers = #tpu.dot_dimension_numbers<[1], [0], [0], [1], [0, 0, 1, 1], [], []>} : vector<128x32xbf16>, vector<32x32xbf16>, vector<128x32xf32> -> vector<128x32xf32>
      %175 = arith.addf %171, %174 : vector<128x32xf32>
      %176 = arith.negf %175 : vector<128x32xf32>
      %177 = math.exp %176 : vector<128x32xf32>
      %cst_105 = arith.constant 1.000000e+00 : f32
      %178 = vector.broadcast %cst_105 : f32 to vector<128x32xf32>
      %179 = arith.addf %178, %177 : vector<128x32xf32>
      %180 = arith.divf %178, %179 : vector<128x32xf32>
      %181 = vector.extract_strided_slice %143 {offsets = [2, 0, 0], sizes = [1, 32, 32], strides = [1, 1, 1]} : vector<4x64x32xbf16> to vector<1x32x32xbf16>
      %182 = vector.shape_cast %181 : vector<1x32x32xbf16> to vector<32x32xbf16>
      %cst_106 = arith.constant dense<0.000000e+00> : vector<128x32xf32>
      %183 = tpu.matmul %146, %182, %cst_106 {dimension_numbers = #tpu.dot_dimension_numbers<[1], [0], [0], [1], [0, 0, 1, 1], [], []>} : vector<128x32xbf16>, vector<32x32xbf16>, vector<128x32xf32> -> vector<128x32xf32>
      %184 = vector.extract_strided_slice %143 {offsets = [2, 32, 0], sizes = [1, 32, 32], strides = [1, 1, 1]} : vector<4x64x32xbf16> to vector<1x32x32xbf16>
      %185 = vector.shape_cast %184 : vector<1x32x32xbf16> to vector<32x32xbf16>
      %cst_107 = arith.constant dense<0.000000e+00> : vector<128x32xf32>
      %186 = tpu.matmul %147, %185, %cst_107 {dimension_numbers = #tpu.dot_dimension_numbers<[1], [0], [0], [1], [0, 0, 1, 1], [], []>} : vector<128x32xbf16>, vector<32x32xbf16>, vector<128x32xf32> -> vector<128x32xf32>
      %187 = arith.addf %183, %186 : vector<128x32xf32>
      %188 = vector.extract_strided_slice %145 {offsets = [2, 0, 0], sizes = [1, 32, 32], strides = [1, 1, 1]} : vector<4x32x32xbf16> to vector<1x32x32xbf16>
      %189 = vector.shape_cast %188 : vector<1x32x32xbf16> to vector<32x32xbf16>
      %cst_108 = arith.constant dense<0.000000e+00> : vector<128x32xf32>
      %190 = tpu.matmul %148, %189, %cst_108 {dimension_numbers = #tpu.dot_dimension_numbers<[1], [0], [0], [1], [0, 0, 1, 1], [], []>} : vector<128x32xbf16>, vector<32x32xbf16>, vector<128x32xf32> -> vector<128x32xf32>
      %191 = arith.addf %187, %190 : vector<128x32xf32>
      %192 = math.tanh %191 : vector<128x32xf32>
      %193 = vector.extract_strided_slice %143 {offsets = [3, 0, 0], sizes = [1, 32, 32], strides = [1, 1, 1]} : vector<4x64x32xbf16> to vector<1x32x32xbf16>
      %194 = vector.shape_cast %193 : vector<1x32x32xbf16> to vector<32x32xbf16>
      %cst_109 = arith.constant dense<0.000000e+00> : vector<128x32xf32>
      %195 = tpu.matmul %146, %194, %cst_109 {dimension_numbers = #tpu.dot_dimension_numbers<[1], [0], [0], [1], [0, 0, 1, 1], [], []>} : vector<128x32xbf16>, vector<32x32xbf16>, vector<128x32xf32> -> vector<128x32xf32>
      %196 = vector.extract_strided_slice %143 {offsets = [3, 32, 0], sizes = [1, 32, 32], strides = [1, 1, 1]} : vector<4x64x32xbf16> to vector<1x32x32xbf16>
      %197 = vector.shape_cast %196 : vector<1x32x32xbf16> to vector<32x32xbf16>
      %cst_110 = arith.constant dense<0.000000e+00> : vector<128x32xf32>
      %198 = tpu.matmul %147, %197, %cst_110 {dimension_numbers = #tpu.dot_dimension_numbers<[1], [0], [0], [1], [0, 0, 1, 1], [], []>} : vector<128x32xbf16>, vector<32x32xbf16>, vector<128x32xf32> -> vector<128x32xf32>
      %199 = arith.addf %195, %198 : vector<128x32xf32>
      %200 = vector.extract_strided_slice %145 {offsets = [3, 0, 0], sizes = [1, 32, 32], strides = [1, 1, 1]} : vector<4x32x32xbf16> to vector<1x32x32xbf16>
      %201 = vector.shape_cast %200 : vector<1x32x32xbf16> to vector<32x32xbf16>
      %cst_111 = arith.constant dense<0.000000e+00> : vector<128x32xf32>
      %202 = tpu.matmul %148, %201, %cst_111 {dimension_numbers = #tpu.dot_dimension_numbers<[1], [0], [0], [1], [0, 0, 1, 1], [], []>} : vector<128x32xbf16>, vector<32x32xbf16>, vector<128x32xf32> -> vector<128x32xf32>
      %203 = arith.addf %199, %202 : vector<128x32xf32>
      %204 = arith.negf %203 : vector<128x32xf32>
      %205 = math.exp %204 : vector<128x32xf32>
      %cst_112 = arith.constant 1.000000e+00 : f32
      %206 = vector.broadcast %cst_112 : f32 to vector<128x32xf32>
      %207 = arith.addf %206, %205 : vector<128x32xf32>
      %208 = arith.divf %206, %207 : vector<128x32xf32>
      %209 = arith.mulf %180, %129 : vector<128x32xf32>
      %210 = arith.mulf %164, %192 : vector<128x32xf32>
      %211 = arith.addf %209, %210 : vector<128x32xf32>
      %212 = math.tanh %211 : vector<128x32xf32>
      %213 = arith.mulf %208, %212 : vector<128x32xf32>
      %c1_113 = arith.constant 1 : index
      %c0_114 = arith.constant 0 : index
      %c0_115 = arith.constant 0 : index
      %214 = vector.load %arg14[%c1_113, %c0_114, %c0_115] : memref<2x128x1xf32, #tpu.memory_space<vmem>>, vector<1x128x1xf32>
      %215 = vector.shape_cast %214 : vector<1x128x1xf32> to vector<128x1xf32>
      %216 = tpu.reciprocal %215 {approx = true} : vector<128x1xf32> -> vector<128x1xf32>
      %c1_116 = arith.constant 1 : index
      %c0_117 = arith.constant 0 : index
      %c0_118 = arith.constant 0 : index
      %217 = vector.load %arg15[%c1_116, %c0_117, %c0_118] : memref<2x128x32xf32, #tpu.memory_space<vmem>>, vector<1x128x32xf32>
      %218 = vector.shape_cast %217 : vector<1x128x32xf32> to vector<128x32xf32>
      %219 = vector.broadcast %216 : vector<128x1xf32> to vector<128x32xf32>
      %220 = arith.mulf %218, %219 : vector<128x32xf32>
      %c1_119 = arith.constant 1 : index
      %c0_120 = arith.constant 0 : index
      %c0_121 = arith.constant 0 : index
      %221 = vector.load %arg8[%c1_119, %c0_120, %c0_121] : memref<2x1x32xf32, #tpu.memory_space<vmem>>, vector<1x1x32xf32>
      %222 = vector.shape_cast %221 : vector<1x1x32xf32> to vector<1x32xf32>
      %223 = vector.broadcast %222 : vector<1x32xf32> to vector<128x32xf32>
      %224 = arith.addf %220, %223 : vector<128x32xf32>
      %225 = math.tanh %224 : vector<128x32xf32>
      %c1_122 = arith.constant 1 : index
      %c0_123 = arith.constant 0 : index
      %c0_124 = arith.constant 0 : index
      %c0_125 = arith.constant 0 : index
      %226 = vector.load %arg9[%c1_122, %c0_123, %c0_124, %c0_125] : memref<2x4x64x32xbf16, #tpu.memory_space<vmem>>, vector<1x4x64x32xbf16>
      %227 = vector.shape_cast %226 : vector<1x4x64x32xbf16> to vector<4x64x32xbf16>
      %c1_126 = arith.constant 1 : index
      %c0_127 = arith.constant 0 : index
      %c0_128 = arith.constant 0 : index
      %c0_129 = arith.constant 0 : index
      %228 = vector.load %arg10[%c1_126, %c0_127, %c0_128, %c0_129] : memref<2x4x32x32xbf16, #tpu.memory_space<vmem>>, vector<1x4x32x32xbf16>
      %229 = vector.shape_cast %228 : vector<1x4x32x32xbf16> to vector<4x32x32xbf16>
      %230 = arith.truncf %225 : vector<128x32xf32> to vector<128x32xbf16>
      %231 = arith.truncf %213 : vector<128x32xf32> to vector<128x32xbf16>
      %232 = arith.truncf %213 : vector<128x32xf32> to vector<128x32xbf16>
      %233 = vector.extract_strided_slice %227 {offsets = [0, 0, 0], sizes = [1, 32, 32], strides = [1, 1, 1]} : vector<4x64x32xbf16> to vector<1x32x32xbf16>
      %234 = vector.shape_cast %233 : vector<1x32x32xbf16> to vector<32x32xbf16>
      %cst_130 = arith.constant dense<0.000000e+00> : vector<128x32xf32>
      %235 = tpu.matmul %230, %234, %cst_130 {dimension_numbers = #tpu.dot_dimension_numbers<[1], [0], [0], [1], [0, 0, 1, 1], [], []>} : vector<128x32xbf16>, vector<32x32xbf16>, vector<128x32xf32> -> vector<128x32xf32>
      %236 = vector.extract_strided_slice %227 {offsets = [0, 32, 0], sizes = [1, 32, 32], strides = [1, 1, 1]} : vector<4x64x32xbf16> to vector<1x32x32xbf16>
      %237 = vector.shape_cast %236 : vector<1x32x32xbf16> to vector<32x32xbf16>
      %cst_131 = arith.constant dense<0.000000e+00> : vector<128x32xf32>
      %238 = tpu.matmul %231, %237, %cst_131 {dimension_numbers = #tpu.dot_dimension_numbers<[1], [0], [0], [1], [0, 0, 1, 1], [], []>} : vector<128x32xbf16>, vector<32x32xbf16>, vector<128x32xf32> -> vector<128x32xf32>
      %239 = arith.addf %235, %238 : vector<128x32xf32>
      %240 = vector.extract_strided_slice %229 {offsets = [0, 0, 0], sizes = [1, 32, 32], strides = [1, 1, 1]} : vector<4x32x32xbf16> to vector<1x32x32xbf16>
      %241 = vector.shape_cast %240 : vector<1x32x32xbf16> to vector<32x32xbf16>
      %cst_132 = arith.constant dense<0.000000e+00> : vector<128x32xf32>
      %242 = tpu.matmul %232, %241, %cst_132 {dimension_numbers = #tpu.dot_dimension_numbers<[1], [0], [0], [1], [0, 0, 1, 1], [], []>} : vector<128x32xbf16>, vector<32x32xbf16>, vector<128x32xf32> -> vector<128x32xf32>
      %243 = arith.addf %239, %242 : vector<128x32xf32>
      %244 = arith.negf %243 : vector<128x32xf32>
      %245 = math.exp %244 : vector<128x32xf32>
      %cst_133 = arith.constant 1.000000e+00 : f32
      %246 = vector.broadcast %cst_133 : f32 to vector<128x32xf32>
      %247 = arith.addf %246, %245 : vector<128x32xf32>
      %248 = arith.divf %246, %247 : vector<128x32xf32>
      %249 = vector.extract_strided_slice %227 {offsets = [1, 0, 0], sizes = [1, 32, 32], strides = [1, 1, 1]} : vector<4x64x32xbf16> to vector<1x32x32xbf16>
      %250 = vector.shape_cast %249 : vector<1x32x32xbf16> to vector<32x32xbf16>
      %cst_134 = arith.constant dense<0.000000e+00> : vector<128x32xf32>
      %251 = tpu.matmul %230, %250, %cst_134 {dimension_numbers = #tpu.dot_dimension_numbers<[1], [0], [0], [1], [0, 0, 1, 1], [], []>} : vector<128x32xbf16>, vector<32x32xbf16>, vector<128x32xf32> -> vector<128x32xf32>
      %252 = vector.extract_strided_slice %227 {offsets = [1, 32, 0], sizes = [1, 32, 32], strides = [1, 1, 1]} : vector<4x64x32xbf16> to vector<1x32x32xbf16>
      %253 = vector.shape_cast %252 : vector<1x32x32xbf16> to vector<32x32xbf16>
      %cst_135 = arith.constant dense<0.000000e+00> : vector<128x32xf32>
      %254 = tpu.matmul %231, %253, %cst_135 {dimension_numbers = #tpu.dot_dimension_numbers<[1], [0], [0], [1], [0, 0, 1, 1], [], []>} : vector<128x32xbf16>, vector<32x32xbf16>, vector<128x32xf32> -> vector<128x32xf32>
      %255 = arith.addf %251, %254 : vector<128x32xf32>
      %256 = vector.extract_strided_slice %229 {offsets = [1, 0, 0], sizes = [1, 32, 32], strides = [1, 1, 1]} : vector<4x32x32xbf16> to vector<1x32x32xbf16>
      %257 = vector.shape_cast %256 : vector<1x32x32xbf16> to vector<32x32xbf16>
      %cst_136 = arith.constant dense<0.000000e+00> : vector<128x32xf32>
      %258 = tpu.matmul %232, %257, %cst_136 {dimension_numbers = #tpu.dot_dimension_numbers<[1], [0], [0], [1], [0, 0, 1, 1], [], []>} : vector<128x32xbf16>, vector<32x32xbf16>, vector<128x32xf32> -> vector<128x32xf32>
      %259 = arith.addf %255, %258 : vector<128x32xf32>
      %260 = arith.negf %259 : vector<128x32xf32>
      %261 = math.exp %260 : vector<128x32xf32>
      %cst_137 = arith.constant 1.000000e+00 : f32
      %262 = vector.broadcast %cst_137 : f32 to vector<128x32xf32>
      %263 = arith.addf %262, %261 : vector<128x32xf32>
      %264 = arith.divf %262, %263 : vector<128x32xf32>
      %265 = vector.extract_strided_slice %227 {offsets = [2, 0, 0], sizes = [1, 32, 32], strides = [1, 1, 1]} : vector<4x64x32xbf16> to vector<1x32x32xbf16>
      %266 = vector.shape_cast %265 : vector<1x32x32xbf16> to vector<32x32xbf16>
      %cst_138 = arith.constant dense<0.000000e+00> : vector<128x32xf32>
      %267 = tpu.matmul %230, %266, %cst_138 {dimension_numbers = #tpu.dot_dimension_numbers<[1], [0], [0], [1], [0, 0, 1, 1], [], []>} : vector<128x32xbf16>, vector<32x32xbf16>, vector<128x32xf32> -> vector<128x32xf32>
      %268 = vector.extract_strided_slice %227 {offsets = [2, 32, 0], sizes = [1, 32, 32], strides = [1, 1, 1]} : vector<4x64x32xbf16> to vector<1x32x32xbf16>
      %269 = vector.shape_cast %268 : vector<1x32x32xbf16> to vector<32x32xbf16>
      %cst_139 = arith.constant dense<0.000000e+00> : vector<128x32xf32>
      %270 = tpu.matmul %231, %269, %cst_139 {dimension_numbers = #tpu.dot_dimension_numbers<[1], [0], [0], [1], [0, 0, 1, 1], [], []>} : vector<128x32xbf16>, vector<32x32xbf16>, vector<128x32xf32> -> vector<128x32xf32>
      %271 = arith.addf %267, %270 : vector<128x32xf32>
      %272 = vector.extract_strided_slice %229 {offsets = [2, 0, 0], sizes = [1, 32, 32], strides = [1, 1, 1]} : vector<4x32x32xbf16> to vector<1x32x32xbf16>
      %273 = vector.shape_cast %272 : vector<1x32x32xbf16> to vector<32x32xbf16>
      %cst_140 = arith.constant dense<0.000000e+00> : vector<128x32xf32>
      %274 = tpu.matmul %232, %273, %cst_140 {dimension_numbers = #tpu.dot_dimension_numbers<[1], [0], [0], [1], [0, 0, 1, 1], [], []>} : vector<128x32xbf16>, vector<32x32xbf16>, vector<128x32xf32> -> vector<128x32xf32>
      %275 = arith.addf %271, %274 : vector<128x32xf32>
      %276 = math.tanh %275 : vector<128x32xf32>
      %277 = vector.extract_strided_slice %227 {offsets = [3, 0, 0], sizes = [1, 32, 32], strides = [1, 1, 1]} : vector<4x64x32xbf16> to vector<1x32x32xbf16>
      %278 = vector.shape_cast %277 : vector<1x32x32xbf16> to vector<32x32xbf16>
      %cst_141 = arith.constant dense<0.000000e+00> : vector<128x32xf32>
      %279 = tpu.matmul %230, %278, %cst_141 {dimension_numbers = #tpu.dot_dimension_numbers<[1], [0], [0], [1], [0, 0, 1, 1], [], []>} : vector<128x32xbf16>, vector<32x32xbf16>, vector<128x32xf32> -> vector<128x32xf32>
      %280 = vector.extract_strided_slice %227 {offsets = [3, 32, 0], sizes = [1, 32, 32], strides = [1, 1, 1]} : vector<4x64x32xbf16> to vector<1x32x32xbf16>
      %281 = vector.shape_cast %280 : vector<1x32x32xbf16> to vector<32x32xbf16>
      %cst_142 = arith.constant dense<0.000000e+00> : vector<128x32xf32>
      %282 = tpu.matmul %231, %281, %cst_142 {dimension_numbers = #tpu.dot_dimension_numbers<[1], [0], [0], [1], [0, 0, 1, 1], [], []>} : vector<128x32xbf16>, vector<32x32xbf16>, vector<128x32xf32> -> vector<128x32xf32>
      %283 = arith.addf %279, %282 : vector<128x32xf32>
      %284 = vector.extract_strided_slice %229 {offsets = [3, 0, 0], sizes = [1, 32, 32], strides = [1, 1, 1]} : vector<4x32x32xbf16> to vector<1x32x32xbf16>
      %285 = vector.shape_cast %284 : vector<1x32x32xbf16> to vector<32x32xbf16>
      %cst_143 = arith.constant dense<0.000000e+00> : vector<128x32xf32>
      %286 = tpu.matmul %232, %285, %cst_143 {dimension_numbers = #tpu.dot_dimension_numbers<[1], [0], [0], [1], [0, 0, 1, 1], [], []>} : vector<128x32xbf16>, vector<32x32xbf16>, vector<128x32xf32> -> vector<128x32xf32>
      %287 = arith.addf %283, %286 : vector<128x32xf32>
      %288 = arith.negf %287 : vector<128x32xf32>
      %289 = math.exp %288 : vector<128x32xf32>
      %cst_144 = arith.constant 1.000000e+00 : f32
      %290 = vector.broadcast %cst_144 : f32 to vector<128x32xf32>
      %291 = arith.addf %290, %289 : vector<128x32xf32>
      %292 = arith.divf %290, %291 : vector<128x32xf32>
      %293 = arith.mulf %264, %211 : vector<128x32xf32>
      %294 = arith.mulf %248, %276 : vector<128x32xf32>
      %295 = arith.addf %293, %294 : vector<128x32xf32>
      %296 = math.tanh %295 : vector<128x32xf32>
      %297 = arith.mulf %292, %296 : vector<128x32xf32>
      %c0_145 = arith.constant 0 : index
      %c0_146 = arith.constant 0 : index
      %298 = vector.load %arg11[%c0_145, %c0_146] : memref<128x32xf32, #tpu.memory_space<vmem>>, vector<128x32xf32>
      tpu.vector_store %arg11[%c0_145, %c0_146], %297 {strides = array<i32>} : memref<128x32xf32, #tpu.memory_space<vmem>>, vector<128x32xf32>,
    } else {
    }
    return
  }
  func.func @transform_0(%arg0: i32, %arg1: i32) -> (i32, i32) {
    %c0_i32 = arith.constant 0 : i32
    return %arg0, %arg1 : i32, i32
  }
  func.func @transform_1(%arg0: i32, %arg1: i32) -> (i32, i32) {
    %c0_i32 = arith.constant 0 : i32
    %c0_i32_0 = arith.constant 0 : i32
    return %arg0, %c0_i32 : i32, i32
  }
  func.func @transform_2(%arg0: i32, %arg1: i32) -> (i32, i32) {
    %c0_i32 = arith.constant 0 : i32
    %c0_i32_0 = arith.constant 0 : i32
    return %arg1, %c0_i32 : i32, i32
  }
  func.func @transform_3(%arg0: i32, %arg1: i32) -> (i32, i32, i32) {
    %c0_i32 = arith.constant 0 : i32
    %c0_i32_0 = arith.constant 0 : i32
    %c0_i32_1 = arith.constant 0 : i32
    %c0_i32_2 = arith.constant 0 : i32
    return %c0_i32, %c0_i32_0, %c0_i32_1 : i32, i32, i32
  }
  func.func @transform_4(%arg0: i32, %arg1: i32) -> (i32, i32, i32) {
    %c0_i32 = arith.constant 0 : i32
    %c0_i32_0 = arith.constant 0 : i32
    %c0_i32_1 = arith.constant 0 : i32
    %c0_i32_2 = arith.constant 0 : i32
    return %c0_i32, %c0_i32_0, %c0_i32_1 : i32, i32, i32
  }
  func.func @transform_5(%arg0: i32, %arg1: i32) -> (i32, i32, i32) {
    %c0_i32 = arith.constant 0 : i32
    %c0_i32_0 = arith.constant 0 : i32
    %c0_i32_1 = arith.constant 0 : i32
    %c0_i32_2 = arith.constant 0 : i32
    return %c0_i32, %c0_i32_0, %c0_i32_1 : i32, i32, i32
  }
  func.func @transform_6(%arg0: i32, %arg1: i32) -> (i32, i32, i32) {
    %c0_i32 = arith.constant 0 : i32
    %c0_i32_0 = arith.constant 0 : i32
    %c0_i32_1 = arith.constant 0 : i32
    %c0_i32_2 = arith.constant 0 : i32
    return %c0_i32, %c0_i32_0, %c0_i32_1 : i32, i32, i32
  }
  func.func @transform_7(%arg0: i32, %arg1: i32) -> (i32, i32, i32, i32) {
    %c0_i32 = arith.constant 0 : i32
    %c0_i32_0 = arith.constant 0 : i32
    %c0_i32_1 = arith.constant 0 : i32
    %c0_i32_2 = arith.constant 0 : i32
    %c0_i32_3 = arith.constant 0 : i32
    return %c0_i32, %c0_i32_0, %c0_i32_1, %c0_i32_2 : i32, i32, i32, i32
  }
  func.func @transform_8(%arg0: i32, %arg1: i32) -> (i32, i32, i32, i32) {
    %c0_i32 = arith.constant 0 : i32
    %c0_i32_0 = arith.constant 0 : i32
    %c0_i32_1 = arith.constant 0 : i32
    %c0_i32_2 = arith.constant 0 : i32
    %c0_i32_3 = arith.constant 0 : i32
    return %c0_i32, %c0_i32_0, %c0_i32_1, %c0_i32_2 : i32, i32, i32, i32
  }
  func.func @transform_9(%arg0: i32, %arg1: i32) -> (i32, i32) {
    %c0_i32 = arith.constant 0 : i32
    %c0_i32_0 = arith.constant 0 : i32
    return %arg0, %c0_i32 : i32, i32
  }
}

</mosaic_0001>

<llo_original>
// kernel: pagnn_aggregation.2
$region0: #{pagnn_aggregation.2}
  #allocation0 [shape = 'u32[]', space=smem, size = 0x4, offset = 0x4, fixed_abs, tag = 'smem constant byte address 0x4 - core index']
  #allocation1 [shape = 'u32[144,128]{1,0:T(1,128)}', space=vmem, size = 0x12000, scoped, tag = 'internal scratch']
  %s0 = inlined_call_operand.vmem [shape: f32[256,32], index: 0, kind: input, shape index: {}]
  %s1 = inlined_call_operand.vmem [shape: f32[256,32], index: 1, kind: input, shape index: {}]
  %s2 = inlined_call_operand.vmem [shape: bf16[32,32], index: 2, kind: input, shape index: {}]
  %s3 = inlined_call_operand.vmem [shape: bf16[32,32], index: 3, kind: input, shape index: {}]
  %s4 = inlined_call_operand.vmem [shape: f32[1,32], index: 4, kind: input, shape index: {}]
  %s5 = inlined_call_operand.vmem [shape: f32[256,32], index: 5, kind: output, shape index: {}]
  %s6 = sld [smem:[#allocation0]]
  $region53: #{pagnn_aggregation.2} parent=0
    _
  %s8 = ssub.s32 1, %s6
  %s9 = scalar_select 0, %s8, %s6
  loop: start=0, step=1, limit=4
  $region2: #{pagnn_aggregation.2} parent=0 // loop_pre_header
    _
  $region3: #{pagnn_aggregation.2} parent=0 // loop_header
    %s11 = sphi 0, %s15
    %p12 = scmp.ge.s32.totalorder %s11, 4
    %s21 = sphi 0, %s23
    %s24 = sphi 0, %s21
    %s25 = sphi 0, %s24
    %s41 = sphi 0, %s25
    %s47 = sphi 0, %s49
    %s50 = sphi 0, %s47
    %s51 = sphi 0, %s50
    %s67 = sphi 0, %s51
    %s71 = sphi 0, %s71
    %s73 = sphi 0, %s71
    %s74 = sphi 0, %s73
    %s88 = sphi 0, %s74
    %s92 = sphi 0, %s92
    %s94 = sphi 0, %s92
    %s95 = sphi 0, %s94
    %s109 = sphi 0, %s95
    %s113 = sphi 0, %s113
    %s115 = sphi 0, %s113
    %s116 = sphi 0, %s115
    %s130 = sphi 0, %s116
    %s136 = sphi 0, %s138
    %s139 = sphi 0, %s136
    %s140 = sphi 0, %s139
    %s156 = sphi 0, %s140
  $region4: #{pagnn_aggregation.2} parent=0 // loop_header_branch
    %14 = sbr.rel (%p12) target = $region8
  $region5: #{pagnn_aggregation.2} parent=0 // loop_body
    %s16 = ssub.s32 %s11, 1
    %s17 = ssub.s32 %s11, 2
    %s18 = sadd.s32 %s11, 1
    %s19 = ssub.s32 %s11, %s18
    %p20 = scmp.eq.s32.totalorder %s19, 0
    %s22 = sadd.s32 %s21, 1
    %s23 = scalar_select %p20, %s21, %s22
    %p26 = pneg %p20
    %p27 = scmp.eq.s32.totalorder %s11, 1
    %p28 = por %p26, %p27
    %p29 = scmp.ne.s32.totalorder %s21, %s24
    %p30 = scmp.eq.s32.totalorder %s11, 0
    %p31 = por %p29, %p30
    %p32 = scmp.ne.s32.totalorder %s21, %s24
    %p33 = scmp.eq.s32.totalorder %s16, 1
    %p34 = por %p32, %p33
    %p35 = scmp.ne.s32.totalorder %s24, %s25
    %p36 = scmp.eq.s32.totalorder %s16, 0
    %p37 = por %p35, %p36
    %p38 = scmp.ne.s32.totalorder %s24, %s25
    %p39 = scmp.eq.s32.totalorder %s17, 1
    %p40 = por %p38, %p39
    %p42 = scmp.ne.s32.totalorder %s25, %s41
    %p43 = scmp.eq.s32.totalorder %s17, 0
    %p44 = por %p42, %p43
    %s45 = ssub.s32 %s11, %s18
    %p46 = scmp.eq.s32.totalorder %s45, 0
    %s48 = sadd.s32 %s47, 1
    %s49 = scalar_select %p46, %s47, %s48
    %p52 = pneg %p46
    %p53 = scmp.eq.s32.totalorder %s11, 1
    %p54 = por %p52, %p53
    %p55 = scmp.ne.s32.totalorder %s47, %s50
    %p56 = scmp.eq.s32.totalorder %s11, 0
    %p57 = por %p55, %p56
    %p58 = scmp.ne.s32.totalorder %s47, %s50
    %p59 = scmp.eq.s32.totalorder %s16, 1
    %p60 = por %p58, %p59
    %p61 = scmp.ne.s32.totalorder %s50, %s51
    %p62 = scmp.eq.s32.totalorder %s16, 0
    %p63 = por %p61, %p62
    %p64 = scmp.ne.s32.totalorder %s50, %s51
    %p65 = scmp.eq.s32.totalorder %s17, 1
    %p66 = por %p64, %p65
    %p68 = scmp.ne.s32.totalorder %s51, %s67
    %p69 = scmp.eq.s32.totalorder %s17, 0
    %p70 = por %p68, %p69
    %s72 = sadd.s32 %s71, 1
    %p75 = scmp.eq.s32.totalorder %s11, 1
    %p76 = scmp.ne.s32.totalorder %s71, %s73
    %p77 = scmp.eq.s32.totalorder %s11, 0
    %p78 = por %p76, %p77
    %p79 = scmp.ne.s32.totalorder %s71, %s73
    %p80 = scmp.eq.s32.totalorder %s16, 1
    %p81 = por %p79, %p80
    %p82 = scmp.ne.s32.totalorder %s73, %s74
    %p83 = scmp.eq.s32.totalorder %s16, 0
    %p84 = por %p82, %p83
    %p85 = scmp.ne.s32.totalorder %s73, %s74
    %p86 = scmp.eq.s32.totalorder %s17, 1
    %p87 = por %p85, %p86
    %p89 = scmp.ne.s32.totalorder %s74, %s88
    %p90 = scmp.eq.s32.totalorder %s17, 0
    %p91 = por %p89, %p90
    %s93 = sadd.s32 %s92, 1
    %p96 = scmp.eq.s32.totalorder %s11, 1
    %p97 = scmp.ne.s32.totalorder %s92, %s94
    %p98 = scmp.eq.s32.totalorder %s11, 0
    %p99 = por %p97, %p98
    %p100 = scmp.ne.s32.totalorder %s92, %s94
    %p101 = scmp.eq.s32.totalorder %s16, 1
    %p102 = por %p100, %p101
    %p103 = scmp.ne.s32.totalorder %s94, %s95
    %p104 = scmp.eq.s32.totalorder %s16, 0
    %p105 = por %p103, %p104
    %p106 = scmp.ne.s32.totalorder %s94, %s95
    %p107 = scmp.eq.s32.totalorder %s17, 1
    %p108 = por %p106, %p107
    %p110 = scmp.ne.s32.totalorder %s95, %s109
    %p111 = scmp.eq.s32.totalorder %s17, 0
    %p112 = por %p110, %p111
    %s114 = sadd.s32 %s113, 1
    %p117 = scmp.eq.s32.totalorder %s11, 1
    %p118 = scmp.ne.s32.totalorder %s113, %s115
    %p119 = scmp.eq.s32.totalorder %s11, 0
    %p120 = por %p118, %p119
    %p121 = scmp.ne.s32.totalorder %s113, %s115
    %p122 = scmp.eq.s32.totalorder %s16, 1
    %p123 = por %p121, %p122
    %p124 = scmp.ne.s32.totalorder %s115, %s116
    %p125 = scmp.eq.s32.totalorder %s16, 0
    %p126 = por %p124, %p125
    %p127 = scmp.ne.s32.totalorder %s115, %s116
    %p128 = scmp.eq.s32.totalorder %s17, 1
    %p129 = por %p127, %p128
    %p131 = scmp.ne.s32.totalorder %s116, %s130
    %p132 = scmp.eq.s32.totalorder %s17, 0
    %p133 = por %p131, %p132
    %s134 = ssub.s32 %s11, %s18
    %p135 = scmp.eq.s32.totalorder %s134, 0
    %s137 = sadd.s32 %s136, 1
    %s138 = scalar_select %p135, %s136, %s137
    %p141 = pneg %p135
    %p142 = scmp.eq.s32.totalorder %s11, 1
    %p143 = por %p141, %p142
    %p144 = scmp.ne.s32.totalorder %s136, %s139
    %p145 = scmp.eq.s32.totalorder %s11, 0
    %p146 = por %p144, %p145
    %p147 = scmp.ne.s32.totalorder %s136, %s139
    %p148 = scmp.eq.s32.totalorder %s16, 1
    %p149 = por %p147, %p148
    %p150 = scmp.ne.s32.totalorder %s139, %s140
    %p151 = scmp.eq.s32.totalorder %s16, 0
    %p152 = por %p150, %p151
    %p153 = scmp.ne.s32.totalorder %s139, %s140
    %p154 = scmp.eq.s32.totalorder %s17, 1
    %p155 = por %p153, %p154
    %p157 = scmp.ne.s32.totalorder %s140, %s156
    %p158 = scmp.eq.s32.totalorder %s17, 0
    %p159 = por %p157, %p158
    %p160 = scmp.le.s32.totalorder 1, %s11
    %p161 = scmp.lt.s32.totalorder %s11, 3
    %p162 = pnand %p160, %p161
    %p163 = pneg %p162
    // Predicated region
    $region9: #{pagnn_aggregation.2} parent=5 // pred_check
      _
    $region10: #{pagnn_aggregation.2} parent=5 // pred_check_branch
      %165 = sbr.rel (%p162) target = $region12
    $region11: #{pagnn_aggregation.2} parent=5 // pred_region
      %s166 = ssub.s32 %s11, 1
      // Predicated region
      $region13: #{pagnn_aggregation.2} parent=11 // pred_check
        %p167 = pneg %p84
      $region14: #{pagnn_aggregation.2} parent=11 // pred_check_branch
        %169 = sbr.rel (%p167) target = $region16
      $region15: #{pagnn_aggregation.2} parent=11 // pred_region
        _
      $region16: #{pagnn_aggregation.2} parent=11 // pred_fallthru
        _
      // Predicated region
      $region17: #{pagnn_aggregation.2} parent=11 // pred_check
        %p170 = pneg %p105
      $region18: #{pagnn_aggregation.2} parent=11 // pred_check_branch
        %172 = sbr.rel (%p170) target = $region20
      $region19: #{pagnn_aggregation.2} parent=11 // pred_region
        _
      $region20: #{pagnn_aggregation.2} parent=11 // pred_fallthru
        _
      // Predicated region
      $region21: #{pagnn_aggregation.2} parent=11 // pred_check
        %p173 = pneg %p126
      $region22: #{pagnn_aggregation.2} parent=11 // pred_check_branch
        %175 = sbr.rel (%p173) target = $region24
      $region23: #{pagnn_aggregation.2} parent=11 // pred_region
        _
      $region24: #{pagnn_aggregation.2} parent=11 // pred_fallthru
        _
    $region12: #{pagnn_aggregation.2} parent=5 // pred_fallthru
      _
    %p176 = scmp.lt.s32.totalorder %s11, 2
    // Predicated region
    $region25: #{pagnn_aggregation.2} parent=5 // pred_check
      %p177 = pneg %p176
    $region26: #{pagnn_aggregation.2} parent=5 // pred_check_branch
      %179 = sbr.rel (%p177) target = $region28
    $region27: #{pagnn_aggregation.2} parent=5 // pred_region
      // Predicated region
      $region29: #{pagnn_aggregation.2} parent=27 // pred_check
        %p180 = pneg %p31
      $region30: #{pagnn_aggregation.2} parent=27 // pred_check_branch
        %182 = sbr.rel (%p180) target = $region32
      $region31: #{pagnn_aggregation.2} parent=27 // pred_region
        %s183 = smul.u32 16, %s11
        %p184 = scmp.lt.s32.totalorder %s183, 31
        %s185 = scalar_select %p184, %s183, 31
        %s186 = smul.addr %s185, 8
        %s187 = scalar_lea.vmem %s0, %s186
        %s188 = smul.u32 16, %s11
      $region32: #{pagnn_aggregation.2} parent=27 // pred_fallthru
        _
      // Predicated region
      $region33: #{pagnn_aggregation.2} parent=27 // pred_check
        %p189 = pneg %p57
      $region34: #{pagnn_aggregation.2} parent=27 // pred_check_branch
        %191 = sbr.rel (%p189) target = $region36
      $region35: #{pagnn_aggregation.2} parent=27 // pred_region
        %s192 = smul.u32 16, %s11
        %p193 = scmp.lt.s32.totalorder %s192, 31
        %s194 = scalar_select %p193, %s192, 31
        %s195 = smul.addr %s194, 8
        %s196 = scalar_lea.vmem %s1, %s195
        %s197 = smul.u32 16, %s11
      $region36: #{pagnn_aggregation.2} parent=27 // pred_fallthru
        _
    $region28: #{pagnn_aggregation.2} parent=5 // pred_fallthru
      _
    %p198 = scmp.le.s32.totalorder 1, %s11
    %p199 = scmp.lt.s32.totalorder %s11, 3
    %p200 = pnand %p198, %p199
    %p201 = pneg %p200
    // Predicated region
    $region37: #{pagnn_aggregation.2} parent=5 // pred_check
      _
    $region38: #{pagnn_aggregation.2} parent=5 // pred_check_branch
      %203 = sbr.rel (%p200) target = $region40
    $region39: #{pagnn_aggregation.2} parent=5 // pred_region
      %s204 = ssub.s32 %s11, 1
      %s205 = smul.u32 16, %s16
      %p206 = scmp.lt.s32.totalorder %s205, 31
      %s207 = scalar_select %p206, %s205, 31
      %s208 = smul.addr %s207, 8
      %s209 = scalar_lea.vmem %s0, %s208
      %p210 = pneg %p37
      %p211 = pneg %p34
      %s212 = smul.u32 16, %s16
      %p213 = scmp.lt.s32.totalorder %s212, 31
      %s214 = scalar_select %p213, %s212, 31
      %s215 = smul.addr %s214, 8
      %s216 = scalar_lea.vmem %s1, %s215
      %p217 = pneg %p63
      %p218 = pneg %p60
      %p219 = pneg %p84
      %p220 = pneg %p81
      %p221 = pneg %p105
      %p222 = pneg %p102
      %p223 = pneg %p126
      %p224 = pneg %p123
      %p225 = pneg %p152
      %p226 = pneg %p149
      %s227 = smul.u32 16, %s16
      %p228 = scmp.lt.s32.totalorder %s227, 31
      %s229 = scalar_select %p228, %s227, 31
      %s230 = smul.addr %s229, 8
      %s231 = scalar_lea.vmem %s5, %s230
      %s232 = smul.u32 16, %s16
      %p233 = scmp.lt.s32.totalorder %s232, 31
      %s234 = scalar_select %p233, %s232, 31
      %s235 = smul.addr %s234, 8
      %s236 = scalar_lea.vmem %s0, %s235
      %s237 = smul.u32 16, %s16
      %s238 = smul.u32 16, %s16
      %p239 = scmp.lt.s32.totalorder %s238, 31
      %s240 = scalar_select %p239, %s238, 31
      %s241 = smul.addr %s240, 8
      %s242 = scalar_lea.vmem %s1, %s241
      %s243 = smul.u32 16, %s16
      %s244 = smul.u32 16, %s16
      %p245 = scmp.lt.s32.totalorder %s244, 31
      %s246 = scalar_select %p245, %s244, 31
      %s247 = smul.addr %s246, 8
      %s248 = scalar_lea.vmem %s5, %s247
      %s249 = smul.u32 16, %s16
      %v251 = vld [vmem:[%s236] sm:$0xff]
      %v252 = vld [vmem:[%s236 + $0x8] sm:$0xff]
      %v253 = vld [vmem:[%s236 + $0x10] sm:$0xff]
      %v254 = vld [vmem:[%s236 + $0x18] sm:$0xff]
      %v255 = vld [vmem:[%s236 + $0x20] sm:$0xff]
      %v256 = vld [vmem:[%s236 + $0x28] sm:$0xff]
      %v257 = vld [vmem:[%s236 + $0x30] sm:$0xff]
      %v258 = vld [vmem:[%s236 + $0x38] sm:$0xff]
      %v259 = vld [vmem:[%s236 + $0x40] sm:$0xff]
      %v260 = vld [vmem:[%s236 + $0x48] sm:$0xff]
      %v261 = vld [vmem:[%s236 + $0x50] sm:$0xff]
      %v262 = vld [vmem:[%s236 + $0x58] sm:$0xff]
      %v263 = vld [vmem:[%s236 + $0x60] sm:$0xff]
      %v264 = vld [vmem:[%s236 + $0x68] sm:$0xff]
      %v265 = vld [vmem:[%s236 + $0x70] sm:$0xff]
      %v266 = vld [vmem:[%s236 + $0x78] sm:$0xff]
      %v267 = vpack.c.bf16 %v252, %v251
      %v268 = vpack.c.bf16 %v254, %v253
      %v269 = vpack.c.bf16 %v256, %v255
      %v270 = vpack.c.bf16 %v258, %v257
      %v271 = vpack.c.bf16 %v260, %v259
      %v272 = vpack.c.bf16 %v262, %v261
      %v273 = vpack.c.bf16 %v264, %v263
      %v274 = vpack.c.bf16 %v266, %v265
      %v275 = vld [vmem:[%s242] sm:$0xff]
      %v276 = vld [vmem:[%s242 + $0x8] sm:$0xff]
      %v277 = vld [vmem:[%s242 + $0x10] sm:$0xff]
      %v278 = vld [vmem:[%s242 + $0x18] sm:$0xff]
      %v279 = vld [vmem:[%s242 + $0x20] sm:$0xff]
      %v280 = vld [vmem:[%s242 + $0x28] sm:$0xff]
      %v281 = vld [vmem:[%s242 + $0x30] sm:$0xff]
      %v282 = vld [vmem:[%s242 + $0x38] sm:$0xff]
      %v283 = vld [vmem:[%s242 + $0x40] sm:$0xff]
      %v284 = vld [vmem:[%s242 + $0x48] sm:$0xff]
      %v285 = vld [vmem:[%s242 + $0x50] sm:$0xff]
      %v286 = vld [vmem:[%s242 + $0x58] sm:$0xff]
      %v287 = vld [vmem:[%s242 + $0x60] sm:$0xff]
      %v288 = vld [vmem:[%s242 + $0x68] sm:$0xff]
      %v289 = vld [vmem:[%s242 + $0x70] sm:$0xff]
      %v290 = vld [vmem:[%s242 + $0x78] sm:$0xff]
      %v291 = vpack.c.bf16 %v276, %v275
      %v292 = vpack.c.bf16 %v278, %v277
      %v293 = vpack.c.bf16 %v280, %v279
      %v294 = vpack.c.bf16 %v282, %v281
      %v295 = vpack.c.bf16 %v284, %v283
      %v296 = vpack.c.bf16 %v286, %v285
      %v297 = vpack.c.bf16 %v288, %v287
      %v298 = vpack.c.bf16 %v290, %v289
      %v299 = vld [vmem:[%s2] sm:$0xf]
      %v300 = vld [vmem:[%s2 + $0x4] sm:$0xf]
      %v301 = vld [vmem:[%s2 + $0x8] sm:$0xf]
      %v302 = vld [vmem:[%s2 + $0xc] sm:$0xf]
      %v303 = vld [vmem:[%s3] sm:$0xf]
      %v304 = vld [vmem:[%s3 + $0x4] sm:$0xf]
      %v305 = vld [vmem:[%s3 + $0x8] sm:$0xf]
      %v306 = vld [vmem:[%s3 + $0xc] sm:$0xf]
      %v311 = vunpack.c.l.b16 %v303
      %v312 = vunpack.c.l.b16 %v304
      %v313 = vunpack.c.l.b16 %v305
      %v314 = vunpack.c.l.b16 %v306
      %v315 = vpack.c.b16 %v312, %v311
      %v316 = vpack.c.b16 %v314, %v313
      %vm319 = vcmask 261120
      %v321 = vsel %vm319, %v291, 0
      %v324 = vsel %vm319, %v292, 0
      %v327 = vsel %vm319, %v293, 0
      %v330 = vsel %vm319, %v294, 0
      %v333 = vsel %vm319, %v295, 0
      %v336 = vsel %vm319, %v296, 0
      %v339 = vsel %vm319, %v297, 0
      %v342 = vsel %vm319, %v298, 0
      %344 = vmatprep.subr.bf16.mxu0 0
      %345 = vmatpush1.bf16.msra.mxu0 %v315
      %346 = vmatprep.subr.bf16.mxu0 0
      %347 = vmatpush1.bf16.msra.mxu0 %v316
      %348 = vmatprep.subr.bf16.mxu0 0
      %349 = vmatpush1.bf16.msra.mxu0 0
      %350 = vmatprep.subr.bf16.mxu0 0
      %351 = vmatpush1.bf16.msra.mxu0 0
      %352 = vmatprep.subr.bf16.mxu0 0
      %353 = vmatpush1.bf16.msra.mxu0 0
      %354 = vmatprep.subr.bf16.mxu0 0
      %355 = vmatpush1.bf16.msra.mxu0 0
      %356 = vmatprep.subr.bf16.mxu0 0
      %357 = vmatpush1.bf16.msra.mxu0 0
      %358 = vmatprep.subr.bf16.mxu0 0
      %359 = vmatpush1.bf16.msra.mxu0 0
      %360 = vmatprep.subr.bf16.mxu0 0
      %361 = vmatpush1.bf16.msra.mxu0 0
      %362 = vmatprep.subr.bf16.mxu0 0
      %363 = vmatpush1.bf16.msra.mxu0 0
      %364 = vmatprep.subr.bf16.mxu0 0
      %365 = vmatpush1.bf16.msra.mxu0 0
      %366 = vmatprep.subr.bf16.mxu0 0
      %367 = vmatpush1.bf16.msra.mxu0 0
      %368 = vmatprep.subr.bf16.mxu0 0
      %369 = vmatpush1.bf16.msra.mxu0 0
      %370 = vmatprep.subr.bf16.mxu0 0
      %371 = vmatpush1.bf16.msra.mxu0 0
      %372 = vmatprep.subr.bf16.mxu0 0
      %373 = vmatpush1.bf16.msra.mxu0 0
      %374 = vmatprep.subr.bf16.mxu0 0
      %375 = vmatpush1.bf16.msra.mxu0 0
      %376 = vmatprep.mubr.bf16.mxu0 0
      %377 = vmatmul.mubr.bf16.gmra.mrb[0].mxu0 %v321
      %v378 = vpop.f32.mrb[0].mxu0
      %v379 = vadd.f32 0.0, %v378
      %v380 = vpop.f32.mrb[0].mxu0
      %v381 = vpop.f32.mrb[0].mxu0
      %v382 = vadd.f32 0.0, %v381
      %v383 = vpop.f32.mrb[0].mxu0
      %384 = vmatprep.mubr.bf16.mxu0 0
      %385 = vmatmul.mubr.bf16.gmra.mrb[0].mxu0 %v324
      %v386 = vpop.f32.mrb[0].mxu0
      %v387 = vadd.f32 0.0, %v386
      %v388 = vpop.f32.mrb[0].mxu0
      %v389 = vpop.f32.mrb[0].mxu0
      %v390 = vadd.f32 0.0, %v389
      %v391 = vpop.f32.mrb[0].mxu0
      %392 = vmatprep.mubr.bf16.mxu0 0
      %393 = vmatmul.mubr.bf16.gmra.mrb[0].mxu0 %v327
      %v394 = vpop.f32.mrb[0].mxu0
      %v395 = vadd.f32 0.0, %v394
      %v396 = vpop.f32.mrb[0].mxu0
      %v397 = vpop.f32.mrb[0].mxu0
      %v398 = vadd.f32 0.0, %v397
      %v399 = vpop.f32.mrb[0].mxu0
      %400 = vmatprep.mubr.bf16.mxu0 0
      %401 = vmatmul.mubr.bf16.gmra.mrb[0].mxu0 %v330
      %v402 = vpop.f32.mrb[0].mxu0
      %v403 = vadd.f32 0.0, %v402
      %v404 = vpop.f32.mrb[0].mxu0
      %v405 = vpop.f32.mrb[0].mxu0
      %v406 = vadd.f32 0.0, %v405
      %v407 = vpop.f32.mrb[0].mxu0
      %408 = vmatprep.mubr.bf16.mxu0 0
      %409 = vmatmul.mubr.bf16.gmra.mrb[0].mxu0 %v333
      %v410 = vpop.f32.mrb[0].mxu0
      %v411 = vadd.f32 0.0, %v410
      %v412 = vpop.f32.mrb[0].mxu0
      %v413 = vpop.f32.mrb[0].mxu0
      %v414 = vadd.f32 0.0, %v413
      %v415 = vpop.f32.mrb[0].mxu0
      %416 = vmatprep.mubr.bf16.mxu0 0
      %417 = vmatmul.mubr.bf16.gmra.mrb[0].mxu0 %v336
      %v418 = vpop.f32.mrb[0].mxu0
      %v419 = vadd.f32 0.0, %v418
      %v420 = vpop.f32.mrb[0].mxu0
      %v421 = vpop.f32.mrb[0].mxu0
      %v422 = vadd.f32 0.0, %v421
      %v423 = vpop.f32.mrb[0].mxu0
      %424 = vmatprep.mubr.bf16.mxu0 0
      %425 = vmatmul.mubr.bf16.gmra.mrb[0].mxu0 %v339
      %v426 = vpop.f32.mrb[0].mxu0
      %v427 = vadd.f32 0.0, %v426
      %v428 = vpop.f32.mrb[0].mxu0
      %v429 = vpop.f32.mrb[0].mxu0
      %v430 = vadd.f32 0.0, %v429
      %v431 = vpop.f32.mrb[0].mxu0
      %432 = vmatprep.mubr.bf16.mxu0 0
      %433 = vmatmul.mubr.bf16.gmra.mrb[0].mxu0 %v342
      %v434 = vpop.f32.mrb[0].mxu0
      %v435 = vadd.f32 0.0, %v434
      %v436 = vpop.f32.mrb[0].mxu0
      %v437 = vpop.f32.mrb[0].mxu0
      %v438 = vadd.f32 0.0, %v437
      %v439 = vpop.f32.mrb[0].mxu0
      %440 = vdwg.mxu0
      %v445 = vunpack.c.l.b16 %v299
      %v446 = vunpack.c.l.b16 %v300
      %v447 = vunpack.c.l.b16 %v301
      %v448 = vunpack.c.l.b16 %v302
      %v449 = vpack.c.b16 %v446, %v445
      %v450 = vpack.c.b16 %v448, %v447
      %v454 = vsel %vm319, %v267, 0
      %v457 = vsel %vm319, %v268, 0
      %v460 = vsel %vm319, %v269, 0
      %v463 = vsel %vm319, %v270, 0
      %v466 = vsel %vm319, %v271, 0
      %v469 = vsel %vm319, %v272, 0
      %v472 = vsel %vm319, %v273, 0
      %v475 = vsel %vm319, %v274, 0
      %477 = vmatprep.subr.bf16.mxu0 0
      %478 = vmatpush1.bf16.msra.mxu0 %v449
      %479 = vmatprep.subr.bf16.mxu0 0
      %480 = vmatpush1.bf16.msra.mxu0 %v450
      %481 = vmatprep.subr.bf16.mxu0 0
      %482 = vmatpush1.bf16.msra.mxu0 0
      %483 = vmatprep.subr.bf16.mxu0 0
      %484 = vmatpush1.bf16.msra.mxu0 0
      %485 = vmatprep.subr.bf16.mxu0 0
      %486 = vmatpush1.bf16.msra.mxu0 0
      %487 = vmatprep.subr.bf16.mxu0 0
      %488 = vmatpush1.bf16.msra.mxu0 0
      %489 = vmatprep.subr.bf16.mxu0 0
      %490 = vmatpush1.bf16.msra.mxu0 0
      %491 = vmatprep.subr.bf16.mxu0 0
      %492 = vmatpush1.bf16.msra.mxu0 0
      %493 = vmatprep.subr.bf16.mxu0 0
      %494 = vmatpush1.bf16.msra.mxu0 0
      %495 = vmatprep.subr.bf16.mxu0 0
      %496 = vmatpush1.bf16.msra.mxu0 0
      %497 = vmatprep.subr.bf16.mxu0 0
      %498 = vmatpush1.bf16.msra.mxu0 0
      %499 = vmatprep.subr.bf16.mxu0 0
      %500 = vmatpush1.bf16.msra.mxu0 0
      %501 = vmatprep.subr.bf16.mxu0 0
      %502 = vmatpush1.bf16.msra.mxu0 0
      %503 = vmatprep.subr.bf16.mxu0 0
      %504 = vmatpush1.bf16.msra.mxu0 0
      %505 = vmatprep.subr.bf16.mxu0 0
      %506 = vmatpush1.bf16.msra.mxu0 0
      %507 = vmatprep.subr.bf16.mxu0 0
      %508 = vmatpush1.bf16.msra.mxu0 0
      %509 = vmatprep.mubr.bf16.mxu0 0
      %510 = vmatmul.mubr.bf16.gmra.mrb[0].mxu0 %v454
      %v511 = vpop.f32.mrb[0].mxu0
      %v512 = vadd.f32 %v379, %v511
      %v513 = vpop.f32.mrb[0].mxu0
      %v514 = vpop.f32.mrb[0].mxu0
      %v515 = vadd.f32 %v382, %v514
      %v516 = vpop.f32.mrb[0].mxu0
      %517 = vmatprep.mubr.bf16.mxu0 0
      %518 = vmatmul.mubr.bf16.gmra.mrb[0].mxu0 %v457
      %v519 = vpop.f32.mrb[0].mxu0
      %v520 = vadd.f32 %v387, %v519
      %v521 = vpop.f32.mrb[0].mxu0
      %v522 = vpop.f32.mrb[0].mxu0
      %v523 = vadd.f32 %v390, %v522
      %v524 = vpop.f32.mrb[0].mxu0
      %525 = vmatprep.mubr.bf16.mxu0 0
      %526 = vmatmul.mubr.bf16.gmra.mrb[0].mxu0 %v460
      %v527 = vpop.f32.mrb[0].mxu0
      %v528 = vadd.f32 %v395, %v527
      %v529 = vpop.f32.mrb[0].mxu0
      %v530 = vpop.f32.mrb[0].mxu0
      %v531 = vadd.f32 %v398, %v530
      %v532 = vpop.f32.mrb[0].mxu0
      %533 = vmatprep.mubr.bf16.mxu0 0
      %534 = vmatmul.mubr.bf16.gmra.mrb[0].mxu0 %v463
      %v535 = vpop.f32.mrb[0].mxu0
      %v536 = vadd.f32 %v403, %v535
      %v537 = vpop.f32.mrb[0].mxu0
      %v538 = vpop.f32.mrb[0].mxu0
      %v539 = vadd.f32 %v406, %v538
      %v540 = vpop.f32.mrb[0].mxu0
      %541 = vmatprep.mubr.bf16.mxu0 0
      %542 = vmatmul.mubr.bf16.gmra.mrb[0].mxu0 %v466
      %v543 = vpop.f32.mrb[0].mxu0
      %v544 = vadd.f32 %v411, %v543
      %v545 = vpop.f32.mrb[0].mxu0
      %v546 = vpop.f32.mrb[0].mxu0
      %v547 = vadd.f32 %v414, %v546
      %v548 = vpop.f32.mrb[0].mxu0
      %549 = vmatprep.mubr.bf16.mxu0 0
      %550 = vmatmul.mubr.bf16.gmra.mrb[0].mxu0 %v469
      %v551 = vpop.f32.mrb[0].mxu0
      %v552 = vadd.f32 %v419, %v551
      %v553 = vpop.f32.mrb[0].mxu0
      %v554 = vpop.f32.mrb[0].mxu0
      %v555 = vadd.f32 %v422, %v554
      %v556 = vpop.f32.mrb[0].mxu0
      %557 = vmatprep.mubr.bf16.mxu0 0
      %558 = vmatmul.mubr.bf16.gmra.mrb[0].mxu0 %v472
      %v559 = vpop.f32.mrb[0].mxu0
      %v560 = vadd.f32 %v427, %v559
      %v561 = vpop.f32.mrb[0].mxu0
      %v562 = vpop.f32.mrb[0].mxu0
      %v563 = vadd.f32 %v430, %v562
      %v564 = vpop.f32.mrb[0].mxu0
      %565 = vmatprep.mubr.bf16.mxu0 0
      %566 = vmatmul.mubr.bf16.gmra.mrb[0].mxu0 %v475
      %v567 = vpop.f32.mrb[0].mxu0
      %v568 = vadd.f32 %v435, %v567
      %v569 = vpop.f32.mrb[0].mxu0
      %v570 = vpop.f32.mrb[0].mxu0
      %v571 = vadd.f32 %v438, %v570
      %v572 = vpop.f32.mrb[0].mxu0
      %573 = vdwg.mxu0
      %v574 = vld [vmem:[%s4] sm:$0x1]
      %v576 = vlaneseq
      %v577 = vshrl.u32 %v576, 7
      %v578 = vsub.s32 0, %v577
      %v579 = vrot.slane %v574, %v578
      %v581 = vadd.f32 %v512, %v579
      %v582 = vadd.f32 %v515, %v579
      %v583 = vadd.f32 %v520, %v579
      %v584 = vadd.f32 %v523, %v579
      %v585 = vadd.f32 %v528, %v579
      %v586 = vadd.f32 %v531, %v579
      %v587 = vadd.f32 %v536, %v579
      %v588 = vadd.f32 %v539, %v579
      %v589 = vadd.f32 %v544, %v579
      %v590 = vadd.f32 %v547, %v579
      %v591 = vadd.f32 %v552, %v579
      %v592 = vadd.f32 %v555, %v579
      %v593 = vadd.f32 %v560, %v579
      %v594 = vadd.f32 %v563, %v579
      %v595 = vadd.f32 %v568, %v579
      %v596 = vadd.f32 %v571, %v579
      %597 = vst.msk [vmem:[%s248] sm:$0xff] %vm319, %v581
      %598 = vst.msk [vmem:[%s248 + $0x8] sm:$0xff] %vm319, %v582
      %599 = vst.msk [vmem:[%s248 + $0x10] sm:$0xff] %vm319, %v583
      %600 = vst.msk [vmem:[%s248 + $0x18] sm:$0xff] %vm319, %v584
      %601 = vst.msk [vmem:[%s248 + $0x20] sm:$0xff] %vm319, %v585
      %602 = vst.msk [vmem:[%s248 + $0x28] sm:$0xff] %vm319, %v586
      %603 = vst.msk [vmem:[%s248 + $0x30] sm:$0xff] %vm319, %v587
      %604 = vst.msk [vmem:[%s248 + $0x38] sm:$0xff] %vm319, %v588
      %605 = vst.msk [vmem:[%s248 + $0x40] sm:$0xff] %vm319, %v589
      %606 = vst.msk [vmem:[%s248 + $0x48] sm:$0xff] %vm319, %v590
      %607 = vst.msk [vmem:[%s248 + $0x50] sm:$0xff] %vm319, %v591
      %608 = vst.msk [vmem:[%s248 + $0x58] sm:$0xff] %vm319, %v592
      %609 = vst.msk [vmem:[%s248 + $0x60] sm:$0xff] %vm319, %v593
      %610 = vst.msk [vmem:[%s248 + $0x68] sm:$0xff] %vm319, %v594
      %611 = vst.msk [vmem:[%s248 + $0x70] sm:$0xff] %vm319, %v595
      %612 = vst.msk [vmem:[%s248 + $0x78] sm:$0xff] %vm319, %v596
      %s613 = smul.u32 16, %s16
      %p614 = scmp.lt.s32.totalorder %s613, 31
      %s615 = scalar_select %p614, %s613, 31
      %s616 = smul.addr %s615, 8
      %s617 = scalar_lea.vmem %s5, %s616
      // Predicated region
      $region41: #{pagnn_aggregation.2} parent=39 // pred_check
        %p618 = pneg %p149
      $region42: #{pagnn_aggregation.2} parent=39 // pred_check_branch
        %620 = sbr.rel (%p618) target = $region44
      $region43: #{pagnn_aggregation.2} parent=39 // pred_region
        %s621 = smul.u32 16, %s16
      $region44: #{pagnn_aggregation.2} parent=39 // pred_fallthru
        _
    $region40: #{pagnn_aggregation.2} parent=5 // pred_fallthru
      _
    %p622 = scmp.le.s32.totalorder 2, %s11
    // Predicated region
    $region45: #{pagnn_aggregation.2} parent=5 // pred_check
      %p623 = pneg %p622
    $region46: #{pagnn_aggregation.2} parent=5 // pred_check_branch
      %625 = sbr.rel (%p623) target = $region48
    $region47: #{pagnn_aggregation.2} parent=5 // pred_region
      %s626 = ssub.s32 %s11, 2
      // Predicated region
      $region49: #{pagnn_aggregation.2} parent=47 // pred_check
        %p627 = pneg %p155
      $region50: #{pagnn_aggregation.2} parent=47 // pred_check_branch
        %629 = sbr.rel (%p627) target = $region52
      $region51: #{pagnn_aggregation.2} parent=47 // pred_region
        %s630 = smul.u32 16, %s17
        %p631 = scmp.lt.s32.totalorder %s630, 31
        %s632 = scalar_select %p631, %s630, 31
        %s633 = smul.addr %s632, 8
        %s634 = scalar_lea.vmem %s5, %s633
      $region52: #{pagnn_aggregation.2} parent=47 // pred_fallthru
        _
    $region48: #{pagnn_aggregation.2} parent=5 // pred_fallthru
      _
  $region6: #{pagnn_aggregation.2} parent=0 // loop_footer
    %s15 = sadd.s32 1, %s11
  $region7: #{pagnn_aggregation.2} parent=0 // loop_footer_branch
    %10 = sbr.rel target = $region3
  $region8: #{pagnn_aggregation.2} parent=0 // loop_exit
    _

// kernel: pagnn_aggregation.3
$region0: #{pagnn_aggregation.3}
  #allocation0 [shape = 'u32[]', space=smem, size = 0x4, offset = 0x4, fixed_abs, tag = 'smem constant byte address 0x4 - core index']
  #allocation1 [shape = 'u32[144,128]{1,0:T(1,128)}', space=vmem, size = 0x12000, scoped, tag = 'internal scratch']
  #allocation2 [shape = 'f32[2,128,1]{2,1,0:T(8,128)}', space=vmem, size = 0x20000, scoped, tag = 'scratch operand']
  #allocation3 [shape = 'f32[2,128,1]{2,1,0:T(8,128)}', space=vmem, size = 0x20000, scoped, tag = 'scratch operand']
  #allocation4 [shape = 'f32[2,128,1]{2,1,0:T(8,128)}', space=vmem, size = 0x20000, scoped, tag = 'scratch operand']
  #allocation5 [shape = 'f32[2,128,32]{2,1,0:T(8,128)}', space=vmem, size = 0x20000, scoped, tag = 'scratch operand']
  %s0 = inlined_call_operand.vmem [shape: bf16[256,256], index: 0, kind: input, shape index: {}]
  %s1 = inlined_call_operand.vmem [shape: f32[256,32], index: 1, kind: input, shape index: {}, may-alias: {1,2}]
  %s2 = inlined_call_operand.vmem [shape: f32[256,32], index: 2, kind: input, shape index: {}, may-alias: {1,2}]
  %s3 = inlined_call_operand.vmem [shape: bf16[2,32,32], index: 3, kind: input, shape index: {}]
  %s4 = inlined_call_operand.vmem [shape: bf16[2,1,32], index: 4, kind: input, shape index: {}]
  %s5 = inlined_call_operand.vmem [shape: f32[2,1,32], index: 5, kind: input, shape index: {}]
  %s6 = inlined_call_operand.vmem [shape: f32[2,1,32], index: 6, kind: input, shape index: {}]
  %s7 = inlined_call_operand.vmem [shape: bf16[2,4,64,32], index: 7, kind: input, shape index: {}]
  %s8 = inlined_call_operand.vmem [shape: bf16[2,4,32,32], index: 8, kind: input, shape index: {}]
  %s9 = inlined_call_operand.vmem [shape: f32[256,32], index: 9, kind: output, shape index: {}]
  %s10 = sld [smem:[#allocation0]]
  $region118: #{pagnn_aggregation.3} parent=0
    _
  %s12 = ssub.s32 1, %s10
  %s13 = scalar_select 0, %s12, %s10
  $region1: #{pagnn_aggregation.3} parent=0
    #allocation6 [shape = 'u8[65536]{0}', space=vmem, size = 0x10000, scoped, tag = 'input window, operand 0']
    loop: start=0, step=1, limit=6
    $region2: #{pagnn_aggregation.3} parent=1 // loop_pre_header
      _
    $region3: #{pagnn_aggregation.3} parent=1 // loop_header
      %s15 = sphi 0, %s19
      %p16 = scmp.ge.s32.totalorder %s15, 6
      %s22 = sphi 0, %s34
      %s23 = sphi 0, %s30
      %s24 = sphi 0, %s22
      %s25 = sphi 0, %s23
      %s26 = sphi 0, %s24
      %s27 = sphi 0, %s25
      %s39 = sphi 0, %s41
      %s42 = sphi 0, %s39
      %s43 = sphi 0, %s42
      %s59 = sphi 0, %s43
      %s65 = sphi 0, %s67
      %s68 = sphi 0, %s65
      %s69 = sphi 0, %s68
      %s85 = sphi 0, %s69
      %s91 = sphi 0, %s93
      %s94 = sphi 0, %s91
      %s95 = sphi 0, %s94
      %s111 = sphi 0, %s95
      %s115 = sphi 0, %s115
      %s117 = sphi 0, %s115
      %s118 = sphi 0, %s117
      %s132 = sphi 0, %s118
      %s136 = sphi 0, %s136
      %s138 = sphi 0, %s136
      %s139 = sphi 0, %s138
      %s153 = sphi 0, %s139
      %s157 = sphi 0, %s157
      %s159 = sphi 0, %s157
      %s160 = sphi 0, %s159
      %s174 = sphi 0, %s160
      %s178 = sphi 0, %s178
      %s180 = sphi 0, %s178
      %s181 = sphi 0, %s180
      %s195 = sphi 0, %s181
      %s199 = sphi 0, %s199
      %s201 = sphi 0, %s199
      %s202 = sphi 0, %s201
      %s216 = sphi 0, %s202
      %s220 = sphi 0, %s220
      %s222 = sphi 0, %s220
      %s223 = sphi 0, %s222
      %s237 = sphi 0, %s223
      %s243 = sphi 0, %s245
      %s246 = sphi 0, %s243
      %s247 = sphi 0, %s246
      %s263 = sphi 0, %s247
    $region4: #{pagnn_aggregation.3} parent=1 // loop_header_branch
      %18 = sbr.rel (%p16) target = $region8
    $region5: #{pagnn_aggregation.3} parent=1 // loop_body
      %s20 = ssub.s32 %s15, 1
      %s21 = ssub.s32 %s15, 2
      %s28 = sadd.s32 1, %s23
      %p29 = scmp.ge.s32.totalorder %s28, 2
      %s30 = scalar_select %p29, 0, %s28
      %s31 = sadd.s32 1, %s22
      %s32 = scalar_select %p29, %s31, %s22
      %p33 = scmp.ge.s32.totalorder %s32, 2
      %s34 = scalar_select %p33, 0, %s32
      %s35 = ssub.s32 %s22, %s34
      %s36 = ssub.s32 %s23, %s30
      %s37 = sor.u32 %s35, %s36
      %p38 = scmp.eq.s32.totalorder %s37, 0
      %s40 = sadd.s32 %s39, 1
      %s41 = scalar_select %p38, %s39, %s40
      %p44 = pneg %p38
      %p45 = scmp.eq.s32.totalorder %s15, 3
      %p46 = por %p44, %p45
      %p47 = scmp.ne.s32.totalorder %s39, %s42
      %p48 = scmp.eq.s32.totalorder %s15, 0
      %p49 = por %p47, %p48
      %p50 = scmp.ne.s32.totalorder %s39, %s42
      %p51 = scmp.eq.s32.totalorder %s20, 3
      %p52 = por %p50, %p51
      %p53 = scmp.ne.s32.totalorder %s42, %s43
      %p54 = scmp.eq.s32.totalorder %s20, 0
      %p55 = por %p53, %p54
      %p56 = scmp.ne.s32.totalorder %s42, %s43
      %p57 = scmp.eq.s32.totalorder %s21, 3
      %p58 = por %p56, %p57
      %p60 = scmp.ne.s32.totalorder %s43, %s59
      %p61 = scmp.eq.s32.totalorder %s21, 0
      %p62 = por %p60, %p61
      %s63 = ssub.s32 %s22, %s34
      %p64 = scmp.eq.s32.totalorder %s63, 0
      %s66 = sadd.s32 %s65, 1
      %s67 = scalar_select %p64, %s65, %s66
      %p70 = pneg %p64
      %p71 = scmp.eq.s32.totalorder %s15, 3
      %p72 = por %p70, %p71
      %p73 = scmp.ne.s32.totalorder %s65, %s68
      %p74 = scmp.eq.s32.totalorder %s15, 0
      %p75 = por %p73, %p74
      %p76 = scmp.ne.s32.totalorder %s65, %s68
      %p77 = scmp.eq.s32.totalorder %s20, 3
      %p78 = por %p76, %p77
      %p79 = scmp.ne.s32.totalorder %s68, %s69
      %p80 = scmp.eq.s32.totalorder %s20, 0
      %p81 = por %p79, %p80
      %p82 = scmp.ne.s32.totalorder %s68, %s69
      %p83 = scmp.eq.s32.totalorder %s21, 3
      %p84 = por %p82, %p83
      %p86 = scmp.ne.s32.totalorder %s69, %s85
      %p87 = scmp.eq.s32.totalorder %s21, 0
      %p88 = por %p86, %p87
      %s89 = ssub.s32 %s23, %s30
      %p90 = scmp.eq.s32.totalorder %s89, 0
      %s92 = sadd.s32 %s91, 1
      %s93 = scalar_select %p90, %s91, %s92
      %p96 = pneg %p90
      %p97 = scmp.eq.s32.totalorder %s15, 3
      %p98 = por %p96, %p97
      %p99 = scmp.ne.s32.totalorder %s91, %s94
      %p100 = scmp.eq.s32.totalorder %s15, 0
      %p101 = por %p99, %p100
      %p102 = scmp.ne.s32.totalorder %s91, %s94
      %p103 = scmp.eq.s32.totalorder %s20, 3
      %p104 = por %p102, %p103
      %p105 = scmp.ne.s32.totalorder %s94, %s95
      %p106 = scmp.eq.s32.totalorder %s20, 0
      %p107 = por %p105, %p106
      %p108 = scmp.ne.s32.totalorder %s94, %s95
      %p109 = scmp.eq.s32.totalorder %s21, 3
      %p110 = por %p108, %p109
      %p112 = scmp.ne.s32.totalorder %s95, %s111
      %p113 = scmp.eq.s32.totalorder %s21, 0
      %p114 = por %p112, %p113
      %s116 = sadd.s32 %s115, 1
      %p119 = scmp.eq.s32.totalorder %s15, 3
      %p120 = scmp.ne.s32.totalorder %s115, %s117
      %p121 = scmp.eq.s32.totalorder %s15, 0
      %p122 = por %p120, %p121
      %p123 = scmp.ne.s32.totalorder %s115, %s117
      %p124 = scmp.eq.s32.totalorder %s20, 3
      %p125 = por %p123, %p124
      %p126 = scmp.ne.s32.totalorder %s117, %s118
      %p127 = scmp.eq.s32.totalorder %s20, 0
      %p128 = por %p126, %p127
      %p129 = scmp.ne.s32.totalorder %s117, %s118
      %p130 = scmp.eq.s32.totalorder %s21, 3
      %p131 = por %p129, %p130
      %p133 = scmp.ne.s32.totalorder %s118, %s132
      %p134 = scmp.eq.s32.totalorder %s21, 0
      %p135 = por %p133, %p134
      %s137 = sadd.s32 %s136, 1
      %p140 = scmp.eq.s32.totalorder %s15, 3
      %p141 = scmp.ne.s32.totalorder %s136, %s138
      %p142 = scmp.eq.s32.totalorder %s15, 0
      %p143 = por %p141, %p142
      %p144 = scmp.ne.s32.totalorder %s136, %s138
      %p145 = scmp.eq.s32.totalorder %s20, 3
      %p146 = por %p144, %p145
      %p147 = scmp.ne.s32.totalorder %s138, %s139
      %p148 = scmp.eq.s32.totalorder %s20, 0
      %p149 = por %p147, %p148
      %p150 = scmp.ne.s32.totalorder %s138, %s139
      %p151 = scmp.eq.s32.totalorder %s21, 3
      %p152 = por %p150, %p151
      %p154 = scmp.ne.s32.totalorder %s139, %s153
      %p155 = scmp.eq.s32.totalorder %s21, 0
      %p156 = por %p154, %p155
      %s158 = sadd.s32 %s157, 1
      %p161 = scmp.eq.s32.totalorder %s15, 3
      %p162 = scmp.ne.s32.totalorder %s157, %s159
      %p163 = scmp.eq.s32.totalorder %s15, 0
      %p164 = por %p162, %p163
      %p165 = scmp.ne.s32.totalorder %s157, %s159
      %p166 = scmp.eq.s32.totalorder %s20, 3
      %p167 = por %p165, %p166
      %p168 = scmp.ne.s32.totalorder %s159, %s160
      %p169 = scmp.eq.s32.totalorder %s20, 0
      %p170 = por %p168, %p169
      %p171 = scmp.ne.s32.totalorder %s159, %s160
      %p172 = scmp.eq.s32.totalorder %s21, 3
      %p173 = por %p171, %p172
      %p175 = scmp.ne.s32.totalorder %s160, %s174
      %p176 = scmp.eq.s32.totalorder %s21, 0
      %p177 = por %p175, %p176
      %s179 = sadd.s32 %s178, 1
      %p182 = scmp.eq.s32.totalorder %s15, 3
      %p183 = scmp.ne.s32.totalorder %s178, %s180
      %p184 = scmp.eq.s32.totalorder %s15, 0
      %p185 = por %p183, %p184
      %p186 = scmp.ne.s32.totalorder %s178, %s180
      %p187 = scmp.eq.s32.totalorder %s20, 3
      %p188 = por %p186, %p187
      %p189 = scmp.ne.s32.totalorder %s180, %s181
      %p190 = scmp.eq.s32.totalorder %s20, 0
      %p191 = por %p189, %p190
      %p192 = scmp.ne.s32.totalorder %s180, %s181
      %p193 = scmp.eq.s32.totalorder %s21, 3
      %p194 = por %p192, %p193
      %p196 = scmp.ne.s32.totalorder %s181, %s195
      %p197 = scmp.eq.s32.totalorder %s21, 0
      %p198 = por %p196, %p197
      %s200 = sadd.s32 %s199, 1
      %p203 = scmp.eq.s32.totalorder %s15, 3
      %p204 = scmp.ne.s32.totalorder %s199, %s201
      %p205 = scmp.eq.s32.totalorder %s15, 0
      %p206 = por %p204, %p205
      %p207 = scmp.ne.s32.totalorder %s199, %s201
      %p208 = scmp.eq.s32.totalorder %s20, 3
      %p209 = por %p207, %p208
      %p210 = scmp.ne.s32.totalorder %s201, %s202
      %p211 = scmp.eq.s32.totalorder %s20, 0
      %p212 = por %p210, %p211
      %p213 = scmp.ne.s32.totalorder %s201, %s202
      %p214 = scmp.eq.s32.totalorder %s21, 3
      %p215 = por %p213, %p214
      %p217 = scmp.ne.s32.totalorder %s202, %s216
      %p218 = scmp.eq.s32.totalorder %s21, 0
      %p219 = por %p217, %p218
      %s221 = sadd.s32 %s220, 1
      %p224 = scmp.eq.s32.totalorder %s15, 3
      %p225 = scmp.ne.s32.totalorder %s220, %s222
      %p226 = scmp.eq.s32.totalorder %s15, 0
      %p227 = por %p225, %p226
      %p228 = scmp.ne.s32.totalorder %s220, %s222
      %p229 = scmp.eq.s32.totalorder %s20, 3
      %p230 = por %p228, %p229
      %p231 = scmp.ne.s32.totalorder %s222, %s223
      %p232 = scmp.eq.s32.totalorder %s20, 0
      %p233 = por %p231, %p232
      %p234 = scmp.ne.s32.totalorder %s222, %s223
      %p235 = scmp.eq.s32.totalorder %s21, 3
      %p236 = por %p234, %p235
      %p238 = scmp.ne.s32.totalorder %s223, %s237
      %p239 = scmp.eq.s32.totalorder %s21, 0
      %p240 = por %p238, %p239
      %s241 = ssub.s32 %s22, %s34
      %p242 = scmp.eq.s32.totalorder %s241, 0
      %s244 = sadd.s32 %s243, 1
      %s245 = scalar_select %p242, %s243, %s244
      %p248 = pneg %p242
      %p249 = scmp.eq.s32.totalorder %s15, 3
      %p250 = por %p248, %p249
      %p251 = scmp.ne.s32.totalorder %s243, %s246
      %p252 = scmp.eq.s32.totalorder %s15, 0
      %p253 = por %p251, %p252
      %p254 = scmp.ne.s32.totalorder %s243, %s246
      %p255 = scmp.eq.s32.totalorder %s20, 3
      %p256 = por %p254, %p255
      %p257 = scmp.ne.s32.totalorder %s246, %s247
      %p258 = scmp.eq.s32.totalorder %s20, 0
      %p259 = por %p257, %p258
      %p260 = scmp.ne.s32.totalorder %s246, %s247
      %p261 = scmp.eq.s32.totalorder %s21, 3
      %p262 = por %p260, %p261
      %p264 = scmp.ne.s32.totalorder %s247, %s263
      %p265 = scmp.eq.s32.totalorder %s21, 0
      %p266 = por %p264, %p265
      %p267 = scmp.le.s32.totalorder 1, %s15
      %p268 = scmp.lt.s32.totalorder %s15, 5
      %p269 = pnand %p267, %p268
      %p270 = pneg %p269
      // Predicated region
      $region9: #{pagnn_aggregation.3} parent=5 // pred_check
        _
      $region10: #{pagnn_aggregation.3} parent=5 // pred_check_branch
        %272 = sbr.rel (%p269) target = $region12
      $region11: #{pagnn_aggregation.3} parent=5 // pred_region
        %s273 = ssub.s32 %s15, 1
        // Predicated region
        $region13: #{pagnn_aggregation.3} parent=11 // pred_check
          %p274 = pneg %p128
        $region14: #{pagnn_aggregation.3} parent=11 // pred_check_branch
          %276 = sbr.rel (%p274) target = $region16
        $region15: #{pagnn_aggregation.3} parent=11 // pred_region
          _
        $region16: #{pagnn_aggregation.3} parent=11 // pred_fallthru
          _
        // Predicated region
        $region17: #{pagnn_aggregation.3} parent=11 // pred_check
          %p277 = pneg %p149
        $region18: #{pagnn_aggregation.3} parent=11 // pred_check_branch
          %279 = sbr.rel (%p277) target = $region20
        $region19: #{pagnn_aggregation.3} parent=11 // pred_region
          _
        $region20: #{pagnn_aggregation.3} parent=11 // pred_fallthru
          _
        // Predicated region
        $region21: #{pagnn_aggregation.3} parent=11 // pred_check
          %p280 = pneg %p170
        $region22: #{pagnn_aggregation.3} parent=11 // pred_check_branch
          %282 = sbr.rel (%p280) target = $region24
        $region23: #{pagnn_aggregation.3} parent=11 // pred_region
          _
        $region24: #{pagnn_aggregation.3} parent=11 // pred_fallthru
          _
        // Predicated region
        $region25: #{pagnn_aggregation.3} parent=11 // pred_check
          %p283 = pneg %p191
        $region26: #{pagnn_aggregation.3} parent=11 // pred_check_branch
          %285 = sbr.rel (%p283) target = $region28
        $region27: #{pagnn_aggregation.3} parent=11 // pred_region
          _
        $region28: #{pagnn_aggregation.3} parent=11 // pred_fallthru
          _
        // Predicated region
        $region29: #{pagnn_aggregation.3} parent=11 // pred_check
          %p286 = pneg %p212
        $region30: #{pagnn_aggregation.3} parent=11 // pred_check_branch
          %288 = sbr.rel (%p286) target = $region32
        $region31: #{pagnn_aggregation.3} parent=11 // pred_region
          _
        $region32: #{pagnn_aggregation.3} parent=11 // pred_fallthru
          _
        // Predicated region
        $region33: #{pagnn_aggregation.3} parent=11 // pred_check
          %p289 = pneg %p233
        $region34: #{pagnn_aggregation.3} parent=11 // pred_check_branch
          %291 = sbr.rel (%p289) target = $region36
        $region35: #{pagnn_aggregation.3} parent=11 // pred_region
          _
        $region36: #{pagnn_aggregation.3} parent=11 // pred_fallthru
          _
      $region12: #{pagnn_aggregation.3} parent=5 // pred_fallthru
        _
      %p292 = scmp.lt.s32.totalorder %s15, 4
      // Predicated region
      $region37: #{pagnn_aggregation.3} parent=5 // pred_check
        %p293 = pneg %p292
      $region38: #{pagnn_aggregation.3} parent=5 // pred_check_branch
        %295 = sbr.rel (%p293) target = $region40
      $region39: #{pagnn_aggregation.3} parent=5 // pred_region
        // Predicated region
        $region41: #{pagnn_aggregation.3} parent=39 // pred_check
          %p296 = pneg %p49
        $region42: #{pagnn_aggregation.3} parent=39 // pred_check_branch
          %298 = sbr.rel (%p296) target = $region44
        $region43: #{pagnn_aggregation.3} parent=39 // pred_region
          %s299 = sand.u32 %s39, 1
          %s300 = sand.u32 %s39, 1
          %s301 = smul.addr %s300, 64
          %s302 = scalar_lea.vmem [#allocation6], %s301
          %s303 = smul.u32 16, %s22
          %s304 = smul.addr %s303, 2
          %s305 = sadd.s32 %s23, %s304
          %s306 = smul.addr %s305, 4
          %s307 = scalar_lea.vmem %s0, %s306
          // Predicated region
          $region45: #{pagnn_aggregation.3} parent=43 // pred_check
            _
          $region46: #{pagnn_aggregation.3} parent=43 // pred_check_branch
            %309 = sbr.rel (0) target = $region48
          $region47: #{pagnn_aggregation.3} parent=43 // pred_region
            // Predicated region
            $region49: #{pagnn_aggregation.3} parent=47 // pred_check
              _
            $region50: #{pagnn_aggregation.3} parent=47 // pred_check_branch
              %311 = sbr.rel target = $region52
            $region51: #{pagnn_aggregation.3} parent=47 // pred_region
              // Predicated region
              $region64: #{pagnn_aggregation.3} parent=51 // pred_check
                _
              $region65: #{pagnn_aggregation.3} parent=51 // pred_check_branch
                %356 = sbr.rel (0) target = $region67
              $region66: #{pagnn_aggregation.3} parent=51 // pred_region
                loop: start=0, step=1, limit=1
                $region68: #{pagnn_aggregation.3} parent=66 // loop_pre_header
                  _
                $region69: #{pagnn_aggregation.3} parent=66 // loop_header
                  %s358 = sphi 0, %s362
                  %p359 = scmp.ge.s32.totalorder %s358, 1
                  %s363 = sphi %s307, %s307
                  %s364 = sphi %s302, %s302
                $region70: #{pagnn_aggregation.3} parent=66 // loop_header_branch
                  %361 = sbr.rel (%p359) target = $region74
                $region71: #{pagnn_aggregation.3} parent=66 // loop_body
                  _
                $region72: #{pagnn_aggregation.3} parent=66 // loop_footer
                  %s362 = sadd.s32 1, %s358
                $region73: #{pagnn_aggregation.3} parent=66 // loop_footer_branch
                  %357 = sbr.rel target = $region69
                $region74: #{pagnn_aggregation.3} parent=66 // loop_exit
                  _
                loop: start=0, step=1, limit=1
                $region75: #{pagnn_aggregation.3} parent=66 // loop_pre_header
                  _
                $region76: #{pagnn_aggregation.3} parent=66 // loop_header
                  %s367 = sphi 0, %s371
                  %p368 = scmp.ge.s32.totalorder %s367, 1
                  %s372 = sphi %s307, %s307
                  %s373 = sphi %s302, %s302
                $region77: #{pagnn_aggregation.3} parent=66 // loop_header_branch
                  %370 = sbr.rel (%p368) target = $region81
                $region78: #{pagnn_aggregation.3} parent=66 // loop_body
                  %v374 = vld [vmem:[%s372] sm:$0xf]
                  %375 = vst [vmem:[%s373] sm:$0xf] %v374
                  %v376 = vld [vmem:[%s372 + $0x8] sm:$0xf]
                  %377 = vst [vmem:[%s373 + $0x4] sm:$0xf] %v376
                  %v378 = vld [vmem:[%s372 + $0x10] sm:$0xf]
                  %379 = vst [vmem:[%s373 + $0x8] sm:$0xf] %v378
                  %v380 = vld [vmem:[%s372 + $0x18] sm:$0xf]
                  %381 = vst [vmem:[%s373 + $0xc] sm:$0xf] %v380
                  %v382 = vld [vmem:[%s372 + $0x20] sm:$0xf]
                  %383 = vst [vmem:[%s373 + $0x10] sm:$0xf] %v382
                  %v384 = vld [vmem:[%s372 + $0x28] sm:$0xf]
                  %385 = vst [vmem:[%s373 + $0x14] sm:$0xf] %v384
                  %v386 = vld [vmem:[%s372 + $0x30] sm:$0xf]
                  %387 = vst [vmem:[%s373 + $0x18] sm:$0xf] %v386
                  %v388 = vld [vmem:[%s372 + $0x38] sm:$0xf]
                  %389 = vst [vmem:[%s373 + $0x1c] sm:$0xf] %v388
                  %v390 = vld [vmem:[%s372 + $0x40] sm:$0xf]
                  %391 = vst [vmem:[%s373 + $0x20] sm:$0xf] %v390
                  %v392 = vld [vmem:[%s372 + $0x48] sm:$0xf]
                  %393 = vst [vmem:[%s373 + $0x24] sm:$0xf] %v392
                  %v394 = vld [vmem:[%s372 + $0x50] sm:$0xf]
                  %395 = vst [vmem:[%s373 + $0x28] sm:$0xf] %v394
                  %v396 = vld [vmem:[%s372 + $0x58] sm:$0xf]
                  %397 = vst [vmem:[%s373 + $0x2c] sm:$0xf] %v396
                  %v398 = vld [vmem:[%s372 + $0x60] sm:$0xf]
                  %399 = vst [vmem:[%s373 + $0x30] sm:$0xf] %v398
                  %v400 = vld [vmem:[%s372 + $0x68] sm:$0xf]
                  %401 = vst [vmem:[%s373 + $0x34] sm:$0xf] %v400
                  %v402 = vld [vmem:[%s372 + $0x70] sm:$0xf]
                  %403 = vst [vmem:[%s373 + $0x38] sm:$0xf] %v402
                  %v404 = vld [vmem:[%s372 + $0x78] sm:$0xf]
                  %405 = vst [vmem:[%s373 + $0x3c] sm:$0xf] %v404
                $region79: #{pagnn_aggregation.3} parent=66 // loop_footer
                  %s371 = sadd.s32 1, %s367
                $region80: #{pagnn_aggregation.3} parent=66 // loop_footer_branch
                  %366 = sbr.rel target = $region76
                $region81: #{pagnn_aggregation.3} parent=66 // loop_exit
                  _
              $region67: #{pagnn_aggregation.3} parent=51 // pred_fallthru
                _
            $region52: #{pagnn_aggregation.3} parent=47 // pred_fallthru
              _
            // Predicated region
            $region53: #{pagnn_aggregation.3} parent=47 // pred_check
              _
            $region54: #{pagnn_aggregation.3} parent=47 // pred_check_branch
              %313 = sbr.rel (0) target = $region56
            $region55: #{pagnn_aggregation.3} parent=47 // pred_region
              loop: start=0, step=1, limit=1
              $region57: #{pagnn_aggregation.3} parent=55 // loop_pre_header
                _
              $region58: #{pagnn_aggregation.3} parent=55 // loop_header
                %s316 = sphi 0, %s320
                %p317 = scmp.ge.s32.totalorder %s316, 1
                %s321 = sphi %s307, %s307
                %s322 = sphi %s302, %s302
              $region59: #{pagnn_aggregation.3} parent=55 // loop_header_branch
                %319 = sbr.rel (%p317) target = $region63
              $region60: #{pagnn_aggregation.3} parent=55 // loop_body
                %v323 = vld [vmem:[%s321] sm:$0xf]
                %324 = vst [vmem:[%s322] sm:$0xf] %v323
                %v325 = vld [vmem:[%s321 + $0x8] sm:$0xf]
                %326 = vst [vmem:[%s322 + $0x4] sm:$0xf] %v325
                %v327 = vld [vmem:[%s321 + $0x10] sm:$0xf]
                %328 = vst [vmem:[%s322 + $0x8] sm:$0xf] %v327
                %v329 = vld [vmem:[%s321 + $0x18] sm:$0xf]
                %330 = vst [vmem:[%s322 + $0xc] sm:$0xf] %v329
                %v331 = vld [vmem:[%s321 + $0x20] sm:$0xf]
                %332 = vst [vmem:[%s322 + $0x10] sm:$0xf] %v331
                %v333 = vld [vmem:[%s321 + $0x28] sm:$0xf]
                %334 = vst [vmem:[%s322 + $0x14] sm:$0xf] %v333
                %v335 = vld [vmem:[%s321 + $0x30] sm:$0xf]
                %336 = vst [vmem:[%s322 + $0x18] sm:$0xf] %v335
                %v337 = vld [vmem:[%s321 + $0x38] sm:$0xf]
                %338 = vst [vmem:[%s322 + $0x1c] sm:$0xf] %v337
                %v339 = vld [vmem:[%s321 + $0x40] sm:$0xf]
                %340 = vst [vmem:[%s322 + $0x20] sm:$0xf] %v339
                %v341 = vld [vmem:[%s321 + $0x48] sm:$0xf]
                %342 = vst [vmem:[%s322 + $0x24] sm:$0xf] %v341
                %v343 = vld [vmem:[%s321 + $0x50] sm:$0xf]
                %344 = vst [vmem:[%s322 + $0x28] sm:$0xf] %v343
                %v345 = vld [vmem:[%s321 + $0x58] sm:$0xf]
                %346 = vst [vmem:[%s322 + $0x2c] sm:$0xf] %v345
                %v347 = vld [vmem:[%s321 + $0x60] sm:$0xf]
                %348 = vst [vmem:[%s322 + $0x30] sm:$0xf] %v347
                %v349 = vld [vmem:[%s321 + $0x68] sm:$0xf]
                %350 = vst [vmem:[%s322 + $0x34] sm:$0xf] %v349
                %v351 = vld [vmem:[%s321 + $0x70] sm:$0xf]
                %352 = vst [vmem:[%s322 + $0x38] sm:$0xf] %v351
                %v353 = vld [vmem:[%s321 + $0x78] sm:$0xf]
                %354 = vst [vmem:[%s322 + $0x3c] sm:$0xf] %v353
              $region61: #{pagnn_aggregation.3} parent=55 // loop_footer
                %s320 = sadd.s32 1, %s316
              $region62: #{pagnn_aggregation.3} parent=55 // loop_footer_branch
                %315 = sbr.rel target = $region58
              $region63: #{pagnn_aggregation.3} parent=55 // loop_exit
                _
            $region56: #{pagnn_aggregation.3} parent=47 // pred_fallthru
              _
          $region48: #{pagnn_aggregation.3} parent=43 // pred_fallthru
            _
          %406 = vnop
        $region44: #{pagnn_aggregation.3} parent=39 // pred_fallthru
          _
        // Predicated region
        $region82: #{pagnn_aggregation.3} parent=39 // pred_check
          %p407 = pneg %p75
        $region83: #{pagnn_aggregation.3} parent=39 // pred_check_branch
          %409 = sbr.rel (%p407) target = $region85
        $region84: #{pagnn_aggregation.3} parent=39 // pred_region
          %s410 = smul.u32 16, %s22
          %p411 = scmp.lt.s32.totalorder %s410, 31
          %s412 = scalar_select %p411, %s410, 31
          %s413 = smul.addr %s412, 8
          %s414 = scalar_lea.vmem %s1, %s413
          %s415 = smul.u32 16, %s22
        $region85: #{pagnn_aggregation.3} parent=39 // pred_fallthru
          _
        // Predicated region
        $region86: #{pagnn_aggregation.3} parent=39 // pred_check
          %p416 = pneg %p101
        $region87: #{pagnn_aggregation.3} parent=39 // pred_check_branch
          %418 = sbr.rel (%p416) target = $region89
        $region88: #{pagnn_aggregation.3} parent=39 // pred_region
          %s419 = smul.u32 16, %s23
          %p420 = scmp.lt.s32.totalorder %s419, 31
          %s421 = scalar_select %p420, %s419, 31
          %s422 = smul.addr %s421, 8
          %s423 = scalar_lea.vmem %s2, %s422
          %s424 = smul.u32 16, %s23
        $region89: #{pagnn_aggregation.3} parent=39 // pred_fallthru
          _
      $region40: #{pagnn_aggregation.3} parent=5 // pred_fallthru
        _
      %p425 = scmp.le.s32.totalorder 1, %s15
      %p426 = scmp.lt.s32.totalorder %s15, 5
      %p427 = pnand %p425, %p426
      %p428 = pneg %p427
      // Predicated region
      $region90: #{pagnn_aggregation.3} parent=5 // pred_check
        _
      $region91: #{pagnn_aggregation.3} parent=5 // pred_check_branch
        %430 = sbr.rel (%p427) target = $region93
      $region92: #{pagnn_aggregation.3} parent=5 // pred_region
        %s431 = ssub.s32 %s15, 1
        %s432 = sand.u32 %s42, 1
        %s433 = sand.u32 %s42, 1
        %s434 = smul.addr %s433, 64
        %s435 = scalar_lea.vmem [#allocation6], %s434
        // Predicated region
        $region94: #{pagnn_aggregation.3} parent=92 // pred_check
          %p436 = pneg %p55
        $region95: #{pagnn_aggregation.3} parent=92 // pred_check_branch
          %438 = sbr.rel (%p436) target = $region97
        $region96: #{pagnn_aggregation.3} parent=92 // pred_region
          _
        $region97: #{pagnn_aggregation.3} parent=92 // pred_fallthru
          _
        %s439 = sand.u32 %s42, 1
        %s440 = sand.u32 %s42, 1
        %s441 = smul.addr %s440, 64
        %s442 = scalar_lea.vmem [#allocation6], %s441
        %p443 = pneg %p55
        %p444 = pneg %p52
        %s445 = smul.u32 16, %s24
        %p446 = scmp.lt.s32.totalorder %s445, 31
        %s447 = scalar_select %p446, %s445, 31
        %s448 = smul.addr %s447, 8
        %s449 = scalar_lea.vmem %s1, %s448
        %p450 = pneg %p81
        %p451 = pneg %p78
        %s452 = smul.u32 16, %s25
        %p453 = scmp.lt.s32.totalorder %s452, 31
        %s454 = scalar_select %p453, %s452, 31
        %s455 = smul.addr %s454, 8
        %s456 = scalar_lea.vmem %s2, %s455
        %p457 = pneg %p107
        %p458 = pneg %p104
        %p459 = pneg %p128
        %p460 = pneg %p125
        %p461 = pneg %p149
        %p462 = pneg %p146
        %p463 = pneg %p170
        %p464 = pneg %p167
        %p465 = pneg %p191
        %p466 = pneg %p188
        %p467 = pneg %p212
        %p468 = pneg %p209
        %p469 = pneg %p233
        %p470 = pneg %p230
        %p471 = pneg %p259
        %p472 = pneg %p256
        %s473 = smul.u32 16, %s24
        %p474 = scmp.lt.s32.totalorder %s473, 31
        %s475 = scalar_select %p474, %s473, 31
        %s476 = smul.addr %s475, 8
        %s477 = scalar_lea.vmem %s9, %s476
        %s478 = smul.u32 16, %s24
        %s479 = smul.u32 16, %s24
        %p480 = scmp.lt.s32.totalorder %s479, 31
        %s481 = scalar_select %p480, %s479, 31
        %s482 = smul.addr %s481, 8
        %s483 = scalar_lea.vmem %s1, %s482
        %s484 = smul.u32 16, %s24
        %s485 = smul.u32 16, %s25
        %p486 = scmp.lt.s32.totalorder %s485, 31
        %s487 = scalar_select %p486, %s485, 31
        %s488 = smul.addr %s487, 8
        %s489 = scalar_lea.vmem %s2, %s488
        %s490 = smul.u32 16, %s25
        %s491 = smul.u32 16, %s24
        %p492 = scmp.lt.s32.totalorder %s491, 31
        %s493 = scalar_select %p492, %s491, 31
        %s494 = smul.addr %s493, 8
        %s495 = scalar_lea.vmem %s9, %s494
        %s496 = smul.u32 16, %s24
        %p500 = scmp.eq.s32.totalorder %s25, 0
        // Predicated region
        $region98: #{pagnn_aggregation.3} parent=92 // pred_check
          %p501 = pneg %p500
        $region99: #{pagnn_aggregation.3} parent=92 // pred_check_branch
          %503 = sbr.rel (%p501) target = $region101
        $region100: #{pagnn_aggregation.3} parent=92 // pred_region
          %vm504 = vcmask 7168
          %505 = vst.msk [vmem:[#allocation3] sm:$0xff] %vm504, -1e+30
          %506 = vst.msk [vmem:[#allocation3 + $0x8] sm:$0xff] %vm504, -1e+30
          %507 = vst.msk [vmem:[#allocation3 + $0x10] sm:$0xff] %vm504, -1e+30
          %508 = vst.msk [vmem:[#allocation3 + $0x18] sm:$0xff] %vm504, -1e+30
          %509 = vst.msk [vmem:[#allocation3 + $0x20] sm:$0xff] %vm504, -1e+30
          %510 = vst.msk [vmem:[#allocation3 + $0x28] sm:$0xff] %vm504, -1e+30
          %511 = vst.msk [vmem:[#allocation3 + $0x30] sm:$0xff] %vm504, -1e+30
          %512 = vst.msk [vmem:[#allocation3 + $0x38] sm:$0xff] %vm504, -1e+30
          %513 = vst.msk [vmem:[#allocation3 + $0x40] sm:$0xff] %vm504, -1e+30
          %514 = vst.msk [vmem:[#allocation3 + $0x48] sm:$0xff] %vm504, -1e+30
          %515 = vst.msk [vmem:[#allocation3 + $0x50] sm:$0xff] %vm504, -1e+30
          %516 = vst.msk [vmem:[#allocation3 + $0x58] sm:$0xff] %vm504, -1e+30
          %517 = vst.msk [vmem:[#allocation3 + $0x60] sm:$0xff] %vm504, -1e+30
          %518 = vst.msk [vmem:[#allocation3 + $0x68] sm:$0xff] %vm504, -1e+30
          %519 = vst.msk [vmem:[#allocation3 + $0x70] sm:$0xff] %vm504, -1e+30
          %520 = vst.msk [vmem:[#allocation3 + $0x78] sm:$0xff] %vm504, -1e+30
          %521 = vst.msk [vmem:[#allocation3 + $0x80] sm:$0xff] %vm504, -1e+30
          %522 = vst.msk [vmem:[#allocation3 + $0x88] sm:$0xff] %vm504, -1e+30
          %523 = vst.msk [vmem:[#allocation3 + $0x90] sm:$0xff] %vm504, -1e+30
          %524 = vst.msk [vmem:[#allocation3 + $0x98] sm:$0xff] %vm504, -1e+30
          %525 = vst.msk [vmem:[#allocation3 + $0xa0] sm:$0xff] %vm504, -1e+30
          %526 = vst.msk [vmem:[#allocation3 + $0xa8] sm:$0xff] %vm504, -1e+30
          %527 = vst.msk [vmem:[#allocation3 + $0xb0] sm:$0xff] %vm504, -1e+30
          %528 = vst.msk [vmem:[#allocation3 + $0xb8] sm:$0xff] %vm504, -1e+30
          %529 = vst.msk [vmem:[#allocation3 + $0xc0] sm:$0xff] %vm504, -1e+30
          %530 = vst.msk [vmem:[#allocation3 + $0xc8] sm:$0xff] %vm504, -1e+30
          %531 = vst.msk [vmem:[#allocation3 + $0xd0] sm:$0xff] %vm504, -1e+30
          %532 = vst.msk [vmem:[#allocation3 + $0xd8] sm:$0xff] %vm504, -1e+30
          %533 = vst.msk [vmem:[#allocation3 + $0xe0] sm:$0xff] %vm504, -1e+30
          %534 = vst.msk [vmem:[#allocation3 + $0xe8] sm:$0xff] %vm504, -1e+30
          %535 = vst.msk [vmem:[#allocation3 + $0xf0] sm:$0xff] %vm504, -1e+30
          %536 = vst.msk [vmem:[#allocation3 + $0xf8] sm:$0xff] %vm504, -1e+30
          %537 = vst.msk [vmem:[#allocation4] sm:$0xff] %vm504, 0.0
          %538 = vst.msk [vmem:[#allocation4 + $0x8] sm:$0xff] %vm504, 0.0
          %539 = vst.msk [vmem:[#allocation4 + $0x10] sm:$0xff] %vm504, 0.0
          %540 = vst.msk [vmem:[#allocation4 + $0x18] sm:$0xff] %vm504, 0.0
          %541 = vst.msk [vmem:[#allocation4 + $0x20] sm:$0xff] %vm504, 0.0
          %542 = vst.msk [vmem:[#allocation4 + $0x28] sm:$0xff] %vm504, 0.0
          %543 = vst.msk [vmem:[#allocation4 + $0x30] sm:$0xff] %vm504, 0.0
          %544 = vst.msk [vmem:[#allocation4 + $0x38] sm:$0xff] %vm504, 0.0
          %545 = vst.msk [vmem:[#allocation4 + $0x40] sm:$0xff] %vm504, 0.0
          %546 = vst.msk [vmem:[#allocation4 + $0x48] sm:$0xff] %vm504, 0.0
          %547 = vst.msk [vmem:[#allocation4 + $0x50] sm:$0xff] %vm504, 0.0
          %548 = vst.msk [vmem:[#allocation4 + $0x58] sm:$0xff] %vm504, 0.0
          %549 = vst.msk [vmem:[#allocation4 + $0x60] sm:$0xff] %vm504, 0.0
          %550 = vst.msk [vmem:[#allocation4 + $0x68] sm:$0xff] %vm504, 0.0
          %551 = vst.msk [vmem:[#allocation4 + $0x70] sm:$0xff] %vm504, 0.0
          %552 = vst.msk [vmem:[#allocation4 + $0x78] sm:$0xff] %vm504, 0.0
          %553 = vst.msk [vmem:[#allocation4 + $0x80] sm:$0xff] %vm504, 0.0
          %554 = vst.msk [vmem:[#allocation4 + $0x88] sm:$0xff] %vm504, 0.0
          %555 = vst.msk [vmem:[#allocation4 + $0x90] sm:$0xff] %vm504, 0.0
          %556 = vst.msk [vmem:[#allocation4 + $0x98] sm:$0xff] %vm504, 0.0
          %557 = vst.msk [vmem:[#allocation4 + $0xa0] sm:$0xff] %vm504, 0.0
          %558 = vst.msk [vmem:[#allocation4 + $0xa8] sm:$0xff] %vm504, 0.0
          %559 = vst.msk [vmem:[#allocation4 + $0xb0] sm:$0xff] %vm504, 0.0
          %560 = vst.msk [vmem:[#allocation4 + $0xb8] sm:$0xff] %vm504, 0.0
          %561 = vst.msk [vmem:[#allocation4 + $0xc0] sm:$0xff] %vm504, 0.0
          %562 = vst.msk [vmem:[#allocation4 + $0xc8] sm:$0xff] %vm504, 0.0
          %563 = vst.msk [vmem:[#allocation4 + $0xd0] sm:$0xff] %vm504, 0.0
          %564 = vst.msk [vmem:[#allocation4 + $0xd8] sm:$0xff] %vm504, 0.0
          %565 = vst.msk [vmem:[#allocation4 + $0xe0] sm:$0xff] %vm504, 0.0
          %566 = vst.msk [vmem:[#allocation4 + $0xe8] sm:$0xff] %vm504, 0.0
          %567 = vst.msk [vmem:[#allocation4 + $0xf0] sm:$0xff] %vm504, 0.0
          %568 = vst.msk [vmem:[#allocation4 + $0xf8] sm:$0xff] %vm504, 0.0
          %vm569 = vcmask 261120
          %570 = vst.msk [vmem:[#allocation5] sm:$0xff] %vm569, 0.0
          %571 = vst.msk [vmem:[#allocation5 + $0x8] sm:$0xff] %vm569, 0.0
          %572 = vst.msk [vmem:[#allocation5 + $0x10] sm:$0xff] %vm569, 0.0
          %573 = vst.msk [vmem:[#allocation5 + $0x18] sm:$0xff] %vm569, 0.0
          %574 = vst.msk [vmem:[#allocation5 + $0x20] sm:$0xff] %vm569, 0.0
          %575 = vst.msk [vmem:[#allocation5 + $0x28] sm:$0xff] %vm569, 0.0
          %576 = vst.msk [vmem:[#allocation5 + $0x30] sm:$0xff] %vm569, 0.0
          %577 = vst.msk [vmem:[#allocation5 + $0x38] sm:$0xff] %vm569, 0.0
          %578 = vst.msk [vmem:[#allocation5 + $0x40] sm:$0xff] %vm569, 0.0
          %579 = vst.msk [vmem:[#allocation5 + $0x48] sm:$0xff] %vm569, 0.0
          %580 = vst.msk [vmem:[#allocation5 + $0x50] sm:$0xff] %vm569, 0.0
          %581 = vst.msk [vmem:[#allocation5 + $0x58] sm:$0xff] %vm569, 0.0
          %582 = vst.msk [vmem:[#allocation5 + $0x60] sm:$0xff] %vm569, 0.0
          %583 = vst.msk [vmem:[#allocation5 + $0x68] sm:$0xff] %vm569, 0.0
          %584 = vst.msk [vmem:[#allocation5 + $0x70] sm:$0xff] %vm569, 0.0
          %585 = vst.msk [vmem:[#allocation5 + $0x78] sm:$0xff] %vm569, 0.0
          %586 = vst.msk [vmem:[#allocation5 + $0x80] sm:$0xff] %vm569, 0.0
          %587 = vst.msk [vmem:[#allocation5 + $0x88] sm:$0xff] %vm569, 0.0
          %588 = vst.msk [vmem:[#allocation5 + $0x90] sm:$0xff] %vm569, 0.0
          %589 = vst.msk [vmem:[#allocation5 + $0x98] sm:$0xff] %vm569, 0.0
          %590 = vst.msk [vmem:[#allocation5 + $0xa0] sm:$0xff] %vm569, 0.0
          %591 = vst.msk [vmem:[#allocation5 + $0xa8] sm:$0xff] %vm569, 0.0
          %592 = vst.msk [vmem:[#allocation5 + $0xb0] sm:$0xff] %vm569, 0.0
          %593 = vst.msk [vmem:[#allocation5 + $0xb8] sm:$0xff] %vm569, 0.0
          %594 = vst.msk [vmem:[#allocation5 + $0xc0] sm:$0xff] %vm569, 0.0
          %595 = vst.msk [vmem:[#allocation5 + $0xc8] sm:$0xff] %vm569, 0.0
          %596 = vst.msk [vmem:[#allocation5 + $0xd0] sm:$0xff] %vm569, 0.0
          %597 = vst.msk [vmem:[#allocation5 + $0xd8] sm:$0xff] %vm569, 0.0
          %598 = vst.msk [vmem:[#allocation5 + $0xe0] sm:$0xff] %vm569, 0.0
          %599 = vst.msk [vmem:[#allocation5 + $0xe8] sm:$0xff] %vm569, 0.0
          %600 = vst.msk [vmem:[#allocation5 + $0xf0] sm:$0xff] %vm569, 0.0
          %601 = vst.msk [vmem:[#allocation5 + $0xf8] sm:$0xff] %vm569, 0.0
          %v602 = vld [vmem:[%s483] sm:$0xff]
          %v603 = vld [vmem:[%s483 + $0x8] sm:$0xff]
          %v604 = vld [vmem:[%s483 + $0x10] sm:$0xff]
          %v605 = vld [vmem:[%s483 + $0x18] sm:$0xff]
          %v606 = vld [vmem:[%s483 + $0x20] sm:$0xff]
          %v607 = vld [vmem:[%s483 + $0x28] sm:$0xff]
          %v608 = vld [vmem:[%s483 + $0x30] sm:$0xff]
          %v609 = vld [vmem:[%s483 + $0x38] sm:$0xff]
          %v610 = vld [vmem:[%s483 + $0x40] sm:$0xff]
          %v611 = vld [vmem:[%s483 + $0x48] sm:$0xff]
          %v612 = vld [vmem:[%s483 + $0x50] sm:$0xff]
          %v613 = vld [vmem:[%s483 + $0x58] sm:$0xff]
          %v614 = vld [vmem:[%s483 + $0x60] sm:$0xff]
          %v615 = vld [vmem:[%s483 + $0x68] sm:$0xff]
          %v616 = vld [vmem:[%s483 + $0x70] sm:$0xff]
          %v617 = vld [vmem:[%s483 + $0x78] sm:$0xff]
          %v618 = vld [vmem:[%s5] sm:$0x1]
          %v620 = vlaneseq
          %v621 = vshrl.u32 %v620, 7
          %v622 = vsub.s32 0, %v621
          %v623 = vrot.slane %v618, %v622
          %v625 = vmul.f32 %v602, %v623
          %v626 = vmul.f32 %v603, %v623
          %v627 = vmul.f32 %v604, %v623
          %v628 = vmul.f32 %v605, %v623
          %v629 = vmul.f32 %v606, %v623
          %v630 = vmul.f32 %v607, %v623
          %v631 = vmul.f32 %v608, %v623
          %v632 = vmul.f32 %v609, %v623
          %v633 = vmul.f32 %v610, %v623
          %v634 = vmul.f32 %v611, %v623
          %v635 = vmul.f32 %v612, %v623
          %v636 = vmul.f32 %v613, %v623
          %v637 = vmul.f32 %v614, %v623
          %v638 = vmul.f32 %v615, %v623
          %v639 = vmul.f32 %v616, %v623
          %v640 = vmul.f32 %v617, %v623
          %v641 = vsel %vm569, %v625, 0.0
          %642 = vadd.xlane.f32.xlu0 %v641
          %v643 = vpop.xlane.xlu0 %642
          %v644 = vsel %vm569, %v626, 0.0
          %645 = vadd.xlane.f32.xlu0 %v644
          %v646 = vpop.xlane.xlu0 %645
          %v647 = vsel %vm569, %v627, 0.0
          %648 = vadd.xlane.f32.xlu0 %v647
          %v649 = vpop.xlane.xlu0 %648
          %v650 = vsel %vm569, %v628, 0.0
          %651 = vadd.xlane.f32.xlu0 %v650
          %v652 = vpop.xlane.xlu0 %651
          %v653 = vsel %vm569, %v629, 0.0
          %654 = vadd.xlane.f32.xlu0 %v653
          %v655 = vpop.xlane.xlu0 %654
          %v656 = vsel %vm569, %v630, 0.0
          %657 = vadd.xlane.f32.xlu0 %v656
          %v658 = vpop.xlane.xlu0 %657
          %v659 = vsel %vm569, %v631, 0.0
          %660 = vadd.xlane.f32.xlu0 %v659
          %v661 = vpop.xlane.xlu0 %660
          %v662 = vsel %vm569, %v632, 0.0
          %663 = vadd.xlane.f32.xlu0 %v662
          %v664 = vpop.xlane.xlu0 %663
          %v665 = vsel %vm569, %v633, 0.0
          %666 = vadd.xlane.f32.xlu0 %v665
          %v667 = vpop.xlane.xlu0 %666
          %v668 = vsel %vm569, %v634, 0.0
          %669 = vadd.xlane.f32.xlu0 %v668
          %v670 = vpop.xlane.xlu0 %669
          %v671 = vsel %vm569, %v635, 0.0
          %672 = vadd.xlane.f32.xlu0 %v671
          %v673 = vpop.xlane.xlu0 %672
          %v674 = vsel %vm569, %v636, 0.0
          %675 = vadd.xlane.f32.xlu0 %v674
          %v676 = vpop.xlane.xlu0 %675
          %v677 = vsel %vm569, %v637, 0.0
          %678 = vadd.xlane.f32.xlu0 %v677
          %v679 = vpop.xlane.xlu0 %678
          %v680 = vsel %vm569, %v638, 0.0
          %681 = vadd.xlane.f32.xlu0 %v680
          %v682 = vpop.xlane.xlu0 %681
          %v683 = vsel %vm569, %v639, 0.0
          %684 = vadd.xlane.f32.xlu0 %v683
          %v685 = vpop.xlane.xlu0 %684
          %v686 = vsel %vm569, %v640, 0.0
          %687 = vadd.xlane.f32.xlu0 %v686
          %v688 = vpop.xlane.xlu0 %687
          %689 = vst.msk [vmem:[#allocation2] sm:$0xff] %vm504, %v643
          %690 = vst.msk [vmem:[#allocation2 + $0x8] sm:$0xff] %vm504, %v646
          %691 = vst.msk [vmem:[#allocation2 + $0x10] sm:$0xff] %vm504, %v649
          %692 = vst.msk [vmem:[#allocation2 + $0x18] sm:$0xff] %vm504, %v652
          %693 = vst.msk [vmem:[#allocation2 + $0x20] sm:$0xff] %vm504, %v655
          %694 = vst.msk [vmem:[#allocation2 + $0x28] sm:$0xff] %vm504, %v658
          %695 = vst.msk [vmem:[#allocation2 + $0x30] sm:$0xff] %vm504, %v661
          %696 = vst.msk [vmem:[#allocation2 + $0x38] sm:$0xff] %vm504, %v664
          %697 = vst.msk [vmem:[#allocation2 + $0x40] sm:$0xff] %vm504, %v667
          %698 = vst.msk [vmem:[#allocation2 + $0x48] sm:$0xff] %vm504, %v670
          %699 = vst.msk [vmem:[#allocation2 + $0x50] sm:$0xff] %vm504, %v673
          %700 = vst.msk [vmem:[#allocation2 + $0x58] sm:$0xff] %vm504, %v676
          %701 = vst.msk [vmem:[#allocation2 + $0x60] sm:$0xff] %vm504, %v679
          %702 = vst.msk [vmem:[#allocation2 + $0x68] sm:$0xff] %vm504, %v682
          %703 = vst.msk [vmem:[#allocation2 + $0x70] sm:$0xff] %vm504, %v685
          %704 = vst.msk [vmem:[#allocation2 + $0x78] sm:$0xff] %vm504, %v688
          %s705 = scalar_lea.vmem %s5, 1
          %v706 = vld [vmem:[%s705] sm:$0x1]
          %v708 = vlaneseq
          %v709 = vshrl.u32 %v708, 7
          %v710 = vsub.s32 0, %v709
          %v711 = vrot.slane %v706, %v710
          %v713 = vmul.f32 %v602, %v711
          %v714 = vmul.f32 %v603, %v711
          %v715 = vmul.f32 %v604, %v711
          %v716 = vmul.f32 %v605, %v711
          %v717 = vmul.f32 %v606, %v711
          %v718 = vmul.f32 %v607, %v711
          %v719 = vmul.f32 %v608, %v711
          %v720 = vmul.f32 %v609, %v711
          %v721 = vmul.f32 %v610, %v711
          %v722 = vmul.f32 %v611, %v711
          %v723 = vmul.f32 %v612, %v711
          %v724 = vmul.f32 %v613, %v711
          %v725 = vmul.f32 %v614, %v711
          %v726 = vmul.f32 %v615, %v711
          %v727 = vmul.f32 %v616, %v711
          %v728 = vmul.f32 %v617, %v711
          %v729 = vsel %vm569, %v713, 0.0
          %730 = vadd.xlane.f32.xlu0 %v729
          %v731 = vpop.xlane.xlu0 %730
          %v732 = vsel %vm569, %v714, 0.0
          %733 = vadd.xlane.f32.xlu0 %v732
          %v734 = vpop.xlane.xlu0 %733
          %v735 = vsel %vm569, %v715, 0.0
          %736 = vadd.xlane.f32.xlu0 %v735
          %v737 = vpop.xlane.xlu0 %736
          %v738 = vsel %vm569, %v716, 0.0
          %739 = vadd.xlane.f32.xlu0 %v738
          %v740 = vpop.xlane.xlu0 %739
          %v741 = vsel %vm569, %v717, 0.0
          %742 = vadd.xlane.f32.xlu0 %v741
          %v743 = vpop.xlane.xlu0 %742
          %v744 = vsel %vm569, %v718, 0.0
          %745 = vadd.xlane.f32.xlu0 %v744
          %v746 = vpop.xlane.xlu0 %745
          %v747 = vsel %vm569, %v719, 0.0
          %748 = vadd.xlane.f32.xlu0 %v747
          %v749 = vpop.xlane.xlu0 %748
          %v750 = vsel %vm569, %v720, 0.0
          %751 = vadd.xlane.f32.xlu0 %v750
          %v752 = vpop.xlane.xlu0 %751
          %v753 = vsel %vm569, %v721, 0.0
          %754 = vadd.xlane.f32.xlu0 %v753
          %v755 = vpop.xlane.xlu0 %754
          %v756 = vsel %vm569, %v722, 0.0
          %757 = vadd.xlane.f32.xlu0 %v756
          %v758 = vpop.xlane.xlu0 %757
          %v759 = vsel %vm569, %v723, 0.0
          %760 = vadd.xlane.f32.xlu0 %v759
          %v761 = vpop.xlane.xlu0 %760
          %v762 = vsel %vm569, %v724, 0.0
          %763 = vadd.xlane.f32.xlu0 %v762
          %v764 = vpop.xlane.xlu0 %763
          %v765 = vsel %vm569, %v725, 0.0
          %766 = vadd.xlane.f32.xlu0 %v765
          %v767 = vpop.xlane.xlu0 %766
          %v768 = vsel %vm569, %v726, 0.0
          %769 = vadd.xlane.f32.xlu0 %v768
          %v770 = vpop.xlane.xlu0 %769
          %v771 = vsel %vm569, %v727, 0.0
          %772 = vadd.xlane.f32.xlu0 %v771
          %v773 = vpop.xlane.xlu0 %772
          %v774 = vsel %vm569, %v728, 0.0
          %775 = vadd.xlane.f32.xlu0 %v774
          %v776 = vpop.xlane.xlu0 %775
          %s777 = scalar_lea.vmem [#allocation2], 128
          %778 = vst.msk [vmem:[%s777] sm:$0xff] %vm504, %v731
          %779 = vst.msk [vmem:[%s777 + $0x8] sm:$0xff] %vm504, %v734
          %780 = vst.msk [vmem:[%s777 + $0x10] sm:$0xff] %vm504, %v737
          %781 = vst.msk [vmem:[%s777 + $0x18] sm:$0xff] %vm504, %v740
          %782 = vst.msk [vmem:[%s777 + $0x20] sm:$0xff] %vm504, %v743
          %783 = vst.msk [vmem:[%s777 + $0x28] sm:$0xff] %vm504, %v746
          %784 = vst.msk [vmem:[%s777 + $0x30] sm:$0xff] %vm504, %v749
          %785 = vst.msk [vmem:[%s777 + $0x38] sm:$0xff] %vm504, %v752
          %786 = vst.msk [vmem:[%s777 + $0x40] sm:$0xff] %vm504, %v755
          %787 = vst.msk [vmem:[%s777 + $0x48] sm:$0xff] %vm504, %v758
          %788 = vst.msk [vmem:[%s777 + $0x50] sm:$0xff] %vm504, %v761
          %789 = vst.msk [vmem:[%s777 + $0x58] sm:$0xff] %vm504, %v764
          %790 = vst.msk [vmem:[%s777 + $0x60] sm:$0xff] %vm504, %v767
          %791 = vst.msk [vmem:[%s777 + $0x68] sm:$0xff] %vm504, %v770
          %792 = vst.msk [vmem:[%s777 + $0x70] sm:$0xff] %vm504, %v773
          %793 = vst.msk [vmem:[%s777 + $0x78] sm:$0xff] %vm504, %v776
        $region101: #{pagnn_aggregation.3} parent=92 // pred_fallthru
          _
        %s794 = smul.u32 %s24, 128
        %v795 = vlaneseq
        %v796 = vshrl.u32 %v795, 7
        %v797 = vadd.s32 %v796, 8
        %v798 = vadd.s32 %v796, 16
        %v799 = vadd.s32 %v796, 24
        %v800 = vadd.s32 %v796, 32
        %v801 = vadd.s32 %v796, 40
        %v802 = vadd.s32 %v796, 48
        %v803 = vadd.s32 %v796, 56
        %v804 = vadd.s32 %v796, 64
        %v805 = vadd.s32 %v796, 72
        %v806 = vadd.s32 %v796, 80
        %v807 = vadd.s32 %v796, 88
        %v808 = vadd.s32 %v796, 96
        %v809 = vadd.s32 %v796, 104
        %v810 = vadd.s32 %v796, 112
        %v811 = vadd.s32 %v796, 120
        %v812 = vstv %s794
        %v813 = vadd.s32 %v812, %v796
        %v814 = vadd.s32 %v812, %v797
        %v815 = vadd.s32 %v812, %v798
        %v816 = vadd.s32 %v812, %v799
        %v817 = vadd.s32 %v812, %v800
        %v818 = vadd.s32 %v812, %v801
        %v819 = vadd.s32 %v812, %v802
        %v820 = vadd.s32 %v812, %v803
        %v821 = vadd.s32 %v812, %v804
        %v822 = vadd.s32 %v812, %v805
        %v823 = vadd.s32 %v812, %v806
        %v824 = vadd.s32 %v812, %v807
        %v825 = vadd.s32 %v812, %v808
        %v826 = vadd.s32 %v812, %v809
        %v827 = vadd.s32 %v812, %v810
        %v828 = vadd.s32 %v812, %v811
        %s829 = smul.u32 %s25, 128
        %v830 = vlaneseq
        %v831 = vand.u32 %v830, 127
        %v832 = vstv %s829
        %v833 = vadd.s32 %v832, %v831
        %v834 = vld [vmem:[%s435] sm:$0xf]
        %v835 = vld [vmem:[%s435 + $0x4] sm:$0xf]
        %v836 = vld [vmem:[%s435 + $0x8] sm:$0xf]
        %v837 = vld [vmem:[%s435 + $0xc] sm:$0xf]
        %v838 = vld [vmem:[%s435 + $0x10] sm:$0xf]
        %v839 = vld [vmem:[%s435 + $0x14] sm:$0xf]
        %v840 = vld [vmem:[%s435 + $0x18] sm:$0xf]
        %v841 = vld [vmem:[%s435 + $0x1c] sm:$0xf]
        %v842 = vld [vmem:[%s435 + $0x20] sm:$0xf]
        %v843 = vld [vmem:[%s435 + $0x24] sm:$0xf]
        %v844 = vld [vmem:[%s435 + $0x28] sm:$0xf]
        %v845 = vld [vmem:[%s435 + $0x2c] sm:$0xf]
        %v846 = vld [vmem:[%s435 + $0x30] sm:$0xf]
        %v847 = vld [vmem:[%s435 + $0x34] sm:$0xf]
        %v848 = vld [vmem:[%s435 + $0x38] sm:$0xf]
        %v849 = vld [vmem:[%s435 + $0x3c] sm:$0xf]
        %vm850 = vcmp.gt.bf16.partialorder %v834, 0
        %vm851 = vcmp.gt.bf16.partialorder %v835, 0
        %vm852 = vcmp.gt.bf16.partialorder %v836, 0
        %vm853 = vcmp.gt.bf16.partialorder %v837, 0
        %vm854 = vcmp.gt.bf16.partialorder %v838, 0
        %vm855 = vcmp.gt.bf16.partialorder %v839, 0
        %vm856 = vcmp.gt.bf16.partialorder %v840, 0
        %vm857 = vcmp.gt.bf16.partialorder %v841, 0
        %vm858 = vcmp.gt.bf16.partialorder %v842, 0
        %vm859 = vcmp.gt.bf16.partialorder %v843, 0
        %vm860 = vcmp.gt.bf16.partialorder %v844, 0
        %vm861 = vcmp.gt.bf16.partialorder %v845, 0
        %vm862 = vcmp.gt.bf16.partialorder %v846, 0
        %vm863 = vcmp.gt.bf16.partialorder %v847, 0
        %vm864 = vcmp.gt.bf16.partialorder %v848, 0
        %vm865 = vcmp.gt.bf16.partialorder %v849, 0
        %vm866 = vcmp.eq.s32.totalorder %v813, %v833
        %vm867 = vcmp.eq.s32.totalorder %v814, %v833
        %vm868 = vcmp.eq.s32.totalorder %v815, %v833
        %vm869 = vcmp.eq.s32.totalorder %v816, %v833
        %vm870 = vcmp.eq.s32.totalorder %v817, %v833
        %vm871 = vcmp.eq.s32.totalorder %v818, %v833
        %vm872 = vcmp.eq.s32.totalorder %v819, %v833
        %vm873 = vcmp.eq.s32.totalorder %v820, %v833
        %vm874 = vcmp.eq.s32.totalorder %v821, %v833
        %vm875 = vcmp.eq.s32.totalorder %v822, %v833
        %vm876 = vcmp.eq.s32.totalorder %v823, %v833
        %vm877 = vcmp.eq.s32.totalorder %v824, %v833
        %vm878 = vcmp.eq.s32.totalorder %v825, %v833
        %vm879 = vcmp.eq.s32.totalorder %v826, %v833
        %vm880 = vcmp.eq.s32.totalorder %v827, %v833
        %vm881 = vcmp.eq.s32.totalorder %v828, %v833
        %vm882 = vmpackc.low %vm866, %vm866
        %vm883 = vmpackc.low %vm867, %vm867
        %vm884 = vmpackc.low %vm868, %vm868
        %vm885 = vmpackc.low %vm869, %vm869
        %vm886 = vmpackc.low %vm870, %vm870
        %vm887 = vmpackc.low %vm871, %vm871
        %vm888 = vmpackc.low %vm872, %vm872
        %vm889 = vmpackc.low %vm873, %vm873
        %vm890 = vmpackc.low %vm874, %vm874
        %vm891 = vmpackc.low %vm875, %vm875
        %vm892 = vmpackc.low %vm876, %vm876
        %vm893 = vmpackc.low %vm877, %vm877
        %vm894 = vmpackc.low %vm878, %vm878
        %vm895 = vmpackc.low %vm879, %vm879
        %vm896 = vmpackc.low %vm880, %vm880
        %vm897 = vmpackc.low %vm881, %vm881
        %vm898 = vmor %vm850, %vm882
        %vm899 = vmor %vm851, %vm883
        %vm900 = vmor %vm852, %vm884
        %vm901 = vmor %vm853, %vm885
        %vm902 = vmor %vm854, %vm886
        %vm903 = vmor %vm855, %vm887
        %vm904 = vmor %vm856, %vm888
        %vm905 = vmor %vm857, %vm889
        %vm906 = vmor %vm858, %vm890
        %vm907 = vmor %vm859, %vm891
        %vm908 = vmor %vm860, %vm892
        %vm909 = vmor %vm861, %vm893
        %vm910 = vmor %vm862, %vm894
        %vm911 = vmor %vm863, %vm895
        %vm912 = vmor %vm864, %vm896
        %vm913 = vmor %vm865, %vm897
        %v914 = vld [vmem:[%s489] sm:$0xff]
        %v915 = vld [vmem:[%s489 + $0x8] sm:$0xff]
        %v916 = vld [vmem:[%s489 + $0x10] sm:$0xff]
        %v917 = vld [vmem:[%s489 + $0x18] sm:$0xff]
        %v918 = vld [vmem:[%s489 + $0x20] sm:$0xff]
        %v919 = vld [vmem:[%s489 + $0x28] sm:$0xff]
        %v920 = vld [vmem:[%s489 + $0x30] sm:$0xff]
        %v921 = vld [vmem:[%s489 + $0x38] sm:$0xff]
        %v922 = vld [vmem:[%s489 + $0x40] sm:$0xff]
        %v923 = vld [vmem:[%s489 + $0x48] sm:$0xff]
        %v924 = vld [vmem:[%s489 + $0x50] sm:$0xff]
        %v925 = vld [vmem:[%s489 + $0x58] sm:$0xff]
        %v926 = vld [vmem:[%s489 + $0x60] sm:$0xff]
        %v927 = vld [vmem:[%s489 + $0x68] sm:$0xff]
        %v928 = vld [vmem:[%s489 + $0x70] sm:$0xff]
        %v929 = vld [vmem:[%s489 + $0x78] sm:$0xff]
        %v930 = vpack.c.bf16 %v915, %v914
        %v931 = vpack.c.bf16 %v917, %v916
        %v932 = vpack.c.bf16 %v919, %v918
        %v933 = vpack.c.bf16 %v921, %v920
        %v934 = vpack.c.bf16 %v923, %v922
        %v935 = vpack.c.bf16 %v925, %v924
        %v936 = vpack.c.bf16 %v927, %v926
        %v937 = vpack.c.bf16 %v929, %v928
        %v938 = vld [vmem:[%s3] sm:$0xf]
        %v939 = vld [vmem:[%s3 + $0x4] sm:$0xf]
        %v940 = vld [vmem:[%s3 + $0x8] sm:$0xf]
        %v941 = vld [vmem:[%s3 + $0xc] sm:$0xf]
        %v946 = vunpack.c.l.b16 %v938
        %v947 = vunpack.c.l.b16 %v939
        %v948 = vunpack.c.l.b16 %v940
        %v949 = vunpack.c.l.b16 %v941
        %v950 = vpack.c.b16 %v947, %v946
        %v951 = vpack.c.b16 %v949, %v948
        %vm954 = vcmask 261120
        %v956 = vsel %vm954, %v930, 0
        %v959 = vsel %vm954, %v931, 0
        %v962 = vsel %vm954, %v932, 0
        %v965 = vsel %vm954, %v933, 0
        %v968 = vsel %vm954, %v934, 0
        %v971 = vsel %vm954, %v935, 0
        %v974 = vsel %vm954, %v936, 0
        %v977 = vsel %vm954, %v937, 0
        %979 = vmatprep.subr.bf16.mxu0 0
        %980 = vmatpush1.bf16.msra.mxu0 %v950
        %981 = vmatprep.subr.bf16.mxu0 0
        %982 = vmatpush1.bf16.msra.mxu0 %v951
        %983 = vmatprep.subr.bf16.mxu0 0
        %984 = vmatpush1.bf16.msra.mxu0 0
        %985 = vmatprep.subr.bf16.mxu0 0
        %986 = vmatpush1.bf16.msra.mxu0 0
        %987 = vmatprep.subr.bf16.mxu0 0
        %988 = vmatpush1.bf16.msra.mxu0 0
        %989 = vmatprep.subr.bf16.mxu0 0
        %990 = vmatpush1.bf16.msra.mxu0 0
        %991 = vmatprep.subr.bf16.mxu0 0
        %992 = vmatpush1.bf16.msra.mxu0 0
        %993 = vmatprep.subr.bf16.mxu0 0
        %994 = vmatpush1.bf16.msra.mxu0 0
        %995 = vmatprep.subr.bf16.mxu0 0
        %996 = vmatpush1.bf16.msra.mxu0 0
        %997 = vmatprep.subr.bf16.mxu0 0
        %998 = vmatpush1.bf16.msra.mxu0 0
        %999 = vmatprep.subr.bf16.mxu0 0
        %1000 = vmatpush1.bf16.msra.mxu0 0
        %1001 = vmatprep.subr.bf16.mxu0 0
        %1002 = vmatpush1.bf16.msra.mxu0 0
        %1003 = vmatprep.subr.bf16.mxu0 0
        %1004 = vmatpush1.bf16.msra.mxu0 0
        %1005 = vmatprep.subr.bf16.mxu0 0
        %1006 = vmatpush1.bf16.msra.mxu0 0
        %1007 = vmatprep.subr.bf16.mxu0 0
        %1008 = vmatpush1.bf16.msra.mxu0 0
        %1009 = vmatprep.subr.bf16.mxu0 0
        %1010 = vmatpush1.bf16.msra.mxu0 0
        %1011 = vmatprep.mubr.bf16.mxu0 0
        %1012 = vmatmul.mubr.bf16.gmra.mrb[0].mxu0 %v956
        %v1013 = vpop.f32.mrb[0].mxu0
        %v1014 = vadd.f32 0.0, %v1013
        %v1015 = vpop.f32.mrb[0].mxu0
        %v1016 = vpop.f32.mrb[0].mxu0
        %v1017 = vadd.f32 0.0, %v1016
        %v1018 = vpop.f32.mrb[0].mxu0
        %1019 = vmatprep.mubr.bf16.mxu0 0
        %1020 = vmatmul.mubr.bf16.gmra.mrb[0].mxu0 %v959
        %v1021 = vpop.f32.mrb[0].mxu0
        %v1022 = vadd.f32 0.0, %v1021
        %v1023 = vpop.f32.mrb[0].mxu0
        %v1024 = vpop.f32.mrb[0].mxu0
        %v1025 = vadd.f32 0.0, %v1024
        %v1026 = vpop.f32.mrb[0].mxu0
        %1027 = vmatprep.mubr.bf16.mxu0 0
        %1028 = vmatmul.mubr.bf16.gmra.mrb[0].mxu0 %v962
        %v1029 = vpop.f32.mrb[0].mxu0
        %v1030 = vadd.f32 0.0, %v1029
        %v1031 = vpop.f32.mrb[0].mxu0
        %v1032 = vpop.f32.mrb[0].mxu0
        %v1033 = vadd.f32 0.0, %v1032
        %v1034 = vpop.f32.mrb[0].mxu0
        %1035 = vmatprep.mubr.bf16.mxu0 0
        %1036 = vmatmul.mubr.bf16.gmra.mrb[0].mxu0 %v965
        %v1037 = vpop.f32.mrb[0].mxu0
        %v1038 = vadd.f32 0.0, %v1037
        %v1039 = vpop.f32.mrb[0].mxu0
        %v1040 = vpop.f32.mrb[0].mxu0
        %v1041 = vadd.f32 0.0, %v1040
        %v1042 = vpop.f32.mrb[0].mxu0
        %1043 = vmatprep.mubr.bf16.mxu0 0
        %1044 = vmatmul.mubr.bf16.gmra.mrb[0].mxu0 %v968
        %v1045 = vpop.f32.mrb[0].mxu0
        %v1046 = vadd.f32 0.0, %v1045
        %v1047 = vpop.f32.mrb[0].mxu0
        %v1048 = vpop.f32.mrb[0].mxu0
        %v1049 = vadd.f32 0.0, %v1048
        %v1050 = vpop.f32.mrb[0].mxu0
        %1051 = vmatprep.mubr.bf16.mxu0 0
        %1052 = vmatmul.mubr.bf16.gmra.mrb[0].mxu0 %v971
        %v1053 = vpop.f32.mrb[0].mxu0
        %v1054 = vadd.f32 0.0, %v1053
        %v1055 = vpop.f32.mrb[0].mxu0
        %v1056 = vpop.f32.mrb[0].mxu0
        %v1057 = vadd.f32 0.0, %v1056
        %v1058 = vpop.f32.mrb[0].mxu0
        %1059 = vmatprep.mubr.bf16.mxu0 0
        %1060 = vmatmul.mubr.bf16.gmra.mrb[0].mxu0 %v974
        %v1061 = vpop.f32.mrb[0].mxu0
        %v1062 = vadd.f32 0.0, %v1061
        %v1063 = vpop.f32.mrb[0].mxu0
        %v1064 = vpop.f32.mrb[0].mxu0
        %v1065 = vadd.f32 0.0, %v1064
        %v1066 = vpop.f32.mrb[0].mxu0
        %1067 = vmatprep.mubr.bf16.mxu0 0
        %1068 = vmatmul.mubr.bf16.gmra.mrb[0].mxu0 %v977
        %v1069 = vpop.f32.mrb[0].mxu0
        %v1070 = vadd.f32 0.0, %v1069
        %v1071 = vpop.f32.mrb[0].mxu0
        %v1072 = vpop.f32.mrb[0].mxu0
        %v1073 = vadd.f32 0.0, %v1072
        %v1074 = vpop.f32.mrb[0].mxu0
        %1075 = vdwg.mxu0
        %v1076 = vld [vmem:[%s4] sm:$0x1]
        %v1078 = vsel %vm954, %v1076, 0
        %1080 = vmatprep.subr.bf16.mxu0 0
        %1081 = vmatpush1.bf16.xpose.msra.mxu0 %v956
        %1082 = vmatprep.subr.bf16.mxu0 0
        %1083 = vmatpush1.bf16.xpose.msra.mxu0 %v959
        %1084 = vmatprep.subr.bf16.mxu0 0
        %1085 = vmatpush1.bf16.xpose.msra.mxu0 %v962
        %1086 = vmatprep.subr.bf16.mxu0 0
        %1087 = vmatpush1.bf16.xpose.msra.mxu0 %v965
        %1088 = vmatprep.subr.bf16.mxu0 0
        %1089 = vmatpush1.bf16.xpose.msra.mxu0 %v968
        %1090 = vmatprep.subr.bf16.mxu0 0
        %1091 = vmatpush1.bf16.xpose.msra.mxu0 %v971
        %1092 = vmatprep.subr.bf16.mxu0 0
        %1093 = vmatpush1.bf16.xpose.msra.mxu0 %v974
        %1094 = vmatprep.subr.bf16.mxu0 0
        %1095 = vmatpush1.bf16.xpose.msra.mxu0 %v977
        %1096 = vmatprep.subr.bf16.mxu0 0
        %1097 = vmatpush1.bf16.xpose.msra.mxu0 0
        %1098 = vmatprep.subr.bf16.mxu0 0
        %1099 = vmatpush1.bf16.xpose.msra.mxu0 0
        %1100 = vmatprep.subr.bf16.mxu0 0
        %1101 = vmatpush1.bf16.xpose.msra.mxu0 0
        %1102 = vmatprep.subr.bf16.mxu0 0
        %1103 = vmatpush1.bf16.xpose.msra.mxu0 0
        %1104 = vmatprep.subr.bf16.mxu0 0
        %1105 = vmatpush1.bf16.xpose.msra.mxu0 0
        %1106 = vmatprep.subr.bf16.mxu0 0
        %1107 = vmatpush1.bf16.xpose.msra.mxu0 0
        %1108 = vmatprep.subr.bf16.mxu0 0
        %1109 = vmatpush1.bf16.xpose.msra.mxu0 0
        %1110 = vmatprep.subr.bf16.mxu0 0
        %1111 = vmatpush1.bf16.xpose.msra.mxu0 0
        %1112 = vmatprep.mubr.bf16.mxu0 0
        %1113 = vmatmul.mubr.bf16.gmra.mrb[0].mxu0 %v1078
        %v1114 = vpop.f32.mrb[0].mxu0
        %v1115 = vadd.f32 0.0, %v1114
        %v1116 = vpop.f32.mrb[0].mxu0
        %v1117 = vpop.f32.mrb[0].mxu0
        %v1118 = vpop.f32.mrb[0].mxu0
        %1119 = vdwg.mxu0
        %v1120 = vld [vmem:[#allocation2] sm:$0xff]
        %v1121 = vld [vmem:[#allocation2 + $0x8] sm:$0xff]
        %v1122 = vld [vmem:[#allocation2 + $0x10] sm:$0xff]
        %v1123 = vld [vmem:[#allocation2 + $0x18] sm:$0xff]
        %v1124 = vld [vmem:[#allocation2 + $0x20] sm:$0xff]
        %v1125 = vld [vmem:[#allocation2 + $0x28] sm:$0xff]
        %v1126 = vld [vmem:[#allocation2 + $0x30] sm:$0xff]
        %v1127 = vld [vmem:[#allocation2 + $0x38] sm:$0xff]
        %v1128 = vld [vmem:[#allocation2 + $0x40] sm:$0xff]
        %v1129 = vld [vmem:[#allocation2 + $0x48] sm:$0xff]
        %v1130 = vld [vmem:[#allocation2 + $0x50] sm:$0xff]
        %v1131 = vld [vmem:[#allocation2 + $0x58] sm:$0xff]
        %v1132 = vld [vmem:[#allocation2 + $0x60] sm:$0xff]
        %v1133 = vld [vmem:[#allocation2 + $0x68] sm:$0xff]
        %v1134 = vld [vmem:[#allocation2 + $0x70] sm:$0xff]
        %v1135 = vld [vmem:[#allocation2 + $0x78] sm:$0xff]
        %1137 = vset.pattern.permute.xlu0 0
        %1138 = vperm.xlu0 %1137, %v1120
        %v1139 = vpop.permute.xlu0 %1138
        %1142 = vset.pattern.permute.xlu0 0
        %1143 = vperm.xlu0 %1142, %v1121
        %v1144 = vpop.permute.xlu0 %1143
        %1147 = vset.pattern.permute.xlu0 0
        %1148 = vperm.xlu0 %1147, %v1122
        %v1149 = vpop.permute.xlu0 %1148
        %1152 = vset.pattern.permute.xlu0 0
        %1153 = vperm.xlu0 %1152, %v1123
        %v1154 = vpop.permute.xlu0 %1153
        %1157 = vset.pattern.permute.xlu0 0
        %1158 = vperm.xlu0 %1157, %v1124
        %v1159 = vpop.permute.xlu0 %1158
        %1162 = vset.pattern.permute.xlu0 0
        %1163 = vperm.xlu0 %1162, %v1125
        %v1164 = vpop.permute.xlu0 %1163
        %1167 = vset.pattern.permute.xlu0 0
        %1168 = vperm.xlu0 %1167, %v1126
        %v1169 = vpop.permute.xlu0 %1168
        %1172 = vset.pattern.permute.xlu0 0
        %1173 = vperm.xlu0 %1172, %v1127
        %v1174 = vpop.permute.xlu0 %1173
        %1177 = vset.pattern.permute.xlu0 0
        %1178 = vperm.xlu0 %1177, %v1128
        %v1179 = vpop.permute.xlu0 %1178
        %1182 = vset.pattern.permute.xlu0 0
        %1183 = vperm.xlu0 %1182, %v1129
        %v1184 = vpop.permute.xlu0 %1183
        %1187 = vset.pattern.permute.xlu0 0
        %1188 = vperm.xlu0 %1187, %v1130
        %v1189 = vpop.permute.xlu0 %1188
        %1192 = vset.pattern.permute.xlu0 0
        %1193 = vperm.xlu0 %1192, %v1131
        %v1194 = vpop.permute.xlu0 %1193
        %1197 = vset.pattern.permute.xlu0 0
        %1198 = vperm.xlu0 %1197, %v1132
        %v1199 = vpop.permute.xlu0 %1198
        %1202 = vset.pattern.permute.xlu0 0
        %1203 = vperm.xlu0 %1202, %v1133
        %v1204 = vpop.permute.xlu0 %1203
        %1207 = vset.pattern.permute.xlu0 0
        %1208 = vperm.xlu0 %1207, %v1134
        %v1209 = vpop.permute.xlu0 %1208
        %1212 = vset.pattern.permute.xlu0 0
        %1213 = vperm.xlu0 %1212, %v1135
        %v1214 = vpop.permute.xlu0 %1213
        %v1216 = vlaneseq
        %v1217 = vshrl.u32 %v1216, 7
        %v1218 = vsub.s32 0, %v1217
        %v1219 = vrot.slane %v1115, %v1218
        %v1220 = vadd.f32 %v1139, %v1219
        %v1221 = vadd.f32 %v1144, %v1219
        %v1222 = vadd.f32 %v1149, %v1219
        %v1223 = vadd.f32 %v1154, %v1219
        %v1224 = vadd.f32 %v1159, %v1219
        %v1225 = vadd.f32 %v1164, %v1219
        %v1226 = vadd.f32 %v1169, %v1219
        %v1227 = vadd.f32 %v1174, %v1219
        %v1228 = vadd.f32 %v1179, %v1219
        %v1229 = vadd.f32 %v1184, %v1219
        %v1230 = vadd.f32 %v1189, %v1219
        %v1231 = vadd.f32 %v1194, %v1219
        %v1232 = vadd.f32 %v1199, %v1219
        %v1233 = vadd.f32 %v1204, %v1219
        %v1234 = vadd.f32 %v1209, %v1219
        %v1235 = vadd.f32 %v1214, %v1219
        %vm1236 = vcmp.gt.f32.partialorder %v1220, 0.0
        %vm1237 = vcmp.gt.f32.partialorder %v1221, 0.0
        %vm1238 = vcmp.gt.f32.partialorder %v1222, 0.0
        %vm1239 = vcmp.gt.f32.partialorder %v1223, 0.0
        %vm1240 = vcmp.gt.f32.partialorder %v1224, 0.0
        %vm1241 = vcmp.gt.f32.partialorder %v1225, 0.0
        %vm1242 = vcmp.gt.f32.partialorder %v1226, 0.0
        %vm1243 = vcmp.gt.f32.partialorder %v1227, 0.0
        %vm1244 = vcmp.gt.f32.partialorder %v1228, 0.0
        %vm1245 = vcmp.gt.f32.partialorder %v1229, 0.0
        %vm1246 = vcmp.gt.f32.partialorder %v1230, 0.0
        %vm1247 = vcmp.gt.f32.partialorder %v1231, 0.0
        %vm1248 = vcmp.gt.f32.partialorder %v1232, 0.0
        %vm1249 = vcmp.gt.f32.partialorder %v1233, 0.0
        %vm1250 = vcmp.gt.f32.partialorder %v1234, 0.0
        %vm1251 = vcmp.gt.f32.partialorder %v1235, 0.0
        %v1252 = vmul.f32 %v1220, 0.2
        %v1253 = vmul.f32 %v1221, 0.2
        %v1254 = vmul.f32 %v1222, 0.2
        %v1255 = vmul.f32 %v1223, 0.2
        %v1256 = vmul.f32 %v1224, 0.2
        %v1257 = vmul.f32 %v1225, 0.2
        %v1258 = vmul.f32 %v1226, 0.2
        %v1259 = vmul.f32 %v1227, 0.2
        %v1260 = vmul.f32 %v1228, 0.2
        %v1261 = vmul.f32 %v1229, 0.2
        %v1262 = vmul.f32 %v1230, 0.2
        %v1263 = vmul.f32 %v1231, 0.2
        %v1264 = vmul.f32 %v1232, 0.2
        %v1265 = vmul.f32 %v1233, 0.2
        %v1266 = vmul.f32 %v1234, 0.2
        %v1267 = vmul.f32 %v1235, 0.2
        %v1268 = vsel %vm1236, %v1220, %v1252
        %v1269 = vsel %vm1237, %v1221, %v1253
        %v1270 = vsel %vm1238, %v1222, %v1254
        %v1271 = vsel %vm1239, %v1223, %v1255
        %v1272 = vsel %vm1240, %v1224, %v1256
        %v1273 = vsel %vm1241, %v1225, %v1257
        %v1274 = vsel %vm1242, %v1226, %v1258
        %v1275 = vsel %vm1243, %v1227, %v1259
        %v1276 = vsel %vm1244, %v1228, %v1260
        %v1277 = vsel %vm1245, %v1229, %v1261
        %v1278 = vsel %vm1246, %v1230, %v1262
        %v1279 = vsel %vm1247, %v1231, %v1263
        %v1280 = vsel %vm1248, %v1232, %v1264
        %v1281 = vsel %vm1249, %v1233, %v1265
        %v1282 = vsel %vm1250, %v1234, %v1266
        %v1283 = vsel %vm1251, %v1235, %v1267
        %v1284 = vsel %vm898, 65537, 0
        %v1285 = vsel %vm899, 65537, 0
        %v1286 = vsel %vm900, 65537, 0
        %v1287 = vsel %vm901, 65537, 0
        %v1288 = vsel %vm902, 65537, 0
        %v1289 = vsel %vm903, 65537, 0
        %v1290 = vsel %vm904, 65537, 0
        %v1291 = vsel %vm905, 65537, 0
        %v1292 = vsel %vm906, 65537, 0
        %v1293 = vsel %vm907, 65537, 0
        %v1294 = vsel %vm908, 65537, 0
        %v1295 = vsel %vm909, 65537, 0
        %v1296 = vsel %vm910, 65537, 0
        %v1297 = vsel %vm911, 65537, 0
        %v1298 = vsel %vm912, 65537, 0
        %v1299 = vsel %vm913, 65537, 0
        %v1300 = vunpack.c.l.b16 %v1284
        %v1301 = vunpack.c.l.b16 %v1285
        %v1302 = vunpack.c.l.b16 %v1286
        %v1303 = vunpack.c.l.b16 %v1287
        %v1304 = vunpack.c.l.b16 %v1288
        %v1305 = vunpack.c.l.b16 %v1289
        %v1306 = vunpack.c.l.b16 %v1290
        %v1307 = vunpack.c.l.b16 %v1291
        %v1308 = vunpack.c.l.b16 %v1292
        %v1309 = vunpack.c.l.b16 %v1293
        %v1310 = vunpack.c.l.b16 %v1294
        %v1311 = vunpack.c.l.b16 %v1295
        %v1312 = vunpack.c.l.b16 %v1296
        %v1313 = vunpack.c.l.b16 %v1297
        %v1314 = vunpack.c.l.b16 %v1298
        %v1315 = vunpack.c.l.b16 %v1299
        %vm1316 = vcmp.ne.s32.totalorder %v1300, 0
        %vm1317 = vcmp.ne.s32.totalorder %v1301, 0
        %vm1318 = vcmp.ne.s32.totalorder %v1302, 0
        %vm1319 = vcmp.ne.s32.totalorder %v1303, 0
        %vm1320 = vcmp.ne.s32.totalorder %v1304, 0
        %vm1321 = vcmp.ne.s32.totalorder %v1305, 0
        %vm1322 = vcmp.ne.s32.totalorder %v1306, 0
        %vm1323 = vcmp.ne.s32.totalorder %v1307, 0
        %vm1324 = vcmp.ne.s32.totalorder %v1308, 0
        %vm1325 = vcmp.ne.s32.totalorder %v1309, 0
        %vm1326 = vcmp.ne.s32.totalorder %v1310, 0
        %vm1327 = vcmp.ne.s32.totalorder %v1311, 0
        %vm1328 = vcmp.ne.s32.totalorder %v1312, 0
        %vm1329 = vcmp.ne.s32.totalorder %v1313, 0
        %vm1330 = vcmp.ne.s32.totalorder %v1314, 0
        %vm1331 = vcmp.ne.s32.totalorder %v1315, 0
        %v1332 = vsel %vm1316, %v1268, -1e+30
        %v1333 = vsel %vm1317, %v1269, -1e+30
        %v1334 = vsel %vm1318, %v1270, -1e+30
        %v1335 = vsel %vm1319, %v1271, -1e+30
        %v1336 = vsel %vm1320, %v1272, -1e+30
        %v1337 = vsel %vm1321, %v1273, -1e+30
        %v1338 = vsel %vm1322, %v1274, -1e+30
        %v1339 = vsel %vm1323, %v1275, -1e+30
        %v1340 = vsel %vm1324, %v1276, -1e+30
        %v1341 = vsel %vm1325, %v1277, -1e+30
        %v1342 = vsel %vm1326, %v1278, -1e+30
        %v1343 = vsel %vm1327, %v1279, -1e+30
        %v1344 = vsel %vm1328, %v1280, -1e+30
        %v1345 = vsel %vm1329, %v1281, -1e+30
        %v1346 = vsel %vm1330, %v1282, -1e+30
        %v1347 = vsel %vm1331, %v1283, -1e+30
        %v1348 = vld [vmem:[#allocation3] sm:$0xff]
        %v1349 = vld [vmem:[#allocation3 + $0x8] sm:$0xff]
        %v1350 = vld [vmem:[#allocation3 + $0x10] sm:$0xff]
        %v1351 = vld [vmem:[#allocation3 + $0x18] sm:$0xff]
        %v1352 = vld [vmem:[#allocation3 + $0x20] sm:$0xff]
        %v1353 = vld [vmem:[#allocation3 + $0x28] sm:$0xff]
        %v1354 = vld [vmem:[#allocation3 + $0x30] sm:$0xff]
        %v1355 = vld [vmem:[#allocation3 + $0x38] sm:$0xff]
        %v1356 = vld [vmem:[#allocation3 + $0x40] sm:$0xff]
        %v1357 = vld [vmem:[#allocation3 + $0x48] sm:$0xff]
        %v1358 = vld [vmem:[#allocation3 + $0x50] sm:$0xff]
        %v1359 = vld [vmem:[#allocation3 + $0x58] sm:$0xff]
        %v1360 = vld [vmem:[#allocation3 + $0x60] sm:$0xff]
        %v1361 = vld [vmem:[#allocation3 + $0x68] sm:$0xff]
        %v1362 = vld [vmem:[#allocation3 + $0x70] sm:$0xff]
        %v1363 = vld [vmem:[#allocation3 + $0x78] sm:$0xff]
        %1364 = vmax.xlane.f32.xlu0 %v1332
        %v1365 = vpop.xlane.xlu0 %1364
        %1366 = vmax.xlane.f32.xlu0 %v1333
        %v1367 = vpop.xlane.xlu0 %1366
        %1368 = vmax.xlane.f32.xlu0 %v1334
        %v1369 = vpop.xlane.xlu0 %1368
        %1370 = vmax.xlane.f32.xlu0 %v1335
        %v1371 = vpop.xlane.xlu0 %1370
        %1372 = vmax.xlane.f32.xlu0 %v1336
        %v1373 = vpop.xlane.xlu0 %1372
        %1374 = vmax.xlane.f32.xlu0 %v1337
        %v1375 = vpop.xlane.xlu0 %1374
        %1376 = vmax.xlane.f32.xlu0 %v1338
        %v1377 = vpop.xlane.xlu0 %1376
        %1378 = vmax.xlane.f32.xlu0 %v1339
        %v1379 = vpop.xlane.xlu0 %1378
        %1380 = vmax.xlane.f32.xlu0 %v1340
        %v1381 = vpop.xlane.xlu0 %1380
        %1382 = vmax.xlane.f32.xlu0 %v1341
        %v1383 = vpop.xlane.xlu0 %1382
        %1384 = vmax.xlane.f32.xlu0 %v1342
        %v1385 = vpop.xlane.xlu0 %1384
        %1386 = vmax.xlane.f32.xlu0 %v1343
        %v1387 = vpop.xlane.xlu0 %1386
        %1388 = vmax.xlane.f32.xlu0 %v1344
        %v1389 = vpop.xlane.xlu0 %1388
        %1390 = vmax.xlane.f32.xlu0 %v1345
        %v1391 = vpop.xlane.xlu0 %1390
        %1392 = vmax.xlane.f32.xlu0 %v1346
        %v1393 = vpop.xlane.xlu0 %1392
        %1394 = vmax.xlane.f32.xlu0 %v1347
        %v1395 = vpop.xlane.xlu0 %1394
        %v1396 = vmax.f32 %v1348, %v1365
        %v1397 = vmax.f32 %v1349, %v1367
        %v1398 = vmax.f32 %v1350, %v1369
        %v1399 = vmax.f32 %v1351, %v1371
        %v1400 = vmax.f32 %v1352, %v1373
        %v1401 = vmax.f32 %v1353, %v1375
        %v1402 = vmax.f32 %v1354, %v1377
        %v1403 = vmax.f32 %v1355, %v1379
        %v1404 = vmax.f32 %v1356, %v1381
        %v1405 = vmax.f32 %v1357, %v1383
        %v1406 = vmax.f32 %v1358, %v1385
        %v1407 = vmax.f32 %v1359, %v1387
        %v1408 = vmax.f32 %v1360, %v1389
        %v1409 = vmax.f32 %v1361, %v1391
        %v1410 = vmax.f32 %v1362, %v1393
        %v1411 = vmax.f32 %v1363, %v1395
        %1413 = vset.pattern.permute.xlu0 0
        %1414 = vperm.xlu0 %1413, %v1396
        %v1415 = vpop.permute.xlu0 %1414
        %1418 = vset.pattern.permute.xlu0 0
        %1419 = vperm.xlu0 %1418, %v1397
        %v1420 = vpop.permute.xlu0 %1419
        %1423 = vset.pattern.permute.xlu0 0
        %1424 = vperm.xlu0 %1423, %v1398
        %v1425 = vpop.permute.xlu0 %1424
        %1428 = vset.pattern.permute.xlu0 0
        %1429 = vperm.xlu0 %1428, %v1399
        %v1430 = vpop.permute.xlu0 %1429
        %1433 = vset.pattern.permute.xlu0 0
        %1434 = vperm.xlu0 %1433, %v1400
        %v1435 = vpop.permute.xlu0 %1434
        %1438 = vset.pattern.permute.xlu0 0
        %1439 = vperm.xlu0 %1438, %v1401
        %v1440 = vpop.permute.xlu0 %1439
        %1443 = vset.pattern.permute.xlu0 0
        %1444 = vperm.xlu0 %1443, %v1402
        %v1445 = vpop.permute.xlu0 %1444
        %1448 = vset.pattern.permute.xlu0 0
        %1449 = vperm.xlu0 %1448, %v1403
        %v1450 = vpop.permute.xlu0 %1449
        %1453 = vset.pattern.permute.xlu0 0
        %1454 = vperm.xlu0 %1453, %v1404
        %v1455 = vpop.permute.xlu0 %1454
        %1458 = vset.pattern.permute.xlu0 0
        %1459 = vperm.xlu0 %1458, %v1405
        %v1460 = vpop.permute.xlu0 %1459
        %1463 = vset.pattern.permute.xlu0 0
        %1464 = vperm.xlu0 %1463, %v1406
        %v1465 = vpop.permute.xlu0 %1464
        %1468 = vset.pattern.permute.xlu0 0
        %1469 = vperm.xlu0 %1468, %v1407
        %v1470 = vpop.permute.xlu0 %1469
        %1473 = vset.pattern.permute.xlu0 0
        %1474 = vperm.xlu0 %1473, %v1408
        %v1475 = vpop.permute.xlu0 %1474
        %1478 = vset.pattern.permute.xlu0 0
        %1479 = vperm.xlu0 %1478, %v1409
        %v1480 = vpop.permute.xlu0 %1479
        %1483 = vset.pattern.permute.xlu0 0
        %1484 = vperm.xlu0 %1483, %v1410
        %v1485 = vpop.permute.xlu0 %1484
        %1488 = vset.pattern.permute.xlu0 0
        %1489 = vperm.xlu0 %1488, %v1411
        %v1490 = vpop.permute.xlu0 %1489
        %v1492 = vsub.f32 %v1332, %v1415
        %v1493 = vsub.f32 %v1333, %v1420
        %v1494 = vsub.f32 %v1334, %v1425
        %v1495 = vsub.f32 %v1335, %v1430
        %v1496 = vsub.f32 %v1336, %v1435
        %v1497 = vsub.f32 %v1337, %v1440
        %v1498 = vsub.f32 %v1338, %v1445
        %v1499 = vsub.f32 %v1339, %v1450
        %v1500 = vsub.f32 %v1340, %v1455
        %v1501 = vsub.f32 %v1341, %v1460
        %v1502 = vsub.f32 %v1342, %v1465
        %v1503 = vsub.f32 %v1343, %v1470
        %v1504 = vsub.f32 %v1344, %v1475
        %v1505 = vsub.f32 %v1345, %v1480
        %v1506 = vsub.f32 %v1346, %v1485
        %v1507 = vsub.f32 %v1347, %v1490
        %v1508 = vmul.f32 %v1492, 1.442695
        %v1509 = vpow.pop %v1508
        %v1510 = vmul.f32 %v1493, 1.442695
        %v1511 = vpow.pop %v1510
        %v1512 = vmul.f32 %v1494, 1.442695
        %v1513 = vpow.pop %v1512
        %v1514 = vmul.f32 %v1495, 1.442695
        %v1515 = vpow.pop %v1514
        %v1516 = vmul.f32 %v1496, 1.442695
        %v1517 = vpow.pop %v1516
        %v1518 = vmul.f32 %v1497, 1.442695
        %v1519 = vpow.pop %v1518
        %v1520 = vmul.f32 %v1498, 1.442695
        %v1521 = vpow.pop %v1520
        %v1522 = vmul.f32 %v1499, 1.442695
        %v1523 = vpow.pop %v1522
        %v1524 = vmul.f32 %v1500, 1.442695
        %v1525 = vpow.pop %v1524
        %v1526 = vmul.f32 %v1501, 1.442695
        %v1527 = vpow.pop %v1526
        %v1528 = vmul.f32 %v1502, 1.442695
        %v1529 = vpow.pop %v1528
        %v1530 = vmul.f32 %v1503, 1.442695
        %v1531 = vpow.pop %v1530
        %v1532 = vmul.f32 %v1504, 1.442695
        %v1533 = vpow.pop %v1532
        %v1534 = vmul.f32 %v1505, 1.442695
        %v1535 = vpow.pop %v1534
        %v1536 = vmul.f32 %v1506, 1.442695
        %v1537 = vpow.pop %v1536
        %v1538 = vmul.f32 %v1507, 1.442695
        %v1539 = vpow.pop %v1538
        %v1540 = vsel %vm1316, %v1509, 0.0
        %v1541 = vsel %vm1317, %v1511, 0.0
        %v1542 = vsel %vm1318, %v1513, 0.0
        %v1543 = vsel %vm1319, %v1515, 0.0
        %v1544 = vsel %vm1320, %v1517, 0.0
        %v1545 = vsel %vm1321, %v1519, 0.0
        %v1546 = vsel %vm1322, %v1521, 0.0
        %v1547 = vsel %vm1323, %v1523, 0.0
        %v1548 = vsel %vm1324, %v1525, 0.0
        %v1549 = vsel %vm1325, %v1527, 0.0
        %v1550 = vsel %vm1326, %v1529, 0.0
        %v1551 = vsel %vm1327, %v1531, 0.0
        %v1552 = vsel %vm1328, %v1533, 0.0
        %v1553 = vsel %vm1329, %v1535, 0.0
        %v1554 = vsel %vm1330, %v1537, 0.0
        %v1555 = vsel %vm1331, %v1539, 0.0
        %v1556 = vsub.f32 %v1348, %v1396
        %v1557 = vsub.f32 %v1349, %v1397
        %v1558 = vsub.f32 %v1350, %v1398
        %v1559 = vsub.f32 %v1351, %v1399
        %v1560 = vsub.f32 %v1352, %v1400
        %v1561 = vsub.f32 %v1353, %v1401
        %v1562 = vsub.f32 %v1354, %v1402
        %v1563 = vsub.f32 %v1355, %v1403
        %v1564 = vsub.f32 %v1356, %v1404
        %v1565 = vsub.f32 %v1357, %v1405
        %v1566 = vsub.f32 %v1358, %v1406
        %v1567 = vsub.f32 %v1359, %v1407
        %v1568 = vsub.f32 %v1360, %v1408
        %v1569 = vsub.f32 %v1361, %v1409
        %v1570 = vsub.f32 %v1362, %v1410
        %v1571 = vsub.f32 %v1363, %v1411
        %v1572 = vmul.f32 %v1556, 1.442695
        %v1573 = vpow.pop %v1572
        %v1574 = vmul.f32 %v1557, 1.442695
        %v1575 = vpow.pop %v1574
        %v1576 = vmul.f32 %v1558, 1.442695
        %v1577 = vpow.pop %v1576
        %v1578 = vmul.f32 %v1559, 1.442695
        %v1579 = vpow.pop %v1578
        %v1580 = vmul.f32 %v1560, 1.442695
        %v1581 = vpow.pop %v1580
        %v1582 = vmul.f32 %v1561, 1.442695
        %v1583 = vpow.pop %v1582
        %v1584 = vmul.f32 %v1562, 1.442695
        %v1585 = vpow.pop %v1584
        %v1586 = vmul.f32 %v1563, 1.442695
        %v1587 = vpow.pop %v1586
        %v1588 = vmul.f32 %v1564, 1.442695
        %v1589 = vpow.pop %v1588
        %v1590 = vmul.f32 %v1565, 1.442695
        %v1591 = vpow.pop %v1590
        %v1592 = vmul.f32 %v1566, 1.442695
        %v1593 = vpow.pop %v1592
        %v1594 = vmul.f32 %v1567, 1.442695
        %v1595 = vpow.pop %v1594
        %v1596 = vmul.f32 %v1568, 1.442695
        %v1597 = vpow.pop %v1596
        %v1598 = vmul.f32 %v1569, 1.442695
        %v1599 = vpow.pop %v1598
        %v1600 = vmul.f32 %v1570, 1.442695
        %v1601 = vpow.pop %v1600
        %v1602 = vmul.f32 %v1571, 1.442695
        %v1603 = vpow.pop %v1602
        %v1604 = vld [vmem:[#allocation4] sm:$0xff]
        %v1605 = vld [vmem:[#allocation4 + $0x8] sm:$0xff]
        %v1606 = vld [vmem:[#allocation4 + $0x10] sm:$0xff]
        %v1607 = vld [vmem:[#allocation4 + $0x18] sm:$0xff]
        %v1608 = vld [vmem:[#allocation4 + $0x20] sm:$0xff]
        %v1609 = vld [vmem:[#allocation4 + $0x28] sm:$0xff]
        %v1610 = vld [vmem:[#allocation4 + $0x30] sm:$0xff]
        %v1611 = vld [vmem:[#allocation4 + $0x38] sm:$0xff]
        %v1612 = vld [vmem:[#allocation4 + $0x40] sm:$0xff]
        %v1613 = vld [vmem:[#allocation4 + $0x48] sm:$0xff]
        %v1614 = vld [vmem:[#allocation4 + $0x50] sm:$0xff]
        %v1615 = vld [vmem:[#allocation4 + $0x58] sm:$0xff]
        %v1616 = vld [vmem:[#allocation4 + $0x60] sm:$0xff]
        %v1617 = vld [vmem:[#allocation4 + $0x68] sm:$0xff]
        %v1618 = vld [vmem:[#allocation4 + $0x70] sm:$0xff]
        %v1619 = vld [vmem:[#allocation4 + $0x78] sm:$0xff]
        %v1620 = vmul.f32 %v1573, %v1604
        %v1621 = vmul.f32 %v1575, %v1605
        %v1622 = vmul.f32 %v1577, %v1606
        %v1623 = vmul.f32 %v1579, %v1607
        %v1624 = vmul.f32 %v1581, %v1608
        %v1625 = vmul.f32 %v1583, %v1609
        %v1626 = vmul.f32 %v1585, %v1610
        %v1627 = vmul.f32 %v1587, %v1611
        %v1628 = vmul.f32 %v1589, %v1612
        %v1629 = vmul.f32 %v1591, %v1613
        %v1630 = vmul.f32 %v1593, %v1614
        %v1631 = vmul.f32 %v1595, %v1615
        %v1632 = vmul.f32 %v1597, %v1616
        %v1633 = vmul.f32 %v1599, %v1617
        %v1634 = vmul.f32 %v1601, %v1618
        %v1635 = vmul.f32 %v1603, %v1619
        %1636 = vadd.xlane.f32.xlu0 %v1540
        %v1637 = vpop.xlane.xlu0 %1636
        %1638 = vadd.xlane.f32.xlu0 %v1541
        %v1639 = vpop.xlane.xlu0 %1638
        %1640 = vadd.xlane.f32.xlu0 %v1542
        %v1641 = vpop.xlane.xlu0 %1640
        %1642 = vadd.xlane.f32.xlu0 %v1543
        %v1643 = vpop.xlane.xlu0 %1642
        %1644 = vadd.xlane.f32.xlu0 %v1544
        %v1645 = vpop.xlane.xlu0 %1644
        %1646 = vadd.xlane.f32.xlu0 %v1545
        %v1647 = vpop.xlane.xlu0 %1646
        %1648 = vadd.xlane.f32.xlu0 %v1546
        %v1649 = vpop.xlane.xlu0 %1648
        %1650 = vadd.xlane.f32.xlu0 %v1547
        %v1651 = vpop.xlane.xlu0 %1650
        %1652 = vadd.xlane.f32.xlu0 %v1548
        %v1653 = vpop.xlane.xlu0 %1652
        %1654 = vadd.xlane.f32.xlu0 %v1549
        %v1655 = vpop.xlane.xlu0 %1654
        %1656 = vadd.xlane.f32.xlu0 %v1550
        %v1657 = vpop.xlane.xlu0 %1656
        %1658 = vadd.xlane.f32.xlu0 %v1551
        %v1659 = vpop.xlane.xlu0 %1658
        %1660 = vadd.xlane.f32.xlu0 %v1552
        %v1661 = vpop.xlane.xlu0 %1660
        %1662 = vadd.xlane.f32.xlu0 %v1553
        %v1663 = vpop.xlane.xlu0 %1662
        %1664 = vadd.xlane.f32.xlu0 %v1554
        %v1665 = vpop.xlane.xlu0 %1664
        %1666 = vadd.xlane.f32.xlu0 %v1555
        %v1667 = vpop.xlane.xlu0 %1666
        %v1668 = vadd.f32 %v1620, %v1637
        %v1669 = vadd.f32 %v1621, %v1639
        %v1670 = vadd.f32 %v1622, %v1641
        %v1671 = vadd.f32 %v1623, %v1643
        %v1672 = vadd.f32 %v1624, %v1645
        %v1673 = vadd.f32 %v1625, %v1647
        %v1674 = vadd.f32 %v1626, %v1649
        %v1675 = vadd.f32 %v1627, %v1651
        %v1676 = vadd.f32 %v1628, %v1653
        %v1677 = vadd.f32 %v1629, %v1655
        %v1678 = vadd.f32 %v1630, %v1657
        %v1679 = vadd.f32 %v1631, %v1659
        %v1680 = vadd.f32 %v1632, %v1661
        %v1681 = vadd.f32 %v1633, %v1663
        %v1682 = vadd.f32 %v1634, %v1665
        %v1683 = vadd.f32 %v1635, %v1667
        %vm1684 = vcmask 7168
        %1685 = vst.msk [vmem:[#allocation4] sm:$0xff] %vm1684, %v1668
        %1686 = vst.msk [vmem:[#allocation4 + $0x8] sm:$0xff] %vm1684, %v1669
        %1687 = vst.msk [vmem:[#allocation4 + $0x10] sm:$0xff] %vm1684, %v1670
        %1688 = vst.msk [vmem:[#allocation4 + $0x18] sm:$0xff] %vm1684, %v1671
        %1689 = vst.msk [vmem:[#allocation4 + $0x20] sm:$0xff] %vm1684, %v1672
        %1690 = vst.msk [vmem:[#allocation4 + $0x28] sm:$0xff] %vm1684, %v1673
        %1691 = vst.msk [vmem:[#allocation4 + $0x30] sm:$0xff] %vm1684, %v1674
        %1692 = vst.msk [vmem:[#allocation4 + $0x38] sm:$0xff] %vm1684, %v1675
        %1693 = vst.msk [vmem:[#allocation4 + $0x40] sm:$0xff] %vm1684, %v1676
        %1694 = vst.msk [vmem:[#allocation4 + $0x48] sm:$0xff] %vm1684, %v1677
        %1695 = vst.msk [vmem:[#allocation4 + $0x50] sm:$0xff] %vm1684, %v1678
        %1696 = vst.msk [vmem:[#allocation4 + $0x58] sm:$0xff] %vm1684, %v1679
        %1697 = vst.msk [vmem:[#allocation4 + $0x60] sm:$0xff] %vm1684, %v1680
        %1698 = vst.msk [vmem:[#allocation4 + $0x68] sm:$0xff] %vm1684, %v1681
        %1699 = vst.msk [vmem:[#allocation4 + $0x70] sm:$0xff] %vm1684, %v1682
        %1700 = vst.msk [vmem:[#allocation4 + $0x78] sm:$0xff] %vm1684, %v1683
        %v1701 = vld [vmem:[#allocation5] sm:$0xff]
        %v1702 = vld [vmem:[#allocation5 + $0x8] sm:$0xff]
        %v1703 = vld [vmem:[#allocation5 + $0x10] sm:$0xff]
        %v1704 = vld [vmem:[#allocation5 + $0x18] sm:$0xff]
        %v1705 = vld [vmem:[#allocation5 + $0x20] sm:$0xff]
        %v1706 = vld [vmem:[#allocation5 + $0x28] sm:$0xff]
        %v1707 = vld [vmem:[#allocation5 + $0x30] sm:$0xff]
        %v1708 = vld [vmem:[#allocation5 + $0x38] sm:$0xff]
        %v1709 = vld [vmem:[#allocation5 + $0x40] sm:$0xff]
        %v1710 = vld [vmem:[#allocation5 + $0x48] sm:$0xff]
        %v1711 = vld [vmem:[#allocation5 + $0x50] sm:$0xff]
        %v1712 = vld [vmem:[#allocation5 + $0x58] sm:$0xff]
        %v1713 = vld [vmem:[#allocation5 + $0x60] sm:$0xff]
        %v1714 = vld [vmem:[#allocation5 + $0x68] sm:$0xff]
        %v1715 = vld [vmem:[#allocation5 + $0x70] sm:$0xff]
        %v1716 = vld [vmem:[#allocation5 + $0x78] sm:$0xff]
        %1718 = vset.pattern.permute.xlu0 0
        %1719 = vperm.xlu0 %1718, %v1573
        %v1720 = vpop.permute.xlu0 %1719
        %1723 = vset.pattern.permute.xlu0 0
        %1724 = vperm.xlu0 %1723, %v1575
        %v1725 = vpop.permute.xlu0 %1724
        %1728 = vset.pattern.permute.xlu0 0
        %1729 = vperm.xlu0 %1728, %v1577
        %v1730 = vpop.permute.xlu0 %1729
        %1733 = vset.pattern.permute.xlu0 0
        %1734 = vperm.xlu0 %1733, %v1579
        %v1735 = vpop.permute.xlu0 %1734
        %1738 = vset.pattern.permute.xlu0 0
        %1739 = vperm.xlu0 %1738, %v1581
        %v1740 = vpop.permute.xlu0 %1739
        %1743 = vset.pattern.permute.xlu0 0
        %1744 = vperm.xlu0 %1743, %v1583
        %v1745 = vpop.permute.xlu0 %1744
        %1748 = vset.pattern.permute.xlu0 0
        %1749 = vperm.xlu0 %1748, %v1585
        %v1750 = vpop.permute.xlu0 %1749
        %1753 = vset.pattern.permute.xlu0 0
        %1754 = vperm.xlu0 %1753, %v1587
        %v1755 = vpop.permute.xlu0 %1754
        %1758 = vset.pattern.permute.xlu0 0
        %1759 = vperm.xlu0 %1758, %v1589
        %v1760 = vpop.permute.xlu0 %1759
        %1763 = vset.pattern.permute.xlu0 0
        %1764 = vperm.xlu0 %1763, %v1591
        %v1765 = vpop.permute.xlu0 %1764
        %1768 = vset.pattern.permute.xlu0 0
        %1769 = vperm.xlu0 %1768, %v1593
        %v1770 = vpop.permute.xlu0 %1769
        %1773 = vset.pattern.permute.xlu0 0
        %1774 = vperm.xlu0 %1773, %v1595
        %v1775 = vpop.permute.xlu0 %1774
        %1778 = vset.pattern.permute.xlu0 0
        %1779 = vperm.xlu0 %1778, %v1597
        %v1780 = vpop.permute.xlu0 %1779
        %1783 = vset.pattern.permute.xlu0 0
        %1784 = vperm.xlu0 %1783, %v1599
        %v1785 = vpop.permute.xlu0 %1784
        %1788 = vset.pattern.permute.xlu0 0
        %1789 = vperm.xlu0 %1788, %v1601
        %v1790 = vpop.permute.xlu0 %1789
        %1793 = vset.pattern.permute.xlu0 0
        %1794 = vperm.xlu0 %1793, %v1603
        %v1795 = vpop.permute.xlu0 %1794
        %v1797 = vmul.f32 %v1720, %v1701
        %v1798 = vmul.f32 %v1725, %v1702
        %v1799 = vmul.f32 %v1730, %v1703
        %v1800 = vmul.f32 %v1735, %v1704
        %v1801 = vmul.f32 %v1740, %v1705
        %v1802 = vmul.f32 %v1745, %v1706
        %v1803 = vmul.f32 %v1750, %v1707
        %v1804 = vmul.f32 %v1755, %v1708
        %v1805 = vmul.f32 %v1760, %v1709
        %v1806 = vmul.f32 %v1765, %v1710
        %v1807 = vmul.f32 %v1770, %v1711
        %v1808 = vmul.f32 %v1775, %v1712
        %v1809 = vmul.f32 %v1780, %v1713
        %v1810 = vmul.f32 %v1785, %v1714
        %v1811 = vmul.f32 %v1790, %v1715
        %v1812 = vmul.f32 %v1795, %v1716
        %v1813 = vpack.c.bf16 %v1541, %v1540
        %v1814 = vpack.c.bf16 %v1543, %v1542
        %v1815 = vpack.c.bf16 %v1545, %v1544
        %v1816 = vpack.c.bf16 %v1547, %v1546
        %v1817 = vpack.c.bf16 %v1549, %v1548
        %v1818 = vpack.c.bf16 %v1551, %v1550
        %v1819 = vpack.c.bf16 %v1553, %v1552
        %v1820 = vpack.c.bf16 %v1555, %v1554
        %v1821 = vpack.c.bf16 %v1017, %v1014
        %v1822 = vpack.c.bf16 %v1025, %v1022
        %v1823 = vpack.c.bf16 %v1033, %v1030
        %v1824 = vpack.c.bf16 %v1041, %v1038
        %v1825 = vpack.c.bf16 %v1049, %v1046
        %v1826 = vpack.c.bf16 %v1057, %v1054
        %v1827 = vpack.c.bf16 %v1065, %v1062
        %v1828 = vpack.c.bf16 %v1073, %v1070
        %1829 = vmatprep.subr.bf16.mxu0 0
        %1830 = vmatpush1.bf16.msra.mxu0 %v1821
        %1831 = vmatprep.subr.bf16.mxu0 0
        %1832 = vmatpush1.bf16.msra.mxu0 %v1822
        %1833 = vmatprep.subr.bf16.mxu0 0
        %1834 = vmatpush1.bf16.msra.mxu0 %v1823
        %1835 = vmatprep.subr.bf16.mxu0 0
        %1836 = vmatpush1.bf16.msra.mxu0 %v1824
        %1837 = vmatprep.subr.bf16.mxu0 0
        %1838 = vmatpush1.bf16.msra.mxu0 %v1825
        %1839 = vmatprep.subr.bf16.mxu0 0
        %1840 = vmatpush1.bf16.msra.mxu0 %v1826
        %1841 = vmatprep.subr.bf16.mxu0 0
        %1842 = vmatpush1.bf16.msra.mxu0 %v1827
        %1843 = vmatprep.subr.bf16.mxu0 0
        %1844 = vmatpush1.bf16.msra.mxu0 %v1828
        %1845 = vmatprep.subr.bf16.mxu0 0
        %1846 = vmatpush1.bf16.msra.mxu0 0
        %1847 = vmatprep.subr.bf16.mxu0 0
        %1848 = vmatpush1.bf16.msra.mxu0 0
        %1849 = vmatprep.subr.bf16.mxu0 0
        %1850 = vmatpush1.bf16.msra.mxu0 0
        %1851 = vmatprep.subr.bf16.mxu0 0
        %1852 = vmatpush1.bf16.msra.mxu0 0
        %1853 = vmatprep.subr.bf16.mxu0 0
        %1854 = vmatpush1.bf16.msra.mxu0 0
        %1855 = vmatprep.subr.bf16.mxu0 0
        %1856 = vmatpush1.bf16.msra.mxu0 0
        %1857 = vmatprep.subr.bf16.mxu0 0
        %1858 = vmatpush1.bf16.msra.mxu0 0
        %1859 = vmatprep.subr.bf16.mxu0 0
        %1860 = vmatpush1.bf16.msra.mxu0 0
        %1861 = vmatprep.mubr.bf16.mxu0 0
        %1862 = vmatmul.mubr.bf16.gmra.mrb[0].mxu0 %v1813
        %v1863 = vpop.f32.mrb[0].mxu0
        %v1864 = vadd.f32 0.0, %v1863
        %v1865 = vpop.f32.mrb[0].mxu0
        %v1866 = vpop.f32.mrb[0].mxu0
        %v1867 = vadd.f32 0.0, %v1866
        %v1868 = vpop.f32.mrb[0].mxu0
        %1869 = vmatprep.mubr.bf16.mxu0 0
        %1870 = vmatmul.mubr.bf16.gmra.mrb[0].mxu0 %v1814
        %v1871 = vpop.f32.mrb[0].mxu0
        %v1872 = vadd.f32 0.0, %v1871
        %v1873 = vpop.f32.mrb[0].mxu0
        %v1874 = vpop.f32.mrb[0].mxu0
        %v1875 = vadd.f32 0.0, %v1874
        %v1876 = vpop.f32.mrb[0].mxu0
        %1877 = vmatprep.mubr.bf16.mxu0 0
        %1878 = vmatmul.mubr.bf16.gmra.mrb[0].mxu0 %v1815
        %v1879 = vpop.f32.mrb[0].mxu0
        %v1880 = vadd.f32 0.0, %v1879
        %v1881 = vpop.f32.mrb[0].mxu0
        %v1882 = vpop.f32.mrb[0].mxu0
        %v1883 = vadd.f32 0.0, %v1882
        %v1884 = vpop.f32.mrb[0].mxu0
        %1885 = vmatprep.mubr.bf16.mxu0 0
        %1886 = vmatmul.mubr.bf16.gmra.mrb[0].mxu0 %v1816
        %v1887 = vpop.f32.mrb[0].mxu0
        %v1888 = vadd.f32 0.0, %v1887
        %v1889 = vpop.f32.mrb[0].mxu0
        %v1890 = vpop.f32.mrb[0].mxu0
        %v1891 = vadd.f32 0.0, %v1890
        %v1892 = vpop.f32.mrb[0].mxu0
        %1893 = vmatprep.mubr.bf16.mxu0 0
        %1894 = vmatmul.mubr.bf16.gmra.mrb[0].mxu0 %v1817
        %v1895 = vpop.f32.mrb[0].mxu0
        %v1896 = vadd.f32 0.0, %v1895
        %v1897 = vpop.f32.mrb[0].mxu0
        %v1898 = vpop.f32.mrb[0].mxu0
        %v1899 = vadd.f32 0.0, %v1898
        %v1900 = vpop.f32.mrb[0].mxu0
        %1901 = vmatprep.mubr.bf16.mxu0 0
        %1902 = vmatmul.mubr.bf16.gmra.mrb[0].mxu0 %v1818
        %v1903 = vpop.f32.mrb[0].mxu0
        %v1904 = vadd.f32 0.0, %v1903
        %v1905 = vpop.f32.mrb[0].mxu0
        %v1906 = vpop.f32.mrb[0].mxu0
        %v1907 = vadd.f32 0.0, %v1906
        %v1908 = vpop.f32.mrb[0].mxu0
        %1909 = vmatprep.mubr.bf16.mxu0 0
        %1910 = vmatmul.mubr.bf16.gmra.mrb[0].mxu0 %v1819
        %v1911 = vpop.f32.mrb[0].mxu0
        %v1912 = vadd.f32 0.0, %v1911
        %v1913 = vpop.f32.mrb[0].mxu0
        %v1914 = vpop.f32.mrb[0].mxu0
        %v1915 = vadd.f32 0.0, %v1914
        %v1916 = vpop.f32.mrb[0].mxu0
        %1917 = vmatprep.mubr.bf16.mxu0 0
        %1918 = vmatmul.mubr.bf16.gmra.mrb[0].mxu0 %v1820
        %v1919 = vpop.f32.mrb[0].mxu0
        %v1920 = vadd.f32 0.0, %v1919
        %v1921 = vpop.f32.mrb[0].mxu0
        %v1922 = vpop.f32.mrb[0].mxu0
        %v1923 = vadd.f32 0.0, %v1922
        %v1924 = vpop.f32.mrb[0].mxu0
        %1925 = vdwg.mxu0
        %v1926 = vadd.f32 %v1797, %v1864
        %v1927 = vadd.f32 %v1798, %v1867
        %v1928 = vadd.f32 %v1799, %v1872
        %v1929 = vadd.f32 %v1800, %v1875
        %v1930 = vadd.f32 %v1801, %v1880
        %v1931 = vadd.f32 %v1802, %v1883
        %v1932 = vadd.f32 %v1803, %v1888
        %v1933 = vadd.f32 %v1804, %v1891
        %v1934 = vadd.f32 %v1805, %v1896
        %v1935 = vadd.f32 %v1806, %v1899
        %v1936 = vadd.f32 %v1807, %v1904
        %v1937 = vadd.f32 %v1808, %v1907
        %v1938 = vadd.f32 %v1809, %v1912
        %v1939 = vadd.f32 %v1810, %v1915
        %v1940 = vadd.f32 %v1811, %v1920
        %v1941 = vadd.f32 %v1812, %v1923
        %1942 = vst.msk [vmem:[#allocation5] sm:$0xff] %vm954, %v1926
        %1943 = vst.msk [vmem:[#allocation5 + $0x8] sm:$0xff] %vm954, %v1927
        %1944 = vst.msk [vmem:[#allocation5 + $0x10] sm:$0xff] %vm954, %v1928
        %1945 = vst.msk [vmem:[#allocation5 + $0x18] sm:$0xff] %vm954, %v1929
        %1946 = vst.msk [vmem:[#allocation5 + $0x20] sm:$0xff] %vm954, %v1930
        %1947 = vst.msk [vmem:[#allocation5 + $0x28] sm:$0xff] %vm954, %v1931
        %1948 = vst.msk [vmem:[#allocation5 + $0x30] sm:$0xff] %vm954, %v1932
        %1949 = vst.msk [vmem:[#allocation5 + $0x38] sm:$0xff] %vm954, %v1933
        %1950 = vst.msk [vmem:[#allocation5 + $0x40] sm:$0xff] %vm954, %v1934
        %1951 = vst.msk [vmem:[#allocation5 + $0x48] sm:$0xff] %vm954, %v1935
        %1952 = vst.msk [vmem:[#allocation5 + $0x50] sm:$0xff] %vm954, %v1936
        %1953 = vst.msk [vmem:[#allocation5 + $0x58] sm:$0xff] %vm954, %v1937
        %1954 = vst.msk [vmem:[#allocation5 + $0x60] sm:$0xff] %vm954, %v1938
        %1955 = vst.msk [vmem:[#allocation5 + $0x68] sm:$0xff] %vm954, %v1939
        %1956 = vst.msk [vmem:[#allocation5 + $0x70] sm:$0xff] %vm954, %v1940
        %1957 = vst.msk [vmem:[#allocation5 + $0x78] sm:$0xff] %vm954, %v1941
        %1958 = vst.msk [vmem:[#allocation3] sm:$0xff] %vm1684, %v1396
        %1959 = vst.msk [vmem:[#allocation3 + $0x8] sm:$0xff] %vm1684, %v1397
        %1960 = vst.msk [vmem:[#allocation3 + $0x10] sm:$0xff] %vm1684, %v1398
        %1961 = vst.msk [vmem:[#allocation3 + $0x18] sm:$0xff] %vm1684, %v1399
        %1962 = vst.msk [vmem:[#allocation3 + $0x20] sm:$0xff] %vm1684, %v1400
        %1963 = vst.msk [vmem:[#allocation3 + $0x28] sm:$0xff] %vm1684, %v1401
        %1964 = vst.msk [vmem:[#allocation3 + $0x30] sm:$0xff] %vm1684, %v1402
        %1965 = vst.msk [vmem:[#allocation3 + $0x38] sm:$0xff] %vm1684, %v1403
        %1966 = vst.msk [vmem:[#allocation3 + $0x40] sm:$0xff] %vm1684, %v1404
        %1967 = vst.msk [vmem:[#allocation3 + $0x48] sm:$0xff] %vm1684, %v1405
        %1968 = vst.msk [vmem:[#allocation3 + $0x50] sm:$0xff] %vm1684, %v1406
        %1969 = vst.msk [vmem:[#allocation3 + $0x58] sm:$0xff] %vm1684, %v1407
        %1970 = vst.msk [vmem:[#allocation3 + $0x60] sm:$0xff] %vm1684, %v1408
        %1971 = vst.msk [vmem:[#allocation3 + $0x68] sm:$0xff] %vm1684, %v1409
        %1972 = vst.msk [vmem:[#allocation3 + $0x70] sm:$0xff] %vm1684, %v1410
        %1973 = vst.msk [vmem:[#allocation3 + $0x78] sm:$0xff] %vm1684, %v1411
        %s1974 = scalar_lea.vmem %s3, 16
        %v1975 = vld [vmem:[%s1974] sm:$0xf]
        %v1976 = vld [vmem:[%s1974 + $0x4] sm:$0xf]
        %v1977 = vld [vmem:[%s1974 + $0x8] sm:$0xf]
        %v1978 = vld [vmem:[%s1974 + $0xc] sm:$0xf]
        %v1983 = vunpack.c.l.b16 %v1975
        %v1984 = vunpack.c.l.b16 %v1976
        %v1985 = vunpack.c.l.b16 %v1977
        %v1986 = vunpack.c.l.b16 %v1978
        %v1987 = vpack.c.b16 %v1984, %v1983
        %v1988 = vpack.c.b16 %v1986, %v1985
        %1991 = vmatprep.subr.bf16.mxu0 0
        %1992 = vmatpush1.bf16.msra.mxu0 %v1987
        %1993 = vmatprep.subr.bf16.mxu0 0
        %1994 = vmatpush1.bf16.msra.mxu0 %v1988
        %1995 = vmatprep.subr.bf16.mxu0 0
        %1996 = vmatpush1.bf16.msra.mxu0 0
        %1997 = vmatprep.subr.bf16.mxu0 0
        %1998 = vmatpush1.bf16.msra.mxu0 0
        %1999 = vmatprep.subr.bf16.mxu0 0
        %2000 = vmatpush1.bf16.msra.mxu0 0
        %2001 = vmatprep.subr.bf16.mxu0 0
        %2002 = vmatpush1.bf16.msra.mxu0 0
        %2003 = vmatprep.subr.bf16.mxu0 0
        %2004 = vmatpush1.bf16.msra.mxu0 0
        %2005 = vmatprep.subr.bf16.mxu0 0
        %2006 = vmatpush1.bf16.msra.mxu0 0
        %2007 = vmatprep.subr.bf16.mxu0 0
        %2008 = vmatpush1.bf16.msra.mxu0 0
        %2009 = vmatprep.subr.bf16.mxu0 0
        %2010 = vmatpush1.bf16.msra.mxu0 0
        %2011 = vmatprep.subr.bf16.mxu0 0
        %2012 = vmatpush1.bf16.msra.mxu0 0
        %2013 = vmatprep.subr.bf16.mxu0 0
        %2014 = vmatpush1.bf16.msra.mxu0 0
        %2015 = vmatprep.subr.bf16.mxu0 0
        %2016 = vmatpush1.bf16.msra.mxu0 0
        %2017 = vmatprep.subr.bf16.mxu0 0
        %2018 = vmatpush1.bf16.msra.mxu0 0
        %2019 = vmatprep.subr.bf16.mxu0 0
        %2020 = vmatpush1.bf16.msra.mxu0 0
        %2021 = vmatprep.subr.bf16.mxu0 0
        %2022 = vmatpush1.bf16.msra.mxu0 0
        %2023 = vmatprep.mubr.bf16.mxu0 0
        %2024 = vmatmul.mubr.bf16.gmra.mrb[0].mxu0 %v956
        %v2025 = vpop.f32.mrb[0].mxu0
        %v2026 = vadd.f32 0.0, %v2025
        %v2027 = vpop.f32.mrb[0].mxu0
        %v2028 = vpop.f32.mrb[0].mxu0
        %v2029 = vadd.f32 0.0, %v2028
        %v2030 = vpop.f32.mrb[0].mxu0
        %2031 = vmatprep.mubr.bf16.mxu0 0
        %2032 = vmatmul.mubr.bf16.gmra.mrb[0].mxu0 %v959
        %v2033 = vpop.f32.mrb[0].mxu0
        %v2034 = vadd.f32 0.0, %v2033
        %v2035 = vpop.f32.mrb[0].mxu0
        %v2036 = vpop.f32.mrb[0].mxu0
        %v2037 = vadd.f32 0.0, %v2036
        %v2038 = vpop.f32.mrb[0].mxu0
        %2039 = vmatprep.mubr.bf16.mxu0 0
        %2040 = vmatmul.mubr.bf16.gmra.mrb[0].mxu0 %v962
        %v2041 = vpop.f32.mrb[0].mxu0
        %v2042 = vadd.f32 0.0, %v2041
        %v2043 = vpop.f32.mrb[0].mxu0
        %v2044 = vpop.f32.mrb[0].mxu0
        %v2045 = vadd.f32 0.0, %v2044
        %v2046 = vpop.f32.mrb[0].mxu0
        %2047 = vmatprep.mubr.bf16.mxu0 0
        %2048 = vmatmul.mubr.bf16.gmra.mrb[0].mxu0 %v965
        %v2049 = vpop.f32.mrb[0].mxu0
        %v2050 = vadd.f32 0.0, %v2049
        %v2051 = vpop.f32.mrb[0].mxu0
        %v2052 = vpop.f32.mrb[0].mxu0
        %v2053 = vadd.f32 0.0, %v2052
        %v2054 = vpop.f32.mrb[0].mxu0
        %2055 = vmatprep.mubr.bf16.mxu0 0
        %2056 = vmatmul.mubr.bf16.gmra.mrb[0].mxu0 %v968
        %v2057 = vpop.f32.mrb[0].mxu0
        %v2058 = vadd.f32 0.0, %v2057
        %v2059 = vpop.f32.mrb[0].mxu0
        %v2060 = vpop.f32.mrb[0].mxu0
        %v2061 = vadd.f32 0.0, %v2060
        %v2062 = vpop.f32.mrb[0].mxu0
        %2063 = vmatprep.mubr.bf16.mxu0 0
        %2064 = vmatmul.mubr.bf16.gmra.mrb[0].mxu0 %v971
        %v2065 = vpop.f32.mrb[0].mxu0
        %v2066 = vadd.f32 0.0, %v2065
        %v2067 = vpop.f32.mrb[0].mxu0
        %v2068 = vpop.f32.mrb[0].mxu0
        %v2069 = vadd.f32 0.0, %v2068
        %v2070 = vpop.f32.mrb[0].mxu0
        %2071 = vmatprep.mubr.bf16.mxu0 0
        %2072 = vmatmul.mubr.bf16.gmra.mrb[0].mxu0 %v974
        %v2073 = vpop.f32.mrb[0].mxu0
        %v2074 = vadd.f32 0.0, %v2073
        %v2075 = vpop.f32.mrb[0].mxu0
        %v2076 = vpop.f32.mrb[0].mxu0
        %v2077 = vadd.f32 0.0, %v2076
        %v2078 = vpop.f32.mrb[0].mxu0
        %2079 = vmatprep.mubr.bf16.mxu0 0
        %2080 = vmatmul.mubr.bf16.gmra.mrb[0].mxu0 %v977
        %v2081 = vpop.f32.mrb[0].mxu0
        %v2082 = vadd.f32 0.0, %v2081
        %v2083 = vpop.f32.mrb[0].mxu0
        %v2084 = vpop.f32.mrb[0].mxu0
        %v2085 = vadd.f32 0.0, %v2084
        %v2086 = vpop.f32.mrb[0].mxu0
        %2087 = vdwg.mxu0
        %s2088 = scalar_lea.vmem %s4, 1
        %v2089 = vld [vmem:[%s2088] sm:$0x1]
        %v2091 = vsel %vm954, %v2089, 0
        %2093 = vmatprep.subr.bf16.mxu0 0
        %2094 = vmatpush1.bf16.xpose.msra.mxu0 %v956
        %2095 = vmatprep.subr.bf16.mxu0 0
        %2096 = vmatpush1.bf16.xpose.msra.mxu0 %v959
        %2097 = vmatprep.subr.bf16.mxu0 0
        %2098 = vmatpush1.bf16.xpose.msra.mxu0 %v962
        %2099 = vmatprep.subr.bf16.mxu0 0
        %2100 = vmatpush1.bf16.xpose.msra.mxu0 %v965
        %2101 = vmatprep.subr.bf16.mxu0 0
        %2102 = vmatpush1.bf16.xpose.msra.mxu0 %v968
        %2103 = vmatprep.subr.bf16.mxu0 0
        %2104 = vmatpush1.bf16.xpose.msra.mxu0 %v971
        %2105 = vmatprep.subr.bf16.mxu0 0
        %2106 = vmatpush1.bf16.xpose.msra.mxu0 %v974
        %2107 = vmatprep.subr.bf16.mxu0 0
        %2108 = vmatpush1.bf16.xpose.msra.mxu0 %v977
        %2109 = vmatprep.subr.bf16.mxu0 0
        %2110 = vmatpush1.bf16.xpose.msra.mxu0 0
        %2111 = vmatprep.subr.bf16.mxu0 0
        %2112 = vmatpush1.bf16.xpose.msra.mxu0 0
        %2113 = vmatprep.subr.bf16.mxu0 0
        %2114 = vmatpush1.bf16.xpose.msra.mxu0 0
        %2115 = vmatprep.subr.bf16.mxu0 0
        %2116 = vmatpush1.bf16.xpose.msra.mxu0 0
        %2117 = vmatprep.subr.bf16.mxu0 0
        %2118 = vmatpush1.bf16.xpose.msra.mxu0 0
        %2119 = vmatprep.subr.bf16.mxu0 0
        %2120 = vmatpush1.bf16.xpose.msra.mxu0 0
        %2121 = vmatprep.subr.bf16.mxu0 0
        %2122 = vmatpush1.bf16.xpose.msra.mxu0 0
        %2123 = vmatprep.subr.bf16.mxu0 0
        %2124 = vmatpush1.bf16.xpose.msra.mxu0 0
        %2125 = vmatprep.mubr.bf16.mxu0 0
        %2126 = vmatmul.mubr.bf16.gmra.mrb[0].mxu0 %v2091
        %v2127 = vpop.f32.mrb[0].mxu0
        %v2128 = vadd.f32 0.0, %v2127
        %v2129 = vpop.f32.mrb[0].mxu0
        %v2130 = vpop.f32.mrb[0].mxu0
        %v2131 = vpop.f32.mrb[0].mxu0
        %2132 = vdwg.mxu0
        %s2133 = scalar_lea.vmem [#allocation2], 128
        %v2134 = vld [vmem:[%s2133] sm:$0xff]
        %v2135 = vld [vmem:[%s2133 + $0x8] sm:$0xff]
        %v2136 = vld [vmem:[%s2133 + $0x10] sm:$0xff]
        %v2137 = vld [vmem:[%s2133 + $0x18] sm:$0xff]
        %v2138 = vld [vmem:[%s2133 + $0x20] sm:$0xff]
        %v2139 = vld [vmem:[%s2133 + $0x28] sm:$0xff]
        %v2140 = vld [vmem:[%s2133 + $0x30] sm:$0xff]
        %v2141 = vld [vmem:[%s2133 + $0x38] sm:$0xff]
        %v2142 = vld [vmem:[%s2133 + $0x40] sm:$0xff]
        %v2143 = vld [vmem:[%s2133 + $0x48] sm:$0xff]
        %v2144 = vld [vmem:[%s2133 + $0x50] sm:$0xff]
        %v2145 = vld [vmem:[%s2133 + $0x58] sm:$0xff]
        %v2146 = vld [vmem:[%s2133 + $0x60] sm:$0xff]
        %v2147 = vld [vmem:[%s2133 + $0x68] sm:$0xff]
        %v2148 = vld [vmem:[%s2133 + $0x70] sm:$0xff]
        %v2149 = vld [vmem:[%s2133 + $0x78] sm:$0xff]
        %2151 = vset.pattern.permute.xlu0 0
        %2152 = vperm.xlu0 %2151, %v2134
        %v2153 = vpop.permute.xlu0 %2152
        %2156 = vset.pattern.permute.xlu0 0
        %2157 = vperm.xlu0 %2156, %v2135
        %v2158 = vpop.permute.xlu0 %2157
        %2161 = vset.pattern.permute.xlu0 0
        %2162 = vperm.xlu0 %2161, %v2136
        %v2163 = vpop.permute.xlu0 %2162
        %2166 = vset.pattern.permute.xlu0 0
        %2167 = vperm.xlu0 %2166, %v2137
        %v2168 = vpop.permute.xlu0 %2167
        %2171 = vset.pattern.permute.xlu0 0
        %2172 = vperm.xlu0 %2171, %v2138
        %v2173 = vpop.permute.xlu0 %2172
        %2176 = vset.pattern.permute.xlu0 0
        %2177 = vperm.xlu0 %2176, %v2139
        %v2178 = vpop.permute.xlu0 %2177
        %2181 = vset.pattern.permute.xlu0 0
        %2182 = vperm.xlu0 %2181, %v2140
        %v2183 = vpop.permute.xlu0 %2182
        %2186 = vset.pattern.permute.xlu0 0
        %2187 = vperm.xlu0 %2186, %v2141
        %v2188 = vpop.permute.xlu0 %2187
        %2191 = vset.pattern.permute.xlu0 0
        %2192 = vperm.xlu0 %2191, %v2142
        %v2193 = vpop.permute.xlu0 %2192
        %2196 = vset.pattern.permute.xlu0 0
        %2197 = vperm.xlu0 %2196, %v2143
        %v2198 = vpop.permute.xlu0 %2197
        %2201 = vset.pattern.permute.xlu0 0
        %2202 = vperm.xlu0 %2201, %v2144
        %v2203 = vpop.permute.xlu0 %2202
        %2206 = vset.pattern.permute.xlu0 0
        %2207 = vperm.xlu0 %2206, %v2145
        %v2208 = vpop.permute.xlu0 %2207
        %2211 = vset.pattern.permute.xlu0 0
        %2212 = vperm.xlu0 %2211, %v2146
        %v2213 = vpop.permute.xlu0 %2212
        %2216 = vset.pattern.permute.xlu0 0
        %2217 = vperm.xlu0 %2216, %v2147
        %v2218 = vpop.permute.xlu0 %2217
        %2221 = vset.pattern.permute.xlu0 0
        %2222 = vperm.xlu0 %2221, %v2148
        %v2223 = vpop.permute.xlu0 %2222
        %2226 = vset.pattern.permute.xlu0 0
        %2227 = vperm.xlu0 %2226, %v2149
        %v2228 = vpop.permute.xlu0 %2227
        %v2230 = vlaneseq
        %v2231 = vshrl.u32 %v2230, 7
        %v2232 = vsub.s32 0, %v2231
        %v2233 = vrot.slane %v2128, %v2232
        %v2234 = vadd.f32 %v2153, %v2233
        %v2235 = vadd.f32 %v2158, %v2233
        %v2236 = vadd.f32 %v2163, %v2233
        %v2237 = vadd.f32 %v2168, %v2233
        %v2238 = vadd.f32 %v2173, %v2233
        %v2239 = vadd.f32 %v2178, %v2233
        %v2240 = vadd.f32 %v2183, %v2233
        %v2241 = vadd.f32 %v2188, %v2233
        %v2242 = vadd.f32 %v2193, %v2233
        %v2243 = vadd.f32 %v2198, %v2233
        %v2244 = vadd.f32 %v2203, %v2233
        %v2245 = vadd.f32 %v2208, %v2233
        %v2246 = vadd.f32 %v2213, %v2233
        %v2247 = vadd.f32 %v2218, %v2233
        %v2248 = vadd.f32 %v2223, %v2233
        %v2249 = vadd.f32 %v2228, %v2233
        %vm2250 = vcmp.gt.f32.partialorder %v2234, 0.0
        %vm2251 = vcmp.gt.f32.partialorder %v2235, 0.0
        %vm2252 = vcmp.gt.f32.partialorder %v2236, 0.0
        %vm2253 = vcmp.gt.f32.partialorder %v2237, 0.0
        %vm2254 = vcmp.gt.f32.partialorder %v2238, 0.0
        %vm2255 = vcmp.gt.f32.partialorder %v2239, 0.0
        %vm2256 = vcmp.gt.f32.partialorder %v2240, 0.0
        %vm2257 = vcmp.gt.f32.partialorder %v2241, 0.0
        %vm2258 = vcmp.gt.f32.partialorder %v2242, 0.0
        %vm2259 = vcmp.gt.f32.partialorder %v2243, 0.0
        %vm2260 = vcmp.gt.f32.partialorder %v2244, 0.0
        %vm2261 = vcmp.gt.f32.partialorder %v2245, 0.0
        %vm2262 = vcmp.gt.f32.partialorder %v2246, 0.0
        %vm2263 = vcmp.gt.f32.partialorder %v2247, 0.0
        %vm2264 = vcmp.gt.f32.partialorder %v2248, 0.0
        %vm2265 = vcmp.gt.f32.partialorder %v2249, 0.0
        %v2266 = vmul.f32 %v2234, 0.2
        %v2267 = vmul.f32 %v2235, 0.2
        %v2268 = vmul.f32 %v2236, 0.2
        %v2269 = vmul.f32 %v2237, 0.2
        %v2270 = vmul.f32 %v2238, 0.2
        %v2271 = vmul.f32 %v2239, 0.2
        %v2272 = vmul.f32 %v2240, 0.2
        %v2273 = vmul.f32 %v2241, 0.2
        %v2274 = vmul.f32 %v2242, 0.2
        %v2275 = vmul.f32 %v2243, 0.2
        %v2276 = vmul.f32 %v2244, 0.2
        %v2277 = vmul.f32 %v2245, 0.2
        %v2278 = vmul.f32 %v2246, 0.2
        %v2279 = vmul.f32 %v2247, 0.2
        %v2280 = vmul.f32 %v2248, 0.2
        %v2281 = vmul.f32 %v2249, 0.2
        %v2282 = vsel %vm2250, %v2234, %v2266
        %v2283 = vsel %vm2251, %v2235, %v2267
        %v2284 = vsel %vm2252, %v2236, %v2268
        %v2285 = vsel %vm2253, %v2237, %v2269
        %v2286 = vsel %vm2254, %v2238, %v2270
        %v2287 = vsel %vm2255, %v2239, %v2271
        %v2288 = vsel %vm2256, %v2240, %v2272
        %v2289 = vsel %vm2257, %v2241, %v2273
        %v2290 = vsel %vm2258, %v2242, %v2274
        %v2291 = vsel %vm2259, %v2243, %v2275
        %v2292 = vsel %vm2260, %v2244, %v2276
        %v2293 = vsel %vm2261, %v2245, %v2277
        %v2294 = vsel %vm2262, %v2246, %v2278
        %v2295 = vsel %vm2263, %v2247, %v2279
        %v2296 = vsel %vm2264, %v2248, %v2280
        %v2297 = vsel %vm2265, %v2249, %v2281
        %v2298 = vsel %vm1316, %v2282, -1e+30
        %v2299 = vsel %vm1317, %v2283, -1e+30
        %v2300 = vsel %vm1318, %v2284, -1e+30
        %v2301 = vsel %vm1319, %v2285, -1e+30
        %v2302 = vsel %vm1320, %v2286, -1e+30
        %v2303 = vsel %vm1321, %v2287, -1e+30
        %v2304 = vsel %vm1322, %v2288, -1e+30
        %v2305 = vsel %vm1323, %v2289, -1e+30
        %v2306 = vsel %vm1324, %v2290, -1e+30
        %v2307 = vsel %vm1325, %v2291, -1e+30
        %v2308 = vsel %vm1326, %v2292, -1e+30
        %v2309 = vsel %vm1327, %v2293, -1e+30
        %v2310 = vsel %vm1328, %v2294, -1e+30
        %v2311 = vsel %vm1329, %v2295, -1e+30
        %v2312 = vsel %vm1330, %v2296, -1e+30
        %v2313 = vsel %vm1331, %v2297, -1e+30
        %s2314 = scalar_lea.vmem [#allocation3], 128
        %v2315 = vld [vmem:[%s2314] sm:$0xff]
        %v2316 = vld [vmem:[%s2314 + $0x8] sm:$0xff]
        %v2317 = vld [vmem:[%s2314 + $0x10] sm:$0xff]
        %v2318 = vld [vmem:[%s2314 + $0x18] sm:$0xff]
        %v2319 = vld [vmem:[%s2314 + $0x20] sm:$0xff]
        %v2320 = vld [vmem:[%s2314 + $0x28] sm:$0xff]
        %v2321 = vld [vmem:[%s2314 + $0x30] sm:$0xff]
        %v2322 = vld [vmem:[%s2314 + $0x38] sm:$0xff]
        %v2323 = vld [vmem:[%s2314 + $0x40] sm:$0xff]
        %v2324 = vld [vmem:[%s2314 + $0x48] sm:$0xff]
        %v2325 = vld [vmem:[%s2314 + $0x50] sm:$0xff]
        %v2326 = vld [vmem:[%s2314 + $0x58] sm:$0xff]
        %v2327 = vld [vmem:[%s2314 + $0x60] sm:$0xff]
        %v2328 = vld [vmem:[%s2314 + $0x68] sm:$0xff]
        %v2329 = vld [vmem:[%s2314 + $0x70] sm:$0xff]
        %v2330 = vld [vmem:[%s2314 + $0x78] sm:$0xff]
        %2331 = vmax.xlane.f32.xlu0 %v2298
        %v2332 = vpop.xlane.xlu0 %2331
        %2333 = vmax.xlane.f32.xlu0 %v2299
        %v2334 = vpop.xlane.xlu0 %2333
        %2335 = vmax.xlane.f32.xlu0 %v2300
        %v2336 = vpop.xlane.xlu0 %2335
        %2337 = vmax.xlane.f32.xlu0 %v2301
        %v2338 = vpop.xlane.xlu0 %2337
        %2339 = vmax.xlane.f32.xlu0 %v2302
        %v2340 = vpop.xlane.xlu0 %2339
        %2341 = vmax.xlane.f32.xlu0 %v2303
        %v2342 = vpop.xlane.xlu0 %2341
        %2343 = vmax.xlane.f32.xlu0 %v2304
        %v2344 = vpop.xlane.xlu0 %2343
        %2345 = vmax.xlane.f32.xlu0 %v2305
        %v2346 = vpop.xlane.xlu0 %2345
        %2347 = vmax.xlane.f32.xlu0 %v2306
        %v2348 = vpop.xlane.xlu0 %2347
        %2349 = vmax.xlane.f32.xlu0 %v2307
        %v2350 = vpop.xlane.xlu0 %2349
        %2351 = vmax.xlane.f32.xlu0 %v2308
        %v2352 = vpop.xlane.xlu0 %2351
        %2353 = vmax.xlane.f32.xlu0 %v2309
        %v2354 = vpop.xlane.xlu0 %2353
        %2355 = vmax.xlane.f32.xlu0 %v2310
        %v2356 = vpop.xlane.xlu0 %2355
        %2357 = vmax.xlane.f32.xlu0 %v2311
        %v2358 = vpop.xlane.xlu0 %2357
        %2359 = vmax.xlane.f32.xlu0 %v2312
        %v2360 = vpop.xlane.xlu0 %2359
        %2361 = vmax.xlane.f32.xlu0 %v2313
        %v2362 = vpop.xlane.xlu0 %2361
        %v2363 = vmax.f32 %v2315, %v2332
        %v2364 = vmax.f32 %v2316, %v2334
        %v2365 = vmax.f32 %v2317, %v2336
        %v2366 = vmax.f32 %v2318, %v2338
        %v2367 = vmax.f32 %v2319, %v2340
        %v2368 = vmax.f32 %v2320, %v2342
        %v2369 = vmax.f32 %v2321, %v2344
        %v2370 = vmax.f32 %v2322, %v2346
        %v2371 = vmax.f32 %v2323, %v2348
        %v2372 = vmax.f32 %v2324, %v2350
        %v2373 = vmax.f32 %v2325, %v2352
        %v2374 = vmax.f32 %v2326, %v2354
        %v2375 = vmax.f32 %v2327, %v2356
        %v2376 = vmax.f32 %v2328, %v2358
        %v2377 = vmax.f32 %v2329, %v2360
        %v2378 = vmax.f32 %v2330, %v2362
        %2380 = vset.pattern.permute.xlu0 0
        %2381 = vperm.xlu0 %2380, %v2363
        %v2382 = vpop.permute.xlu0 %2381
        %2385 = vset.pattern.permute.xlu0 0
        %2386 = vperm.xlu0 %2385, %v2364
        %v2387 = vpop.permute.xlu0 %2386
        %2390 = vset.pattern.permute.xlu0 0
        %2391 = vperm.xlu0 %2390, %v2365
        %v2392 = vpop.permute.xlu0 %2391
        %2395 = vset.pattern.permute.xlu0 0
        %2396 = vperm.xlu0 %2395, %v2366
        %v2397 = vpop.permute.xlu0 %2396
        %2400 = vset.pattern.permute.xlu0 0
        %2401 = vperm.xlu0 %2400, %v2367
        %v2402 = vpop.permute.xlu0 %2401
        %2405 = vset.pattern.permute.xlu0 0
        %2406 = vperm.xlu0 %2405, %v2368
        %v2407 = vpop.permute.xlu0 %2406
        %2410 = vset.pattern.permute.xlu0 0
        %2411 = vperm.xlu0 %2410, %v2369
        %v2412 = vpop.permute.xlu0 %2411
        %2415 = vset.pattern.permute.xlu0 0
        %2416 = vperm.xlu0 %2415, %v2370
        %v2417 = vpop.permute.xlu0 %2416
        %2420 = vset.pattern.permute.xlu0 0
        %2421 = vperm.xlu0 %2420, %v2371
        %v2422 = vpop.permute.xlu0 %2421
        %2425 = vset.pattern.permute.xlu0 0
        %2426 = vperm.xlu0 %2425, %v2372
        %v2427 = vpop.permute.xlu0 %2426
        %2430 = vset.pattern.permute.xlu0 0
        %2431 = vperm.xlu0 %2430, %v2373
        %v2432 = vpop.permute.xlu0 %2431
        %2435 = vset.pattern.permute.xlu0 0
        %2436 = vperm.xlu0 %2435, %v2374
        %v2437 = vpop.permute.xlu0 %2436
        %2440 = vset.pattern.permute.xlu0 0
        %2441 = vperm.xlu0 %2440, %v2375
        %v2442 = vpop.permute.xlu0 %2441
        %2445 = vset.pattern.permute.xlu0 0
        %2446 = vperm.xlu0 %2445, %v2376
        %v2447 = vpop.permute.xlu0 %2446
        %2450 = vset.pattern.permute.xlu0 0
        %2451 = vperm.xlu0 %2450, %v2377
        %v2452 = vpop.permute.xlu0 %2451
        %2455 = vset.pattern.permute.xlu0 0
        %2456 = vperm.xlu0 %2455, %v2378
        %v2457 = vpop.permute.xlu0 %2456
        %v2459 = vsub.f32 %v2298, %v2382
        %v2460 = vsub.f32 %v2299, %v2387
        %v2461 = vsub.f32 %v2300, %v2392
        %v2462 = vsub.f32 %v2301, %v2397
        %v2463 = vsub.f32 %v2302, %v2402
        %v2464 = vsub.f32 %v2303, %v2407
        %v2465 = vsub.f32 %v2304, %v2412
        %v2466 = vsub.f32 %v2305, %v2417
        %v2467 = vsub.f32 %v2306, %v2422
        %v2468 = vsub.f32 %v2307, %v2427
        %v2469 = vsub.f32 %v2308, %v2432
        %v2470 = vsub.f32 %v2309, %v2437
        %v2471 = vsub.f32 %v2310, %v2442
        %v2472 = vsub.f32 %v2311, %v2447
        %v2473 = vsub.f32 %v2312, %v2452
        %v2474 = vsub.f32 %v2313, %v2457
        %v2475 = vmul.f32 %v2459, 1.442695
        %v2476 = vpow.pop %v2475
        %v2477 = vmul.f32 %v2460, 1.442695
        %v2478 = vpow.pop %v2477
        %v2479 = vmul.f32 %v2461, 1.442695
        %v2480 = vpow.pop %v2479
        %v2481 = vmul.f32 %v2462, 1.442695
        %v2482 = vpow.pop %v2481
        %v2483 = vmul.f32 %v2463, 1.442695
        %v2484 = vpow.pop %v2483
        %v2485 = vmul.f32 %v2464, 1.442695
        %v2486 = vpow.pop %v2485
        %v2487 = vmul.f32 %v2465, 1.442695
        %v2488 = vpow.pop %v2487
        %v2489 = vmul.f32 %v2466, 1.442695
        %v2490 = vpow.pop %v2489
        %v2491 = vmul.f32 %v2467, 1.442695
        %v2492 = vpow.pop %v2491
        %v2493 = vmul.f32 %v2468, 1.442695
        %v2494 = vpow.pop %v2493
        %v2495 = vmul.f32 %v2469, 1.442695
        %v2496 = vpow.pop %v2495
        %v2497 = vmul.f32 %v2470, 1.442695
        %v2498 = vpow.pop %v2497
        %v2499 = vmul.f32 %v2471, 1.442695
        %v2500 = vpow.pop %v2499
        %v2501 = vmul.f32 %v2472, 1.442695
        %v2502 = vpow.pop %v2501
        %v2503 = vmul.f32 %v2473, 1.442695
        %v2504 = vpow.pop %v2503
        %v2505 = vmul.f32 %v2474, 1.442695
        %v2506 = vpow.pop %v2505
        %v2507 = vsel %vm1316, %v2476, 0.0
        %v2508 = vsel %vm1317, %v2478, 0.0
        %v2509 = vsel %vm1318, %v2480, 0.0
        %v2510 = vsel %vm1319, %v2482, 0.0
        %v2511 = vsel %vm1320, %v2484, 0.0
        %v2512 = vsel %vm1321, %v2486, 0.0
        %v2513 = vsel %vm1322, %v2488, 0.0
        %v2514 = vsel %vm1323, %v2490, 0.0
        %v2515 = vsel %vm1324, %v2492, 0.0
        %v2516 = vsel %vm1325, %v2494, 0.0
        %v2517 = vsel %vm1326, %v2496, 0.0
        %v2518 = vsel %vm1327, %v2498, 0.0
        %v2519 = vsel %vm1328, %v2500, 0.0
        %v2520 = vsel %vm1329, %v2502, 0.0
        %v2521 = vsel %vm1330, %v2504, 0.0
        %v2522 = vsel %vm1331, %v2506, 0.0
        %v2523 = vsub.f32 %v2315, %v2363
        %v2524 = vsub.f32 %v2316, %v2364
        %v2525 = vsub.f32 %v2317, %v2365
        %v2526 = vsub.f32 %v2318, %v2366
        %v2527 = vsub.f32 %v2319, %v2367
        %v2528 = vsub.f32 %v2320, %v2368
        %v2529 = vsub.f32 %v2321, %v2369
        %v2530 = vsub.f32 %v2322, %v2370
        %v2531 = vsub.f32 %v2323, %v2371
        %v2532 = vsub.f32 %v2324, %v2372
        %v2533 = vsub.f32 %v2325, %v2373
        %v2534 = vsub.f32 %v2326, %v2374
        %v2535 = vsub.f32 %v2327, %v2375
        %v2536 = vsub.f32 %v2328, %v2376
        %v2537 = vsub.f32 %v2329, %v2377
        %v2538 = vsub.f32 %v2330, %v2378
        %v2539 = vmul.f32 %v2523, 1.442695
        %v2540 = vpow.pop %v2539
        %v2541 = vmul.f32 %v2524, 1.442695
        %v2542 = vpow.pop %v2541
        %v2543 = vmul.f32 %v2525, 1.442695
        %v2544 = vpow.pop %v2543
        %v2545 = vmul.f32 %v2526, 1.442695
        %v2546 = vpow.pop %v2545
        %v2547 = vmul.f32 %v2527, 1.442695
        %v2548 = vpow.pop %v2547
        %v2549 = vmul.f32 %v2528, 1.442695
        %v2550 = vpow.pop %v2549
        %v2551 = vmul.f32 %v2529, 1.442695
        %v2552 = vpow.pop %v2551
        %v2553 = vmul.f32 %v2530, 1.442695
        %v2554 = vpow.pop %v2553
        %v2555 = vmul.f32 %v2531, 1.442695
        %v2556 = vpow.pop %v2555
        %v2557 = vmul.f32 %v2532, 1.442695
        %v2558 = vpow.pop %v2557
        %v2559 = vmul.f32 %v2533, 1.442695
        %v2560 = vpow.pop %v2559
        %v2561 = vmul.f32 %v2534, 1.442695
        %v2562 = vpow.pop %v2561
        %v2563 = vmul.f32 %v2535, 1.442695
        %v2564 = vpow.pop %v2563
        %v2565 = vmul.f32 %v2536, 1.442695
        %v2566 = vpow.pop %v2565
        %v2567 = vmul.f32 %v2537, 1.442695
        %v2568 = vpow.pop %v2567
        %v2569 = vmul.f32 %v2538, 1.442695
        %v2570 = vpow.pop %v2569
        %s2571 = scalar_lea.vmem [#allocation4], 128
        %v2572 = vld [vmem:[%s2571] sm:$0xff]
        %v2573 = vld [vmem:[%s2571 + $0x8] sm:$0xff]
        %v2574 = vld [vmem:[%s2571 + $0x10] sm:$0xff]
        %v2575 = vld [vmem:[%s2571 + $0x18] sm:$0xff]
        %v2576 = vld [vmem:[%s2571 + $0x20] sm:$0xff]
        %v2577 = vld [vmem:[%s2571 + $0x28] sm:$0xff]
        %v2578 = vld [vmem:[%s2571 + $0x30] sm:$0xff]
        %v2579 = vld [vmem:[%s2571 + $0x38] sm:$0xff]
        %v2580 = vld [vmem:[%s2571 + $0x40] sm:$0xff]
        %v2581 = vld [vmem:[%s2571 + $0x48] sm:$0xff]
        %v2582 = vld [vmem:[%s2571 + $0x50] sm:$0xff]
        %v2583 = vld [vmem:[%s2571 + $0x58] sm:$0xff]
        %v2584 = vld [vmem:[%s2571 + $0x60] sm:$0xff]
        %v2585 = vld [vmem:[%s2571 + $0x68] sm:$0xff]
        %v2586 = vld [vmem:[%s2571 + $0x70] sm:$0xff]
        %v2587 = vld [vmem:[%s2571 + $0x78] sm:$0xff]
        %v2588 = vmul.f32 %v2540, %v2572
        %v2589 = vmul.f32 %v2542, %v2573
        %v2590 = vmul.f32 %v2544, %v2574
        %v2591 = vmul.f32 %v2546, %v2575
        %v2592 = vmul.f32 %v2548, %v2576
        %v2593 = vmul.f32 %v2550, %v2577
        %v2594 = vmul.f32 %v2552, %v2578
        %v2595 = vmul.f32 %v2554, %v2579
        %v2596 = vmul.f32 %v2556, %v2580
        %v2597 = vmul.f32 %v2558, %v2581
        %v2598 = vmul.f32 %v2560, %v2582
        %v2599 = vmul.f32 %v2562, %v2583
        %v2600 = vmul.f32 %v2564, %v2584
        %v2601 = vmul.f32 %v2566, %v2585
        %v2602 = vmul.f32 %v2568, %v2586
        %v2603 = vmul.f32 %v2570, %v2587
        %2604 = vadd.xlane.f32.xlu0 %v2507
        %v2605 = vpop.xlane.xlu0 %2604
        %2606 = vadd.xlane.f32.xlu0 %v2508
        %v2607 = vpop.xlane.xlu0 %2606
        %2608 = vadd.xlane.f32.xlu0 %v2509
        %v2609 = vpop.xlane.xlu0 %2608
        %2610 = vadd.xlane.f32.xlu0 %v2510
        %v2611 = vpop.xlane.xlu0 %2610
        %2612 = vadd.xlane.f32.xlu0 %v2511
        %v2613 = vpop.xlane.xlu0 %2612
        %2614 = vadd.xlane.f32.xlu0 %v2512
        %v2615 = vpop.xlane.xlu0 %2614
        %2616 = vadd.xlane.f32.xlu0 %v2513
        %v2617 = vpop.xlane.xlu0 %2616
        %2618 = vadd.xlane.f32.xlu0 %v2514
        %v2619 = vpop.xlane.xlu0 %2618
        %2620 = vadd.xlane.f32.xlu0 %v2515
        %v2621 = vpop.xlane.xlu0 %2620
        %2622 = vadd.xlane.f32.xlu0 %v2516
        %v2623 = vpop.xlane.xlu0 %2622
        %2624 = vadd.xlane.f32.xlu0 %v2517
        %v2625 = vpop.xlane.xlu0 %2624
        %2626 = vadd.xlane.f32.xlu0 %v2518
        %v2627 = vpop.xlane.xlu0 %2626
        %2628 = vadd.xlane.f32.xlu0 %v2519
        %v2629 = vpop.xlane.xlu0 %2628
        %2630 = vadd.xlane.f32.xlu0 %v2520
        %v2631 = vpop.xlane.xlu0 %2630
        %2632 = vadd.xlane.f32.xlu0 %v2521
        %v2633 = vpop.xlane.xlu0 %2632
        %2634 = vadd.xlane.f32.xlu0 %v2522
        %v2635 = vpop.xlane.xlu0 %2634
        %v2636 = vadd.f32 %v2588, %v2605
        %v2637 = vadd.f32 %v2589, %v2607
        %v2638 = vadd.f32 %v2590, %v2609
        %v2639 = vadd.f32 %v2591, %v2611
        %v2640 = vadd.f32 %v2592, %v2613
        %v2641 = vadd.f32 %v2593, %v2615
        %v2642 = vadd.f32 %v2594, %v2617
        %v2643 = vadd.f32 %v2595, %v2619
        %v2644 = vadd.f32 %v2596, %v2621
        %v2645 = vadd.f32 %v2597, %v2623
        %v2646 = vadd.f32 %v2598, %v2625
        %v2647 = vadd.f32 %v2599, %v2627
        %v2648 = vadd.f32 %v2600, %v2629
        %v2649 = vadd.f32 %v2601, %v2631
        %v2650 = vadd.f32 %v2602, %v2633
        %v2651 = vadd.f32 %v2603, %v2635
        %2652 = vst.msk [vmem:[%s2571] sm:$0xff] %vm1684, %v2636
        %2653 = vst.msk [vmem:[%s2571 + $0x8] sm:$0xff] %vm1684, %v2637
        %2654 = vst.msk [vmem:[%s2571 + $0x10] sm:$0xff] %vm1684, %v2638
        %2655 = vst.msk [vmem:[%s2571 + $0x18] sm:$0xff] %vm1684, %v2639
        %2656 = vst.msk [vmem:[%s2571 + $0x20] sm:$0xff] %vm1684, %v2640
        %2657 = vst.msk [vmem:[%s2571 + $0x28] sm:$0xff] %vm1684, %v2641
        %2658 = vst.msk [vmem:[%s2571 + $0x30] sm:$0xff] %vm1684, %v2642
        %2659 = vst.msk [vmem:[%s2571 + $0x38] sm:$0xff] %vm1684, %v2643
        %2660 = vst.msk [vmem:[%s2571 + $0x40] sm:$0xff] %vm1684, %v2644
        %2661 = vst.msk [vmem:[%s2571 + $0x48] sm:$0xff] %vm1684, %v2645
        %2662 = vst.msk [vmem:[%s2571 + $0x50] sm:$0xff] %vm1684, %v2646
        %2663 = vst.msk [vmem:[%s2571 + $0x58] sm:$0xff] %vm1684, %v2647
        %2664 = vst.msk [vmem:[%s2571 + $0x60] sm:$0xff] %vm1684, %v2648
        %2665 = vst.msk [vmem:[%s2571 + $0x68] sm:$0xff] %vm1684, %v2649
        %2666 = vst.msk [vmem:[%s2571 + $0x70] sm:$0xff] %vm1684, %v2650
        %2667 = vst.msk [vmem:[%s2571 + $0x78] sm:$0xff] %vm1684, %v2651
        %s2668 = scalar_lea.vmem [#allocation5], 128
        %v2669 = vld [vmem:[%s2668] sm:$0xff]
        %v2670 = vld [vmem:[%s2668 + $0x8] sm:$0xff]
        %v2671 = vld [vmem:[%s2668 + $0x10] sm:$0xff]
        %v2672 = vld [vmem:[%s2668 + $0x18] sm:$0xff]
        %v2673 = vld [vmem:[%s2668 + $0x20] sm:$0xff]
        %v2674 = vld [vmem:[%s2668 + $0x28] sm:$0xff]
        %v2675 = vld [vmem:[%s2668 + $0x30] sm:$0xff]
        %v2676 = vld [vmem:[%s2668 + $0x38] sm:$0xff]
        %v2677 = vld [vmem:[%s2668 + $0x40] sm:$0xff]
        %v2678 = vld [vmem:[%s2668 + $0x48] sm:$0xff]
        %v2679 = vld [vmem:[%s2668 + $0x50] sm:$0xff]
        %v2680 = vld [vmem:[%s2668 + $0x58] sm:$0xff]
        %v2681 = vld [vmem:[%s2668 + $0x60] sm:$0xff]
        %v2682 = vld [vmem:[%s2668 + $0x68] sm:$0xff]
        %v2683 = vld [vmem:[%s2668 + $0x70] sm:$0xff]
        %v2684 = vld [vmem:[%s2668 + $0x78] sm:$0xff]
        %2686 = vset.pattern.permute.xlu0 0
        %2687 = vperm.xlu0 %2686, %v2540
        %v2688 = vpop.permute.xlu0 %2687
        %2691 = vset.pattern.permute.xlu0 0
        %2692 = vperm.xlu0 %2691, %v2542
        %v2693 = vpop.permute.xlu0 %2692
        %2696 = vset.pattern.permute.xlu0 0
        %2697 = vperm.xlu0 %2696, %v2544
        %v2698 = vpop.permute.xlu0 %2697
        %2701 = vset.pattern.permute.xlu0 0
        %2702 = vperm.xlu0 %2701, %v2546
        %v2703 = vpop.permute.xlu0 %2702
        %2706 = vset.pattern.permute.xlu0 0
        %2707 = vperm.xlu0 %2706, %v2548
        %v2708 = vpop.permute.xlu0 %2707
        %2711 = vset.pattern.permute.xlu0 0
        %2712 = vperm.xlu0 %2711, %v2550
        %v2713 = vpop.permute.xlu0 %2712
        %2716 = vset.pattern.permute.xlu0 0
        %2717 = vperm.xlu0 %2716, %v2552
        %v2718 = vpop.permute.xlu0 %2717
        %2721 = vset.pattern.permute.xlu0 0
        %2722 = vperm.xlu0 %2721, %v2554
        %v2723 = vpop.permute.xlu0 %2722
        %2726 = vset.pattern.permute.xlu0 0
        %2727 = vperm.xlu0 %2726, %v2556
        %v2728 = vpop.permute.xlu0 %2727
        %2731 = vset.pattern.permute.xlu0 0
        %2732 = vperm.xlu0 %2731, %v2558
        %v2733 = vpop.permute.xlu0 %2732
        %2736 = vset.pattern.permute.xlu0 0
        %2737 = vperm.xlu0 %2736, %v2560
        %v2738 = vpop.permute.xlu0 %2737
        %2741 = vset.pattern.permute.xlu0 0
        %2742 = vperm.xlu0 %2741, %v2562
        %v2743 = vpop.permute.xlu0 %2742
        %2746 = vset.pattern.permute.xlu0 0
        %2747 = vperm.xlu0 %2746, %v2564
        %v2748 = vpop.permute.xlu0 %2747
        %2751 = vset.pattern.permute.xlu0 0
        %2752 = vperm.xlu0 %2751, %v2566
        %v2753 = vpop.permute.xlu0 %2752
        %2756 = vset.pattern.permute.xlu0 0
        %2757 = vperm.xlu0 %2756, %v2568
        %v2758 = vpop.permute.xlu0 %2757
        %2761 = vset.pattern.permute.xlu0 0
        %2762 = vperm.xlu0 %2761, %v2570
        %v2763 = vpop.permute.xlu0 %2762
        %v2765 = vmul.f32 %v2688, %v2669
        %v2766 = vmul.f32 %v2693, %v2670
        %v2767 = vmul.f32 %v2698, %v2671
        %v2768 = vmul.f32 %v2703, %v2672
        %v2769 = vmul.f32 %v2708, %v2673
        %v2770 = vmul.f32 %v2713, %v2674
        %v2771 = vmul.f32 %v2718, %v2675
        %v2772 = vmul.f32 %v2723, %v2676
        %v2773 = vmul.f32 %v2728, %v2677
        %v2774 = vmul.f32 %v2733, %v2678
        %v2775 = vmul.f32 %v2738, %v2679
        %v2776 = vmul.f32 %v2743, %v2680
        %v2777 = vmul.f32 %v2748, %v2681
        %v2778 = vmul.f32 %v2753, %v2682
        %v2779 = vmul.f32 %v2758, %v2683
        %v2780 = vmul.f32 %v2763, %v2684
        %v2781 = vpack.c.bf16 %v2508, %v2507
        %v2782 = vpack.c.bf16 %v2510, %v2509
        %v2783 = vpack.c.bf16 %v2512, %v2511
        %v2784 = vpack.c.bf16 %v2514, %v2513
        %v2785 = vpack.c.bf16 %v2516, %v2515
        %v2786 = vpack.c.bf16 %v2518, %v2517
        %v2787 = vpack.c.bf16 %v2520, %v2519
        %v2788 = vpack.c.bf16 %v2522, %v2521
        %v2789 = vpack.c.bf16 %v2029, %v2026
        %v2790 = vpack.c.bf16 %v2037, %v2034
        %v2791 = vpack.c.bf16 %v2045, %v2042
        %v2792 = vpack.c.bf16 %v2053, %v2050
        %v2793 = vpack.c.bf16 %v2061, %v2058
        %v2794 = vpack.c.bf16 %v2069, %v2066
        %v2795 = vpack.c.bf16 %v2077, %v2074
        %v2796 = vpack.c.bf16 %v2085, %v2082
        %2797 = vmatprep.subr.bf16.mxu0 0
        %2798 = vmatpush1.bf16.msra.mxu0 %v2789
        %2799 = vmatprep.subr.bf16.mxu0 0
        %2800 = vmatpush1.bf16.msra.mxu0 %v2790
        %2801 = vmatprep.subr.bf16.mxu0 0
        %2802 = vmatpush1.bf16.msra.mxu0 %v2791
        %2803 = vmatprep.subr.bf16.mxu0 0
        %2804 = vmatpush1.bf16.msra.mxu0 %v2792
        %2805 = vmatprep.subr.bf16.mxu0 0
        %2806 = vmatpush1.bf16.msra.mxu0 %v2793
        %2807 = vmatprep.subr.bf16.mxu0 0
        %2808 = vmatpush1.bf16.msra.mxu0 %v2794
        %2809 = vmatprep.subr.bf16.mxu0 0
        %2810 = vmatpush1.bf16.msra.mxu0 %v2795
        %2811 = vmatprep.subr.bf16.mxu0 0
        %2812 = vmatpush1.bf16.msra.mxu0 %v2796
        %2813 = vmatprep.subr.bf16.mxu0 0
        %2814 = vmatpush1.bf16.msra.mxu0 0
        %2815 = vmatprep.subr.bf16.mxu0 0
        %2816 = vmatpush1.bf16.msra.mxu0 0
        %2817 = vmatprep.subr.bf16.mxu0 0
        %2818 = vmatpush1.bf16.msra.mxu0 0
        %2819 = vmatprep.subr.bf16.mxu0 0
        %2820 = vmatpush1.bf16.msra.mxu0 0
        %2821 = vmatprep.subr.bf16.mxu0 0
        %2822 = vmatpush1.bf16.msra.mxu0 0
        %2823 = vmatprep.subr.bf16.mxu0 0
        %2824 = vmatpush1.bf16.msra.mxu0 0
        %2825 = vmatprep.subr.bf16.mxu0 0
        %2826 = vmatpush1.bf16.msra.mxu0 0
        %2827 = vmatprep.subr.bf16.mxu0 0
        %2828 = vmatpush1.bf16.msra.mxu0 0
        %2829 = vmatprep.mubr.bf16.mxu0 0
        %2830 = vmatmul.mubr.bf16.gmra.mrb[0].mxu0 %v2781
        %v2831 = vpop.f32.mrb[0].mxu0
        %v2832 = vadd.f32 0.0, %v2831
        %v2833 = vpop.f32.mrb[0].mxu0
        %v2834 = vpop.f32.mrb[0].mxu0
        %v2835 = vadd.f32 0.0, %v2834
        %v2836 = vpop.f32.mrb[0].mxu0
        %2837 = vmatprep.mubr.bf16.mxu0 0
        %2838 = vmatmul.mubr.bf16.gmra.mrb[0].mxu0 %v2782
        %v2839 = vpop.f32.mrb[0].mxu0
        %v2840 = vadd.f32 0.0, %v2839
        %v2841 = vpop.f32.mrb[0].mxu0
        %v2842 = vpop.f32.mrb[0].mxu0
        %v2843 = vadd.f32 0.0, %v2842
        %v2844 = vpop.f32.mrb[0].mxu0
        %2845 = vmatprep.mubr.bf16.mxu0 0
        %2846 = vmatmul.mubr.bf16.gmra.mrb[0].mxu0 %v2783
        %v2847 = vpop.f32.mrb[0].mxu0
        %v2848 = vadd.f32 0.0, %v2847
        %v2849 = vpop.f32.mrb[0].mxu0
        %v2850 = vpop.f32.mrb[0].mxu0
        %v2851 = vadd.f32 0.0, %v2850
        %v2852 = vpop.f32.mrb[0].mxu0
        %2853 = vmatprep.mubr.bf16.mxu0 0
        %2854 = vmatmul.mubr.bf16.gmra.mrb[0].mxu0 %v2784
        %v2855 = vpop.f32.mrb[0].mxu0
        %v2856 = vadd.f32 0.0, %v2855
        %v2857 = vpop.f32.mrb[0].mxu0
        %v2858 = vpop.f32.mrb[0].mxu0
        %v2859 = vadd.f32 0.0, %v2858
        %v2860 = vpop.f32.mrb[0].mxu0
        %2861 = vmatprep.mubr.bf16.mxu0 0
        %2862 = vmatmul.mubr.bf16.gmra.mrb[0].mxu0 %v2785
        %v2863 = vpop.f32.mrb[0].mxu0
        %v2864 = vadd.f32 0.0, %v2863
        %v2865 = vpop.f32.mrb[0].mxu0
        %v2866 = vpop.f32.mrb[0].mxu0
        %v2867 = vadd.f32 0.0, %v2866
        %v2868 = vpop.f32.mrb[0].mxu0
        %2869 = vmatprep.mubr.bf16.mxu0 0
        %2870 = vmatmul.mubr.bf16.gmra.mrb[0].mxu0 %v2786
        %v2871 = vpop.f32.mrb[0].mxu0
        %v2872 = vadd.f32 0.0, %v2871
        %v2873 = vpop.f32.mrb[0].mxu0
        %v2874 = vpop.f32.mrb[0].mxu0
        %v2875 = vadd.f32 0.0, %v2874
        %v2876 = vpop.f32.mrb[0].mxu0
        %2877 = vmatprep.mubr.bf16.mxu0 0
        %2878 = vmatmul.mubr.bf16.gmra.mrb[0].mxu0 %v2787
        %v2879 = vpop.f32.mrb[0].mxu0
        %v2880 = vadd.f32 0.0, %v2879
        %v2881 = vpop.f32.mrb[0].mxu0
        %v2882 = vpop.f32.mrb[0].mxu0
        %v2883 = vadd.f32 0.0, %v2882
        %v2884 = vpop.f32.mrb[0].mxu0
        %2885 = vmatprep.mubr.bf16.mxu0 0
        %2886 = vmatmul.mubr.bf16.gmra.mrb[0].mxu0 %v2788
        %v2887 = vpop.f32.mrb[0].mxu0
        %v2888 = vadd.f32 0.0, %v2887
        %v2889 = vpop.f32.mrb[0].mxu0
        %v2890 = vpop.f32.mrb[0].mxu0
        %v2891 = vadd.f32 0.0, %v2890
        %v2892 = vpop.f32.mrb[0].mxu0
        %2893 = vdwg.mxu0
        %v2894 = vadd.f32 %v2765, %v2832
        %v2895 = vadd.f32 %v2766, %v2835
        %v2896 = vadd.f32 %v2767, %v2840
        %v2897 = vadd.f32 %v2768, %v2843
        %v2898 = vadd.f32 %v2769, %v2848
        %v2899 = vadd.f32 %v2770, %v2851
        %v2900 = vadd.f32 %v2771, %v2856
        %v2901 = vadd.f32 %v2772, %v2859
        %v2902 = vadd.f32 %v2773, %v2864
        %v2903 = vadd.f32 %v2774, %v2867
        %v2904 = vadd.f32 %v2775, %v2872
        %v2905 = vadd.f32 %v2776, %v2875
        %v2906 = vadd.f32 %v2777, %v2880
        %v2907 = vadd.f32 %v2778, %v2883
        %v2908 = vadd.f32 %v2779, %v2888
        %v2909 = vadd.f32 %v2780, %v2891
        %2910 = vst.msk [vmem:[%s2668] sm:$0xff] %vm954, %v2894
        %2911 = vst.msk [vmem:[%s2668 + $0x8] sm:$0xff] %vm954, %v2895
        %2912 = vst.msk [vmem:[%s2668 + $0x10] sm:$0xff] %vm954, %v2896
        %2913 = vst.msk [vmem:[%s2668 + $0x18] sm:$0xff] %vm954, %v2897
        %2914 = vst.msk [vmem:[%s2668 + $0x20] sm:$0xff] %vm954, %v2898
        %2915 = vst.msk [vmem:[%s2668 + $0x28] sm:$0xff] %vm954, %v2899
        %2916 = vst.msk [vmem:[%s2668 + $0x30] sm:$0xff] %vm954, %v2900
        %2917 = vst.msk [vmem:[%s2668 + $0x38] sm:$0xff] %vm954, %v2901
        %2918 = vst.msk [vmem:[%s2668 + $0x40] sm:$0xff] %vm954, %v2902
        %2919 = vst.msk [vmem:[%s2668 + $0x48] sm:$0xff] %vm954, %v2903
        %2920 = vst.msk [vmem:[%s2668 + $0x50] sm:$0xff] %vm954, %v2904
        %2921 = vst.msk [vmem:[%s2668 + $0x58] sm:$0xff] %vm954, %v2905
        %2922 = vst.msk [vmem:[%s2668 + $0x60] sm:$0xff] %vm954, %v2906
        %2923 = vst.msk [vmem:[%s2668 + $0x68] sm:$0xff] %vm954, %v2907
        %2924 = vst.msk [vmem:[%s2668 + $0x70] sm:$0xff] %vm954, %v2908
        %2925 = vst.msk [vmem:[%s2668 + $0x78] sm:$0xff] %vm954, %v2909
        %2926 = vst.msk [vmem:[%s2314] sm:$0xff] %vm1684, %v2363
        %2927 = vst.msk [vmem:[%s2314 + $0x8] sm:$0xff] %vm1684, %v2364
        %2928 = vst.msk [vmem:[%s2314 + $0x10] sm:$0xff] %vm1684, %v2365
        %2929 = vst.msk [vmem:[%s2314 + $0x18] sm:$0xff] %vm1684, %v2366
        %2930 = vst.msk [vmem:[%s2314 + $0x20] sm:$0xff] %vm1684, %v2367
        %2931 = vst.msk [vmem:[%s2314 + $0x28] sm:$0xff] %vm1684, %v2368
        %2932 = vst.msk [vmem:[%s2314 + $0x30] sm:$0xff] %vm1684, %v2369
        %2933 = vst.msk [vmem:[%s2314 + $0x38] sm:$0xff] %vm1684, %v2370
        %2934 = vst.msk [vmem:[%s2314 + $0x40] sm:$0xff] %vm1684, %v2371
        %2935 = vst.msk [vmem:[%s2314 + $0x48] sm:$0xff] %vm1684, %v2372
        %2936 = vst.msk [vmem:[%s2314 + $0x50] sm:$0xff] %vm1684, %v2373
        %2937 = vst.msk [vmem:[%s2314 + $0x58] sm:$0xff] %vm1684, %v2374
        %2938 = vst.msk [vmem:[%s2314 + $0x60] sm:$0xff] %vm1684, %v2375
        %2939 = vst.msk [vmem:[%s2314 + $0x68] sm:$0xff] %vm1684, %v2376
        %2940 = vst.msk [vmem:[%s2314 + $0x70] sm:$0xff] %vm1684, %v2377
        %2941 = vst.msk [vmem:[%s2314 + $0x78] sm:$0xff] %vm1684, %v2378
        %p2942 = scmp.eq.s32.totalorder %s25, 1
        // Predicated region
        $region102: #{pagnn_aggregation.3} parent=92 // pred_check
          %p2943 = pneg %p2942
        $region103: #{pagnn_aggregation.3} parent=92 // pred_check_branch
          %2945 = sbr.rel (%p2943) target = $region105
        $region104: #{pagnn_aggregation.3} parent=92 // pred_region
          %v2946 = vld [vmem:[%s483] sm:$0xff]
          %v2947 = vld [vmem:[%s483 + $0x8] sm:$0xff]
          %v2948 = vld [vmem:[%s483 + $0x10] sm:$0xff]
          %v2949 = vld [vmem:[%s483 + $0x18] sm:$0xff]
          %v2950 = vld [vmem:[%s483 + $0x20] sm:$0xff]
          %v2951 = vld [vmem:[%s483 + $0x28] sm:$0xff]
          %v2952 = vld [vmem:[%s483 + $0x30] sm:$0xff]
          %v2953 = vld [vmem:[%s483 + $0x38] sm:$0xff]
          %v2954 = vld [vmem:[%s483 + $0x40] sm:$0xff]
          %v2955 = vld [vmem:[%s483 + $0x48] sm:$0xff]
          %v2956 = vld [vmem:[%s483 + $0x50] sm:$0xff]
          %v2957 = vld [vmem:[%s483 + $0x58] sm:$0xff]
          %v2958 = vld [vmem:[%s483 + $0x60] sm:$0xff]
          %v2959 = vld [vmem:[%s483 + $0x68] sm:$0xff]
          %v2960 = vld [vmem:[%s483 + $0x70] sm:$0xff]
          %v2961 = vld [vmem:[%s483 + $0x78] sm:$0xff]
          %v2962 = vld [vmem:[#allocation4] sm:$0xff]
          %v2963 = vld [vmem:[#allocation4 + $0x8] sm:$0xff]
          %v2964 = vld [vmem:[#allocation4 + $0x10] sm:$0xff]
          %v2965 = vld [vmem:[#allocation4 + $0x18] sm:$0xff]
          %v2966 = vld [vmem:[#allocation4 + $0x20] sm:$0xff]
          %v2967 = vld [vmem:[#allocation4 + $0x28] sm:$0xff]
          %v2968 = vld [vmem:[#allocation4 + $0x30] sm:$0xff]
          %v2969 = vld [vmem:[#allocation4 + $0x38] sm:$0xff]
          %v2970 = vld [vmem:[#allocation4 + $0x40] sm:$0xff]
          %v2971 = vld [vmem:[#allocation4 + $0x48] sm:$0xff]
          %v2972 = vld [vmem:[#allocation4 + $0x50] sm:$0xff]
          %v2973 = vld [vmem:[#allocation4 + $0x58] sm:$0xff]
          %v2974 = vld [vmem:[#allocation4 + $0x60] sm:$0xff]
          %v2975 = vld [vmem:[#allocation4 + $0x68] sm:$0xff]
          %v2976 = vld [vmem:[#allocation4 + $0x70] sm:$0xff]
          %v2977 = vld [vmem:[#allocation4 + $0x78] sm:$0xff]
          %v2978 = vrcp.pop %v2962
          %v2979 = vrcp.pop %v2963
          %v2980 = vrcp.pop %v2964
          %v2981 = vrcp.pop %v2965
          %v2982 = vrcp.pop %v2966
          %v2983 = vrcp.pop %v2967
          %v2984 = vrcp.pop %v2968
          %v2985 = vrcp.pop %v2969
          %v2986 = vrcp.pop %v2970
          %v2987 = vrcp.pop %v2971
          %v2988 = vrcp.pop %v2972
          %v2989 = vrcp.pop %v2973
          %v2990 = vrcp.pop %v2974
          %v2991 = vrcp.pop %v2975
          %v2992 = vrcp.pop %v2976
          %v2993 = vrcp.pop %v2977
          %v2994 = vld [vmem:[#allocation5] sm:$0xff]
          %v2995 = vld [vmem:[#allocation5 + $0x8] sm:$0xff]
          %v2996 = vld [vmem:[#allocation5 + $0x10] sm:$0xff]
          %v2997 = vld [vmem:[#allocation5 + $0x18] sm:$0xff]
          %v2998 = vld [vmem:[#allocation5 + $0x20] sm:$0xff]
          %v2999 = vld [vmem:[#allocation5 + $0x28] sm:$0xff]
          %v3000 = vld [vmem:[#allocation5 + $0x30] sm:$0xff]
          %v3001 = vld [vmem:[#allocation5 + $0x38] sm:$0xff]
          %v3002 = vld [vmem:[#allocation5 + $0x40] sm:$0xff]
          %v3003 = vld [vmem:[#allocation5 + $0x48] sm:$0xff]
          %v3004 = vld [vmem:[#allocation5 + $0x50] sm:$0xff]
          %v3005 = vld [vmem:[#allocation5 + $0x58] sm:$0xff]
          %v3006 = vld [vmem:[#allocation5 + $0x60] sm:$0xff]
          %v3007 = vld [vmem:[#allocation5 + $0x68] sm:$0xff]
          %v3008 = vld [vmem:[#allocation5 + $0x70] sm:$0xff]
          %v3009 = vld [vmem:[#allocation5 + $0x78] sm:$0xff]
          %3011 = vset.pattern.permute.xlu0 0
          %3012 = vperm.xlu0 %3011, %v2978
          %v3013 = vpop.permute.xlu0 %3012
          %3016 = vset.pattern.permute.xlu0 0
          %3017 = vperm.xlu0 %3016, %v2979
          %v3018 = vpop.permute.xlu0 %3017
          %3021 = vset.pattern.permute.xlu0 0
          %3022 = vperm.xlu0 %3021, %v2980
          %v3023 = vpop.permute.xlu0 %3022
          %3026 = vset.pattern.permute.xlu0 0
          %3027 = vperm.xlu0 %3026, %v2981
          %v3028 = vpop.permute.xlu0 %3027
          %3031 = vset.pattern.permute.xlu0 0
          %3032 = vperm.xlu0 %3031, %v2982
          %v3033 = vpop.permute.xlu0 %3032
          %3036 = vset.pattern.permute.xlu0 0
          %3037 = vperm.xlu0 %3036, %v2983
          %v3038 = vpop.permute.xlu0 %3037
          %3041 = vset.pattern.permute.xlu0 0
          %3042 = vperm.xlu0 %3041, %v2984
          %v3043 = vpop.permute.xlu0 %3042
          %3046 = vset.pattern.permute.xlu0 0
          %3047 = vperm.xlu0 %3046, %v2985
          %v3048 = vpop.permute.xlu0 %3047
          %3051 = vset.pattern.permute.xlu0 0
          %3052 = vperm.xlu0 %3051, %v2986
          %v3053 = vpop.permute.xlu0 %3052
          %3056 = vset.pattern.permute.xlu0 0
          %3057 = vperm.xlu0 %3056, %v2987
          %v3058 = vpop.permute.xlu0 %3057
          %3061 = vset.pattern.permute.xlu0 0
          %3062 = vperm.xlu0 %3061, %v2988
          %v3063 = vpop.permute.xlu0 %3062
          %3066 = vset.pattern.permute.xlu0 0
          %3067 = vperm.xlu0 %3066, %v2989
          %v3068 = vpop.permute.xlu0 %3067
          %3071 = vset.pattern.permute.xlu0 0
          %3072 = vperm.xlu0 %3071, %v2990
          %v3073 = vpop.permute.xlu0 %3072
          %3076 = vset.pattern.permute.xlu0 0
          %3077 = vperm.xlu0 %3076, %v2991
          %v3078 = vpop.permute.xlu0 %3077
          %3081 = vset.pattern.permute.xlu0 0
          %3082 = vperm.xlu0 %3081, %v2992
          %v3083 = vpop.permute.xlu0 %3082
          %3086 = vset.pattern.permute.xlu0 0
          %3087 = vperm.xlu0 %3086, %v2993
          %v3088 = vpop.permute.xlu0 %3087
          %v3090 = vmul.f32 %v2994, %v3013
          %v3091 = vmul.f32 %v2995, %v3018
          %v3092 = vmul.f32 %v2996, %v3023
          %v3093 = vmul.f32 %v2997, %v3028
          %v3094 = vmul.f32 %v2998, %v3033
          %v3095 = vmul.f32 %v2999, %v3038
          %v3096 = vmul.f32 %v3000, %v3043
          %v3097 = vmul.f32 %v3001, %v3048
          %v3098 = vmul.f32 %v3002, %v3053
          %v3099 = vmul.f32 %v3003, %v3058
          %v3100 = vmul.f32 %v3004, %v3063
          %v3101 = vmul.f32 %v3005, %v3068
          %v3102 = vmul.f32 %v3006, %v3073
          %v3103 = vmul.f32 %v3007, %v3078
          %v3104 = vmul.f32 %v3008, %v3083
          %v3105 = vmul.f32 %v3009, %v3088
          %v3106 = vld [vmem:[%s6] sm:$0x1]
          %v3108 = vlaneseq
          %v3109 = vshrl.u32 %v3108, 7
          %v3110 = vsub.s32 0, %v3109
          %v3111 = vrot.slane %v3106, %v3110
          %v3113 = vadd.f32 %v3090, %v3111
          %v3114 = vadd.f32 %v3091, %v3111
          %v3115 = vadd.f32 %v3092, %v3111
          %v3116 = vadd.f32 %v3093, %v3111
          %v3117 = vadd.f32 %v3094, %v3111
          %v3118 = vadd.f32 %v3095, %v3111
          %v3119 = vadd.f32 %v3096, %v3111
          %v3120 = vadd.f32 %v3097, %v3111
          %v3121 = vadd.f32 %v3098, %v3111
          %v3122 = vadd.f32 %v3099, %v3111
          %v3123 = vadd.f32 %v3100, %v3111
          %v3124 = vadd.f32 %v3101, %v3111
          %v3125 = vadd.f32 %v3102, %v3111
          %v3126 = vadd.f32 %v3103, %v3111
          %v3127 = vadd.f32 %v3104, %v3111
          %v3128 = vadd.f32 %v3105, %v3111
          %v3129 = vtanh.pop %v3113
          %v3130 = vtanh.pop %v3114
          %v3131 = vtanh.pop %v3115
          %v3132 = vtanh.pop %v3116
          %v3133 = vtanh.pop %v3117
          %v3134 = vtanh.pop %v3118
          %v3135 = vtanh.pop %v3119
          %v3136 = vtanh.pop %v3120
          %v3137 = vtanh.pop %v3121
          %v3138 = vtanh.pop %v3122
          %v3139 = vtanh.pop %v3123
          %v3140 = vtanh.pop %v3124
          %v3141 = vtanh.pop %v3125
          %v3142 = vtanh.pop %v3126
          %v3143 = vtanh.pop %v3127
          %v3144 = vtanh.pop %v3128
          %v3145 = vld [vmem:[%s7] sm:$0xf]
          %v3146 = vld [vmem:[%s7 + $0x4] sm:$0xf]
          %v3147 = vld [vmem:[%s7 + $0x8] sm:$0xf]
          %v3148 = vld [vmem:[%s7 + $0xc] sm:$0xf]
          %v3149 = vld [vmem:[%s7 + $0x10] sm:$0xf]
          %v3150 = vld [vmem:[%s7 + $0x14] sm:$0xf]
          %v3151 = vld [vmem:[%s7 + $0x18] sm:$0xf]
          %v3152 = vld [vmem:[%s7 + $0x1c] sm:$0xf]
          %v3153 = vld [vmem:[%s7 + $0x20] sm:$0xf]
          %v3154 = vld [vmem:[%s7 + $0x24] sm:$0xf]
          %v3155 = vld [vmem:[%s7 + $0x28] sm:$0xf]
          %v3156 = vld [vmem:[%s7 + $0x2c] sm:$0xf]
          %v3157 = vld [vmem:[%s7 + $0x30] sm:$0xf]
          %v3158 = vld [vmem:[%s7 + $0x34] sm:$0xf]
          %v3159 = vld [vmem:[%s7 + $0x38] sm:$0xf]
          %v3160 = vld [vmem:[%s7 + $0x3c] sm:$0xf]
          %v3161 = vld [vmem:[%s7 + $0x40] sm:$0xf]
          %v3162 = vld [vmem:[%s7 + $0x44] sm:$0xf]
          %v3163 = vld [vmem:[%s7 + $0x48] sm:$0xf]
          %v3164 = vld [vmem:[%s7 + $0x4c] sm:$0xf]
          %v3165 = vld [vmem:[%s7 + $0x50] sm:$0xf]
          %v3166 = vld [vmem:[%s7 + $0x54] sm:$0xf]
          %v3167 = vld [vmem:[%s7 + $0x58] sm:$0xf]
          %v3168 = vld [vmem:[%s7 + $0x5c] sm:$0xf]
          %v3169 = vld [vmem:[%s7 + $0x60] sm:$0xf]
          %v3170 = vld [vmem:[%s7 + $0x64] sm:$0xf]
          %v3171 = vld [vmem:[%s7 + $0x68] sm:$0xf]
          %v3172 = vld [vmem:[%s7 + $0x6c] sm:$0xf]
          %v3173 = vld [vmem:[%s7 + $0x70] sm:$0xf]
          %v3174 = vld [vmem:[%s7 + $0x74] sm:$0xf]
          %v3175 = vld [vmem:[%s7 + $0x78] sm:$0xf]
          %v3176 = vld [vmem:[%s7 + $0x7c] sm:$0xf]
          %v3177 = vld [vmem:[%s8] sm:$0xf]
          %v3178 = vld [vmem:[%s8 + $0x4] sm:$0xf]
          %v3179 = vld [vmem:[%s8 + $0x8] sm:$0xf]
          %v3180 = vld [vmem:[%s8 + $0xc] sm:$0xf]
          %v3181 = vld [vmem:[%s8 + $0x10] sm:$0xf]
          %v3182 = vld [vmem:[%s8 + $0x14] sm:$0xf]
          %v3183 = vld [vmem:[%s8 + $0x18] sm:$0xf]
          %v3184 = vld [vmem:[%s8 + $0x1c] sm:$0xf]
          %v3185 = vld [vmem:[%s8 + $0x20] sm:$0xf]
          %v3186 = vld [vmem:[%s8 + $0x24] sm:$0xf]
          %v3187 = vld [vmem:[%s8 + $0x28] sm:$0xf]
          %v3188 = vld [vmem:[%s8 + $0x2c] sm:$0xf]
          %v3189 = vld [vmem:[%s8 + $0x30] sm:$0xf]
          %v3190 = vld [vmem:[%s8 + $0x34] sm:$0xf]
          %v3191 = vld [vmem:[%s8 + $0x38] sm:$0xf]
          %v3192 = vld [vmem:[%s8 + $0x3c] sm:$0xf]
          %v3193 = vpack.c.bf16 %v3130, %v3129
          %v3194 = vpack.c.bf16 %v3132, %v3131
          %v3195 = vpack.c.bf16 %v3134, %v3133
          %v3196 = vpack.c.bf16 %v3136, %v3135
          %v3197 = vpack.c.bf16 %v3138, %v3137
          %v3198 = vpack.c.bf16 %v3140, %v3139
          %v3199 = vpack.c.bf16 %v3142, %v3141
          %v3200 = vpack.c.bf16 %v3144, %v3143
          %v3201 = vpack.c.bf16 %v2947, %v2946
          %v3202 = vpack.c.bf16 %v2949, %v2948
          %v3203 = vpack.c.bf16 %v2951, %v2950
          %v3204 = vpack.c.bf16 %v2953, %v2952
          %v3205 = vpack.c.bf16 %v2955, %v2954
          %v3206 = vpack.c.bf16 %v2957, %v2956
          %v3207 = vpack.c.bf16 %v2959, %v2958
          %v3208 = vpack.c.bf16 %v2961, %v2960
          %v3213 = vunpack.c.l.b16 %v3149
          %v3214 = vunpack.c.l.b16 %v3150
          %v3215 = vunpack.c.l.b16 %v3151
          %v3216 = vunpack.c.l.b16 %v3152
          %v3217 = vpack.c.b16 %v3214, %v3213
          %v3218 = vpack.c.b16 %v3216, %v3215
          %v3222 = vsel %vm954, %v3201, 0
          %v3225 = vsel %vm954, %v3202, 0
          %v3228 = vsel %vm954, %v3203, 0
          %v3231 = vsel %vm954, %v3204, 0
          %v3234 = vsel %vm954, %v3205, 0
          %v3237 = vsel %vm954, %v3206, 0
          %v3240 = vsel %vm954, %v3207, 0
          %v3243 = vsel %vm954, %v3208, 0
          %3245 = vmatprep.subr.bf16.mxu0 0
          %3246 = vmatpush1.bf16.msra.mxu0 %v3217
          %3247 = vmatprep.subr.bf16.mxu0 0
          %3248 = vmatpush1.bf16.msra.mxu0 %v3218
          %3249 = vmatprep.subr.bf16.mxu0 0
          %3250 = vmatpush1.bf16.msra.mxu0 0
          %3251 = vmatprep.subr.bf16.mxu0 0
          %3252 = vmatpush1.bf16.msra.mxu0 0
          %3253 = vmatprep.subr.bf16.mxu0 0
          %3254 = vmatpush1.bf16.msra.mxu0 0
          %3255 = vmatprep.subr.bf16.mxu0 0
          %3256 = vmatpush1.bf16.msra.mxu0 0
          %3257 = vmatprep.subr.bf16.mxu0 0
          %3258 = vmatpush1.bf16.msra.mxu0 0
          %3259 = vmatprep.subr.bf16.mxu0 0
          %3260 = vmatpush1.bf16.msra.mxu0 0
          %3261 = vmatprep.subr.bf16.mxu0 0
          %3262 = vmatpush1.bf16.msra.mxu0 0
          %3263 = vmatprep.subr.bf16.mxu0 0
          %3264 = vmatpush1.bf16.msra.mxu0 0
          %3265 = vmatprep.subr.bf16.mxu0 0
          %3266 = vmatpush1.bf16.msra.mxu0 0
          %3267 = vmatprep.subr.bf16.mxu0 0
          %3268 = vmatpush1.bf16.msra.mxu0 0
          %3269 = vmatprep.subr.bf16.mxu0 0
          %3270 = vmatpush1.bf16.msra.mxu0 0
          %3271 = vmatprep.subr.bf16.mxu0 0
          %3272 = vmatpush1.bf16.msra.mxu0 0
          %3273 = vmatprep.subr.bf16.mxu0 0
          %3274 = vmatpush1.bf16.msra.mxu0 0
          %3275 = vmatprep.subr.bf16.mxu0 0
          %3276 = vmatpush1.bf16.msra.mxu0 0
          %3277 = vmatprep.mubr.bf16.mxu0 0
          %3278 = vmatmul.mubr.bf16.gmra.mrb[0].mxu0 %v3222
          %v3279 = vpop.f32.mrb[0].mxu0
          %v3280 = vadd.f32 0.0, %v3279
          %v3281 = vpop.f32.mrb[0].mxu0
          %v3282 = vpop.f32.mrb[0].mxu0
          %v3283 = vadd.f32 0.0, %v3282
          %v3284 = vpop.f32.mrb[0].mxu0
          %3285 = vmatprep.mubr.bf16.mxu0 0
          %3286 = vmatmul.mubr.bf16.gmra.mrb[0].mxu0 %v3225
          %v3287 = vpop.f32.mrb[0].mxu0
          %v3288 = vadd.f32 0.0, %v3287
          %v3289 = vpop.f32.mrb[0].mxu0
          %v3290 = vpop.f32.mrb[0].mxu0
          %v3291 = vadd.f32 0.0, %v3290
          %v3292 = vpop.f32.mrb[0].mxu0
          %3293 = vmatprep.mubr.bf16.mxu0 0
          %3294 = vmatmul.mubr.bf16.gmra.mrb[0].mxu0 %v3228
          %v3295 = vpop.f32.mrb[0].mxu0
          %v3296 = vadd.f32 0.0, %v3295
          %v3297 = vpop.f32.mrb[0].mxu0
          %v3298 = vpop.f32.mrb[0].mxu0
          %v3299 = vadd.f32 0.0, %v3298
          %v3300 = vpop.f32.mrb[0].mxu0
          %3301 = vmatprep.mubr.bf16.mxu0 0
          %3302 = vmatmul.mubr.bf16.gmra.mrb[0].mxu0 %v3231
          %v3303 = vpop.f32.mrb[0].mxu0
          %v3304 = vadd.f32 0.0, %v3303
          %v3305 = vpop.f32.mrb[0].mxu0
          %v3306 = vpop.f32.mrb[0].mxu0
          %v3307 = vadd.f32 0.0, %v3306
          %v3308 = vpop.f32.mrb[0].mxu0
          %3309 = vmatprep.mubr.bf16.mxu0 0
          %3310 = vmatmul.mubr.bf16.gmra.mrb[0].mxu0 %v3234
          %v3311 = vpop.f32.mrb[0].mxu0
          %v3312 = vadd.f32 0.0, %v3311
          %v3313 = vpop.f32.mrb[0].mxu0
          %v3314 = vpop.f32.mrb[0].mxu0
          %v3315 = vadd.f32 0.0, %v3314
          %v3316 = vpop.f32.mrb[0].mxu0
          %3317 = vmatprep.mubr.bf16.mxu0 0
          %3318 = vmatmul.mubr.bf16.gmra.mrb[0].mxu0 %v3237
          %v3319 = vpop.f32.mrb[0].mxu0
          %v3320 = vadd.f32 0.0, %v3319
          %v3321 = vpop.f32.mrb[0].mxu0
          %v3322 = vpop.f32.mrb[0].mxu0
          %v3323 = vadd.f32 0.0, %v3322
          %v3324 = vpop.f32.mrb[0].mxu0
          %3325 = vmatprep.mubr.bf16.mxu0 0
          %3326 = vmatmul.mubr.bf16.gmra.mrb[0].mxu0 %v3240
          %v3327 = vpop.f32.mrb[0].mxu0
          %v3328 = vadd.f32 0.0, %v3327
          %v3329 = vpop.f32.mrb[0].mxu0
          %v3330 = vpop.f32.mrb[0].mxu0
          %v3331 = vadd.f32 0.0, %v3330
          %v3332 = vpop.f32.mrb[0].mxu0
          %3333 = vmatprep.mubr.bf16.mxu0 0
          %3334 = vmatmul.mubr.bf16.gmra.mrb[0].mxu0 %v3243
          %v3335 = vpop.f32.mrb[0].mxu0
          %v3336 = vadd.f32 0.0, %v3335
          %v3337 = vpop.f32.mrb[0].mxu0
          %v3338 = vpop.f32.mrb[0].mxu0
          %v3339 = vadd.f32 0.0, %v3338
          %v3340 = vpop.f32.mrb[0].mxu0
          %3341 = vdwg.mxu0
          %v3346 = vunpack.c.l.b16 %v3145
          %v3347 = vunpack.c.l.b16 %v3146
          %v3348 = vunpack.c.l.b16 %v3147
          %v3349 = vunpack.c.l.b16 %v3148
          %v3350 = vpack.c.b16 %v3347, %v3346
          %v3351 = vpack.c.b16 %v3349, %v3348
          %v3355 = vsel %vm954, %v3193, 0
          %v3358 = vsel %vm954, %v3194, 0
          %v3361 = vsel %vm954, %v3195, 0
          %v3364 = vsel %vm954, %v3196, 0
          %v3367 = vsel %vm954, %v3197, 0
          %v3370 = vsel %vm954, %v3198, 0
          %v3373 = vsel %vm954, %v3199, 0
          %v3376 = vsel %vm954, %v3200, 0
          %3378 = vmatprep.subr.bf16.mxu0 0
          %3379 = vmatpush1.bf16.msra.mxu0 %v3350
          %3380 = vmatprep.subr.bf16.mxu0 0
          %3381 = vmatpush1.bf16.msra.mxu0 %v3351
          %3382 = vmatprep.subr.bf16.mxu0 0
          %3383 = vmatpush1.bf16.msra.mxu0 0
          %3384 = vmatprep.subr.bf16.mxu0 0
          %3385 = vmatpush1.bf16.msra.mxu0 0
          %3386 = vmatprep.subr.bf16.mxu0 0
          %3387 = vmatpush1.bf16.msra.mxu0 0
          %3388 = vmatprep.subr.bf16.mxu0 0
          %3389 = vmatpush1.bf16.msra.mxu0 0
          %3390 = vmatprep.subr.bf16.mxu0 0
          %3391 = vmatpush1.bf16.msra.mxu0 0
          %3392 = vmatprep.subr.bf16.mxu0 0
          %3393 = vmatpush1.bf16.msra.mxu0 0
          %3394 = vmatprep.subr.bf16.mxu0 0
          %3395 = vmatpush1.bf16.msra.mxu0 0
          %3396 = vmatprep.subr.bf16.mxu0 0
          %3397 = vmatpush1.bf16.msra.mxu0 0
          %3398 = vmatprep.subr.bf16.mxu0 0
          %3399 = vmatpush1.bf16.msra.mxu0 0
          %3400 = vmatprep.subr.bf16.mxu0 0
          %3401 = vmatpush1.bf16.msra.mxu0 0
          %3402 = vmatprep.subr.bf16.mxu0 0
          %3403 = vmatpush1.bf16.msra.mxu0 0
          %3404 = vmatprep.subr.bf16.mxu0 0
          %3405 = vmatpush1.bf16.msra.mxu0 0
          %3406 = vmatprep.subr.bf16.mxu0 0
          %3407 = vmatpush1.bf16.msra.mxu0 0
          %3408 = vmatprep.subr.bf16.mxu0 0
          %3409 = vmatpush1.bf16.msra.mxu0 0
          %3410 = vmatprep.mubr.bf16.mxu0 0
          %3411 = vmatmul.mubr.bf16.gmra.mrb[0].mxu0 %v3355
          %v3412 = vpop.f32.mrb[0].mxu0
          %v3413 = vadd.f32 %v3280, %v3412
          %v3414 = vpop.f32.mrb[0].mxu0
          %v3415 = vpop.f32.mrb[0].mxu0
          %v3416 = vadd.f32 %v3283, %v3415
          %v3417 = vpop.f32.mrb[0].mxu0
          %3418 = vmatprep.mubr.bf16.mxu0 0
          %3419 = vmatmul.mubr.bf16.gmra.mrb[0].mxu0 %v3358
          %v3420 = vpop.f32.mrb[0].mxu0
          %v3421 = vadd.f32 %v3288, %v3420
          %v3422 = vpop.f32.mrb[0].mxu0
          %v3423 = vpop.f32.mrb[0].mxu0
          %v3424 = vadd.f32 %v3291, %v3423
          %v3425 = vpop.f32.mrb[0].mxu0
          %3426 = vmatprep.mubr.bf16.mxu0 0
          %3427 = vmatmul.mubr.bf16.gmra.mrb[0].mxu0 %v3361
          %v3428 = vpop.f32.mrb[0].mxu0
          %v3429 = vadd.f32 %v3296, %v3428
          %v3430 = vpop.f32.mrb[0].mxu0
          %v3431 = vpop.f32.mrb[0].mxu0
          %v3432 = vadd.f32 %v3299, %v3431
          %v3433 = vpop.f32.mrb[0].mxu0
          %3434 = vmatprep.mubr.bf16.mxu0 0
          %3435 = vmatmul.mubr.bf16.gmra.mrb[0].mxu0 %v3364
          %v3436 = vpop.f32.mrb[0].mxu0
          %v3437 = vadd.f32 %v3304, %v3436
          %v3438 = vpop.f32.mrb[0].mxu0
          %v3439 = vpop.f32.mrb[0].mxu0
          %v3440 = vadd.f32 %v3307, %v3439
          %v3441 = vpop.f32.mrb[0].mxu0
          %3442 = vmatprep.mubr.bf16.mxu0 0
          %3443 = vmatmul.mubr.bf16.gmra.mrb[0].mxu0 %v3367
          %v3444 = vpop.f32.mrb[0].mxu0
          %v3445 = vadd.f32 %v3312, %v3444
          %v3446 = vpop.f32.mrb[0].mxu0
          %v3447 = vpop.f32.mrb[0].mxu0
          %v3448 = vadd.f32 %v3315, %v3447
          %v3449 = vpop.f32.mrb[0].mxu0
          %3450 = vmatprep.mubr.bf16.mxu0 0
          %3451 = vmatmul.mubr.bf16.gmra.mrb[0].mxu0 %v3370
          %v3452 = vpop.f32.mrb[0].mxu0
          %v3453 = vadd.f32 %v3320, %v3452
          %v3454 = vpop.f32.mrb[0].mxu0
          %v3455 = vpop.f32.mrb[0].mxu0
          %v3456 = vadd.f32 %v3323, %v3455
          %v3457 = vpop.f32.mrb[0].mxu0
          %3458 = vmatprep.mubr.bf16.mxu0 0
          %3459 = vmatmul.mubr.bf16.gmra.mrb[0].mxu0 %v3373
          %v3460 = vpop.f32.mrb[0].mxu0
          %v3461 = vadd.f32 %v3328, %v3460
          %v3462 = vpop.f32.mrb[0].mxu0
          %v3463 = vpop.f32.mrb[0].mxu0
          %v3464 = vadd.f32 %v3331, %v3463
          %v3465 = vpop.f32.mrb[0].mxu0
          %3466 = vmatprep.mubr.bf16.mxu0 0
          %3467 = vmatmul.mubr.bf16.gmra.mrb[0].mxu0 %v3376
          %v3468 = vpop.f32.mrb[0].mxu0
          %v3469 = vadd.f32 %v3336, %v3468
          %v3470 = vpop.f32.mrb[0].mxu0
          %v3471 = vpop.f32.mrb[0].mxu0
          %v3472 = vadd.f32 %v3339, %v3471
          %v3473 = vpop.f32.mrb[0].mxu0
          %3474 = vdwg.mxu0
          %v3479 = vunpack.c.l.b16 %v3177
          %v3480 = vunpack.c.l.b16 %v3178
          %v3481 = vunpack.c.l.b16 %v3179
          %v3482 = vunpack.c.l.b16 %v3180
          %v3483 = vpack.c.b16 %v3480, %v3479
          %v3484 = vpack.c.b16 %v3482, %v3481
          %v3488 = vsel %vm954, 0, 0
          %3490 = vmatprep.subr.bf16.mxu0 0
          %3491 = vmatpush1.bf16.msra.mxu0 %v3483
          %3492 = vmatprep.subr.bf16.mxu0 0
          %3493 = vmatpush1.bf16.msra.mxu0 %v3484
          %3494 = vmatprep.subr.bf16.mxu0 0
          %3495 = vmatpush1.bf16.msra.mxu0 0
          %3496 = vmatprep.subr.bf16.mxu0 0
          %3497 = vmatpush1.bf16.msra.mxu0 0
          %3498 = vmatprep.subr.bf16.mxu0 0
          %3499 = vmatpush1.bf16.msra.mxu0 0
          %3500 = vmatprep.subr.bf16.mxu0 0
          %3501 = vmatpush1.bf16.msra.mxu0 0
          %3502 = vmatprep.subr.bf16.mxu0 0
          %3503 = vmatpush1.bf16.msra.mxu0 0
          %3504 = vmatprep.subr.bf16.mxu0 0
          %3505 = vmatpush1.bf16.msra.mxu0 0
          %3506 = vmatprep.subr.bf16.mxu0 0
          %3507 = vmatpush1.bf16.msra.mxu0 0
          %3508 = vmatprep.subr.bf16.mxu0 0
          %3509 = vmatpush1.bf16.msra.mxu0 0
          %3510 = vmatprep.subr.bf16.mxu0 0
          %3511 = vmatpush1.bf16.msra.mxu0 0
          %3512 = vmatprep.subr.bf16.mxu0 0
          %3513 = vmatpush1.bf16.msra.mxu0 0
          %3514 = vmatprep.subr.bf16.mxu0 0
          %3515 = vmatpush1.bf16.msra.mxu0 0
          %3516 = vmatprep.subr.bf16.mxu0 0
          %3517 = vmatpush1.bf16.msra.mxu0 0
          %3518 = vmatprep.subr.bf16.mxu0 0
          %3519 = vmatpush1.bf16.msra.mxu0 0
          %3520 = vmatprep.subr.bf16.mxu0 0
          %3521 = vmatpush1.bf16.msra.mxu0 0
          %3522 = vmatprep.mubr.bf16.mxu0 0
          %3523 = vmatmul.mubr.bf16.gmra.mrb[0].mxu0 %v3488
          %v3524 = vpop.f32.mrb[0].mxu0
          %v3525 = vadd.f32 0.0, %v3524
          %v3526 = vpop.f32.mrb[0].mxu0
          %v3527 = vpop.f32.mrb[0].mxu0
          %v3528 = vadd.f32 0.0, %v3527
          %v3529 = vpop.f32.mrb[0].mxu0
          %3530 = vmatprep.mubr.bf16.mxu0 0
          %3531 = vmatmul.mubr.bf16.gmra.mrb[0].mxu0 %v3488
          %v3532 = vpop.f32.mrb[0].mxu0
          %v3533 = vadd.f32 0.0, %v3532
          %v3534 = vpop.f32.mrb[0].mxu0
          %v3535 = vpop.f32.mrb[0].mxu0
          %v3536 = vadd.f32 0.0, %v3535
          %v3537 = vpop.f32.mrb[0].mxu0
          %3538 = vmatprep.mubr.bf16.mxu0 0
          %3539 = vmatmul.mubr.bf16.gmra.mrb[0].mxu0 %v3488
          %v3540 = vpop.f32.mrb[0].mxu0
          %v3541 = vadd.f32 0.0, %v3540
          %v3542 = vpop.f32.mrb[0].mxu0
          %v3543 = vpop.f32.mrb[0].mxu0
          %v3544 = vadd.f32 0.0, %v3543
          %v3545 = vpop.f32.mrb[0].mxu0
          %3546 = vmatprep.mubr.bf16.mxu0 0
          %3547 = vmatmul.mubr.bf16.gmra.mrb[0].mxu0 %v3488
          %v3548 = vpop.f32.mrb[0].mxu0
          %v3549 = vadd.f32 0.0, %v3548
          %v3550 = vpop.f32.mrb[0].mxu0
          %v3551 = vpop.f32.mrb[0].mxu0
          %v3552 = vadd.f32 0.0, %v3551
          %v3553 = vpop.f32.mrb[0].mxu0
          %3554 = vmatprep.mubr.bf16.mxu0 0
          %3555 = vmatmul.mubr.bf16.gmra.mrb[0].mxu0 %v3488
          %v3556 = vpop.f32.mrb[0].mxu0
          %v3557 = vadd.f32 0.0, %v3556
          %v3558 = vpop.f32.mrb[0].mxu0
          %v3559 = vpop.f32.mrb[0].mxu0
          %v3560 = vadd.f32 0.0, %v3559
          %v3561 = vpop.f32.mrb[0].mxu0
          %3562 = vmatprep.mubr.bf16.mxu0 0
          %3563 = vmatmul.mubr.bf16.gmra.mrb[0].mxu0 %v3488
          %v3564 = vpop.f32.mrb[0].mxu0
          %v3565 = vadd.f32 0.0, %v3564
          %v3566 = vpop.f32.mrb[0].mxu0
          %v3567 = vpop.f32.mrb[0].mxu0
          %v3568 = vadd.f32 0.0, %v3567
          %v3569 = vpop.f32.mrb[0].mxu0
          %3570 = vmatprep.mubr.bf16.mxu0 0
          %3571 = vmatmul.mubr.bf16.gmra.mrb[0].mxu0 %v3488
          %v3572 = vpop.f32.mrb[0].mxu0
          %v3573 = vadd.f32 0.0, %v3572
          %v3574 = vpop.f32.mrb[0].mxu0
          %v3575 = vpop.f32.mrb[0].mxu0
          %v3576 = vadd.f32 0.0, %v3575
          %v3577 = vpop.f32.mrb[0].mxu0
          %3578 = vmatprep.mubr.bf16.mxu0 0
          %3579 = vmatmul.mubr.bf16.gmra.mrb[0].mxu0 %v3488
          %v3580 = vpop.f32.mrb[0].mxu0
          %v3581 = vadd.f32 0.0, %v3580
          %v3582 = vpop.f32.mrb[0].mxu0
          %v3583 = vpop.f32.mrb[0].mxu0
          %v3584 = vadd.f32 0.0, %v3583
          %v3585 = vpop.f32.mrb[0].mxu0
          %3586 = vdwg.mxu0
          %v3587 = vadd.f32 %v3413, %v3525
          %v3588 = vadd.f32 %v3416, %v3528
          %v3589 = vadd.f32 %v3421, %v3533
          %v3590 = vadd.f32 %v3424, %v3536
          %v3591 = vadd.f32 %v3429, %v3541
          %v3592 = vadd.f32 %v3432, %v3544
          %v3593 = vadd.f32 %v3437, %v3549
          %v3594 = vadd.f32 %v3440, %v3552
          %v3595 = vadd.f32 %v3445, %v3557
          %v3596 = vadd.f32 %v3448, %v3560
          %v3597 = vadd.f32 %v3453, %v3565
          %v3598 = vadd.f32 %v3456, %v3568
          %v3599 = vadd.f32 %v3461, %v3573
          %v3600 = vadd.f32 %v3464, %v3576
          %v3601 = vadd.f32 %v3469, %v3581
          %v3602 = vadd.f32 %v3472, %v3584
          %v3603 = vxor.u32 %v3587, 2147483648
          %v3604 = vxor.u32 %v3588, 2147483648
          %v3605 = vxor.u32 %v3589, 2147483648
          %v3606 = vxor.u32 %v3590, 2147483648
          %v3607 = vxor.u32 %v3591, 2147483648
          %v3608 = vxor.u32 %v3592, 2147483648
          %v3609 = vxor.u32 %v3593, 2147483648
          %v3610 = vxor.u32 %v3594, 2147483648
          %v3611 = vxor.u32 %v3595, 2147483648
          %v3612 = vxor.u32 %v3596, 2147483648
          %v3613 = vxor.u32 %v3597, 2147483648
          %v3614 = vxor.u32 %v3598, 2147483648
          %v3615 = vxor.u32 %v3599, 2147483648
          %v3616 = vxor.u32 %v3600, 2147483648
          %v3617 = vxor.u32 %v3601, 2147483648
          %v3618 = vxor.u32 %v3602, 2147483648
          %v3619 = vmul.f32 %v3603, 1.442695
          %v3620 = vpow.pop %v3619
          %v3621 = vmul.f32 %v3604, 1.442695
          %v3622 = vpow.pop %v3621
          %v3623 = vmul.f32 %v3605, 1.442695
          %v3624 = vpow.pop %v3623
          %v3625 = vmul.f32 %v3606, 1.442695
          %v3626 = vpow.pop %v3625
          %v3627 = vmul.f32 %v3607, 1.442695
          %v3628 = vpow.pop %v3627
          %v3629 = vmul.f32 %v3608, 1.442695
          %v3630 = vpow.pop %v3629
          %v3631 = vmul.f32 %v3609, 1.442695
          %v3632 = vpow.pop %v3631
          %v3633 = vmul.f32 %v3610, 1.442695
          %v3634 = vpow.pop %v3633
          %v3635 = vmul.f32 %v3611, 1.442695
          %v3636 = vpow.pop %v3635
          %v3637 = vmul.f32 %v3612, 1.442695
          %v3638 = vpow.pop %v3637
          %v3639 = vmul.f32 %v3613, 1.442695
          %v3640 = vpow.pop %v3639
          %v3641 = vmul.f32 %v3614, 1.442695
          %v3642 = vpow.pop %v3641
          %v3643 = vmul.f32 %v3615, 1.442695
          %v3644 = vpow.pop %v3643
          %v3645 = vmul.f32 %v3616, 1.442695
          %v3646 = vpow.pop %v3645
          %v3647 = vmul.f32 %v3617, 1.442695
          %v3648 = vpow.pop %v3647
          %v3649 = vmul.f32 %v3618, 1.442695
          %v3650 = vpow.pop %v3649
          %v3651 = vadd.f32 %v3620, 1.0
          %v3652 = vadd.f32 %v3622, 1.0
          %v3653 = vadd.f32 %v3624, 1.0
          %v3654 = vadd.f32 %v3626, 1.0
          %v3655 = vadd.f32 %v3628, 1.0
          %v3656 = vadd.f32 %v3630, 1.0
          %v3657 = vadd.f32 %v3632, 1.0
          %v3658 = vadd.f32 %v3634, 1.0
          %v3659 = vadd.f32 %v3636, 1.0
          %v3660 = vadd.f32 %v3638, 1.0
          %v3661 = vadd.f32 %v3640, 1.0
          %v3662 = vadd.f32 %v3642, 1.0
          %v3663 = vadd.f32 %v3644, 1.0
          %v3664 = vadd.f32 %v3646, 1.0
          %v3665 = vadd.f32 %v3648, 1.0
          %v3666 = vadd.f32 %v3650, 1.0
          %v3667 = vrcp.pop %v3651
          %v3668 = vmul.f32 1.0, %v3667
          %v3669 = vrcp.pop %v3652
          %v3670 = vmul.f32 1.0, %v3669
          %v3671 = vrcp.pop %v3653
          %v3672 = vmul.f32 1.0, %v3671
          %v3673 = vrcp.pop %v3654
          %v3674 = vmul.f32 1.0, %v3673
          %v3675 = vrcp.pop %v3655
          %v3676 = vmul.f32 1.0, %v3675
          %v3677 = vrcp.pop %v3656
          %v3678 = vmul.f32 1.0, %v3677
          %v3679 = vrcp.pop %v3657
          %v3680 = vmul.f32 1.0, %v3679
          %v3681 = vrcp.pop %v3658
          %v3682 = vmul.f32 1.0, %v3681
          %v3683 = vrcp.pop %v3659
          %v3684 = vmul.f32 1.0, %v3683
          %v3685 = vrcp.pop %v3660
          %v3686 = vmul.f32 1.0, %v3685
          %v3687 = vrcp.pop %v3661
          %v3688 = vmul.f32 1.0, %v3687
          %v3689 = vrcp.pop %v3662
          %v3690 = vmul.f32 1.0, %v3689
          %v3691 = vrcp.pop %v3663
          %v3692 = vmul.f32 1.0, %v3691
          %v3693 = vrcp.pop %v3664
          %v3694 = vmul.f32 1.0, %v3693
          %v3695 = vrcp.pop %v3665
          %v3696 = vmul.f32 1.0, %v3695
          %v3697 = vrcp.pop %v3666
          %v3698 = vmul.f32 1.0, %v3697
          %v3703 = vunpack.c.l.b16 %v3157
          %v3704 = vunpack.c.l.b16 %v3158
          %v3705 = vunpack.c.l.b16 %v3159
          %v3706 = vunpack.c.l.b16 %v3160
          %v3707 = vpack.c.b16 %v3704, %v3703
          %v3708 = vpack.c.b16 %v3706, %v3705
          %3711 = vmatprep.subr.bf16.mxu0 0
          %3712 = vmatpush1.bf16.msra.mxu0 %v3707
          %3713 = vmatprep.subr.bf16.mxu0 0
          %3714 = vmatpush1.bf16.msra.mxu0 %v3708
          %3715 = vmatprep.subr.bf16.mxu0 0
          %3716 = vmatpush1.bf16.msra.mxu0 0
          %3717 = vmatprep.subr.bf16.mxu0 0
          %3718 = vmatpush1.bf16.msra.mxu0 0
          %3719 = vmatprep.subr.bf16.mxu0 0
          %3720 = vmatpush1.bf16.msra.mxu0 0
          %3721 = vmatprep.subr.bf16.mxu0 0
          %3722 = vmatpush1.bf16.msra.mxu0 0
          %3723 = vmatprep.subr.bf16.mxu0 0
          %3724 = vmatpush1.bf16.msra.mxu0 0
          %3725 = vmatprep.subr.bf16.mxu0 0
          %3726 = vmatpush1.bf16.msra.mxu0 0
          %3727 = vmatprep.subr.bf16.mxu0 0
          %3728 = vmatpush1.bf16.msra.mxu0 0
          %3729 = vmatprep.subr.bf16.mxu0 0
          %3730 = vmatpush1.bf16.msra.mxu0 0
          %3731 = vmatprep.subr.bf16.mxu0 0
          %3732 = vmatpush1.bf16.msra.mxu0 0
          %3733 = vmatprep.subr.bf16.mxu0 0
          %3734 = vmatpush1.bf16.msra.mxu0 0
          %3735 = vmatprep.subr.bf16.mxu0 0
          %3736 = vmatpush1.bf16.msra.mxu0 0
          %3737 = vmatprep.subr.bf16.mxu0 0
          %3738 = vmatpush1.bf16.msra.mxu0 0
          %3739 = vmatprep.subr.bf16.mxu0 0
          %3740 = vmatpush1.bf16.msra.mxu0 0
          %3741 = vmatprep.subr.bf16.mxu0 0
          %3742 = vmatpush1.bf16.msra.mxu0 0
          %3743 = vmatprep.mubr.bf16.mxu0 0
          %3744 = vmatmul.mubr.bf16.gmra.mrb[0].mxu0 %v3222
          %v3745 = vpop.f32.mrb[0].mxu0
          %v3746 = vadd.f32 0.0, %v3745
          %v3747 = vpop.f32.mrb[0].mxu0
          %v3748 = vpop.f32.mrb[0].mxu0
          %v3749 = vadd.f32 0.0, %v3748
          %v3750 = vpop.f32.mrb[0].mxu0
          %3751 = vmatprep.mubr.bf16.mxu0 0
          %3752 = vmatmul.mubr.bf16.gmra.mrb[0].mxu0 %v3225
          %v3753 = vpop.f32.mrb[0].mxu0
          %v3754 = vadd.f32 0.0, %v3753
          %v3755 = vpop.f32.mrb[0].mxu0
          %v3756 = vpop.f32.mrb[0].mxu0
          %v3757 = vadd.f32 0.0, %v3756
          %v3758 = vpop.f32.mrb[0].mxu0
          %3759 = vmatprep.mubr.bf16.mxu0 0
          %3760 = vmatmul.mubr.bf16.gmra.mrb[0].mxu0 %v3228
          %v3761 = vpop.f32.mrb[0].mxu0
          %v3762 = vadd.f32 0.0, %v3761
          %v3763 = vpop.f32.mrb[0].mxu0
          %v3764 = vpop.f32.mrb[0].mxu0
          %v3765 = vadd.f32 0.0, %v3764
          %v3766 = vpop.f32.mrb[0].mxu0
          %3767 = vmatprep.mubr.bf16.mxu0 0
          %3768 = vmatmul.mubr.bf16.gmra.mrb[0].mxu0 %v3231
          %v3769 = vpop.f32.mrb[0].mxu0
          %v3770 = vadd.f32 0.0, %v3769
          %v3771 = vpop.f32.mrb[0].mxu0
          %v3772 = vpop.f32.mrb[0].mxu0
          %v3773 = vadd.f32 0.0, %v3772
          %v3774 = vpop.f32.mrb[0].mxu0
          %3775 = vmatprep.mubr.bf16.mxu0 0
          %3776 = vmatmul.mubr.bf16.gmra.mrb[0].mxu0 %v3234
          %v3777 = vpop.f32.mrb[0].mxu0
          %v3778 = vadd.f32 0.0, %v3777
          %v3779 = vpop.f32.mrb[0].mxu0
          %v3780 = vpop.f32.mrb[0].mxu0
          %v3781 = vadd.f32 0.0, %v3780
          %v3782 = vpop.f32.mrb[0].mxu0
          %3783 = vmatprep.mubr.bf16.mxu0 0
          %3784 = vmatmul.mubr.bf16.gmra.mrb[0].mxu0 %v3237
          %v3785 = vpop.f32.mrb[0].mxu0
          %v3786 = vadd.f32 0.0, %v3785
          %v3787 = vpop.f32.mrb[0].mxu0
          %v3788 = vpop.f32.mrb[0].mxu0
          %v3789 = vadd.f32 0.0, %v3788
          %v3790 = vpop.f32.mrb[0].mxu0
          %3791 = vmatprep.mubr.bf16.mxu0 0
          %3792 = vmatmul.mubr.bf16.gmra.mrb[0].mxu0 %v3240
          %v3793 = vpop.f32.mrb[0].mxu0
          %v3794 = vadd.f32 0.0, %v3793
          %v3795 = vpop.f32.mrb[0].mxu0
          %v3796 = vpop.f32.mrb[0].mxu0
          %v3797 = vadd.f32 0.0, %v3796
          %v3798 = vpop.f32.mrb[0].mxu0
          %3799 = vmatprep.mubr.bf16.mxu0 0
          %3800 = vmatmul.mubr.bf16.gmra.mrb[0].mxu0 %v3243
          %v3801 = vpop.f32.mrb[0].mxu0
          %v3802 = vadd.f32 0.0, %v3801
          %v3803 = vpop.f32.mrb[0].mxu0
          %v3804 = vpop.f32.mrb[0].mxu0
          %v3805 = vadd.f32 0.0, %v3804
          %v3806 = vpop.f32.mrb[0].mxu0
          %3807 = vdwg.mxu0
          %v3812 = vunpack.c.l.b16 %v3153
          %v3813 = vunpack.c.l.b16 %v3154
          %v3814 = vunpack.c.l.b16 %v3155
          %v3815 = vunpack.c.l.b16 %v3156
          %v3816 = vpack.c.b16 %v3813, %v3812
          %v3817 = vpack.c.b16 %v3815, %v3814
          %3820 = vmatprep.subr.bf16.mxu0 0
          %3821 = vmatpush1.bf16.msra.mxu0 %v3816
          %3822 = vmatprep.subr.bf16.mxu0 0
          %3823 = vmatpush1.bf16.msra.mxu0 %v3817
          %3824 = vmatprep.subr.bf16.mxu0 0
          %3825 = vmatpush1.bf16.msra.mxu0 0
          %3826 = vmatprep.subr.bf16.mxu0 0
          %3827 = vmatpush1.bf16.msra.mxu0 0
          %3828 = vmatprep.subr.bf16.mxu0 0
          %3829 = vmatpush1.bf16.msra.mxu0 0
          %3830 = vmatprep.subr.bf16.mxu0 0
          %3831 = vmatpush1.bf16.msra.mxu0 0
          %3832 = vmatprep.subr.bf16.mxu0 0
          %3833 = vmatpush1.bf16.msra.mxu0 0
          %3834 = vmatprep.subr.bf16.mxu0 0
          %3835 = vmatpush1.bf16.msra.mxu0 0
          %3836 = vmatprep.subr.bf16.mxu0 0
          %3837 = vmatpush1.bf16.msra.mxu0 0
          %3838 = vmatprep.subr.bf16.mxu0 0
          %3839 = vmatpush1.bf16.msra.mxu0 0
          %3840 = vmatprep.subr.bf16.mxu0 0
          %3841 = vmatpush1.bf16.msra.mxu0 0
          %3842 = vmatprep.subr.bf16.mxu0 0
          %3843 = vmatpush1.bf16.msra.mxu0 0
          %3844 = vmatprep.subr.bf16.mxu0 0
          %3845 = vmatpush1.bf16.msra.mxu0 0
          %3846 = vmatprep.subr.bf16.mxu0 0
          %3847 = vmatpush1.bf16.msra.mxu0 0
          %3848 = vmatprep.subr.bf16.mxu0 0
          %3849 = vmatpush1.bf16.msra.mxu0 0
          %3850 = vmatprep.subr.bf16.mxu0 0
          %3851 = vmatpush1.bf16.msra.mxu0 0
          %3852 = vmatprep.mubr.bf16.mxu0 0
          %3853 = vmatmul.mubr.bf16.gmra.mrb[0].mxu0 %v3355
          %v3854 = vpop.f32.mrb[0].mxu0
          %v3855 = vadd.f32 %v3746, %v3854
          %v3856 = vpop.f32.mrb[0].mxu0
          %v3857 = vpop.f32.mrb[0].mxu0
          %v3858 = vadd.f32 %v3749, %v3857
          %v3859 = vpop.f32.mrb[0].mxu0
          %3860 = vmatprep.mubr.bf16.mxu0 0
          %3861 = vmatmul.mubr.bf16.gmra.mrb[0].mxu0 %v3358
          %v3862 = vpop.f32.mrb[0].mxu0
          %v3863 = vadd.f32 %v3754, %v3862
          %v3864 = vpop.f32.mrb[0].mxu0
          %v3865 = vpop.f32.mrb[0].mxu0
          %v3866 = vadd.f32 %v3757, %v3865
          %v3867 = vpop.f32.mrb[0].mxu0
          %3868 = vmatprep.mubr.bf16.mxu0 0
          %3869 = vmatmul.mubr.bf16.gmra.mrb[0].mxu0 %v3361
          %v3870 = vpop.f32.mrb[0].mxu0
          %v3871 = vadd.f32 %v3762, %v3870
          %v3872 = vpop.f32.mrb[0].mxu0
          %v3873 = vpop.f32.mrb[0].mxu0
          %v3874 = vadd.f32 %v3765, %v3873
          %v3875 = vpop.f32.mrb[0].mxu0
          %3876 = vmatprep.mubr.bf16.mxu0 0
          %3877 = vmatmul.mubr.bf16.gmra.mrb[0].mxu0 %v3364
          %v3878 = vpop.f32.mrb[0].mxu0
          %v3879 = vadd.f32 %v3770, %v3878
          %v3880 = vpop.f32.mrb[0].mxu0
          %v3881 = vpop.f32.mrb[0].mxu0
          %v3882 = vadd.f32 %v3773, %v3881
          %v3883 = vpop.f32.mrb[0].mxu0
          %3884 = vmatprep.mubr.bf16.mxu0 0
          %3885 = vmatmul.mubr.bf16.gmra.mrb[0].mxu0 %v3367
          %v3886 = vpop.f32.mrb[0].mxu0
          %v3887 = vadd.f32 %v3778, %v3886
          %v3888 = vpop.f32.mrb[0].mxu0
          %v3889 = vpop.f32.mrb[0].mxu0
          %v3890 = vadd.f32 %v3781, %v3889
          %v3891 = vpop.f32.mrb[0].mxu0
          %3892 = vmatprep.mubr.bf16.mxu0 0
          %3893 = vmatmul.mubr.bf16.gmra.mrb[0].mxu0 %v3370
          %v3894 = vpop.f32.mrb[0].mxu0
          %v3895 = vadd.f32 %v3786, %v3894
          %v3896 = vpop.f32.mrb[0].mxu0
          %v3897 = vpop.f32.mrb[0].mxu0
          %v3898 = vadd.f32 %v3789, %v3897
          %v3899 = vpop.f32.mrb[0].mxu0
          %3900 = vmatprep.mubr.bf16.mxu0 0
          %3901 = vmatmul.mubr.bf16.gmra.mrb[0].mxu0 %v3373
          %v3902 = vpop.f32.mrb[0].mxu0
          %v3903 = vadd.f32 %v3794, %v3902
          %v3904 = vpop.f32.mrb[0].mxu0
          %v3905 = vpop.f32.mrb[0].mxu0
          %v3906 = vadd.f32 %v3797, %v3905
          %v3907 = vpop.f32.mrb[0].mxu0
          %3908 = vmatprep.mubr.bf16.mxu0 0
          %3909 = vmatmul.mubr.bf16.gmra.mrb[0].mxu0 %v3376
          %v3910 = vpop.f32.mrb[0].mxu0
          %v3911 = vadd.f32 %v3802, %v3910
          %v3912 = vpop.f32.mrb[0].mxu0
          %v3913 = vpop.f32.mrb[0].mxu0
          %v3914 = vadd.f32 %v3805, %v3913
          %v3915 = vpop.f32.mrb[0].mxu0
          %3916 = vdwg.mxu0
          %v3921 = vunpack.c.l.b16 %v3181
          %v3922 = vunpack.c.l.b16 %v3182
          %v3923 = vunpack.c.l.b16 %v3183
          %v3924 = vunpack.c.l.b16 %v3184
          %v3925 = vpack.c.b16 %v3922, %v3921
          %v3926 = vpack.c.b16 %v3924, %v3923
          %3929 = vmatprep.subr.bf16.mxu0 0
          %3930 = vmatpush1.bf16.msra.mxu0 %v3925
          %3931 = vmatprep.subr.bf16.mxu0 0
          %3932 = vmatpush1.bf16.msra.mxu0 %v3926
          %3933 = vmatprep.subr.bf16.mxu0 0
          %3934 = vmatpush1.bf16.msra.mxu0 0
          %3935 = vmatprep.subr.bf16.mxu0 0
          %3936 = vmatpush1.bf16.msra.mxu0 0
          %3937 = vmatprep.subr.bf16.mxu0 0
          %3938 = vmatpush1.bf16.msra.mxu0 0
          %3939 = vmatprep.subr.bf16.mxu0 0
          %3940 = vmatpush1.bf16.msra.mxu0 0
          %3941 = vmatprep.subr.bf16.mxu0 0
          %3942 = vmatpush1.bf16.msra.mxu0 0
          %3943 = vmatprep.subr.bf16.mxu0 0
          %3944 = vmatpush1.bf16.msra.mxu0 0
          %3945 = vmatprep.subr.bf16.mxu0 0
          %3946 = vmatpush1.bf16.msra.mxu0 0
          %3947 = vmatprep.subr.bf16.mxu0 0
          %3948 = vmatpush1.bf16.msra.mxu0 0
          %3949 = vmatprep.subr.bf16.mxu0 0
          %3950 = vmatpush1.bf16.msra.mxu0 0
          %3951 = vmatprep.subr.bf16.mxu0 0
          %3952 = vmatpush1.bf16.msra.mxu0 0
          %3953 = vmatprep.subr.bf16.mxu0 0
          %3954 = vmatpush1.bf16.msra.mxu0 0
          %3955 = vmatprep.subr.bf16.mxu0 0
          %3956 = vmatpush1.bf16.msra.mxu0 0
          %3957 = vmatprep.subr.bf16.mxu0 0
          %3958 = vmatpush1.bf16.msra.mxu0 0
          %3959 = vmatprep.subr.bf16.mxu0 0
          %3960 = vmatpush1.bf16.msra.mxu0 0
          %3961 = vmatprep.mubr.bf16.mxu0 0
          %3962 = vmatmul.mubr.bf16.gmra.mrb[0].mxu0 %v3488
          %v3963 = vpop.f32.mrb[0].mxu0
          %v3964 = vadd.f32 0.0, %v3963
          %v3965 = vpop.f32.mrb[0].mxu0
          %v3966 = vpop.f32.mrb[0].mxu0
          %v3967 = vadd.f32 0.0, %v3966
          %v3968 = vpop.f32.mrb[0].mxu0
          %3969 = vmatprep.mubr.bf16.mxu0 0
          %3970 = vmatmul.mubr.bf16.gmra.mrb[0].mxu0 %v3488
          %v3971 = vpop.f32.mrb[0].mxu0
          %v3972 = vadd.f32 0.0, %v3971
          %v3973 = vpop.f32.mrb[0].mxu0
          %v3974 = vpop.f32.mrb[0].mxu0
          %v3975 = vadd.f32 0.0, %v3974
          %v3976 = vpop.f32.mrb[0].mxu0
          %3977 = vmatprep.mubr.bf16.mxu0 0
          %3978 = vmatmul.mubr.bf16.gmra.mrb[0].mxu0 %v3488
          %v3979 = vpop.f32.mrb[0].mxu0
          %v3980 = vadd.f32 0.0, %v3979
          %v3981 = vpop.f32.mrb[0].mxu0
          %v3982 = vpop.f32.mrb[0].mxu0
          %v3983 = vadd.f32 0.0, %v3982
          %v3984 = vpop.f32.mrb[0].mxu0
          %3985 = vmatprep.mubr.bf16.mxu0 0
          %3986 = vmatmul.mubr.bf16.gmra.mrb[0].mxu0 %v3488
          %v3987 = vpop.f32.mrb[0].mxu0
          %v3988 = vadd.f32 0.0, %v3987
          %v3989 = vpop.f32.mrb[0].mxu0
          %v3990 = vpop.f32.mrb[0].mxu0
          %v3991 = vadd.f32 0.0, %v3990
          %v3992 = vpop.f32.mrb[0].mxu0
          %3993 = vmatprep.mubr.bf16.mxu0 0
          %3994 = vmatmul.mubr.bf16.gmra.mrb[0].mxu0 %v3488
          %v3995 = vpop.f32.mrb[0].mxu0
          %v3996 = vadd.f32 0.0, %v3995
          %v3997 = vpop.f32.mrb[0].mxu0
          %v3998 = vpop.f32.mrb[0].mxu0
          %v3999 = vadd.f32 0.0, %v3998
          %v4000 = vpop.f32.mrb[0].mxu0
          %4001 = vmatprep.mubr.bf16.mxu0 0
          %4002 = vmatmul.mubr.bf16.gmra.mrb[0].mxu0 %v3488
          %v4003 = vpop.f32.mrb[0].mxu0
          %v4004 = vadd.f32 0.0, %v4003
          %v4005 = vpop.f32.mrb[0].mxu0
          %v4006 = vpop.f32.mrb[0].mxu0
          %v4007 = vadd.f32 0.0, %v4006
          %v4008 = vpop.f32.mrb[0].mxu0
          %4009 = vmatprep.mubr.bf16.mxu0 0
          %4010 = vmatmul.mubr.bf16.gmra.mrb[0].mxu0 %v3488
          %v4011 = vpop.f32.mrb[0].mxu0
          %v4012 = vadd.f32 0.0, %v4011
          %v4013 = vpop.f32.mrb[0].mxu0
          %v4014 = vpop.f32.mrb[0].mxu0
          %v4015 = vadd.f32 0.0, %v4014
          %v4016 = vpop.f32.mrb[0].mxu0
          %4017 = vmatprep.mubr.bf16.mxu0 0
          %4018 = vmatmul.mubr.bf16.gmra.mrb[0].mxu0 %v3488
          %v4019 = vpop.f32.mrb[0].mxu0
          %v4020 = vadd.f32 0.0, %v4019
          %v4021 = vpop.f32.mrb[0].mxu0
          %v4022 = vpop.f32.mrb[0].mxu0
          %v4023 = vadd.f32 0.0, %v4022
          %v4024 = vpop.f32.mrb[0].mxu0
          %4025 = vdwg.mxu0
          %v4026 = vadd.f32 %v3855, %v3964
          %v4027 = vadd.f32 %v3858, %v3967
          %v4028 = vadd.f32 %v3863, %v3972
          %v4029 = vadd.f32 %v3866, %v3975
          %v4030 = vadd.f32 %v3871, %v3980
          %v4031 = vadd.f32 %v3874, %v3983
          %v4032 = vadd.f32 %v3879, %v3988
          %v4033 = vadd.f32 %v3882, %v3991
          %v4034 = vadd.f32 %v3887, %v3996
          %v4035 = vadd.f32 %v3890, %v3999
          %v4036 = vadd.f32 %v3895, %v4004
          %v4037 = vadd.f32 %v3898, %v4007
          %v4038 = vadd.f32 %v3903, %v4012
          %v4039 = vadd.f32 %v3906, %v4015
          %v4040 = vadd.f32 %v3911, %v4020
          %v4041 = vadd.f32 %v3914, %v4023
          %v4042 = vxor.u32 %v4026, 2147483648
          %v4043 = vxor.u32 %v4027, 2147483648
          %v4044 = vxor.u32 %v4028, 2147483648
          %v4045 = vxor.u32 %v4029, 2147483648
          %v4046 = vxor.u32 %v4030, 2147483648
          %v4047 = vxor.u32 %v4031, 2147483648
          %v4048 = vxor.u32 %v4032, 2147483648
          %v4049 = vxor.u32 %v4033, 2147483648
          %v4050 = vxor.u32 %v4034, 2147483648
          %v4051 = vxor.u32 %v4035, 2147483648
          %v4052 = vxor.u32 %v4036, 2147483648
          %v4053 = vxor.u32 %v4037, 2147483648
          %v4054 = vxor.u32 %v4038, 2147483648
          %v4055 = vxor.u32 %v4039, 2147483648
          %v4056 = vxor.u32 %v4040, 2147483648
          %v4057 = vxor.u32 %v4041, 2147483648
          %v4058 = vmul.f32 %v4042, 1.442695
          %v4059 = vpow.pop %v4058
          %v4060 = vmul.f32 %v4043, 1.442695
          %v4061 = vpow.pop %v4060
          %v4062 = vmul.f32 %v4044, 1.442695
          %v4063 = vpow.pop %v4062
          %v4064 = vmul.f32 %v4045, 1.442695
          %v4065 = vpow.pop %v4064
          %v4066 = vmul.f32 %v4046, 1.442695
          %v4067 = vpow.pop %v4066
          %v4068 = vmul.f32 %v4047, 1.442695
          %v4069 = vpow.pop %v4068
          %v4070 = vmul.f32 %v4048, 1.442695
          %v4071 = vpow.pop %v4070
          %v4072 = vmul.f32 %v4049, 1.442695
          %v4073 = vpow.pop %v4072
          %v4074 = vmul.f32 %v4050, 1.442695
          %v4075 = vpow.pop %v4074
          %v4076 = vmul.f32 %v4051, 1.442695
          %v4077 = vpow.pop %v4076
          %v4078 = vmul.f32 %v4052, 1.442695
          %v4079 = vpow.pop %v4078
          %v4080 = vmul.f32 %v4053, 1.442695
          %v4081 = vpow.pop %v4080
          %v4082 = vmul.f32 %v4054, 1.442695
          %v4083 = vpow.pop %v4082
          %v4084 = vmul.f32 %v4055, 1.442695
          %v4085 = vpow.pop %v4084
          %v4086 = vmul.f32 %v4056, 1.442695
          %v4087 = vpow.pop %v4086
          %v4088 = vmul.f32 %v4057, 1.442695
          %v4089 = vpow.pop %v4088
          %v4090 = vadd.f32 %v4059, 1.0
          %v4091 = vadd.f32 %v4061, 1.0
          %v4092 = vadd.f32 %v4063, 1.0
          %v4093 = vadd.f32 %v4065, 1.0
          %v4094 = vadd.f32 %v4067, 1.0
          %v4095 = vadd.f32 %v4069, 1.0
          %v4096 = vadd.f32 %v4071, 1.0
          %v4097 = vadd.f32 %v4073, 1.0
          %v4098 = vadd.f32 %v4075, 1.0
          %v4099 = vadd.f32 %v4077, 1.0
          %v4100 = vadd.f32 %v4079, 1.0
          %v4101 = vadd.f32 %v4081, 1.0
          %v4102 = vadd.f32 %v4083, 1.0
          %v4103 = vadd.f32 %v4085, 1.0
          %v4104 = vadd.f32 %v4087, 1.0
          %v4105 = vadd.f32 %v4089, 1.0
          %v4106 = vrcp.pop %v4090
          %v4107 = vmul.f32 1.0, %v4106
          %v4108 = vrcp.pop %v4091
          %v4109 = vmul.f32 1.0, %v4108
          %v4110 = vrcp.pop %v4092
          %v4111 = vmul.f32 1.0, %v4110
          %v4112 = vrcp.pop %v4093
          %v4113 = vmul.f32 1.0, %v4112
          %v4114 = vrcp.pop %v4094
          %v4115 = vmul.f32 1.0, %v4114
          %v4116 = vrcp.pop %v4095
          %v4117 = vmul.f32 1.0, %v4116
          %v4118 = vrcp.pop %v4096
          %v4119 = vmul.f32 1.0, %v4118
          %v4120 = vrcp.pop %v4097
          %v4121 = vmul.f32 1.0, %v4120
          %v4122 = vrcp.pop %v4098
          %v4123 = vmul.f32 1.0, %v4122
          %v4124 = vrcp.pop %v4099
          %v4125 = vmul.f32 1.0, %v4124
          %v4126 = vrcp.pop %v4100
          %v4127 = vmul.f32 1.0, %v4126
          %v4128 = vrcp.pop %v4101
          %v4129 = vmul.f32 1.0, %v4128
          %v4130 = vrcp.pop %v4102
          %v4131 = vmul.f32 1.0, %v4130
          %v4132 = vrcp.pop %v4103
          %v4133 = vmul.f32 1.0, %v4132
          %v4134 = vrcp.pop %v4104
          %v4135 = vmul.f32 1.0, %v4134
          %v4136 = vrcp.pop %v4105
          %v4137 = vmul.f32 1.0, %v4136
          %v4142 = vunpack.c.l.b16 %v3165
          %v4143 = vunpack.c.l.b16 %v3166
          %v4144 = vunpack.c.l.b16 %v3167
          %v4145 = vunpack.c.l.b16 %v3168
          %v4146 = vpack.c.b16 %v4143, %v4142
          %v4147 = vpack.c.b16 %v4145, %v4144
          %4150 = vmatprep.subr.bf16.mxu0 0
          %4151 = vmatpush1.bf16.msra.mxu0 %v4146
          %4152 = vmatprep.subr.bf16.mxu0 0
          %4153 = vmatpush1.bf16.msra.mxu0 %v4147
          %4154 = vmatprep.subr.bf16.mxu0 0
          %4155 = vmatpush1.bf16.msra.mxu0 0
          %4156 = vmatprep.subr.bf16.mxu0 0
          %4157 = vmatpush1.bf16.msra.mxu0 0
          %4158 = vmatprep.subr.bf16.mxu0 0
          %4159 = vmatpush1.bf16.msra.mxu0 0
          %4160 = vmatprep.subr.bf16.mxu0 0
          %4161 = vmatpush1.bf16.msra.mxu0 0
          %4162 = vmatprep.subr.bf16.mxu0 0
          %4163 = vmatpush1.bf16.msra.mxu0 0
          %4164 = vmatprep.subr.bf16.mxu0 0
          %4165 = vmatpush1.bf16.msra.mxu0 0
          %4166 = vmatprep.subr.bf16.mxu0 0
          %4167 = vmatpush1.bf16.msra.mxu0 0
          %4168 = vmatprep.subr.bf16.mxu0 0
          %4169 = vmatpush1.bf16.msra.mxu0 0
          %4170 = vmatprep.subr.bf16.mxu0 0
          %4171 = vmatpush1.bf16.msra.mxu0 0
          %4172 = vmatprep.subr.bf16.mxu0 0
          %4173 = vmatpush1.bf16.msra.mxu0 0
          %4174 = vmatprep.subr.bf16.mxu0 0
          %4175 = vmatpush1.bf16.msra.mxu0 0
          %4176 = vmatprep.subr.bf16.mxu0 0
          %4177 = vmatpush1.bf16.msra.mxu0 0
          %4178 = vmatprep.subr.bf16.mxu0 0
          %4179 = vmatpush1.bf16.msra.mxu0 0
          %4180 = vmatprep.subr.bf16.mxu0 0
          %4181 = vmatpush1.bf16.msra.mxu0 0
          %4182 = vmatprep.mubr.bf16.mxu0 0
          %4183 = vmatmul.mubr.bf16.gmra.mrb[0].mxu0 %v3222
          %v4184 = vpop.f32.mrb[0].mxu0
          %v4185 = vadd.f32 0.0, %v4184
          %v4186 = vpop.f32.mrb[0].mxu0
          %v4187 = vpop.f32.mrb[0].mxu0
          %v4188 = vadd.f32 0.0, %v4187
          %v4189 = vpop.f32.mrb[0].mxu0
          %4190 = vmatprep.mubr.bf16.mxu0 0
          %4191 = vmatmul.mubr.bf16.gmra.mrb[0].mxu0 %v3225
          %v4192 = vpop.f32.mrb[0].mxu0
          %v4193 = vadd.f32 0.0, %v4192
          %v4194 = vpop.f32.mrb[0].mxu0
          %v4195 = vpop.f32.mrb[0].mxu0
          %v4196 = vadd.f32 0.0, %v4195
          %v4197 = vpop.f32.mrb[0].mxu0
          %4198 = vmatprep.mubr.bf16.mxu0 0
          %4199 = vmatmul.mubr.bf16.gmra.mrb[0].mxu0 %v3228
          %v4200 = vpop.f32.mrb[0].mxu0
          %v4201 = vadd.f32 0.0, %v4200
          %v4202 = vpop.f32.mrb[0].mxu0
          %v4203 = vpop.f32.mrb[0].mxu0
          %v4204 = vadd.f32 0.0, %v4203
          %v4205 = vpop.f32.mrb[0].mxu0
          %4206 = vmatprep.mubr.bf16.mxu0 0
          %4207 = vmatmul.mubr.bf16.gmra.mrb[0].mxu0 %v3231
          %v4208 = vpop.f32.mrb[0].mxu0
          %v4209 = vadd.f32 0.0, %v4208
          %v4210 = vpop.f32.mrb[0].mxu0
          %v4211 = vpop.f32.mrb[0].mxu0
          %v4212 = vadd.f32 0.0, %v4211
          %v4213 = vpop.f32.mrb[0].mxu0
          %4214 = vmatprep.mubr.bf16.mxu0 0
          %4215 = vmatmul.mubr.bf16.gmra.mrb[0].mxu0 %v3234
          %v4216 = vpop.f32.mrb[0].mxu0
          %v4217 = vadd.f32 0.0, %v4216
          %v4218 = vpop.f32.mrb[0].mxu0
          %v4219 = vpop.f32.mrb[0].mxu0
          %v4220 = vadd.f32 0.0, %v4219
          %v4221 = vpop.f32.mrb[0].mxu0
          %4222 = vmatprep.mubr.bf16.mxu0 0
          %4223 = vmatmul.mubr.bf16.gmra.mrb[0].mxu0 %v3237
          %v4224 = vpop.f32.mrb[0].mxu0
          %v4225 = vadd.f32 0.0, %v4224
          %v4226 = vpop.f32.mrb[0].mxu0
          %v4227 = vpop.f32.mrb[0].mxu0
          %v4228 = vadd.f32 0.0, %v4227
          %v4229 = vpop.f32.mrb[0].mxu0
          %4230 = vmatprep.mubr.bf16.mxu0 0
          %4231 = vmatmul.mubr.bf16.gmra.mrb[0].mxu0 %v3240
          %v4232 = vpop.f32.mrb[0].mxu0
          %v4233 = vadd.f32 0.0, %v4232
          %v4234 = vpop.f32.mrb[0].mxu0
          %v4235 = vpop.f32.mrb[0].mxu0
          %v4236 = vadd.f32 0.0, %v4235
          %v4237 = vpop.f32.mrb[0].mxu0
          %4238 = vmatprep.mubr.bf16.mxu0 0
          %4239 = vmatmul.mubr.bf16.gmra.mrb[0].mxu0 %v3243
          %v4240 = vpop.f32.mrb[0].mxu0
          %v4241 = vadd.f32 0.0, %v4240
          %v4242 = vpop.f32.mrb[0].mxu0
          %v4243 = vpop.f32.mrb[0].mxu0
          %v4244 = vadd.f32 0.0, %v4243
          %v4245 = vpop.f32.mrb[0].mxu0
          %4246 = vdwg.mxu0
          %v4251 = vunpack.c.l.b16 %v3161
          %v4252 = vunpack.c.l.b16 %v3162
          %v4253 = vunpack.c.l.b16 %v3163
          %v4254 = vunpack.c.l.b16 %v3164
          %v4255 = vpack.c.b16 %v4252, %v4251
          %v4256 = vpack.c.b16 %v4254, %v4253
          %4259 = vmatprep.subr.bf16.mxu0 0
          %4260 = vmatpush1.bf16.msra.mxu0 %v4255
          %4261 = vmatprep.subr.bf16.mxu0 0
          %4262 = vmatpush1.bf16.msra.mxu0 %v4256
          %4263 = vmatprep.subr.bf16.mxu0 0
          %4264 = vmatpush1.bf16.msra.mxu0 0
          %4265 = vmatprep.subr.bf16.mxu0 0
          %4266 = vmatpush1.bf16.msra.mxu0 0
          %4267 = vmatprep.subr.bf16.mxu0 0
          %4268 = vmatpush1.bf16.msra.mxu0 0
          %4269 = vmatprep.subr.bf16.mxu0 0
          %4270 = vmatpush1.bf16.msra.mxu0 0
          %4271 = vmatprep.subr.bf16.mxu0 0
          %4272 = vmatpush1.bf16.msra.mxu0 0
          %4273 = vmatprep.subr.bf16.mxu0 0
          %4274 = vmatpush1.bf16.msra.mxu0 0
          %4275 = vmatprep.subr.bf16.mxu0 0
          %4276 = vmatpush1.bf16.msra.mxu0 0
          %4277 = vmatprep.subr.bf16.mxu0 0
          %4278 = vmatpush1.bf16.msra.mxu0 0
          %4279 = vmatprep.subr.bf16.mxu0 0
          %4280 = vmatpush1.bf16.msra.mxu0 0
          %4281 = vmatprep.subr.bf16.mxu0 0
          %4282 = vmatpush1.bf16.msra.mxu0 0
          %4283 = vmatprep.subr.bf16.mxu0 0
          %4284 = vmatpush1.bf16.msra.mxu0 0
          %4285 = vmatprep.subr.bf16.mxu0 0
          %4286 = vmatpush1.bf16.msra.mxu0 0
          %4287 = vmatprep.subr.bf16.mxu0 0
          %4288 = vmatpush1.bf16.msra.mxu0 0
          %4289 = vmatprep.subr.bf16.mxu0 0
          %4290 = vmatpush1.bf16.msra.mxu0 0
          %4291 = vmatprep.mubr.bf16.mxu0 0
          %4292 = vmatmul.mubr.bf16.gmra.mrb[0].mxu0 %v3355
          %v4293 = vpop.f32.mrb[0].mxu0
          %v4294 = vadd.f32 %v4185, %v4293
          %v4295 = vpop.f32.mrb[0].mxu0
          %v4296 = vpop.f32.mrb[0].mxu0
          %v4297 = vadd.f32 %v4188, %v4296
          %v4298 = vpop.f32.mrb[0].mxu0
          %4299 = vmatprep.mubr.bf16.mxu0 0
          %4300 = vmatmul.mubr.bf16.gmra.mrb[0].mxu0 %v3358
          %v4301 = vpop.f32.mrb[0].mxu0
          %v4302 = vadd.f32 %v4193, %v4301
          %v4303 = vpop.f32.mrb[0].mxu0
          %v4304 = vpop.f32.mrb[0].mxu0
          %v4305 = vadd.f32 %v4196, %v4304
          %v4306 = vpop.f32.mrb[0].mxu0
          %4307 = vmatprep.mubr.bf16.mxu0 0
          %4308 = vmatmul.mubr.bf16.gmra.mrb[0].mxu0 %v3361
          %v4309 = vpop.f32.mrb[0].mxu0
          %v4310 = vadd.f32 %v4201, %v4309
          %v4311 = vpop.f32.mrb[0].mxu0
          %v4312 = vpop.f32.mrb[0].mxu0
          %v4313 = vadd.f32 %v4204, %v4312
          %v4314 = vpop.f32.mrb[0].mxu0
          %4315 = vmatprep.mubr.bf16.mxu0 0
          %4316 = vmatmul.mubr.bf16.gmra.mrb[0].mxu0 %v3364
          %v4317 = vpop.f32.mrb[0].mxu0
          %v4318 = vadd.f32 %v4209, %v4317
          %v4319 = vpop.f32.mrb[0].mxu0
          %v4320 = vpop.f32.mrb[0].mxu0
          %v4321 = vadd.f32 %v4212, %v4320
          %v4322 = vpop.f32.mrb[0].mxu0
          %4323 = vmatprep.mubr.bf16.mxu0 0
          %4324 = vmatmul.mubr.bf16.gmra.mrb[0].mxu0 %v3367
          %v4325 = vpop.f32.mrb[0].mxu0
          %v4326 = vadd.f32 %v4217, %v4325
          %v4327 = vpop.f32.mrb[0].mxu0
          %v4328 = vpop.f32.mrb[0].mxu0
          %v4329 = vadd.f32 %v4220, %v4328
          %v4330 = vpop.f32.mrb[0].mxu0
          %4331 = vmatprep.mubr.bf16.mxu0 0
          %4332 = vmatmul.mubr.bf16.gmra.mrb[0].mxu0 %v3370
          %v4333 = vpop.f32.mrb[0].mxu0
          %v4334 = vadd.f32 %v4225, %v4333
          %v4335 = vpop.f32.mrb[0].mxu0
          %v4336 = vpop.f32.mrb[0].mxu0
          %v4337 = vadd.f32 %v4228, %v4336
          %v4338 = vpop.f32.mrb[0].mxu0
          %4339 = vmatprep.mubr.bf16.mxu0 0
          %4340 = vmatmul.mubr.bf16.gmra.mrb[0].mxu0 %v3373
          %v4341 = vpop.f32.mrb[0].mxu0
          %v4342 = vadd.f32 %v4233, %v4341
          %v4343 = vpop.f32.mrb[0].mxu0
          %v4344 = vpop.f32.mrb[0].mxu0
          %v4345 = vadd.f32 %v4236, %v4344
          %v4346 = vpop.f32.mrb[0].mxu0
          %4347 = vmatprep.mubr.bf16.mxu0 0
          %4348 = vmatmul.mubr.bf16.gmra.mrb[0].mxu0 %v3376
          %v4349 = vpop.f32.mrb[0].mxu0
          %v4350 = vadd.f32 %v4241, %v4349
          %v4351 = vpop.f32.mrb[0].mxu0
          %v4352 = vpop.f32.mrb[0].mxu0
          %v4353 = vadd.f32 %v4244, %v4352
          %v4354 = vpop.f32.mrb[0].mxu0
          %4355 = vdwg.mxu0
          %v4360 = vunpack.c.l.b16 %v3185
          %v4361 = vunpack.c.l.b16 %v3186
          %v4362 = vunpack.c.l.b16 %v3187
          %v4363 = vunpack.c.l.b16 %v3188
          %v4364 = vpack.c.b16 %v4361, %v4360
          %v4365 = vpack.c.b16 %v4363, %v4362
          %4368 = vmatprep.subr.bf16.mxu0 0
          %4369 = vmatpush1.bf16.msra.mxu0 %v4364
          %4370 = vmatprep.subr.bf16.mxu0 0
          %4371 = vmatpush1.bf16.msra.mxu0 %v4365
          %4372 = vmatprep.subr.bf16.mxu0 0
          %4373 = vmatpush1.bf16.msra.mxu0 0
          %4374 = vmatprep.subr.bf16.mxu0 0
          %4375 = vmatpush1.bf16.msra.mxu0 0
          %4376 = vmatprep.subr.bf16.mxu0 0
          %4377 = vmatpush1.bf16.msra.mxu0 0
          %4378 = vmatprep.subr.bf16.mxu0 0
          %4379 = vmatpush1.bf16.msra.mxu0 0
          %4380 = vmatprep.subr.bf16.mxu0 0
          %4381 = vmatpush1.bf16.msra.mxu0 0
          %4382 = vmatprep.subr.bf16.mxu0 0
          %4383 = vmatpush1.bf16.msra.mxu0 0
          %4384 = vmatprep.subr.bf16.mxu0 0
          %4385 = vmatpush1.bf16.msra.mxu0 0
          %4386 = vmatprep.subr.bf16.mxu0 0
          %4387 = vmatpush1.bf16.msra.mxu0 0
          %4388 = vmatprep.subr.bf16.mxu0 0
          %4389 = vmatpush1.bf16.msra.mxu0 0
          %4390 = vmatprep.subr.bf16.mxu0 0
          %4391 = vmatpush1.bf16.msra.mxu0 0
          %4392 = vmatprep.subr.bf16.mxu0 0
          %4393 = vmatpush1.bf16.msra.mxu0 0
          %4394 = vmatprep.subr.bf16.mxu0 0
          %4395 = vmatpush1.bf16.msra.mxu0 0
          %4396 = vmatprep.subr.bf16.mxu0 0
          %4397 = vmatpush1.bf16.msra.mxu0 0
          %4398 = vmatprep.subr.bf16.mxu0 0
          %4399 = vmatpush1.bf16.msra.mxu0 0
          %4400 = vmatprep.mubr.bf16.mxu0 0
          %4401 = vmatmul.mubr.bf16.gmra.mrb[0].mxu0 %v3488
          %v4402 = vpop.f32.mrb[0].mxu0
          %v4403 = vadd.f32 0.0, %v4402
          %v4404 = vpop.f32.mrb[0].mxu0
          %v4405 = vpop.f32.mrb[0].mxu0
          %v4406 = vadd.f32 0.0, %v4405
          %v4407 = vpop.f32.mrb[0].mxu0
          %4408 = vmatprep.mubr.bf16.mxu0 0
          %4409 = vmatmul.mubr.bf16.gmra.mrb[0].mxu0 %v3488
          %v4410 = vpop.f32.mrb[0].mxu0
          %v4411 = vadd.f32 0.0, %v4410
          %v4412 = vpop.f32.mrb[0].mxu0
          %v4413 = vpop.f32.mrb[0].mxu0
          %v4414 = vadd.f32 0.0, %v4413
          %v4415 = vpop.f32.mrb[0].mxu0
          %4416 = vmatprep.mubr.bf16.mxu0 0
          %4417 = vmatmul.mubr.bf16.gmra.mrb[0].mxu0 %v3488
          %v4418 = vpop.f32.mrb[0].mxu0
          %v4419 = vadd.f32 0.0, %v4418
          %v4420 = vpop.f32.mrb[0].mxu0
          %v4421 = vpop.f32.mrb[0].mxu0
          %v4422 = vadd.f32 0.0, %v4421
          %v4423 = vpop.f32.mrb[0].mxu0
          %4424 = vmatprep.mubr.bf16.mxu0 0
          %4425 = vmatmul.mubr.bf16.gmra.mrb[0].mxu0 %v3488
          %v4426 = vpop.f32.mrb[0].mxu0
          %v4427 = vadd.f32 0.0, %v4426
          %v4428 = vpop.f32.mrb[0].mxu0
          %v4429 = vpop.f32.mrb[0].mxu0
          %v4430 = vadd.f32 0.0, %v4429
          %v4431 = vpop.f32.mrb[0].mxu0
          %4432 = vmatprep.mubr.bf16.mxu0 0
          %4433 = vmatmul.mubr.bf16.gmra.mrb[0].mxu0 %v3488
          %v4434 = vpop.f32.mrb[0].mxu0
          %v4435 = vadd.f32 0.0, %v4434
          %v4436 = vpop.f32.mrb[0].mxu0
          %v4437 = vpop.f32.mrb[0].mxu0
          %v4438 = vadd.f32 0.0, %v4437
          %v4439 = vpop.f32.mrb[0].mxu0
          %4440 = vmatprep.mubr.bf16.mxu0 0
          %4441 = vmatmul.mubr.bf16.gmra.mrb[0].mxu0 %v3488
          %v4442 = vpop.f32.mrb[0].mxu0
          %v4443 = vadd.f32 0.0, %v4442
          %v4444 = vpop.f32.mrb[0].mxu0
          %v4445 = vpop.f32.mrb[0].mxu0
          %v4446 = vadd.f32 0.0, %v4445
          %v4447 = vpop.f32.mrb[0].mxu0
          %4448 = vmatprep.mubr.bf16.mxu0 0
          %4449 = vmatmul.mubr.bf16.gmra.mrb[0].mxu0 %v3488
          %v4450 = vpop.f32.mrb[0].mxu0
          %v4451 = vadd.f32 0.0, %v4450
          %v4452 = vpop.f32.mrb[0].mxu0
          %v4453 = vpop.f32.mrb[0].mxu0
          %v4454 = vadd.f32 0.0, %v4453
          %v4455 = vpop.f32.mrb[0].mxu0
          %4456 = vmatprep.mubr.bf16.mxu0 0
          %4457 = vmatmul.mubr.bf16.gmra.mrb[0].mxu0 %v3488
          %v4458 = vpop.f32.mrb[0].mxu0
          %v4459 = vadd.f32 0.0, %v4458
          %v4460 = vpop.f32.mrb[0].mxu0
          %v4461 = vpop.f32.mrb[0].mxu0
          %v4462 = vadd.f32 0.0, %v4461
          %v4463 = vpop.f32.mrb[0].mxu0
          %4464 = vdwg.mxu0
          %v4465 = vadd.f32 %v4294, %v4403
          %v4466 = vadd.f32 %v4297, %v4406
          %v4467 = vadd.f32 %v4302, %v4411
          %v4468 = vadd.f32 %v4305, %v4414
          %v4469 = vadd.f32 %v4310, %v4419
          %v4470 = vadd.f32 %v4313, %v4422
          %v4471 = vadd.f32 %v4318, %v4427
          %v4472 = vadd.f32 %v4321, %v4430
          %v4473 = vadd.f32 %v4326, %v4435
          %v4474 = vadd.f32 %v4329, %v4438
          %v4475 = vadd.f32 %v4334, %v4443
          %v4476 = vadd.f32 %v4337, %v4446
          %v4477 = vadd.f32 %v4342, %v4451
          %v4478 = vadd.f32 %v4345, %v4454
          %v4479 = vadd.f32 %v4350, %v4459
          %v4480 = vadd.f32 %v4353, %v4462
          %v4481 = vtanh.pop %v4465
          %v4482 = vtanh.pop %v4466
          %v4483 = vtanh.pop %v4467
          %v4484 = vtanh.pop %v4468
          %v4485 = vtanh.pop %v4469
          %v4486 = vtanh.pop %v4470
          %v4487 = vtanh.pop %v4471
          %v4488 = vtanh.pop %v4472
          %v4489 = vtanh.pop %v4473
          %v4490 = vtanh.pop %v4474
          %v4491 = vtanh.pop %v4475
          %v4492 = vtanh.pop %v4476
          %v4493 = vtanh.pop %v4477
          %v4494 = vtanh.pop %v4478
          %v4495 = vtanh.pop %v4479
          %v4496 = vtanh.pop %v4480
          %v4501 = vunpack.c.l.b16 %v3173
          %v4502 = vunpack.c.l.b16 %v3174
          %v4503 = vunpack.c.l.b16 %v3175
          %v4504 = vunpack.c.l.b16 %v3176
          %v4505 = vpack.c.b16 %v4502, %v4501
          %v4506 = vpack.c.b16 %v4504, %v4503
          %4509 = vmatprep.subr.bf16.mxu0 0
          %4510 = vmatpush1.bf16.msra.mxu0 %v4505
          %4511 = vmatprep.subr.bf16.mxu0 0
          %4512 = vmatpush1.bf16.msra.mxu0 %v4506
          %4513 = vmatprep.subr.bf16.mxu0 0
          %4514 = vmatpush1.bf16.msra.mxu0 0
          %4515 = vmatprep.subr.bf16.mxu0 0
          %4516 = vmatpush1.bf16.msra.mxu0 0
          %4517 = vmatprep.subr.bf16.mxu0 0
          %4518 = vmatpush1.bf16.msra.mxu0 0
          %4519 = vmatprep.subr.bf16.mxu0 0
          %4520 = vmatpush1.bf16.msra.mxu0 0
          %4521 = vmatprep.subr.bf16.mxu0 0
          %4522 = vmatpush1.bf16.msra.mxu0 0
          %4523 = vmatprep.subr.bf16.mxu0 0
          %4524 = vmatpush1.bf16.msra.mxu0 0
          %4525 = vmatprep.subr.bf16.mxu0 0
          %4526 = vmatpush1.bf16.msra.mxu0 0
          %4527 = vmatprep.subr.bf16.mxu0 0
          %4528 = vmatpush1.bf16.msra.mxu0 0
          %4529 = vmatprep.subr.bf16.mxu0 0
          %4530 = vmatpush1.bf16.msra.mxu0 0
          %4531 = vmatprep.subr.bf16.mxu0 0
          %4532 = vmatpush1.bf16.msra.mxu0 0
          %4533 = vmatprep.subr.bf16.mxu0 0
          %4534 = vmatpush1.bf16.msra.mxu0 0
          %4535 = vmatprep.subr.bf16.mxu0 0
          %4536 = vmatpush1.bf16.msra.mxu0 0
          %4537 = vmatprep.subr.bf16.mxu0 0
          %4538 = vmatpush1.bf16.msra.mxu0 0
          %4539 = vmatprep.subr.bf16.mxu0 0
          %4540 = vmatpush1.bf16.msra.mxu0 0
          %4541 = vmatprep.mubr.bf16.mxu0 0
          %4542 = vmatmul.mubr.bf16.gmra.mrb[0].mxu0 %v3222
          %v4543 = vpop.f32.mrb[0].mxu0
          %v4544 = vadd.f32 0.0, %v4543
          %v4545 = vpop.f32.mrb[0].mxu0
          %v4546 = vpop.f32.mrb[0].mxu0
          %v4547 = vadd.f32 0.0, %v4546
          %v4548 = vpop.f32.mrb[0].mxu0
          %4549 = vmatprep.mubr.bf16.mxu0 0
          %4550 = vmatmul.mubr.bf16.gmra.mrb[0].mxu0 %v3225
          %v4551 = vpop.f32.mrb[0].mxu0
          %v4552 = vadd.f32 0.0, %v4551
          %v4553 = vpop.f32.mrb[0].mxu0
          %v4554 = vpop.f32.mrb[0].mxu0
          %v4555 = vadd.f32 0.0, %v4554
          %v4556 = vpop.f32.mrb[0].mxu0
          %4557 = vmatprep.mubr.bf16.mxu0 0
          %4558 = vmatmul.mubr.bf16.gmra.mrb[0].mxu0 %v3228
          %v4559 = vpop.f32.mrb[0].mxu0
          %v4560 = vadd.f32 0.0, %v4559
          %v4561 = vpop.f32.mrb[0].mxu0
          %v4562 = vpop.f32.mrb[0].mxu0
          %v4563 = vadd.f32 0.0, %v4562
          %v4564 = vpop.f32.mrb[0].mxu0
          %4565 = vmatprep.mubr.bf16.mxu0 0
          %4566 = vmatmul.mubr.bf16.gmra.mrb[0].mxu0 %v3231
          %v4567 = vpop.f32.mrb[0].mxu0
          %v4568 = vadd.f32 0.0, %v4567
          %v4569 = vpop.f32.mrb[0].mxu0
          %v4570 = vpop.f32.mrb[0].mxu0
          %v4571 = vadd.f32 0.0, %v4570
          %v4572 = vpop.f32.mrb[0].mxu0
          %4573 = vmatprep.mubr.bf16.mxu0 0
          %4574 = vmatmul.mubr.bf16.gmra.mrb[0].mxu0 %v3234
          %v4575 = vpop.f32.mrb[0].mxu0
          %v4576 = vadd.f32 0.0, %v4575
          %v4577 = vpop.f32.mrb[0].mxu0
          %v4578 = vpop.f32.mrb[0].mxu0
          %v4579 = vadd.f32 0.0, %v4578
          %v4580 = vpop.f32.mrb[0].mxu0
          %4581 = vmatprep.mubr.bf16.mxu0 0
          %4582 = vmatmul.mubr.bf16.gmra.mrb[0].mxu0 %v3237
          %v4583 = vpop.f32.mrb[0].mxu0
          %v4584 = vadd.f32 0.0, %v4583
          %v4585 = vpop.f32.mrb[0].mxu0
          %v4586 = vpop.f32.mrb[0].mxu0
          %v4587 = vadd.f32 0.0, %v4586
          %v4588 = vpop.f32.mrb[0].mxu0
          %4589 = vmatprep.mubr.bf16.mxu0 0
          %4590 = vmatmul.mubr.bf16.gmra.mrb[0].mxu0 %v3240
          %v4591 = vpop.f32.mrb[0].mxu0
          %v4592 = vadd.f32 0.0, %v4591
          %v4593 = vpop.f32.mrb[0].mxu0
          %v4594 = vpop.f32.mrb[0].mxu0
          %v4595 = vadd.f32 0.0, %v4594
          %v4596 = vpop.f32.mrb[0].mxu0
          %4597 = vmatprep.mubr.bf16.mxu0 0
          %4598 = vmatmul.mubr.bf16.gmra.mrb[0].mxu0 %v3243
          %v4599 = vpop.f32.mrb[0].mxu0
          %v4600 = vadd.f32 0.0, %v4599
          %v4601 = vpop.f32.mrb[0].mxu0
          %v4602 = vpop.f32.mrb[0].mxu0
          %v4603 = vadd.f32 0.0, %v4602
          %v4604 = vpop.f32.mrb[0].mxu0
          %4605 = vdwg.mxu0
          %v4610 = vunpack.c.l.b16 %v3169
          %v4611 = vunpack.c.l.b16 %v3170
          %v4612 = vunpack.c.l.b16 %v3171
          %v4613 = vunpack.c.l.b16 %v3172
          %v4614 = vpack.c.b16 %v4611, %v4610
          %v4615 = vpack.c.b16 %v4613, %v4612
          %4618 = vmatprep.subr.bf16.mxu0 0
          %4619 = vmatpush1.bf16.msra.mxu0 %v4614
          %4620 = vmatprep.subr.bf16.mxu0 0
          %4621 = vmatpush1.bf16.msra.mxu0 %v4615
          %4622 = vmatprep.subr.bf16.mxu0 0
          %4623 = vmatpush1.bf16.msra.mxu0 0
          %4624 = vmatprep.subr.bf16.mxu0 0
          %4625 = vmatpush1.bf16.msra.mxu0 0
          %4626 = vmatprep.subr.bf16.mxu0 0
          %4627 = vmatpush1.bf16.msra.mxu0 0
          %4628 = vmatprep.subr.bf16.mxu0 0
          %4629 = vmatpush1.bf16.msra.mxu0 0
          %4630 = vmatprep.subr.bf16.mxu0 0
          %4631 = vmatpush1.bf16.msra.mxu0 0
          %4632 = vmatprep.subr.bf16.mxu0 0
          %4633 = vmatpush1.bf16.msra.mxu0 0
          %4634 = vmatprep.subr.bf16.mxu0 0
          %4635 = vmatpush1.bf16.msra.mxu0 0
          %4636 = vmatprep.subr.bf16.mxu0 0
          %4637 = vmatpush1.bf16.msra.mxu0 0
          %4638 = vmatprep.subr.bf16.mxu0 0
          %4639 = vmatpush1.bf16.msra.mxu0 0
          %4640 = vmatprep.subr.bf16.mxu0 0
          %4641 = vmatpush1.bf16.msra.mxu0 0
          %4642 = vmatprep.subr.bf16.mxu0 0
          %4643 = vmatpush1.bf16.msra.mxu0 0
          %4644 = vmatprep.subr.bf16.mxu0 0
          %4645 = vmatpush1.bf16.msra.mxu0 0
          %4646 = vmatprep.subr.bf16.mxu0 0
          %4647 = vmatpush1.bf16.msra.mxu0 0
          %4648 = vmatprep.subr.bf16.mxu0 0
          %4649 = vmatpush1.bf16.msra.mxu0 0
          %4650 = vmatprep.mubr.bf16.mxu0 0
          %4651 = vmatmul.mubr.bf16.gmra.mrb[0].mxu0 %v3355
          %v4652 = vpop.f32.mrb[0].mxu0
          %v4653 = vadd.f32 %v4544, %v4652
          %v4654 = vpop.f32.mrb[0].mxu0
          %v4655 = vpop.f32.mrb[0].mxu0
          %v4656 = vadd.f32 %v4547, %v4655
          %v4657 = vpop.f32.mrb[0].mxu0
          %4658 = vmatprep.mubr.bf16.mxu0 0
          %4659 = vmatmul.mubr.bf16.gmra.mrb[0].mxu0 %v3358
          %v4660 = vpop.f32.mrb[0].mxu0
          %v4661 = vadd.f32 %v4552, %v4660
          %v4662 = vpop.f32.mrb[0].mxu0
          %v4663 = vpop.f32.mrb[0].mxu0
          %v4664 = vadd.f32 %v4555, %v4663
          %v4665 = vpop.f32.mrb[0].mxu0
          %4666 = vmatprep.mubr.bf16.mxu0 0
          %4667 = vmatmul.mubr.bf16.gmra.mrb[0].mxu0 %v3361
          %v4668 = vpop.f32.mrb[0].mxu0
          %v4669 = vadd.f32 %v4560, %v4668
          %v4670 = vpop.f32.mrb[0].mxu0
          %v4671 = vpop.f32.mrb[0].mxu0
          %v4672 = vadd.f32 %v4563, %v4671
          %v4673 = vpop.f32.mrb[0].mxu0
          %4674 = vmatprep.mubr.bf16.mxu0 0
          %4675 = vmatmul.mubr.bf16.gmra.mrb[0].mxu0 %v3364
          %v4676 = vpop.f32.mrb[0].mxu0
          %v4677 = vadd.f32 %v4568, %v4676
          %v4678 = vpop.f32.mrb[0].mxu0
          %v4679 = vpop.f32.mrb[0].mxu0
          %v4680 = vadd.f32 %v4571, %v4679
          %v4681 = vpop.f32.mrb[0].mxu0
          %4682 = vmatprep.mubr.bf16.mxu0 0
          %4683 = vmatmul.mubr.bf16.gmra.mrb[0].mxu0 %v3367
          %v4684 = vpop.f32.mrb[0].mxu0
          %v4685 = vadd.f32 %v4576, %v4684
          %v4686 = vpop.f32.mrb[0].mxu0
          %v4687 = vpop.f32.mrb[0].mxu0
          %v4688 = vadd.f32 %v4579, %v4687
          %v4689 = vpop.f32.mrb[0].mxu0
          %4690 = vmatprep.mubr.bf16.mxu0 0
          %4691 = vmatmul.mubr.bf16.gmra.mrb[0].mxu0 %v3370
          %v4692 = vpop.f32.mrb[0].mxu0
          %v4693 = vadd.f32 %v4584, %v4692
          %v4694 = vpop.f32.mrb[0].mxu0
          %v4695 = vpop.f32.mrb[0].mxu0
          %v4696 = vadd.f32 %v4587, %v4695
          %v4697 = vpop.f32.mrb[0].mxu0
          %4698 = vmatprep.mubr.bf16.mxu0 0
          %4699 = vmatmul.mubr.bf16.gmra.mrb[0].mxu0 %v3373
          %v4700 = vpop.f32.mrb[0].mxu0
          %v4701 = vadd.f32 %v4592, %v4700
          %v4702 = vpop.f32.mrb[0].mxu0
          %v4703 = vpop.f32.mrb[0].mxu0
          %v4704 = vadd.f32 %v4595, %v4703
          %v4705 = vpop.f32.mrb[0].mxu0
          %4706 = vmatprep.mubr.bf16.mxu0 0
          %4707 = vmatmul.mubr.bf16.gmra.mrb[0].mxu0 %v3376
          %v4708 = vpop.f32.mrb[0].mxu0
          %v4709 = vadd.f32 %v4600, %v4708
          %v4710 = vpop.f32.mrb[0].mxu0
          %v4711 = vpop.f32.mrb[0].mxu0
          %v4712 = vadd.f32 %v4603, %v4711
          %v4713 = vpop.f32.mrb[0].mxu0
          %4714 = vdwg.mxu0
          %v4719 = vunpack.c.l.b16 %v3189
          %v4720 = vunpack.c.l.b16 %v3190
          %v4721 = vunpack.c.l.b16 %v3191
          %v4722 = vunpack.c.l.b16 %v3192
          %v4723 = vpack.c.b16 %v4720, %v4719
          %v4724 = vpack.c.b16 %v4722, %v4721
          %4727 = vmatprep.subr.bf16.mxu0 0
          %4728 = vmatpush1.bf16.msra.mxu0 %v4723
          %4729 = vmatprep.subr.bf16.mxu0 0
          %4730 = vmatpush1.bf16.msra.mxu0 %v4724
          %4731 = vmatprep.subr.bf16.mxu0 0
          %4732 = vmatpush1.bf16.msra.mxu0 0
          %4733 = vmatprep.subr.bf16.mxu0 0
          %4734 = vmatpush1.bf16.msra.mxu0 0
          %4735 = vmatprep.subr.bf16.mxu0 0
          %4736 = vmatpush1.bf16.msra.mxu0 0
          %4737 = vmatprep.subr.bf16.mxu0 0
          %4738 = vmatpush1.bf16.msra.mxu0 0
          %4739 = vmatprep.subr.bf16.mxu0 0
          %4740 = vmatpush1.bf16.msra.mxu0 0
          %4741 = vmatprep.subr.bf16.mxu0 0
          %4742 = vmatpush1.bf16.msra.mxu0 0
          %4743 = vmatprep.subr.bf16.mxu0 0
          %4744 = vmatpush1.bf16.msra.mxu0 0
          %4745 = vmatprep.subr.bf16.mxu0 0
          %4746 = vmatpush1.bf16.msra.mxu0 0
          %4747 = vmatprep.subr.bf16.mxu0 0
          %4748 = vmatpush1.bf16.msra.mxu0 0
          %4749 = vmatprep.subr.bf16.mxu0 0
          %4750 = vmatpush1.bf16.msra.mxu0 0
          %4751 = vmatprep.subr.bf16.mxu0 0
          %4752 = vmatpush1.bf16.msra.mxu0 0
          %4753 = vmatprep.subr.bf16.mxu0 0
          %4754 = vmatpush1.bf16.msra.mxu0 0
          %4755 = vmatprep.subr.bf16.mxu0 0
          %4756 = vmatpush1.bf16.msra.mxu0 0
          %4757 = vmatprep.subr.bf16.mxu0 0
          %4758 = vmatpush1.bf16.msra.mxu0 0
          %4759 = vmatprep.mubr.bf16.mxu0 0
          %4760 = vmatmul.mubr.bf16.gmra.mrb[0].mxu0 %v3488
          %v4761 = vpop.f32.mrb[0].mxu0
          %v4762 = vadd.f32 0.0, %v4761
          %v4763 = vpop.f32.mrb[0].mxu0
          %v4764 = vpop.f32.mrb[0].mxu0
          %v4765 = vadd.f32 0.0, %v4764
          %v4766 = vpop.f32.mrb[0].mxu0
          %4767 = vmatprep.mubr.bf16.mxu0 0
          %4768 = vmatmul.mubr.bf16.gmra.mrb[0].mxu0 %v3488
          %v4769 = vpop.f32.mrb[0].mxu0
          %v4770 = vadd.f32 0.0, %v4769
          %v4771 = vpop.f32.mrb[0].mxu0
          %v4772 = vpop.f32.mrb[0].mxu0
          %v4773 = vadd.f32 0.0, %v4772
          %v4774 = vpop.f32.mrb[0].mxu0
          %4775 = vmatprep.mubr.bf16.mxu0 0
          %4776 = vmatmul.mubr.bf16.gmra.mrb[0].mxu0 %v3488
          %v4777 = vpop.f32.mrb[0].mxu0
          %v4778 = vadd.f32 0.0, %v4777
          %v4779 = vpop.f32.mrb[0].mxu0
          %v4780 = vpop.f32.mrb[0].mxu0
          %v4781 = vadd.f32 0.0, %v4780
          %v4782 = vpop.f32.mrb[0].mxu0
          %4783 = vmatprep.mubr.bf16.mxu0 0
          %4784 = vmatmul.mubr.bf16.gmra.mrb[0].mxu0 %v3488
          %v4785 = vpop.f32.mrb[0].mxu0
          %v4786 = vadd.f32 0.0, %v4785
          %v4787 = vpop.f32.mrb[0].mxu0
          %v4788 = vpop.f32.mrb[0].mxu0
          %v4789 = vadd.f32 0.0, %v4788
          %v4790 = vpop.f32.mrb[0].mxu0
          %4791 = vmatprep.mubr.bf16.mxu0 0
          %4792 = vmatmul.mubr.bf16.gmra.mrb[0].mxu0 %v3488
          %v4793 = vpop.f32.mrb[0].mxu0
          %v4794 = vadd.f32 0.0, %v4793
          %v4795 = vpop.f32.mrb[0].mxu0
          %v4796 = vpop.f32.mrb[0].mxu0
          %v4797 = vadd.f32 0.0, %v4796
          %v4798 = vpop.f32.mrb[0].mxu0
          %4799 = vmatprep.mubr.bf16.mxu0 0
          %4800 = vmatmul.mubr.bf16.gmra.mrb[0].mxu0 %v3488
          %v4801 = vpop.f32.mrb[0].mxu0
          %v4802 = vadd.f32 0.0, %v4801
          %v4803 = vpop.f32.mrb[0].mxu0
          %v4804 = vpop.f32.mrb[0].mxu0
          %v4805 = vadd.f32 0.0, %v4804
          %v4806 = vpop.f32.mrb[0].mxu0
          %4807 = vmatprep.mubr.bf16.mxu0 0
          %4808 = vmatmul.mubr.bf16.gmra.mrb[0].mxu0 %v3488
          %v4809 = vpop.f32.mrb[0].mxu0
          %v4810 = vadd.f32 0.0, %v4809
          %v4811 = vpop.f32.mrb[0].mxu0
          %v4812 = vpop.f32.mrb[0].mxu0
          %v4813 = vadd.f32 0.0, %v4812
          %v4814 = vpop.f32.mrb[0].mxu0
          %4815 = vmatprep.mubr.bf16.mxu0 0
          %4816 = vmatmul.mubr.bf16.gmra.mrb[0].mxu0 %v3488
          %v4817 = vpop.f32.mrb[0].mxu0
          %v4818 = vadd.f32 0.0, %v4817
          %v4819 = vpop.f32.mrb[0].mxu0
          %v4820 = vpop.f32.mrb[0].mxu0
          %v4821 = vadd.f32 0.0, %v4820
          %v4822 = vpop.f32.mrb[0].mxu0
          %4823 = vdwg.mxu0
          %v4824 = vadd.f32 %v4653, %v4762
          %v4825 = vadd.f32 %v4656, %v4765
          %v4826 = vadd.f32 %v4661, %v4770
          %v4827 = vadd.f32 %v4664, %v4773
          %v4828 = vadd.f32 %v4669, %v4778
          %v4829 = vadd.f32 %v4672, %v4781
          %v4830 = vadd.f32 %v4677, %v4786
          %v4831 = vadd.f32 %v4680, %v4789
          %v4832 = vadd.f32 %v4685, %v4794
          %v4833 = vadd.f32 %v4688, %v4797
          %v4834 = vadd.f32 %v4693, %v4802
          %v4835 = vadd.f32 %v4696, %v4805
          %v4836 = vadd.f32 %v4701, %v4810
          %v4837 = vadd.f32 %v4704, %v4813
          %v4838 = vadd.f32 %v4709, %v4818
          %v4839 = vadd.f32 %v4712, %v4821
          %v4840 = vxor.u32 %v4824, 2147483648
          %v4841 = vxor.u32 %v4825, 2147483648
          %v4842 = vxor.u32 %v4826, 2147483648
          %v4843 = vxor.u32 %v4827, 2147483648
          %v4844 = vxor.u32 %v4828, 2147483648
          %v4845 = vxor.u32 %v4829, 2147483648
          %v4846 = vxor.u32 %v4830, 2147483648
          %v4847 = vxor.u32 %v4831, 2147483648
          %v4848 = vxor.u32 %v4832, 2147483648
          %v4849 = vxor.u32 %v4833, 2147483648
          %v4850 = vxor.u32 %v4834, 2147483648
          %v4851 = vxor.u32 %v4835, 2147483648
          %v4852 = vxor.u32 %v4836, 2147483648
          %v4853 = vxor.u32 %v4837, 2147483648
          %v4854 = vxor.u32 %v4838, 2147483648
          %v4855 = vxor.u32 %v4839, 2147483648
          %v4856 = vmul.f32 %v4840, 1.442695
          %v4857 = vpow.pop %v4856
          %v4858 = vmul.f32 %v4841, 1.442695
          %v4859 = vpow.pop %v4858
          %v4860 = vmul.f32 %v4842, 1.442695
          %v4861 = vpow.pop %v4860
          %v4862 = vmul.f32 %v4843, 1.442695
          %v4863 = vpow.pop %v4862
          %v4864 = vmul.f32 %v4844, 1.442695
          %v4865 = vpow.pop %v4864
          %v4866 = vmul.f32 %v4845, 1.442695
          %v4867 = vpow.pop %v4866
          %v4868 = vmul.f32 %v4846, 1.442695
          %v4869 = vpow.pop %v4868
          %v4870 = vmul.f32 %v4847, 1.442695
          %v4871 = vpow.pop %v4870
          %v4872 = vmul.f32 %v4848, 1.442695
          %v4873 = vpow.pop %v4872
          %v4874 = vmul.f32 %v4849, 1.442695
          %v4875 = vpow.pop %v4874
          %v4876 = vmul.f32 %v4850, 1.442695
          %v4877 = vpow.pop %v4876
          %v4878 = vmul.f32 %v4851, 1.442695
          %v4879 = vpow.pop %v4878
          %v4880 = vmul.f32 %v4852, 1.442695
          %v4881 = vpow.pop %v4880
          %v4882 = vmul.f32 %v4853, 1.442695
          %v4883 = vpow.pop %v4882
          %v4884 = vmul.f32 %v4854, 1.442695
          %v4885 = vpow.pop %v4884
          %v4886 = vmul.f32 %v4855, 1.442695
          %v4887 = vpow.pop %v4886
          %v4888 = vadd.f32 %v4857, 1.0
          %v4889 = vadd.f32 %v4859, 1.0
          %v4890 = vadd.f32 %v4861, 1.0
          %v4891 = vadd.f32 %v4863, 1.0
          %v4892 = vadd.f32 %v4865, 1.0
          %v4893 = vadd.f32 %v4867, 1.0
          %v4894 = vadd.f32 %v4869, 1.0
          %v4895 = vadd.f32 %v4871, 1.0
          %v4896 = vadd.f32 %v4873, 1.0
          %v4897 = vadd.f32 %v4875, 1.0
          %v4898 = vadd.f32 %v4877, 1.0
          %v4899 = vadd.f32 %v4879, 1.0
          %v4900 = vadd.f32 %v4881, 1.0
          %v4901 = vadd.f32 %v4883, 1.0
          %v4902 = vadd.f32 %v4885, 1.0
          %v4903 = vadd.f32 %v4887, 1.0
          %v4904 = vrcp.pop %v4888
          %v4905 = vmul.f32 1.0, %v4904
          %v4906 = vrcp.pop %v4889
          %v4907 = vmul.f32 1.0, %v4906
          %v4908 = vrcp.pop %v4890
          %v4909 = vmul.f32 1.0, %v4908
          %v4910 = vrcp.pop %v4891
          %v4911 = vmul.f32 1.0, %v4910
          %v4912 = vrcp.pop %v4892
          %v4913 = vmul.f32 1.0, %v4912
          %v4914 = vrcp.pop %v4893
          %v4915 = vmul.f32 1.0, %v4914
          %v4916 = vrcp.pop %v4894
          %v4917 = vmul.f32 1.0, %v4916
          %v4918 = vrcp.pop %v4895
          %v4919 = vmul.f32 1.0, %v4918
          %v4920 = vrcp.pop %v4896
          %v4921 = vmul.f32 1.0, %v4920
          %v4922 = vrcp.pop %v4897
          %v4923 = vmul.f32 1.0, %v4922
          %v4924 = vrcp.pop %v4898
          %v4925 = vmul.f32 1.0, %v4924
          %v4926 = vrcp.pop %v4899
          %v4927 = vmul.f32 1.0, %v4926
          %v4928 = vrcp.pop %v4900
          %v4929 = vmul.f32 1.0, %v4928
          %v4930 = vrcp.pop %v4901
          %v4931 = vmul.f32 1.0, %v4930
          %v4932 = vrcp.pop %v4902
          %v4933 = vmul.f32 1.0, %v4932
          %v4934 = vrcp.pop %v4903
          %v4935 = vmul.f32 1.0, %v4934
          %v4936 = vmul.f32 %v4107, 0.0
          %v4937 = vmul.f32 %v4109, 0.0
          %v4938 = vmul.f32 %v4111, 0.0
          %v4939 = vmul.f32 %v4113, 0.0
          %v4940 = vmul.f32 %v4115, 0.0
          %v4941 = vmul.f32 %v4117, 0.0
          %v4942 = vmul.f32 %v4119, 0.0
          %v4943 = vmul.f32 %v4121, 0.0
          %v4944 = vmul.f32 %v4123, 0.0
          %v4945 = vmul.f32 %v4125, 0.0
          %v4946 = vmul.f32 %v4127, 0.0
          %v4947 = vmul.f32 %v4129, 0.0
          %v4948 = vmul.f32 %v4131, 0.0
          %v4949 = vmul.f32 %v4133, 0.0
          %v4950 = vmul.f32 %v4135, 0.0
          %v4951 = vmul.f32 %v4137, 0.0
          %v4952 = vmul.f32 %v3668, %v4481
          %v4953 = vmul.f32 %v3670, %v4482
          %v4954 = vmul.f32 %v3672, %v4483
          %v4955 = vmul.f32 %v3674, %v4484
          %v4956 = vmul.f32 %v3676, %v4485
          %v4957 = vmul.f32 %v3678, %v4486
          %v4958 = vmul.f32 %v3680, %v4487
          %v4959 = vmul.f32 %v3682, %v4488
          %v4960 = vmul.f32 %v3684, %v4489
          %v4961 = vmul.f32 %v3686, %v4490
          %v4962 = vmul.f32 %v3688, %v4491
          %v4963 = vmul.f32 %v3690, %v4492
          %v4964 = vmul.f32 %v3692, %v4493
          %v4965 = vmul.f32 %v3694, %v4494
          %v4966 = vmul.f32 %v3696, %v4495
          %v4967 = vmul.f32 %v3698, %v4496
          %v4968 = vadd.f32 %v4936, %v4952
          %v4969 = vadd.f32 %v4937, %v4953
          %v4970 = vadd.f32 %v4938, %v4954
          %v4971 = vadd.f32 %v4939, %v4955
          %v4972 = vadd.f32 %v4940, %v4956
          %v4973 = vadd.f32 %v4941, %v4957
          %v4974 = vadd.f32 %v4942, %v4958
          %v4975 = vadd.f32 %v4943, %v4959
          %v4976 = vadd.f32 %v4944, %v4960
          %v4977 = vadd.f32 %v4945, %v4961
          %v4978 = vadd.f32 %v4946, %v4962
          %v4979 = vadd.f32 %v4947, %v4963
          %v4980 = vadd.f32 %v4948, %v4964
          %v4981 = vadd.f32 %v4949, %v4965
          %v4982 = vadd.f32 %v4950, %v4966
          %v4983 = vadd.f32 %v4951, %v4967
          %v4984 = vtanh.pop %v4968
          %v4985 = vtanh.pop %v4969
          %v4986 = vtanh.pop %v4970
          %v4987 = vtanh.pop %v4971
          %v4988 = vtanh.pop %v4972
          %v4989 = vtanh.pop %v4973
          %v4990 = vtanh.pop %v4974
          %v4991 = vtanh.pop %v4975
          %v4992 = vtanh.pop %v4976
          %v4993 = vtanh.pop %v4977
          %v4994 = vtanh.pop %v4978
          %v4995 = vtanh.pop %v4979
          %v4996 = vtanh.pop %v4980
          %v4997 = vtanh.pop %v4981
          %v4998 = vtanh.pop %v4982
          %v4999 = vtanh.pop %v4983
          %v5000 = vmul.f32 %v4905, %v4984
          %v5001 = vmul.f32 %v4907, %v4985
          %v5002 = vmul.f32 %v4909, %v4986
          %v5003 = vmul.f32 %v4911, %v4987
          %v5004 = vmul.f32 %v4913, %v4988
          %v5005 = vmul.f32 %v4915, %v4989
          %v5006 = vmul.f32 %v4917, %v4990
          %v5007 = vmul.f32 %v4919, %v4991
          %v5008 = vmul.f32 %v4921, %v4992
          %v5009 = vmul.f32 %v4923, %v4993
          %v5010 = vmul.f32 %v4925, %v4994
          %v5011 = vmul.f32 %v4927, %v4995
          %v5012 = vmul.f32 %v4929, %v4996
          %v5013 = vmul.f32 %v4931, %v4997
          %v5014 = vmul.f32 %v4933, %v4998
          %v5015 = vmul.f32 %v4935, %v4999
          %v5016 = vld [vmem:[%s2571] sm:$0xff]
          %v5017 = vld [vmem:[%s2571 + $0x8] sm:$0xff]
          %v5018 = vld [vmem:[%s2571 + $0x10] sm:$0xff]
          %v5019 = vld [vmem:[%s2571 + $0x18] sm:$0xff]
          %v5020 = vld [vmem:[%s2571 + $0x20] sm:$0xff]
          %v5021 = vld [vmem:[%s2571 + $0x28] sm:$0xff]
          %v5022 = vld [vmem:[%s2571 + $0x30] sm:$0xff]
          %v5023 = vld [vmem:[%s2571 + $0x38] sm:$0xff]
          %v5024 = vld [vmem:[%s2571 + $0x40] sm:$0xff]
          %v5025 = vld [vmem:[%s2571 + $0x48] sm:$0xff]
          %v5026 = vld [vmem:[%s2571 + $0x50] sm:$0xff]
          %v5027 = vld [vmem:[%s2571 + $0x58] sm:$0xff]
          %v5028 = vld [vmem:[%s2571 + $0x60] sm:$0xff]
          %v5029 = vld [vmem:[%s2571 + $0x68] sm:$0xff]
          %v5030 = vld [vmem:[%s2571 + $0x70] sm:$0xff]
          %v5031 = vld [vmem:[%s2571 + $0x78] sm:$0xff]
          %v5032 = vrcp.pop %v5016
          %v5033 = vrcp.pop %v5017
          %v5034 = vrcp.pop %v5018
          %v5035 = vrcp.pop %v5019
          %v5036 = vrcp.pop %v5020
          %v5037 = vrcp.pop %v5021
          %v5038 = vrcp.pop %v5022
          %v5039 = vrcp.pop %v5023
          %v5040 = vrcp.pop %v5024
          %v5041 = vrcp.pop %v5025
          %v5042 = vrcp.pop %v5026
          %v5043 = vrcp.pop %v5027
          %v5044 = vrcp.pop %v5028
          %v5045 = vrcp.pop %v5029
          %v5046 = vrcp.pop %v5030
          %v5047 = vrcp.pop %v5031
          %v5048 = vld [vmem:[%s2668] sm:$0xff]
          %v5049 = vld [vmem:[%s2668 + $0x8] sm:$0xff]
          %v5050 = vld [vmem:[%s2668 + $0x10] sm:$0xff]
          %v5051 = vld [vmem:[%s2668 + $0x18] sm:$0xff]
          %v5052 = vld [vmem:[%s2668 + $0x20] sm:$0xff]
          %v5053 = vld [vmem:[%s2668 + $0x28] sm:$0xff]
          %v5054 = vld [vmem:[%s2668 + $0x30] sm:$0xff]
          %v5055 = vld [vmem:[%s2668 + $0x38] sm:$0xff]
          %v5056 = vld [vmem:[%s2668 + $0x40] sm:$0xff]
          %v5057 = vld [vmem:[%s2668 + $0x48] sm:$0xff]
          %v5058 = vld [vmem:[%s2668 + $0x50] sm:$0xff]
          %v5059 = vld [vmem:[%s2668 + $0x58] sm:$0xff]
          %v5060 = vld [vmem:[%s2668 + $0x60] sm:$0xff]
          %v5061 = vld [vmem:[%s2668 + $0x68] sm:$0xff]
          %v5062 = vld [vmem:[%s2668 + $0x70] sm:$0xff]
          %v5063 = vld [vmem:[%s2668 + $0x78] sm:$0xff]
          %5065 = vset.pattern.permute.xlu0 0
          %5066 = vperm.xlu0 %5065, %v5032
          %v5067 = vpop.permute.xlu0 %5066
          %5070 = vset.pattern.permute.xlu0 0
          %5071 = vperm.xlu0 %5070, %v5033
          %v5072 = vpop.permute.xlu0 %5071
          %5075 = vset.pattern.permute.xlu0 0
          %5076 = vperm.xlu0 %5075, %v5034
          %v5077 = vpop.permute.xlu0 %5076
          %5080 = vset.pattern.permute.xlu0 0
          %5081 = vperm.xlu0 %5080, %v5035
          %v5082 = vpop.permute.xlu0 %5081
          %5085 = vset.pattern.permute.xlu0 0
          %5086 = vperm.xlu0 %5085, %v5036
          %v5087 = vpop.permute.xlu0 %5086
          %5090 = vset.pattern.permute.xlu0 0
          %5091 = vperm.xlu0 %5090, %v5037
          %v5092 = vpop.permute.xlu0 %5091
          %5095 = vset.pattern.permute.xlu0 0
          %5096 = vperm.xlu0 %5095, %v5038
          %v5097 = vpop.permute.xlu0 %5096
          %5100 = vset.pattern.permute.xlu0 0
          %5101 = vperm.xlu0 %5100, %v5039
          %v5102 = vpop.permute.xlu0 %5101
          %5105 = vset.pattern.permute.xlu0 0
          %5106 = vperm.xlu0 %5105, %v5040
          %v5107 = vpop.permute.xlu0 %5106
          %5110 = vset.pattern.permute.xlu0 0
          %5111 = vperm.xlu0 %5110, %v5041
          %v5112 = vpop.permute.xlu0 %5111
          %5115 = vset.pattern.permute.xlu0 0
          %5116 = vperm.xlu0 %5115, %v5042
          %v5117 = vpop.permute.xlu0 %5116
          %5120 = vset.pattern.permute.xlu0 0
          %5121 = vperm.xlu0 %5120, %v5043
          %v5122 = vpop.permute.xlu0 %5121
          %5125 = vset.pattern.permute.xlu0 0
          %5126 = vperm.xlu0 %5125, %v5044
          %v5127 = vpop.permute.xlu0 %5126
          %5130 = vset.pattern.permute.xlu0 0
          %5131 = vperm.xlu0 %5130, %v5045
          %v5132 = vpop.permute.xlu0 %5131
          %5135 = vset.pattern.permute.xlu0 0
          %5136 = vperm.xlu0 %5135, %v5046
          %v5137 = vpop.permute.xlu0 %5136
          %5140 = vset.pattern.permute.xlu0 0
          %5141 = vperm.xlu0 %5140, %v5047
          %v5142 = vpop.permute.xlu0 %5141
          %v5144 = vmul.f32 %v5048, %v5067
          %v5145 = vmul.f32 %v5049, %v5072
          %v5146 = vmul.f32 %v5050, %v5077
          %v5147 = vmul.f32 %v5051, %v5082
          %v5148 = vmul.f32 %v5052, %v5087
          %v5149 = vmul.f32 %v5053, %v5092
          %v5150 = vmul.f32 %v5054, %v5097
          %v5151 = vmul.f32 %v5055, %v5102
          %v5152 = vmul.f32 %v5056, %v5107
          %v5153 = vmul.f32 %v5057, %v5112
          %v5154 = vmul.f32 %v5058, %v5117
          %v5155 = vmul.f32 %v5059, %v5122
          %v5156 = vmul.f32 %v5060, %v5127
          %v5157 = vmul.f32 %v5061, %v5132
          %v5158 = vmul.f32 %v5062, %v5137
          %v5159 = vmul.f32 %v5063, %v5142
          %s5160 = scalar_lea.vmem %s6, 1
          %v5161 = vld [vmem:[%s5160] sm:$0x1]
          %v5163 = vlaneseq
          %v5164 = vshrl.u32 %v5163, 7
          %v5165 = vsub.s32 0, %v5164
          %v5166 = vrot.slane %v5161, %v5165
          %v5168 = vadd.f32 %v5144, %v5166
          %v5169 = vadd.f32 %v5145, %v5166
          %v5170 = vadd.f32 %v5146, %v5166
          %v5171 = vadd.f32 %v5147, %v5166
          %v5172 = vadd.f32 %v5148, %v5166
          %v5173 = vadd.f32 %v5149, %v5166
          %v5174 = vadd.f32 %v5150, %v5166
          %v5175 = vadd.f32 %v5151, %v5166
          %v5176 = vadd.f32 %v5152, %v5166
          %v5177 = vadd.f32 %v5153, %v5166
          %v5178 = vadd.f32 %v5154, %v5166
          %v5179 = vadd.f32 %v5155, %v5166
          %v5180 = vadd.f32 %v5156, %v5166
          %v5181 = vadd.f32 %v5157, %v5166
          %v5182 = vadd.f32 %v5158, %v5166
          %v5183 = vadd.f32 %v5159, %v5166
          %v5184 = vtanh.pop %v5168
          %v5185 = vtanh.pop %v5169
          %v5186 = vtanh.pop %v5170
          %v5187 = vtanh.pop %v5171
          %v5188 = vtanh.pop %v5172
          %v5189 = vtanh.pop %v5173
          %v5190 = vtanh.pop %v5174
          %v5191 = vtanh.pop %v5175
          %v5192 = vtanh.pop %v5176
          %v5193 = vtanh.pop %v5177
          %v5194 = vtanh.pop %v5178
          %v5195 = vtanh.pop %v5179
          %v5196 = vtanh.pop %v5180
          %v5197 = vtanh.pop %v5181
          %v5198 = vtanh.pop %v5182
          %v5199 = vtanh.pop %v5183
          %s5200 = scalar_lea.vmem %s7, 128
          %v5201 = vld [vmem:[%s5200] sm:$0xf]
          %v5202 = vld [vmem:[%s5200 + $0x4] sm:$0xf]
          %v5203 = vld [vmem:[%s5200 + $0x8] sm:$0xf]
          %v5204 = vld [vmem:[%s5200 + $0xc] sm:$0xf]
          %v5205 = vld [vmem:[%s5200 + $0x10] sm:$0xf]
          %v5206 = vld [vmem:[%s5200 + $0x14] sm:$0xf]
          %v5207 = vld [vmem:[%s5200 + $0x18] sm:$0xf]
          %v5208 = vld [vmem:[%s5200 + $0x1c] sm:$0xf]
          %v5209 = vld [vmem:[%s5200 + $0x20] sm:$0xf]
          %v5210 = vld [vmem:[%s5200 + $0x24] sm:$0xf]
          %v5211 = vld [vmem:[%s5200 + $0x28] sm:$0xf]
          %v5212 = vld [vmem:[%s5200 + $0x2c] sm:$0xf]
          %v5213 = vld [vmem:[%s5200 + $0x30] sm:$0xf]
          %v5214 = vld [vmem:[%s5200 + $0x34] sm:$0xf]
          %v5215 = vld [vmem:[%s5200 + $0x38] sm:$0xf]
          %v5216 = vld [vmem:[%s5200 + $0x3c] sm:$0xf]
          %v5217 = vld [vmem:[%s5200 + $0x40] sm:$0xf]
          %v5218 = vld [vmem:[%s5200 + $0x44] sm:$0xf]
          %v5219 = vld [vmem:[%s5200 + $0x48] sm:$0xf]
          %v5220 = vld [vmem:[%s5200 + $0x4c] sm:$0xf]
          %v5221 = vld [vmem:[%s5200 + $0x50] sm:$0xf]
          %v5222 = vld [vmem:[%s5200 + $0x54] sm:$0xf]
          %v5223 = vld [vmem:[%s5200 + $0x58] sm:$0xf]
          %v5224 = vld [vmem:[%s5200 + $0x5c] sm:$0xf]
          %v5225 = vld [vmem:[%s5200 + $0x60] sm:$0xf]
          %v5226 = vld [vmem:[%s5200 + $0x64] sm:$0xf]
          %v5227 = vld [vmem:[%s5200 + $0x68] sm:$0xf]
          %v5228 = vld [vmem:[%s5200 + $0x6c] sm:$0xf]
          %v5229 = vld [vmem:[%s5200 + $0x70] sm:$0xf]
          %v5230 = vld [vmem:[%s5200 + $0x74] sm:$0xf]
          %v5231 = vld [vmem:[%s5200 + $0x78] sm:$0xf]
          %v5232 = vld [vmem:[%s5200 + $0x7c] sm:$0xf]
          %s5233 = scalar_lea.vmem %s8, 64
          %v5234 = vld [vmem:[%s5233] sm:$0xf]
          %v5235 = vld [vmem:[%s5233 + $0x4] sm:$0xf]
          %v5236 = vld [vmem:[%s5233 + $0x8] sm:$0xf]
          %v5237 = vld [vmem:[%s5233 + $0xc] sm:$0xf]
          %v5238 = vld [vmem:[%s5233 + $0x10] sm:$0xf]
          %v5239 = vld [vmem:[%s5233 + $0x14] sm:$0xf]
          %v5240 = vld [vmem:[%s5233 + $0x18] sm:$0xf]
          %v5241 = vld [vmem:[%s5233 + $0x1c] sm:$0xf]
          %v5242 = vld [vmem:[%s5233 + $0x20] sm:$0xf]
          %v5243 = vld [vmem:[%s5233 + $0x24] sm:$0xf]
          %v5244 = vld [vmem:[%s5233 + $0x28] sm:$0xf]
          %v5245 = vld [vmem:[%s5233 + $0x2c] sm:$0xf]
          %v5246 = vld [vmem:[%s5233 + $0x30] sm:$0xf]
          %v5247 = vld [vmem:[%s5233 + $0x34] sm:$0xf]
          %v5248 = vld [vmem:[%s5233 + $0x38] sm:$0xf]
          %v5249 = vld [vmem:[%s5233 + $0x3c] sm:$0xf]
          %v5250 = vpack.c.bf16 %v5185, %v5184
          %v5251 = vpack.c.bf16 %v5187, %v5186
          %v5252 = vpack.c.bf16 %v5189, %v5188
          %v5253 = vpack.c.bf16 %v5191, %v5190
          %v5254 = vpack.c.bf16 %v5193, %v5192
          %v5255 = vpack.c.bf16 %v5195, %v5194
          %v5256 = vpack.c.bf16 %v5197, %v5196
          %v5257 = vpack.c.bf16 %v5199, %v5198
          %v5258 = vpack.c.bf16 %v5001, %v5000
          %v5259 = vpack.c.bf16 %v5003, %v5002
          %v5260 = vpack.c.bf16 %v5005, %v5004
          %v5261 = vpack.c.bf16 %v5007, %v5006
          %v5262 = vpack.c.bf16 %v5009, %v5008
          %v5263 = vpack.c.bf16 %v5011, %v5010
          %v5264 = vpack.c.bf16 %v5013, %v5012
          %v5265 = vpack.c.bf16 %v5015, %v5014
          %v5270 = vunpack.c.l.b16 %v5205
          %v5271 = vunpack.c.l.b16 %v5206
          %v5272 = vunpack.c.l.b16 %v5207
          %v5273 = vunpack.c.l.b16 %v5208
          %v5274 = vpack.c.b16 %v5271, %v5270
          %v5275 = vpack.c.b16 %v5273, %v5272
          %v5279 = vsel %vm954, %v5258, 0
          %v5282 = vsel %vm954, %v5259, 0
          %v5285 = vsel %vm954, %v5260, 0
          %v5288 = vsel %vm954, %v5261, 0
          %v5291 = vsel %vm954, %v5262, 0
          %v5294 = vsel %vm954, %v5263, 0
          %v5297 = vsel %vm954, %v5264, 0
          %v5300 = vsel %vm954, %v5265, 0
          %5302 = vmatprep.subr.bf16.mxu0 0
          %5303 = vmatpush1.bf16.msra.mxu0 %v5274
          %5304 = vmatprep.subr.bf16.mxu0 0
          %5305 = vmatpush1.bf16.msra.mxu0 %v5275
          %5306 = vmatprep.subr.bf16.mxu0 0
          %5307 = vmatpush1.bf16.msra.mxu0 0
          %5308 = vmatprep.subr.bf16.mxu0 0
          %5309 = vmatpush1.bf16.msra.mxu0 0
          %5310 = vmatprep.subr.bf16.mxu0 0
          %5311 = vmatpush1.bf16.msra.mxu0 0
          %5312 = vmatprep.subr.bf16.mxu0 0
          %5313 = vmatpush1.bf16.msra.mxu0 0
          %5314 = vmatprep.subr.bf16.mxu0 0
          %5315 = vmatpush1.bf16.msra.mxu0 0
          %5316 = vmatprep.subr.bf16.mxu0 0
          %5317 = vmatpush1.bf16.msra.mxu0 0
          %5318 = vmatprep.subr.bf16.mxu0 0
          %5319 = vmatpush1.bf16.msra.mxu0 0
          %5320 = vmatprep.subr.bf16.mxu0 0
          %5321 = vmatpush1.bf16.msra.mxu0 0
          %5322 = vmatprep.subr.bf16.mxu0 0
          %5323 = vmatpush1.bf16.msra.mxu0 0
          %5324 = vmatprep.subr.bf16.mxu0 0
          %5325 = vmatpush1.bf16.msra.mxu0 0
          %5326 = vmatprep.subr.bf16.mxu0 0
          %5327 = vmatpush1.bf16.msra.mxu0 0
          %5328 = vmatprep.subr.bf16.mxu0 0
          %5329 = vmatpush1.bf16.msra.mxu0 0
          %5330 = vmatprep.subr.bf16.mxu0 0
          %5331 = vmatpush1.bf16.msra.mxu0 0
          %5332 = vmatprep.subr.bf16.mxu0 0
          %5333 = vmatpush1.bf16.msra.mxu0 0
          %5334 = vmatprep.mubr.bf16.mxu0 0
          %5335 = vmatmul.mubr.bf16.gmra.mrb[0].mxu0 %v5279
          %v5336 = vpop.f32.mrb[0].mxu0
          %v5337 = vadd.f32 0.0, %v5336
          %v5338 = vpop.f32.mrb[0].mxu0
          %v5339 = vpop.f32.mrb[0].mxu0
          %v5340 = vadd.f32 0.0, %v5339
          %v5341 = vpop.f32.mrb[0].mxu0
          %5342 = vmatprep.mubr.bf16.mxu0 0
          %5343 = vmatmul.mubr.bf16.gmra.mrb[0].mxu0 %v5282
          %v5344 = vpop.f32.mrb[0].mxu0
          %v5345 = vadd.f32 0.0, %v5344
          %v5346 = vpop.f32.mrb[0].mxu0
          %v5347 = vpop.f32.mrb[0].mxu0
          %v5348 = vadd.f32 0.0, %v5347
          %v5349 = vpop.f32.mrb[0].mxu0
          %5350 = vmatprep.mubr.bf16.mxu0 0
          %5351 = vmatmul.mubr.bf16.gmra.mrb[0].mxu0 %v5285
          %v5352 = vpop.f32.mrb[0].mxu0
          %v5353 = vadd.f32 0.0, %v5352
          %v5354 = vpop.f32.mrb[0].mxu0
          %v5355 = vpop.f32.mrb[0].mxu0
          %v5356 = vadd.f32 0.0, %v5355
          %v5357 = vpop.f32.mrb[0].mxu0
          %5358 = vmatprep.mubr.bf16.mxu0 0
          %5359 = vmatmul.mubr.bf16.gmra.mrb[0].mxu0 %v5288
          %v5360 = vpop.f32.mrb[0].mxu0
          %v5361 = vadd.f32 0.0, %v5360
          %v5362 = vpop.f32.mrb[0].mxu0
          %v5363 = vpop.f32.mrb[0].mxu0
          %v5364 = vadd.f32 0.0, %v5363
          %v5365 = vpop.f32.mrb[0].mxu0
          %5366 = vmatprep.mubr.bf16.mxu0 0
          %5367 = vmatmul.mubr.bf16.gmra.mrb[0].mxu0 %v5291
          %v5368 = vpop.f32.mrb[0].mxu0
          %v5369 = vadd.f32 0.0, %v5368
          %v5370 = vpop.f32.mrb[0].mxu0
          %v5371 = vpop.f32.mrb[0].mxu0
          %v5372 = vadd.f32 0.0, %v5371
          %v5373 = vpop.f32.mrb[0].mxu0
          %5374 = vmatprep.mubr.bf16.mxu0 0
          %5375 = vmatmul.mubr.bf16.gmra.mrb[0].mxu0 %v5294
          %v5376 = vpop.f32.mrb[0].mxu0
          %v5377 = vadd.f32 0.0, %v5376
          %v5378 = vpop.f32.mrb[0].mxu0
          %v5379 = vpop.f32.mrb[0].mxu0
          %v5380 = vadd.f32 0.0, %v5379
          %v5381 = vpop.f32.mrb[0].mxu0
          %5382 = vmatprep.mubr.bf16.mxu0 0
          %5383 = vmatmul.mubr.bf16.gmra.mrb[0].mxu0 %v5297
          %v5384 = vpop.f32.mrb[0].mxu0
          %v5385 = vadd.f32 0.0, %v5384
          %v5386 = vpop.f32.mrb[0].mxu0
          %v5387 = vpop.f32.mrb[0].mxu0
          %v5388 = vadd.f32 0.0, %v5387
          %v5389 = vpop.f32.mrb[0].mxu0
          %5390 = vmatprep.mubr.bf16.mxu0 0
          %5391 = vmatmul.mubr.bf16.gmra.mrb[0].mxu0 %v5300
          %v5392 = vpop.f32.mrb[0].mxu0
          %v5393 = vadd.f32 0.0, %v5392
          %v5394 = vpop.f32.mrb[0].mxu0
          %v5395 = vpop.f32.mrb[0].mxu0
          %v5396 = vadd.f32 0.0, %v5395
          %v5397 = vpop.f32.mrb[0].mxu0
          %5398 = vdwg.mxu0
          %v5403 = vunpack.c.l.b16 %v5201
          %v5404 = vunpack.c.l.b16 %v5202
          %v5405 = vunpack.c.l.b16 %v5203
          %v5406 = vunpack.c.l.b16 %v5204
          %v5407 = vpack.c.b16 %v5404, %v5403
          %v5408 = vpack.c.b16 %v5406, %v5405
          %v5412 = vsel %vm954, %v5250, 0
          %v5415 = vsel %vm954, %v5251, 0
          %v5418 = vsel %vm954, %v5252, 0
          %v5421 = vsel %vm954, %v5253, 0
          %v5424 = vsel %vm954, %v5254, 0
          %v5427 = vsel %vm954, %v5255, 0
          %v5430 = vsel %vm954, %v5256, 0
          %v5433 = vsel %vm954, %v5257, 0
          %5435 = vmatprep.subr.bf16.mxu0 0
          %5436 = vmatpush1.bf16.msra.mxu0 %v5407
          %5437 = vmatprep.subr.bf16.mxu0 0
          %5438 = vmatpush1.bf16.msra.mxu0 %v5408
          %5439 = vmatprep.subr.bf16.mxu0 0
          %5440 = vmatpush1.bf16.msra.mxu0 0
          %5441 = vmatprep.subr.bf16.mxu0 0
          %5442 = vmatpush1.bf16.msra.mxu0 0
          %5443 = vmatprep.subr.bf16.mxu0 0
          %5444 = vmatpush1.bf16.msra.mxu0 0
          %5445 = vmatprep.subr.bf16.mxu0 0
          %5446 = vmatpush1.bf16.msra.mxu0 0
          %5447 = vmatprep.subr.bf16.mxu0 0
          %5448 = vmatpush1.bf16.msra.mxu0 0
          %5449 = vmatprep.subr.bf16.mxu0 0
          %5450 = vmatpush1.bf16.msra.mxu0 0
          %5451 = vmatprep.subr.bf16.mxu0 0
          %5452 = vmatpush1.bf16.msra.mxu0 0
          %5453 = vmatprep.subr.bf16.mxu0 0
          %5454 = vmatpush1.bf16.msra.mxu0 0
          %5455 = vmatprep.subr.bf16.mxu0 0
          %5456 = vmatpush1.bf16.msra.mxu0 0
          %5457 = vmatprep.subr.bf16.mxu0 0
          %5458 = vmatpush1.bf16.msra.mxu0 0
          %5459 = vmatprep.subr.bf16.mxu0 0
          %5460 = vmatpush1.bf16.msra.mxu0 0
          %5461 = vmatprep.subr.bf16.mxu0 0
          %5462 = vmatpush1.bf16.msra.mxu0 0
          %5463 = vmatprep.subr.bf16.mxu0 0
          %5464 = vmatpush1.bf16.msra.mxu0 0
          %5465 = vmatprep.subr.bf16.mxu0 0
          %5466 = vmatpush1.bf16.msra.mxu0 0
          %5467 = vmatprep.mubr.bf16.mxu0 0
          %5468 = vmatmul.mubr.bf16.gmra.mrb[0].mxu0 %v5412
          %v5469 = vpop.f32.mrb[0].mxu0
          %v5470 = vadd.f32 %v5337, %v5469
          %v5471 = vpop.f32.mrb[0].mxu0
          %v5472 = vpop.f32.mrb[0].mxu0
          %v5473 = vadd.f32 %v5340, %v5472
          %v5474 = vpop.f32.mrb[0].mxu0
          %5475 = vmatprep.mubr.bf16.mxu0 0
          %5476 = vmatmul.mubr.bf16.gmra.mrb[0].mxu0 %v5415
          %v5477 = vpop.f32.mrb[0].mxu0
          %v5478 = vadd.f32 %v5345, %v5477
          %v5479 = vpop.f32.mrb[0].mxu0
          %v5480 = vpop.f32.mrb[0].mxu0
          %v5481 = vadd.f32 %v5348, %v5480
          %v5482 = vpop.f32.mrb[0].mxu0
          %5483 = vmatprep.mubr.bf16.mxu0 0
          %5484 = vmatmul.mubr.bf16.gmra.mrb[0].mxu0 %v5418
          %v5485 = vpop.f32.mrb[0].mxu0
          %v5486 = vadd.f32 %v5353, %v5485
          %v5487 = vpop.f32.mrb[0].mxu0
          %v5488 = vpop.f32.mrb[0].mxu0
          %v5489 = vadd.f32 %v5356, %v5488
          %v5490 = vpop.f32.mrb[0].mxu0
          %5491 = vmatprep.mubr.bf16.mxu0 0
          %5492 = vmatmul.mubr.bf16.gmra.mrb[0].mxu0 %v5421
          %v5493 = vpop.f32.mrb[0].mxu0
          %v5494 = vadd.f32 %v5361, %v5493
          %v5495 = vpop.f32.mrb[0].mxu0
          %v5496 = vpop.f32.mrb[0].mxu0
          %v5497 = vadd.f32 %v5364, %v5496
          %v5498 = vpop.f32.mrb[0].mxu0
          %5499 = vmatprep.mubr.bf16.mxu0 0
          %5500 = vmatmul.mubr.bf16.gmra.mrb[0].mxu0 %v5424
          %v5501 = vpop.f32.mrb[0].mxu0
          %v5502 = vadd.f32 %v5369, %v5501
          %v5503 = vpop.f32.mrb[0].mxu0
          %v5504 = vpop.f32.mrb[0].mxu0
          %v5505 = vadd.f32 %v5372, %v5504
          %v5506 = vpop.f32.mrb[0].mxu0
          %5507 = vmatprep.mubr.bf16.mxu0 0
          %5508 = vmatmul.mubr.bf16.gmra.mrb[0].mxu0 %v5427
          %v5509 = vpop.f32.mrb[0].mxu0
          %v5510 = vadd.f32 %v5377, %v5509
          %v5511 = vpop.f32.mrb[0].mxu0
          %v5512 = vpop.f32.mrb[0].mxu0
          %v5513 = vadd.f32 %v5380, %v5512
          %v5514 = vpop.f32.mrb[0].mxu0
          %5515 = vmatprep.mubr.bf16.mxu0 0
          %5516 = vmatmul.mubr.bf16.gmra.mrb[0].mxu0 %v5430
          %v5517 = vpop.f32.mrb[0].mxu0
          %v5518 = vadd.f32 %v5385, %v5517
          %v5519 = vpop.f32.mrb[0].mxu0
          %v5520 = vpop.f32.mrb[0].mxu0
          %v5521 = vadd.f32 %v5388, %v5520
          %v5522 = vpop.f32.mrb[0].mxu0
          %5523 = vmatprep.mubr.bf16.mxu0 0
          %5524 = vmatmul.mubr.bf16.gmra.mrb[0].mxu0 %v5433
          %v5525 = vpop.f32.mrb[0].mxu0
          %v5526 = vadd.f32 %v5393, %v5525
          %v5527 = vpop.f32.mrb[0].mxu0
          %v5528 = vpop.f32.mrb[0].mxu0
          %v5529 = vadd.f32 %v5396, %v5528
          %v5530 = vpop.f32.mrb[0].mxu0
          %5531 = vdwg.mxu0
          %v5536 = vunpack.c.l.b16 %v5234
          %v5537 = vunpack.c.l.b16 %v5235
          %v5538 = vunpack.c.l.b16 %v5236
          %v5539 = vunpack.c.l.b16 %v5237
          %v5540 = vpack.c.b16 %v5537, %v5536
          %v5541 = vpack.c.b16 %v5539, %v5538
          %5544 = vmatprep.subr.bf16.mxu0 0
          %5545 = vmatpush1.bf16.msra.mxu0 %v5540
          %5546 = vmatprep.subr.bf16.mxu0 0
          %5547 = vmatpush1.bf16.msra.mxu0 %v5541
          %5548 = vmatprep.subr.bf16.mxu0 0
          %5549 = vmatpush1.bf16.msra.mxu0 0
          %5550 = vmatprep.subr.bf16.mxu0 0
          %5551 = vmatpush1.bf16.msra.mxu0 0
          %5552 = vmatprep.subr.bf16.mxu0 0
          %5553 = vmatpush1.bf16.msra.mxu0 0
          %5554 = vmatprep.subr.bf16.mxu0 0
          %5555 = vmatpush1.bf16.msra.mxu0 0
          %5556 = vmatprep.subr.bf16.mxu0 0
          %5557 = vmatpush1.bf16.msra.mxu0 0
          %5558 = vmatprep.subr.bf16.mxu0 0
          %5559 = vmatpush1.bf16.msra.mxu0 0
          %5560 = vmatprep.subr.bf16.mxu0 0
          %5561 = vmatpush1.bf16.msra.mxu0 0
          %5562 = vmatprep.subr.bf16.mxu0 0
          %5563 = vmatpush1.bf16.msra.mxu0 0
          %5564 = vmatprep.subr.bf16.mxu0 0
          %5565 = vmatpush1.bf16.msra.mxu0 0
          %5566 = vmatprep.subr.bf16.mxu0 0
          %5567 = vmatpush1.bf16.msra.mxu0 0
          %5568 = vmatprep.subr.bf16.mxu0 0
          %5569 = vmatpush1.bf16.msra.mxu0 0
          %5570 = vmatprep.subr.bf16.mxu0 0
          %5571 = vmatpush1.bf16.msra.mxu0 0
          %5572 = vmatprep.subr.bf16.mxu0 0
          %5573 = vmatpush1.bf16.msra.mxu0 0
          %5574 = vmatprep.subr.bf16.mxu0 0
          %5575 = vmatpush1.bf16.msra.mxu0 0
          %5576 = vmatprep.mubr.bf16.mxu0 0
          %5577 = vmatmul.mubr.bf16.gmra.mrb[0].mxu0 %v5279
          %v5578 = vpop.f32.mrb[0].mxu0
          %v5579 = vadd.f32 0.0, %v5578
          %v5580 = vpop.f32.mrb[0].mxu0
          %v5581 = vpop.f32.mrb[0].mxu0
          %v5582 = vadd.f32 0.0, %v5581
          %v5583 = vpop.f32.mrb[0].mxu0
          %5584 = vmatprep.mubr.bf16.mxu0 0
          %5585 = vmatmul.mubr.bf16.gmra.mrb[0].mxu0 %v5282
          %v5586 = vpop.f32.mrb[0].mxu0
          %v5587 = vadd.f32 0.0, %v5586
          %v5588 = vpop.f32.mrb[0].mxu0
          %v5589 = vpop.f32.mrb[0].mxu0
          %v5590 = vadd.f32 0.0, %v5589
          %v5591 = vpop.f32.mrb[0].mxu0
          %5592 = vmatprep.mubr.bf16.mxu0 0
          %5593 = vmatmul.mubr.bf16.gmra.mrb[0].mxu0 %v5285
          %v5594 = vpop.f32.mrb[0].mxu0
          %v5595 = vadd.f32 0.0, %v5594
          %v5596 = vpop.f32.mrb[0].mxu0
          %v5597 = vpop.f32.mrb[0].mxu0
          %v5598 = vadd.f32 0.0, %v5597
          %v5599 = vpop.f32.mrb[0].mxu0
          %5600 = vmatprep.mubr.bf16.mxu0 0
          %5601 = vmatmul.mubr.bf16.gmra.mrb[0].mxu0 %v5288
          %v5602 = vpop.f32.mrb[0].mxu0
          %v5603 = vadd.f32 0.0, %v5602
          %v5604 = vpop.f32.mrb[0].mxu0
          %v5605 = vpop.f32.mrb[0].mxu0
          %v5606 = vadd.f32 0.0, %v5605
          %v5607 = vpop.f32.mrb[0].mxu0
          %5608 = vmatprep.mubr.bf16.mxu0 0
          %5609 = vmatmul.mubr.bf16.gmra.mrb[0].mxu0 %v5291
          %v5610 = vpop.f32.mrb[0].mxu0
          %v5611 = vadd.f32 0.0, %v5610
          %v5612 = vpop.f32.mrb[0].mxu0
          %v5613 = vpop.f32.mrb[0].mxu0
          %v5614 = vadd.f32 0.0, %v5613
          %v5615 = vpop.f32.mrb[0].mxu0
          %5616 = vmatprep.mubr.bf16.mxu0 0
          %5617 = vmatmul.mubr.bf16.gmra.mrb[0].mxu0 %v5294
          %v5618 = vpop.f32.mrb[0].mxu0
          %v5619 = vadd.f32 0.0, %v5618
          %v5620 = vpop.f32.mrb[0].mxu0
          %v5621 = vpop.f32.mrb[0].mxu0
          %v5622 = vadd.f32 0.0, %v5621
          %v5623 = vpop.f32.mrb[0].mxu0
          %5624 = vmatprep.mubr.bf16.mxu0 0
          %5625 = vmatmul.mubr.bf16.gmra.mrb[0].mxu0 %v5297
          %v5626 = vpop.f32.mrb[0].mxu0
          %v5627 = vadd.f32 0.0, %v5626
          %v5628 = vpop.f32.mrb[0].mxu0
          %v5629 = vpop.f32.mrb[0].mxu0
          %v5630 = vadd.f32 0.0, %v5629
          %v5631 = vpop.f32.mrb[0].mxu0
          %5632 = vmatprep.mubr.bf16.mxu0 0
          %5633 = vmatmul.mubr.bf16.gmra.mrb[0].mxu0 %v5300
          %v5634 = vpop.f32.mrb[0].mxu0
          %v5635 = vadd.f32 0.0, %v5634
          %v5636 = vpop.f32.mrb[0].mxu0
          %v5637 = vpop.f32.mrb[0].mxu0
          %v5638 = vadd.f32 0.0, %v5637
          %v5639 = vpop.f32.mrb[0].mxu0
          %5640 = vdwg.mxu0
          %v5641 = vadd.f32 %v5470, %v5579
          %v5642 = vadd.f32 %v5473, %v5582
          %v5643 = vadd.f32 %v5478, %v5587
          %v5644 = vadd.f32 %v5481, %v5590
          %v5645 = vadd.f32 %v5486, %v5595
          %v5646 = vadd.f32 %v5489, %v5598
          %v5647 = vadd.f32 %v5494, %v5603
          %v5648 = vadd.f32 %v5497, %v5606
          %v5649 = vadd.f32 %v5502, %v5611
          %v5650 = vadd.f32 %v5505, %v5614
          %v5651 = vadd.f32 %v5510, %v5619
          %v5652 = vadd.f32 %v5513, %v5622
          %v5653 = vadd.f32 %v5518, %v5627
          %v5654 = vadd.f32 %v5521, %v5630
          %v5655 = vadd.f32 %v5526, %v5635
          %v5656 = vadd.f32 %v5529, %v5638
          %v5657 = vxor.u32 %v5641, 2147483648
          %v5658 = vxor.u32 %v5642, 2147483648
          %v5659 = vxor.u32 %v5643, 2147483648
          %v5660 = vxor.u32 %v5644, 2147483648
          %v5661 = vxor.u32 %v5645, 2147483648
          %v5662 = vxor.u32 %v5646, 2147483648
          %v5663 = vxor.u32 %v5647, 2147483648
          %v5664 = vxor.u32 %v5648, 2147483648
          %v5665 = vxor.u32 %v5649, 2147483648
          %v5666 = vxor.u32 %v5650, 2147483648
          %v5667 = vxor.u32 %v5651, 2147483648
          %v5668 = vxor.u32 %v5652, 2147483648
          %v5669 = vxor.u32 %v5653, 2147483648
          %v5670 = vxor.u32 %v5654, 2147483648
          %v5671 = vxor.u32 %v5655, 2147483648
          %v5672 = vxor.u32 %v5656, 2147483648
          %v5673 = vmul.f32 %v5657, 1.442695
          %v5674 = vpow.pop %v5673
          %v5675 = vmul.f32 %v5658, 1.442695
          %v5676 = vpow.pop %v5675
          %v5677 = vmul.f32 %v5659, 1.442695
          %v5678 = vpow.pop %v5677
          %v5679 = vmul.f32 %v5660, 1.442695
          %v5680 = vpow.pop %v5679
          %v5681 = vmul.f32 %v5661, 1.442695
          %v5682 = vpow.pop %v5681
          %v5683 = vmul.f32 %v5662, 1.442695
          %v5684 = vpow.pop %v5683
          %v5685 = vmul.f32 %v5663, 1.442695
          %v5686 = vpow.pop %v5685
          %v5687 = vmul.f32 %v5664, 1.442695
          %v5688 = vpow.pop %v5687
          %v5689 = vmul.f32 %v5665, 1.442695
          %v5690 = vpow.pop %v5689
          %v5691 = vmul.f32 %v5666, 1.442695
          %v5692 = vpow.pop %v5691
          %v5693 = vmul.f32 %v5667, 1.442695
          %v5694 = vpow.pop %v5693
          %v5695 = vmul.f32 %v5668, 1.442695
          %v5696 = vpow.pop %v5695
          %v5697 = vmul.f32 %v5669, 1.442695
          %v5698 = vpow.pop %v5697
          %v5699 = vmul.f32 %v5670, 1.442695
          %v5700 = vpow.pop %v5699
          %v5701 = vmul.f32 %v5671, 1.442695
          %v5702 = vpow.pop %v5701
          %v5703 = vmul.f32 %v5672, 1.442695
          %v5704 = vpow.pop %v5703
          %v5705 = vadd.f32 %v5674, 1.0
          %v5706 = vadd.f32 %v5676, 1.0
          %v5707 = vadd.f32 %v5678, 1.0
          %v5708 = vadd.f32 %v5680, 1.0
          %v5709 = vadd.f32 %v5682, 1.0
          %v5710 = vadd.f32 %v5684, 1.0
          %v5711 = vadd.f32 %v5686, 1.0
          %v5712 = vadd.f32 %v5688, 1.0
          %v5713 = vadd.f32 %v5690, 1.0
          %v5714 = vadd.f32 %v5692, 1.0
          %v5715 = vadd.f32 %v5694, 1.0
          %v5716 = vadd.f32 %v5696, 1.0
          %v5717 = vadd.f32 %v5698, 1.0
          %v5718 = vadd.f32 %v5700, 1.0
          %v5719 = vadd.f32 %v5702, 1.0
          %v5720 = vadd.f32 %v5704, 1.0
          %v5721 = vrcp.pop %v5705
          %v5722 = vmul.f32 1.0, %v5721
          %v5723 = vrcp.pop %v5706
          %v5724 = vmul.f32 1.0, %v5723
          %v5725 = vrcp.pop %v5707
          %v5726 = vmul.f32 1.0, %v5725
          %v5727 = vrcp.pop %v5708
          %v5728 = vmul.f32 1.0, %v5727
          %v5729 = vrcp.pop %v5709
          %v5730 = vmul.f32 1.0, %v5729
          %v5731 = vrcp.pop %v5710
          %v5732 = vmul.f32 1.0, %v5731
          %v5733 = vrcp.pop %v5711
          %v5734 = vmul.f32 1.0, %v5733
          %v5735 = vrcp.pop %v5712
          %v5736 = vmul.f32 1.0, %v5735
          %v5737 = vrcp.pop %v5713
          %v5738 = vmul.f32 1.0, %v5737
          %v5739 = vrcp.pop %v5714
          %v5740 = vmul.f32 1.0, %v5739
          %v5741 = vrcp.pop %v5715
          %v5742 = vmul.f32 1.0, %v5741
          %v5743 = vrcp.pop %v5716
          %v5744 = vmul.f32 1.0, %v5743
          %v5745 = vrcp.pop %v5717
          %v5746 = vmul.f32 1.0, %v5745
          %v5747 = vrcp.pop %v5718
          %v5748 = vmul.f32 1.0, %v5747
          %v5749 = vrcp.pop %v5719
          %v5750 = vmul.f32 1.0, %v5749
          %v5751 = vrcp.pop %v5720
          %v5752 = vmul.f32 1.0, %v5751
          %v5757 = vunpack.c.l.b16 %v5213
          %v5758 = vunpack.c.l.b16 %v5214
          %v5759 = vunpack.c.l.b16 %v5215
          %v5760 = vunpack.c.l.b16 %v5216
          %v5761 = vpack.c.b16 %v5758, %v5757
          %v5762 = vpack.c.b16 %v5760, %v5759
          %5765 = vmatprep.subr.bf16.mxu0 0
          %5766 = vmatpush1.bf16.msra.mxu0 %v5761
          %5767 = vmatprep.subr.bf16.mxu0 0
          %5768 = vmatpush1.bf16.msra.mxu0 %v5762
          %5769 = vmatprep.subr.bf16.mxu0 0
          %5770 = vmatpush1.bf16.msra.mxu0 0
          %5771 = vmatprep.subr.bf16.mxu0 0
          %5772 = vmatpush1.bf16.msra.mxu0 0
          %5773 = vmatprep.subr.bf16.mxu0 0
          %5774 = vmatpush1.bf16.msra.mxu0 0
          %5775 = vmatprep.subr.bf16.mxu0 0
          %5776 = vmatpush1.bf16.msra.mxu0 0
          %5777 = vmatprep.subr.bf16.mxu0 0
          %5778 = vmatpush1.bf16.msra.mxu0 0
          %5779 = vmatprep.subr.bf16.mxu0 0
          %5780 = vmatpush1.bf16.msra.mxu0 0
          %5781 = vmatprep.subr.bf16.mxu0 0
          %5782 = vmatpush1.bf16.msra.mxu0 0
          %5783 = vmatprep.subr.bf16.mxu0 0
          %5784 = vmatpush1.bf16.msra.mxu0 0
          %5785 = vmatprep.subr.bf16.mxu0 0
          %5786 = vmatpush1.bf16.msra.mxu0 0
          %5787 = vmatprep.subr.bf16.mxu0 0
          %5788 = vmatpush1.bf16.msra.mxu0 0
          %5789 = vmatprep.subr.bf16.mxu0 0
          %5790 = vmatpush1.bf16.msra.mxu0 0
          %5791 = vmatprep.subr.bf16.mxu0 0
          %5792 = vmatpush1.bf16.msra.mxu0 0
          %5793 = vmatprep.subr.bf16.mxu0 0
          %5794 = vmatpush1.bf16.msra.mxu0 0
          %5795 = vmatprep.subr.bf16.mxu0 0
          %5796 = vmatpush1.bf16.msra.mxu0 0
          %5797 = vmatprep.mubr.bf16.mxu0 0
          %5798 = vmatmul.mubr.bf16.gmra.mrb[0].mxu0 %v5279
          %v5799 = vpop.f32.mrb[0].mxu0
          %v5800 = vadd.f32 0.0, %v5799
          %v5801 = vpop.f32.mrb[0].mxu0
          %v5802 = vpop.f32.mrb[0].mxu0
          %v5803 = vadd.f32 0.0, %v5802
          %v5804 = vpop.f32.mrb[0].mxu0
          %5805 = vmatprep.mubr.bf16.mxu0 0
          %5806 = vmatmul.mubr.bf16.gmra.mrb[0].mxu0 %v5282
          %v5807 = vpop.f32.mrb[0].mxu0
          %v5808 = vadd.f32 0.0, %v5807
          %v5809 = vpop.f32.mrb[0].mxu0
          %v5810 = vpop.f32.mrb[0].mxu0
          %v5811 = vadd.f32 0.0, %v5810
          %v5812 = vpop.f32.mrb[0].mxu0
          %5813 = vmatprep.mubr.bf16.mxu0 0
          %5814 = vmatmul.mubr.bf16.gmra.mrb[0].mxu0 %v5285
          %v5815 = vpop.f32.mrb[0].mxu0
          %v5816 = vadd.f32 0.0, %v5815
          %v5817 = vpop.f32.mrb[0].mxu0
          %v5818 = vpop.f32.mrb[0].mxu0
          %v5819 = vadd.f32 0.0, %v5818
          %v5820 = vpop.f32.mrb[0].mxu0
          %5821 = vmatprep.mubr.bf16.mxu0 0
          %5822 = vmatmul.mubr.bf16.gmra.mrb[0].mxu0 %v5288
          %v5823 = vpop.f32.mrb[0].mxu0
          %v5824 = vadd.f32 0.0, %v5823
          %v5825 = vpop.f32.mrb[0].mxu0
          %v5826 = vpop.f32.mrb[0].mxu0
          %v5827 = vadd.f32 0.0, %v5826
          %v5828 = vpop.f32.mrb[0].mxu0
          %5829 = vmatprep.mubr.bf16.mxu0 0
          %5830 = vmatmul.mubr.bf16.gmra.mrb[0].mxu0 %v5291
          %v5831 = vpop.f32.mrb[0].mxu0
          %v5832 = vadd.f32 0.0, %v5831
          %v5833 = vpop.f32.mrb[0].mxu0
          %v5834 = vpop.f32.mrb[0].mxu0
          %v5835 = vadd.f32 0.0, %v5834
          %v5836 = vpop.f32.mrb[0].mxu0
          %5837 = vmatprep.mubr.bf16.mxu0 0
          %5838 = vmatmul.mubr.bf16.gmra.mrb[0].mxu0 %v5294
          %v5839 = vpop.f32.mrb[0].mxu0
          %v5840 = vadd.f32 0.0, %v5839
          %v5841 = vpop.f32.mrb[0].mxu0
          %v5842 = vpop.f32.mrb[0].mxu0
          %v5843 = vadd.f32 0.0, %v5842
          %v5844 = vpop.f32.mrb[0].mxu0
          %5845 = vmatprep.mubr.bf16.mxu0 0
          %5846 = vmatmul.mubr.bf16.gmra.mrb[0].mxu0 %v5297
          %v5847 = vpop.f32.mrb[0].mxu0
          %v5848 = vadd.f32 0.0, %v5847
          %v5849 = vpop.f32.mrb[0].mxu0
          %v5850 = vpop.f32.mrb[0].mxu0
          %v5851 = vadd.f32 0.0, %v5850
          %v5852 = vpop.f32.mrb[0].mxu0
          %5853 = vmatprep.mubr.bf16.mxu0 0
          %5854 = vmatmul.mubr.bf16.gmra.mrb[0].mxu0 %v5300
          %v5855 = vpop.f32.mrb[0].mxu0
          %v5856 = vadd.f32 0.0, %v5855
          %v5857 = vpop.f32.mrb[0].mxu0
          %v5858 = vpop.f32.mrb[0].mxu0
          %v5859 = vadd.f32 0.0, %v5858
          %v5860 = vpop.f32.mrb[0].mxu0
          %5861 = vdwg.mxu0
          %v5866 = vunpack.c.l.b16 %v5209
          %v5867 = vunpack.c.l.b16 %v5210
          %v5868 = vunpack.c.l.b16 %v5211
          %v5869 = vunpack.c.l.b16 %v5212
          %v5870 = vpack.c.b16 %v5867, %v5866
          %v5871 = vpack.c.b16 %v5869, %v5868
          %5874 = vmatprep.subr.bf16.mxu0 0
          %5875 = vmatpush1.bf16.msra.mxu0 %v5870
          %5876 = vmatprep.subr.bf16.mxu0 0
          %5877 = vmatpush1.bf16.msra.mxu0 %v5871
          %5878 = vmatprep.subr.bf16.mxu0 0
          %5879 = vmatpush1.bf16.msra.mxu0 0
          %5880 = vmatprep.subr.bf16.mxu0 0
          %5881 = vmatpush1.bf16.msra.mxu0 0
          %5882 = vmatprep.subr.bf16.mxu0 0
          %5883 = vmatpush1.bf16.msra.mxu0 0
          %5884 = vmatprep.subr.bf16.mxu0 0
          %5885 = vmatpush1.bf16.msra.mxu0 0
          %5886 = vmatprep.subr.bf16.mxu0 0
          %5887 = vmatpush1.bf16.msra.mxu0 0
          %5888 = vmatprep.subr.bf16.mxu0 0
          %5889 = vmatpush1.bf16.msra.mxu0 0
          %5890 = vmatprep.subr.bf16.mxu0 0
          %5891 = vmatpush1.bf16.msra.mxu0 0
          %5892 = vmatprep.subr.bf16.mxu0 0
          %5893 = vmatpush1.bf16.msra.mxu0 0
          %5894 = vmatprep.subr.bf16.mxu0 0
          %5895 = vmatpush1.bf16.msra.mxu0 0
          %5896 = vmatprep.subr.bf16.mxu0 0
          %5897 = vmatpush1.bf16.msra.mxu0 0
          %5898 = vmatprep.subr.bf16.mxu0 0
          %5899 = vmatpush1.bf16.msra.mxu0 0
          %5900 = vmatprep.subr.bf16.mxu0 0
          %5901 = vmatpush1.bf16.msra.mxu0 0
          %5902 = vmatprep.subr.bf16.mxu0 0
          %5903 = vmatpush1.bf16.msra.mxu0 0
          %5904 = vmatprep.subr.bf16.mxu0 0
          %5905 = vmatpush1.bf16.msra.mxu0 0
          %5906 = vmatprep.mubr.bf16.mxu0 0
          %5907 = vmatmul.mubr.bf16.gmra.mrb[0].mxu0 %v5412
          %v5908 = vpop.f32.mrb[0].mxu0
          %v5909 = vadd.f32 %v5800, %v5908
          %v5910 = vpop.f32.mrb[0].mxu0
          %v5911 = vpop.f32.mrb[0].mxu0
          %v5912 = vadd.f32 %v5803, %v5911
          %v5913 = vpop.f32.mrb[0].mxu0
          %5914 = vmatprep.mubr.bf16.mxu0 0
          %5915 = vmatmul.mubr.bf16.gmra.mrb[0].mxu0 %v5415
          %v5916 = vpop.f32.mrb[0].mxu0
          %v5917 = vadd.f32 %v5808, %v5916
          %v5918 = vpop.f32.mrb[0].mxu0
          %v5919 = vpop.f32.mrb[0].mxu0
          %v5920 = vadd.f32 %v5811, %v5919
          %v5921 = vpop.f32.mrb[0].mxu0
          %5922 = vmatprep.mubr.bf16.mxu0 0
          %5923 = vmatmul.mubr.bf16.gmra.mrb[0].mxu0 %v5418
          %v5924 = vpop.f32.mrb[0].mxu0
          %v5925 = vadd.f32 %v5816, %v5924
          %v5926 = vpop.f32.mrb[0].mxu0
          %v5927 = vpop.f32.mrb[0].mxu0
          %v5928 = vadd.f32 %v5819, %v5927
          %v5929 = vpop.f32.mrb[0].mxu0
          %5930 = vmatprep.mubr.bf16.mxu0 0
          %5931 = vmatmul.mubr.bf16.gmra.mrb[0].mxu0 %v5421
          %v5932 = vpop.f32.mrb[0].mxu0
          %v5933 = vadd.f32 %v5824, %v5932
          %v5934 = vpop.f32.mrb[0].mxu0
          %v5935 = vpop.f32.mrb[0].mxu0
          %v5936 = vadd.f32 %v5827, %v5935
          %v5937 = vpop.f32.mrb[0].mxu0
          %5938 = vmatprep.mubr.bf16.mxu0 0
          %5939 = vmatmul.mubr.bf16.gmra.mrb[0].mxu0 %v5424
          %v5940 = vpop.f32.mrb[0].mxu0
          %v5941 = vadd.f32 %v5832, %v5940
          %v5942 = vpop.f32.mrb[0].mxu0
          %v5943 = vpop.f32.mrb[0].mxu0
          %v5944 = vadd.f32 %v5835, %v5943
          %v5945 = vpop.f32.mrb[0].mxu0
          %5946 = vmatprep.mubr.bf16.mxu0 0
          %5947 = vmatmul.mubr.bf16.gmra.mrb[0].mxu0 %v5427
          %v5948 = vpop.f32.mrb[0].mxu0
          %v5949 = vadd.f32 %v5840, %v5948
          %v5950 = vpop.f32.mrb[0].mxu0
          %v5951 = vpop.f32.mrb[0].mxu0
          %v5952 = vadd.f32 %v5843, %v5951
          %v5953 = vpop.f32.mrb[0].mxu0
          %5954 = vmatprep.mubr.bf16.mxu0 0
          %5955 = vmatmul.mubr.bf16.gmra.mrb[0].mxu0 %v5430
          %v5956 = vpop.f32.mrb[0].mxu0
          %v5957 = vadd.f32 %v5848, %v5956
          %v5958 = vpop.f32.mrb[0].mxu0
          %v5959 = vpop.f32.mrb[0].mxu0
          %v5960 = vadd.f32 %v5851, %v5959
          %v5961 = vpop.f32.mrb[0].mxu0
          %5962 = vmatprep.mubr.bf16.mxu0 0
          %5963 = vmatmul.mubr.bf16.gmra.mrb[0].mxu0 %v5433
          %v5964 = vpop.f32.mrb[0].mxu0
          %v5965 = vadd.f32 %v5856, %v5964
          %v5966 = vpop.f32.mrb[0].mxu0
          %v5967 = vpop.f32.mrb[0].mxu0
          %v5968 = vadd.f32 %v5859, %v5967
          %v5969 = vpop.f32.mrb[0].mxu0
          %5970 = vdwg.mxu0
          %v5975 = vunpack.c.l.b16 %v5238
          %v5976 = vunpack.c.l.b16 %v5239
          %v5977 = vunpack.c.l.b16 %v5240
          %v5978 = vunpack.c.l.b16 %v5241
          %v5979 = vpack.c.b16 %v5976, %v5975
          %v5980 = vpack.c.b16 %v5978, %v5977
          %5983 = vmatprep.subr.bf16.mxu0 0
          %5984 = vmatpush1.bf16.msra.mxu0 %v5979
          %5985 = vmatprep.subr.bf16.mxu0 0
          %5986 = vmatpush1.bf16.msra.mxu0 %v5980
          %5987 = vmatprep.subr.bf16.mxu0 0
          %5988 = vmatpush1.bf16.msra.mxu0 0
          %5989 = vmatprep.subr.bf16.mxu0 0
          %5990 = vmatpush1.bf16.msra.mxu0 0
          %5991 = vmatprep.subr.bf16.mxu0 0
          %5992 = vmatpush1.bf16.msra.mxu0 0
          %5993 = vmatprep.subr.bf16.mxu0 0
          %5994 = vmatpush1.bf16.msra.mxu0 0
          %5995 = vmatprep.subr.bf16.mxu0 0
          %5996 = vmatpush1.bf16.msra.mxu0 0
          %5997 = vmatprep.subr.bf16.mxu0 0
          %5998 = vmatpush1.bf16.msra.mxu0 0
          %5999 = vmatprep.subr.bf16.mxu0 0
          %6000 = vmatpush1.bf16.msra.mxu0 0
          %6001 = vmatprep.subr.bf16.mxu0 0
          %6002 = vmatpush1.bf16.msra.mxu0 0
          %6003 = vmatprep.subr.bf16.mxu0 0
          %6004 = vmatpush1.bf16.msra.mxu0 0
          %6005 = vmatprep.subr.bf16.mxu0 0
          %6006 = vmatpush1.bf16.msra.mxu0 0
          %6007 = vmatprep.subr.bf16.mxu0 0
          %6008 = vmatpush1.bf16.msra.mxu0 0
          %6009 = vmatprep.subr.bf16.mxu0 0
          %6010 = vmatpush1.bf16.msra.mxu0 0
          %6011 = vmatprep.subr.bf16.mxu0 0
          %6012 = vmatpush1.bf16.msra.mxu0 0
          %6013 = vmatprep.subr.bf16.mxu0 0
          %6014 = vmatpush1.bf16.msra.mxu0 0
          %6015 = vmatprep.mubr.bf16.mxu0 0
          %6016 = vmatmul.mubr.bf16.gmra.mrb[0].mxu0 %v5279
          %v6017 = vpop.f32.mrb[0].mxu0
          %v6018 = vadd.f32 0.0, %v6017
          %v6019 = vpop.f32.mrb[0].mxu0
          %v6020 = vpop.f32.mrb[0].mxu0
          %v6021 = vadd.f32 0.0, %v6020
          %v6022 = vpop.f32.mrb[0].mxu0
          %6023 = vmatprep.mubr.bf16.mxu0 0
          %6024 = vmatmul.mubr.bf16.gmra.mrb[0].mxu0 %v5282
          %v6025 = vpop.f32.mrb[0].mxu0
          %v6026 = vadd.f32 0.0, %v6025
          %v6027 = vpop.f32.mrb[0].mxu0
          %v6028 = vpop.f32.mrb[0].mxu0
          %v6029 = vadd.f32 0.0, %v6028
          %v6030 = vpop.f32.mrb[0].mxu0
          %6031 = vmatprep.mubr.bf16.mxu0 0
          %6032 = vmatmul.mubr.bf16.gmra.mrb[0].mxu0 %v5285
          %v6033 = vpop.f32.mrb[0].mxu0
          %v6034 = vadd.f32 0.0, %v6033
          %v6035 = vpop.f32.mrb[0].mxu0
          %v6036 = vpop.f32.mrb[0].mxu0
          %v6037 = vadd.f32 0.0, %v6036
          %v6038 = vpop.f32.mrb[0].mxu0
          %6039 = vmatprep.mubr.bf16.mxu0 0
          %6040 = vmatmul.mubr.bf16.gmra.mrb[0].mxu0 %v5288
          %v6041 = vpop.f32.mrb[0].mxu0
          %v6042 = vadd.f32 0.0, %v6041
          %v6043 = vpop.f32.mrb[0].mxu0
          %v6044 = vpop.f32.mrb[0].mxu0
          %v6045 = vadd.f32 0.0, %v6044
          %v6046 = vpop.f32.mrb[0].mxu0
          %6047 = vmatprep.mubr.bf16.mxu0 0
          %6048 = vmatmul.mubr.bf16.gmra.mrb[0].mxu0 %v5291
          %v6049 = vpop.f32.mrb[0].mxu0
          %v6050 = vadd.f32 0.0, %v6049
          %v6051 = vpop.f32.mrb[0].mxu0
          %v6052 = vpop.f32.mrb[0].mxu0
          %v6053 = vadd.f32 0.0, %v6052
          %v6054 = vpop.f32.mrb[0].mxu0
          %6055 = vmatprep.mubr.bf16.mxu0 0
          %6056 = vmatmul.mubr.bf16.gmra.mrb[0].mxu0 %v5294
          %v6057 = vpop.f32.mrb[0].mxu0
          %v6058 = vadd.f32 0.0, %v6057
          %v6059 = vpop.f32.mrb[0].mxu0
          %v6060 = vpop.f32.mrb[0].mxu0
          %v6061 = vadd.f32 0.0, %v6060
          %v6062 = vpop.f32.mrb[0].mxu0
          %6063 = vmatprep.mubr.bf16.mxu0 0
          %6064 = vmatmul.mubr.bf16.gmra.mrb[0].mxu0 %v5297
          %v6065 = vpop.f32.mrb[0].mxu0
          %v6066 = vadd.f32 0.0, %v6065
          %v6067 = vpop.f32.mrb[0].mxu0
          %v6068 = vpop.f32.mrb[0].mxu0
          %v6069 = vadd.f32 0.0, %v6068
          %v6070 = vpop.f32.mrb[0].mxu0
          %6071 = vmatprep.mubr.bf16.mxu0 0
          %6072 = vmatmul.mubr.bf16.gmra.mrb[0].mxu0 %v5300
          %v6073 = vpop.f32.mrb[0].mxu0
          %v6074 = vadd.f32 0.0, %v6073
          %v6075 = vpop.f32.mrb[0].mxu0
          %v6076 = vpop.f32.mrb[0].mxu0
          %v6077 = vadd.f32 0.0, %v6076
          %v6078 = vpop.f32.mrb[0].mxu0
          %6079 = vdwg.mxu0
          %v6080 = vadd.f32 %v5909, %v6018
          %v6081 = vadd.f32 %v5912, %v6021
          %v6082 = vadd.f32 %v5917, %v6026
          %v6083 = vadd.f32 %v5920, %v6029
          %v6084 = vadd.f32 %v5925, %v6034
          %v6085 = vadd.f32 %v5928, %v6037
          %v6086 = vadd.f32 %v5933, %v6042
          %v6087 = vadd.f32 %v5936, %v6045
          %v6088 = vadd.f32 %v5941, %v6050
          %v6089 = vadd.f32 %v5944, %v6053
          %v6090 = vadd.f32 %v5949, %v6058
          %v6091 = vadd.f32 %v5952, %v6061
          %v6092 = vadd.f32 %v5957, %v6066
          %v6093 = vadd.f32 %v5960, %v6069
          %v6094 = vadd.f32 %v5965, %v6074
          %v6095 = vadd.f32 %v5968, %v6077
          %v6096 = vxor.u32 %v6080, 2147483648
          %v6097 = vxor.u32 %v6081, 2147483648
          %v6098 = vxor.u32 %v6082, 2147483648
          %v6099 = vxor.u32 %v6083, 2147483648
          %v6100 = vxor.u32 %v6084, 2147483648
          %v6101 = vxor.u32 %v6085, 2147483648
          %v6102 = vxor.u32 %v6086, 2147483648
          %v6103 = vxor.u32 %v6087, 2147483648
          %v6104 = vxor.u32 %v6088, 2147483648
          %v6105 = vxor.u32 %v6089, 2147483648
          %v6106 = vxor.u32 %v6090, 2147483648
          %v6107 = vxor.u32 %v6091, 2147483648
          %v6108 = vxor.u32 %v6092, 2147483648
          %v6109 = vxor.u32 %v6093, 2147483648
          %v6110 = vxor.u32 %v6094, 2147483648
          %v6111 = vxor.u32 %v6095, 2147483648
          %v6112 = vmul.f32 %v6096, 1.442695
          %v6113 = vpow.pop %v6112
          %v6114 = vmul.f32 %v6097, 1.442695
          %v6115 = vpow.pop %v6114
          %v6116 = vmul.f32 %v6098, 1.442695
          %v6117 = vpow.pop %v6116
          %v6118 = vmul.f32 %v6099, 1.442695
          %v6119 = vpow.pop %v6118
          %v6120 = vmul.f32 %v6100, 1.442695
          %v6121 = vpow.pop %v6120
          %v6122 = vmul.f32 %v6101, 1.442695
          %v6123 = vpow.pop %v6122
          %v6124 = vmul.f32 %v6102, 1.442695
          %v6125 = vpow.pop %v6124
          %v6126 = vmul.f32 %v6103, 1.442695
          %v6127 = vpow.pop %v6126
          %v6128 = vmul.f32 %v6104, 1.442695
          %v6129 = vpow.pop %v6128
          %v6130 = vmul.f32 %v6105, 1.442695
          %v6131 = vpow.pop %v6130
          %v6132 = vmul.f32 %v6106, 1.442695
          %v6133 = vpow.pop %v6132
          %v6134 = vmul.f32 %v6107, 1.442695
          %v6135 = vpow.pop %v6134
          %v6136 = vmul.f32 %v6108, 1.442695
          %v6137 = vpow.pop %v6136
          %v6138 = vmul.f32 %v6109, 1.442695
          %v6139 = vpow.pop %v6138
          %v6140 = vmul.f32 %v6110, 1.442695
          %v6141 = vpow.pop %v6140
          %v6142 = vmul.f32 %v6111, 1.442695
          %v6143 = vpow.pop %v6142
          %v6144 = vadd.f32 %v6113, 1.0
          %v6145 = vadd.f32 %v6115, 1.0
          %v6146 = vadd.f32 %v6117, 1.0
          %v6147 = vadd.f32 %v6119, 1.0
          %v6148 = vadd.f32 %v6121, 1.0
          %v6149 = vadd.f32 %v6123, 1.0
          %v6150 = vadd.f32 %v6125, 1.0
          %v6151 = vadd.f32 %v6127, 1.0
          %v6152 = vadd.f32 %v6129, 1.0
          %v6153 = vadd.f32 %v6131, 1.0
          %v6154 = vadd.f32 %v6133, 1.0
          %v6155 = vadd.f32 %v6135, 1.0
          %v6156 = vadd.f32 %v6137, 1.0
          %v6157 = vadd.f32 %v6139, 1.0
          %v6158 = vadd.f32 %v6141, 1.0
          %v6159 = vadd.f32 %v6143, 1.0
          %v6160 = vrcp.pop %v6144
          %v6161 = vmul.f32 1.0, %v6160
          %v6162 = vrcp.pop %v6145
          %v6163 = vmul.f32 1.0, %v6162
          %v6164 = vrcp.pop %v6146
          %v6165 = vmul.f32 1.0, %v6164
          %v6166 = vrcp.pop %v6147
          %v6167 = vmul.f32 1.0, %v6166
          %v6168 = vrcp.pop %v6148
          %v6169 = vmul.f32 1.0, %v6168
          %v6170 = vrcp.pop %v6149
          %v6171 = vmul.f32 1.0, %v6170
          %v6172 = vrcp.pop %v6150
          %v6173 = vmul.f32 1.0, %v6172
          %v6174 = vrcp.pop %v6151
          %v6175 = vmul.f32 1.0, %v6174
          %v6176 = vrcp.pop %v6152
          %v6177 = vmul.f32 1.0, %v6176
          %v6178 = vrcp.pop %v6153
          %v6179 = vmul.f32 1.0, %v6178
          %v6180 = vrcp.pop %v6154
          %v6181 = vmul.f32 1.0, %v6180
          %v6182 = vrcp.pop %v6155
          %v6183 = vmul.f32 1.0, %v6182
          %v6184 = vrcp.pop %v6156
          %v6185 = vmul.f32 1.0, %v6184
          %v6186 = vrcp.pop %v6157
          %v6187 = vmul.f32 1.0, %v6186
          %v6188 = vrcp.pop %v6158
          %v6189 = vmul.f32 1.0, %v6188
          %v6190 = vrcp.pop %v6159
          %v6191 = vmul.f32 1.0, %v6190
          %v6196 = vunpack.c.l.b16 %v5221
          %v6197 = vunpack.c.l.b16 %v5222
          %v6198 = vunpack.c.l.b16 %v5223
          %v6199 = vunpack.c.l.b16 %v5224
          %v6200 = vpack.c.b16 %v6197, %v6196
          %v6201 = vpack.c.b16 %v6199, %v6198
          %6204 = vmatprep.subr.bf16.mxu0 0
          %6205 = vmatpush1.bf16.msra.mxu0 %v6200
          %6206 = vmatprep.subr.bf16.mxu0 0
          %6207 = vmatpush1.bf16.msra.mxu0 %v6201
          %6208 = vmatprep.subr.bf16.mxu0 0
          %6209 = vmatpush1.bf16.msra.mxu0 0
          %6210 = vmatprep.subr.bf16.mxu0 0
          %6211 = vmatpush1.bf16.msra.mxu0 0
          %6212 = vmatprep.subr.bf16.mxu0 0
          %6213 = vmatpush1.bf16.msra.mxu0 0
          %6214 = vmatprep.subr.bf16.mxu0 0
          %6215 = vmatpush1.bf16.msra.mxu0 0
          %6216 = vmatprep.subr.bf16.mxu0 0
          %6217 = vmatpush1.bf16.msra.mxu0 0
          %6218 = vmatprep.subr.bf16.mxu0 0
          %6219 = vmatpush1.bf16.msra.mxu0 0
          %6220 = vmatprep.subr.bf16.mxu0 0
          %6221 = vmatpush1.bf16.msra.mxu0 0
          %6222 = vmatprep.subr.bf16.mxu0 0
          %6223 = vmatpush1.bf16.msra.mxu0 0
          %6224 = vmatprep.subr.bf16.mxu0 0
          %6225 = vmatpush1.bf16.msra.mxu0 0
          %6226 = vmatprep.subr.bf16.mxu0 0
          %6227 = vmatpush1.bf16.msra.mxu0 0
          %6228 = vmatprep.subr.bf16.mxu0 0
          %6229 = vmatpush1.bf16.msra.mxu0 0
          %6230 = vmatprep.subr.bf16.mxu0 0
          %6231 = vmatpush1.bf16.msra.mxu0 0
          %6232 = vmatprep.subr.bf16.mxu0 0
          %6233 = vmatpush1.bf16.msra.mxu0 0
          %6234 = vmatprep.subr.bf16.mxu0 0
          %6235 = vmatpush1.bf16.msra.mxu0 0
          %6236 = vmatprep.mubr.bf16.mxu0 0
          %6237 = vmatmul.mubr.bf16.gmra.mrb[0].mxu0 %v5279
          %v6238 = vpop.f32.mrb[0].mxu0
          %v6239 = vadd.f32 0.0, %v6238
          %v6240 = vpop.f32.mrb[0].mxu0
          %v6241 = vpop.f32.mrb[0].mxu0
          %v6242 = vadd.f32 0.0, %v6241
          %v6243 = vpop.f32.mrb[0].mxu0
          %6244 = vmatprep.mubr.bf16.mxu0 0
          %6245 = vmatmul.mubr.bf16.gmra.mrb[0].mxu0 %v5282
          %v6246 = vpop.f32.mrb[0].mxu0
          %v6247 = vadd.f32 0.0, %v6246
          %v6248 = vpop.f32.mrb[0].mxu0
          %v6249 = vpop.f32.mrb[0].mxu0
          %v6250 = vadd.f32 0.0, %v6249
          %v6251 = vpop.f32.mrb[0].mxu0
          %6252 = vmatprep.mubr.bf16.mxu0 0
          %6253 = vmatmul.mubr.bf16.gmra.mrb[0].mxu0 %v5285
          %v6254 = vpop.f32.mrb[0].mxu0
          %v6255 = vadd.f32 0.0, %v6254
          %v6256 = vpop.f32.mrb[0].mxu0
          %v6257 = vpop.f32.mrb[0].mxu0
          %v6258 = vadd.f32 0.0, %v6257
          %v6259 = vpop.f32.mrb[0].mxu0
          %6260 = vmatprep.mubr.bf16.mxu0 0
          %6261 = vmatmul.mubr.bf16.gmra.mrb[0].mxu0 %v5288
          %v6262 = vpop.f32.mrb[0].mxu0
          %v6263 = vadd.f32 0.0, %v6262
          %v6264 = vpop.f32.mrb[0].mxu0
          %v6265 = vpop.f32.mrb[0].mxu0
          %v6266 = vadd.f32 0.0, %v6265
          %v6267 = vpop.f32.mrb[0].mxu0
          %6268 = vmatprep.mubr.bf16.mxu0 0
          %6269 = vmatmul.mubr.bf16.gmra.mrb[0].mxu0 %v5291
          %v6270 = vpop.f32.mrb[0].mxu0
          %v6271 = vadd.f32 0.0, %v6270
          %v6272 = vpop.f32.mrb[0].mxu0
          %v6273 = vpop.f32.mrb[0].mxu0
          %v6274 = vadd.f32 0.0, %v6273
          %v6275 = vpop.f32.mrb[0].mxu0
          %6276 = vmatprep.mubr.bf16.mxu0 0
          %6277 = vmatmul.mubr.bf16.gmra.mrb[0].mxu0 %v5294
          %v6278 = vpop.f32.mrb[0].mxu0
          %v6279 = vadd.f32 0.0, %v6278
          %v6280 = vpop.f32.mrb[0].mxu0
          %v6281 = vpop.f32.mrb[0].mxu0
          %v6282 = vadd.f32 0.0, %v6281
          %v6283 = vpop.f32.mrb[0].mxu0
          %6284 = vmatprep.mubr.bf16.mxu0 0
          %6285 = vmatmul.mubr.bf16.gmra.mrb[0].mxu0 %v5297
          %v6286 = vpop.f32.mrb[0].mxu0
          %v6287 = vadd.f32 0.0, %v6286
          %v6288 = vpop.f32.mrb[0].mxu0
          %v6289 = vpop.f32.mrb[0].mxu0
          %v6290 = vadd.f32 0.0, %v6289
          %v6291 = vpop.f32.mrb[0].mxu0
          %6292 = vmatprep.mubr.bf16.mxu0 0
          %6293 = vmatmul.mubr.bf16.gmra.mrb[0].mxu0 %v5300
          %v6294 = vpop.f32.mrb[0].mxu0
          %v6295 = vadd.f32 0.0, %v6294
          %v6296 = vpop.f32.mrb[0].mxu0
          %v6297 = vpop.f32.mrb[0].mxu0
          %v6298 = vadd.f32 0.0, %v6297
          %v6299 = vpop.f32.mrb[0].mxu0
          %6300 = vdwg.mxu0
          %v6305 = vunpack.c.l.b16 %v5217
          %v6306 = vunpack.c.l.b16 %v5218
          %v6307 = vunpack.c.l.b16 %v5219
          %v6308 = vunpack.c.l.b16 %v5220
          %v6309 = vpack.c.b16 %v6306, %v6305
          %v6310 = vpack.c.b16 %v6308, %v6307
          %6313 = vmatprep.subr.bf16.mxu0 0
          %6314 = vmatpush1.bf16.msra.mxu0 %v6309
          %6315 = vmatprep.subr.bf16.mxu0 0
          %6316 = vmatpush1.bf16.msra.mxu0 %v6310
          %6317 = vmatprep.subr.bf16.mxu0 0
          %6318 = vmatpush1.bf16.msra.mxu0 0
          %6319 = vmatprep.subr.bf16.mxu0 0
          %6320 = vmatpush1.bf16.msra.mxu0 0
          %6321 = vmatprep.subr.bf16.mxu0 0
          %6322 = vmatpush1.bf16.msra.mxu0 0
          %6323 = vmatprep.subr.bf16.mxu0 0
          %6324 = vmatpush1.bf16.msra.mxu0 0
          %6325 = vmatprep.subr.bf16.mxu0 0
          %6326 = vmatpush1.bf16.msra.mxu0 0
          %6327 = vmatprep.subr.bf16.mxu0 0
          %6328 = vmatpush1.bf16.msra.mxu0 0
          %6329 = vmatprep.subr.bf16.mxu0 0
          %6330 = vmatpush1.bf16.msra.mxu0 0
          %6331 = vmatprep.subr.bf16.mxu0 0
          %6332 = vmatpush1.bf16.msra.mxu0 0
          %6333 = vmatprep.subr.bf16.mxu0 0
          %6334 = vmatpush1.bf16.msra.mxu0 0
          %6335 = vmatprep.subr.bf16.mxu0 0
          %6336 = vmatpush1.bf16.msra.mxu0 0
          %6337 = vmatprep.subr.bf16.mxu0 0
          %6338 = vmatpush1.bf16.msra.mxu0 0
          %6339 = vmatprep.subr.bf16.mxu0 0
          %6340 = vmatpush1.bf16.msra.mxu0 0
          %6341 = vmatprep.subr.bf16.mxu0 0
          %6342 = vmatpush1.bf16.msra.mxu0 0
          %6343 = vmatprep.subr.bf16.mxu0 0
          %6344 = vmatpush1.bf16.msra.mxu0 0
          %6345 = vmatprep.mubr.bf16.mxu0 0
          %6346 = vmatmul.mubr.bf16.gmra.mrb[0].mxu0 %v5412
          %v6347 = vpop.f32.mrb[0].mxu0
          %v6348 = vadd.f32 %v6239, %v6347
          %v6349 = vpop.f32.mrb[0].mxu0
          %v6350 = vpop.f32.mrb[0].mxu0
          %v6351 = vadd.f32 %v6242, %v6350
          %v6352 = vpop.f32.mrb[0].mxu0
          %6353 = vmatprep.mubr.bf16.mxu0 0
          %6354 = vmatmul.mubr.bf16.gmra.mrb[0].mxu0 %v5415
          %v6355 = vpop.f32.mrb[0].mxu0
          %v6356 = vadd.f32 %v6247, %v6355
          %v6357 = vpop.f32.mrb[0].mxu0
          %v6358 = vpop.f32.mrb[0].mxu0
          %v6359 = vadd.f32 %v6250, %v6358
          %v6360 = vpop.f32.mrb[0].mxu0
          %6361 = vmatprep.mubr.bf16.mxu0 0
          %6362 = vmatmul.mubr.bf16.gmra.mrb[0].mxu0 %v5418
          %v6363 = vpop.f32.mrb[0].mxu0
          %v6364 = vadd.f32 %v6255, %v6363
          %v6365 = vpop.f32.mrb[0].mxu0
          %v6366 = vpop.f32.mrb[0].mxu0
          %v6367 = vadd.f32 %v6258, %v6366
          %v6368 = vpop.f32.mrb[0].mxu0
          %6369 = vmatprep.mubr.bf16.mxu0 0
          %6370 = vmatmul.mubr.bf16.gmra.mrb[0].mxu0 %v5421
          %v6371 = vpop.f32.mrb[0].mxu0
          %v6372 = vadd.f32 %v6263, %v6371
          %v6373 = vpop.f32.mrb[0].mxu0
          %v6374 = vpop.f32.mrb[0].mxu0
          %v6375 = vadd.f32 %v6266, %v6374
          %v6376 = vpop.f32.mrb[0].mxu0
          %6377 = vmatprep.mubr.bf16.mxu0 0
          %6378 = vmatmul.mubr.bf16.gmra.mrb[0].mxu0 %v5424
          %v6379 = vpop.f32.mrb[0].mxu0
          %v6380 = vadd.f32 %v6271, %v6379
          %v6381 = vpop.f32.mrb[0].mxu0
          %v6382 = vpop.f32.mrb[0].mxu0
          %v6383 = vadd.f32 %v6274, %v6382
          %v6384 = vpop.f32.mrb[0].mxu0
          %6385 = vmatprep.mubr.bf16.mxu0 0
          %6386 = vmatmul.mubr.bf16.gmra.mrb[0].mxu0 %v5427
          %v6387 = vpop.f32.mrb[0].mxu0
          %v6388 = vadd.f32 %v6279, %v6387
          %v6389 = vpop.f32.mrb[0].mxu0
          %v6390 = vpop.f32.mrb[0].mxu0
          %v6391 = vadd.f32 %v6282, %v6390
          %v6392 = vpop.f32.mrb[0].mxu0
          %6393 = vmatprep.mubr.bf16.mxu0 0
          %6394 = vmatmul.mubr.bf16.gmra.mrb[0].mxu0 %v5430
          %v6395 = vpop.f32.mrb[0].mxu0
          %v6396 = vadd.f32 %v6287, %v6395
          %v6397 = vpop.f32.mrb[0].mxu0
          %v6398 = vpop.f32.mrb[0].mxu0
          %v6399 = vadd.f32 %v6290, %v6398
          %v6400 = vpop.f32.mrb[0].mxu0
          %6401 = vmatprep.mubr.bf16.mxu0 0
          %6402 = vmatmul.mubr.bf16.gmra.mrb[0].mxu0 %v5433
          %v6403 = vpop.f32.mrb[0].mxu0
          %v6404 = vadd.f32 %v6295, %v6403
          %v6405 = vpop.f32.mrb[0].mxu0
          %v6406 = vpop.f32.mrb[0].mxu0
          %v6407 = vadd.f32 %v6298, %v6406
          %v6408 = vpop.f32.mrb[0].mxu0
          %6409 = vdwg.mxu0
          %v6414 = vunpack.c.l.b16 %v5242
          %v6415 = vunpack.c.l.b16 %v5243
          %v6416 = vunpack.c.l.b16 %v5244
          %v6417 = vunpack.c.l.b16 %v5245
          %v6418 = vpack.c.b16 %v6415, %v6414
          %v6419 = vpack.c.b16 %v6417, %v6416
          %6422 = vmatprep.subr.bf16.mxu0 0
          %6423 = vmatpush1.bf16.msra.mxu0 %v6418
          %6424 = vmatprep.subr.bf16.mxu0 0
          %6425 = vmatpush1.bf16.msra.mxu0 %v6419
          %6426 = vmatprep.subr.bf16.mxu0 0
          %6427 = vmatpush1.bf16.msra.mxu0 0
          %6428 = vmatprep.subr.bf16.mxu0 0
          %6429 = vmatpush1.bf16.msra.mxu0 0
          %6430 = vmatprep.subr.bf16.mxu0 0
          %6431 = vmatpush1.bf16.msra.mxu0 0
          %6432 = vmatprep.subr.bf16.mxu0 0
          %6433 = vmatpush1.bf16.msra.mxu0 0
          %6434 = vmatprep.subr.bf16.mxu0 0
          %6435 = vmatpush1.bf16.msra.mxu0 0
          %6436 = vmatprep.subr.bf16.mxu0 0
          %6437 = vmatpush1.bf16.msra.mxu0 0
          %6438 = vmatprep.subr.bf16.mxu0 0
          %6439 = vmatpush1.bf16.msra.mxu0 0
          %6440 = vmatprep.subr.bf16.mxu0 0
          %6441 = vmatpush1.bf16.msra.mxu0 0
          %6442 = vmatprep.subr.bf16.mxu0 0
          %6443 = vmatpush1.bf16.msra.mxu0 0
          %6444 = vmatprep.subr.bf16.mxu0 0
          %6445 = vmatpush1.bf16.msra.mxu0 0
          %6446 = vmatprep.subr.bf16.mxu0 0
          %6447 = vmatpush1.bf16.msra.mxu0 0
          %6448 = vmatprep.subr.bf16.mxu0 0
          %6449 = vmatpush1.bf16.msra.mxu0 0
          %6450 = vmatprep.subr.bf16.mxu0 0
          %6451 = vmatpush1.bf16.msra.mxu0 0
          %6452 = vmatprep.subr.bf16.mxu0 0
          %6453 = vmatpush1.bf16.msra.mxu0 0
          %6454 = vmatprep.mubr.bf16.mxu0 0
          %6455 = vmatmul.mubr.bf16.gmra.mrb[0].mxu0 %v5279
          %v6456 = vpop.f32.mrb[0].mxu0
          %v6457 = vadd.f32 0.0, %v6456
          %v6458 = vpop.f32.mrb[0].mxu0
          %v6459 = vpop.f32.mrb[0].mxu0
          %v6460 = vadd.f32 0.0, %v6459
          %v6461 = vpop.f32.mrb[0].mxu0
          %6462 = vmatprep.mubr.bf16.mxu0 0
          %6463 = vmatmul.mubr.bf16.gmra.mrb[0].mxu0 %v5282
          %v6464 = vpop.f32.mrb[0].mxu0
          %v6465 = vadd.f32 0.0, %v6464
          %v6466 = vpop.f32.mrb[0].mxu0
          %v6467 = vpop.f32.mrb[0].mxu0
          %v6468 = vadd.f32 0.0, %v6467
          %v6469 = vpop.f32.mrb[0].mxu0
          %6470 = vmatprep.mubr.bf16.mxu0 0
          %6471 = vmatmul.mubr.bf16.gmra.mrb[0].mxu0 %v5285
          %v6472 = vpop.f32.mrb[0].mxu0
          %v6473 = vadd.f32 0.0, %v6472
          %v6474 = vpop.f32.mrb[0].mxu0
          %v6475 = vpop.f32.mrb[0].mxu0
          %v6476 = vadd.f32 0.0, %v6475
          %v6477 = vpop.f32.mrb[0].mxu0
          %6478 = vmatprep.mubr.bf16.mxu0 0
          %6479 = vmatmul.mubr.bf16.gmra.mrb[0].mxu0 %v5288
          %v6480 = vpop.f32.mrb[0].mxu0
          %v6481 = vadd.f32 0.0, %v6480
          %v6482 = vpop.f32.mrb[0].mxu0
          %v6483 = vpop.f32.mrb[0].mxu0
          %v6484 = vadd.f32 0.0, %v6483
          %v6485 = vpop.f32.mrb[0].mxu0
          %6486 = vmatprep.mubr.bf16.mxu0 0
          %6487 = vmatmul.mubr.bf16.gmra.mrb[0].mxu0 %v5291
          %v6488 = vpop.f32.mrb[0].mxu0
          %v6489 = vadd.f32 0.0, %v6488
          %v6490 = vpop.f32.mrb[0].mxu0
          %v6491 = vpop.f32.mrb[0].mxu0
          %v6492 = vadd.f32 0.0, %v6491
          %v6493 = vpop.f32.mrb[0].mxu0
          %6494 = vmatprep.mubr.bf16.mxu0 0
          %6495 = vmatmul.mubr.bf16.gmra.mrb[0].mxu0 %v5294
          %v6496 = vpop.f32.mrb[0].mxu0
          %v6497 = vadd.f32 0.0, %v6496
          %v6498 = vpop.f32.mrb[0].mxu0
          %v6499 = vpop.f32.mrb[0].mxu0
          %v6500 = vadd.f32 0.0, %v6499
          %v6501 = vpop.f32.mrb[0].mxu0
          %6502 = vmatprep.mubr.bf16.mxu0 0
          %6503 = vmatmul.mubr.bf16.gmra.mrb[0].mxu0 %v5297
          %v6504 = vpop.f32.mrb[0].mxu0
          %v6505 = vadd.f32 0.0, %v6504
          %v6506 = vpop.f32.mrb[0].mxu0
          %v6507 = vpop.f32.mrb[0].mxu0
          %v6508 = vadd.f32 0.0, %v6507
          %v6509 = vpop.f32.mrb[0].mxu0
          %6510 = vmatprep.mubr.bf16.mxu0 0
          %6511 = vmatmul.mubr.bf16.gmra.mrb[0].mxu0 %v5300
          %v6512 = vpop.f32.mrb[0].mxu0
          %v6513 = vadd.f32 0.0, %v6512
          %v6514 = vpop.f32.mrb[0].mxu0
          %v6515 = vpop.f32.mrb[0].mxu0
          %v6516 = vadd.f32 0.0, %v6515
          %v6517 = vpop.f32.mrb[0].mxu0
          %6518 = vdwg.mxu0
          %v6519 = vadd.f32 %v6348, %v6457
          %v6520 = vadd.f32 %v6351, %v6460
          %v6521 = vadd.f32 %v6356, %v6465
          %v6522 = vadd.f32 %v6359, %v6468
          %v6523 = vadd.f32 %v6364, %v6473
          %v6524 = vadd.f32 %v6367, %v6476
          %v6525 = vadd.f32 %v6372, %v6481
          %v6526 = vadd.f32 %v6375, %v6484
          %v6527 = vadd.f32 %v6380, %v6489
          %v6528 = vadd.f32 %v6383, %v6492
          %v6529 = vadd.f32 %v6388, %v6497
          %v6530 = vadd.f32 %v6391, %v6500
          %v6531 = vadd.f32 %v6396, %v6505
          %v6532 = vadd.f32 %v6399, %v6508
          %v6533 = vadd.f32 %v6404, %v6513
          %v6534 = vadd.f32 %v6407, %v6516
          %v6535 = vtanh.pop %v6519
          %v6536 = vtanh.pop %v6520
          %v6537 = vtanh.pop %v6521
          %v6538 = vtanh.pop %v6522
          %v6539 = vtanh.pop %v6523
          %v6540 = vtanh.pop %v6524
          %v6541 = vtanh.pop %v6525
          %v6542 = vtanh.pop %v6526
          %v6543 = vtanh.pop %v6527
          %v6544 = vtanh.pop %v6528
          %v6545 = vtanh.pop %v6529
          %v6546 = vtanh.pop %v6530
          %v6547 = vtanh.pop %v6531
          %v6548 = vtanh.pop %v6532
          %v6549 = vtanh.pop %v6533
          %v6550 = vtanh.pop %v6534
          %v6555 = vunpack.c.l.b16 %v5229
          %v6556 = vunpack.c.l.b16 %v5230
          %v6557 = vunpack.c.l.b16 %v5231
          %v6558 = vunpack.c.l.b16 %v5232
          %v6559 = vpack.c.b16 %v6556, %v6555
          %v6560 = vpack.c.b16 %v6558, %v6557
          %6563 = vmatprep.subr.bf16.mxu0 0
          %6564 = vmatpush1.bf16.msra.mxu0 %v6559
          %6565 = vmatprep.subr.bf16.mxu0 0
          %6566 = vmatpush1.bf16.msra.mxu0 %v6560
          %6567 = vmatprep.subr.bf16.mxu0 0
          %6568 = vmatpush1.bf16.msra.mxu0 0
          %6569 = vmatprep.subr.bf16.mxu0 0
          %6570 = vmatpush1.bf16.msra.mxu0 0
          %6571 = vmatprep.subr.bf16.mxu0 0
          %6572 = vmatpush1.bf16.msra.mxu0 0
          %6573 = vmatprep.subr.bf16.mxu0 0
          %6574 = vmatpush1.bf16.msra.mxu0 0
          %6575 = vmatprep.subr.bf16.mxu0 0
          %6576 = vmatpush1.bf16.msra.mxu0 0
          %6577 = vmatprep.subr.bf16.mxu0 0
          %6578 = vmatpush1.bf16.msra.mxu0 0
          %6579 = vmatprep.subr.bf16.mxu0 0
          %6580 = vmatpush1.bf16.msra.mxu0 0
          %6581 = vmatprep.subr.bf16.mxu0 0
          %6582 = vmatpush1.bf16.msra.mxu0 0
          %6583 = vmatprep.subr.bf16.mxu0 0
          %6584 = vmatpush1.bf16.msra.mxu0 0
          %6585 = vmatprep.subr.bf16.mxu0 0
          %6586 = vmatpush1.bf16.msra.mxu0 0
          %6587 = vmatprep.subr.bf16.mxu0 0
          %6588 = vmatpush1.bf16.msra.mxu0 0
          %6589 = vmatprep.subr.bf16.mxu0 0
          %6590 = vmatpush1.bf16.msra.mxu0 0
          %6591 = vmatprep.subr.bf16.mxu0 0
          %6592 = vmatpush1.bf16.msra.mxu0 0
          %6593 = vmatprep.subr.bf16.mxu0 0
          %6594 = vmatpush1.bf16.msra.mxu0 0
          %6595 = vmatprep.mubr.bf16.mxu0 0
          %6596 = vmatmul.mubr.bf16.gmra.mrb[0].mxu0 %v5279
          %v6597 = vpop.f32.mrb[0].mxu0
          %v6598 = vadd.f32 0.0, %v6597
          %v6599 = vpop.f32.mrb[0].mxu0
          %v6600 = vpop.f32.mrb[0].mxu0
          %v6601 = vadd.f32 0.0, %v6600
          %v6602 = vpop.f32.mrb[0].mxu0
          %6603 = vmatprep.mubr.bf16.mxu0 0
          %6604 = vmatmul.mubr.bf16.gmra.mrb[0].mxu0 %v5282
          %v6605 = vpop.f32.mrb[0].mxu0
          %v6606 = vadd.f32 0.0, %v6605
          %v6607 = vpop.f32.mrb[0].mxu0
          %v6608 = vpop.f32.mrb[0].mxu0
          %v6609 = vadd.f32 0.0, %v6608
          %v6610 = vpop.f32.mrb[0].mxu0
          %6611 = vmatprep.mubr.bf16.mxu0 0
          %6612 = vmatmul.mubr.bf16.gmra.mrb[0].mxu0 %v5285
          %v6613 = vpop.f32.mrb[0].mxu0
          %v6614 = vadd.f32 0.0, %v6613
          %v6615 = vpop.f32.mrb[0].mxu0
          %v6616 = vpop.f32.mrb[0].mxu0
          %v6617 = vadd.f32 0.0, %v6616
          %v6618 = vpop.f32.mrb[0].mxu0
          %6619 = vmatprep.mubr.bf16.mxu0 0
          %6620 = vmatmul.mubr.bf16.gmra.mrb[0].mxu0 %v5288
          %v6621 = vpop.f32.mrb[0].mxu0
          %v6622 = vadd.f32 0.0, %v6621
          %v6623 = vpop.f32.mrb[0].mxu0
          %v6624 = vpop.f32.mrb[0].mxu0
          %v6625 = vadd.f32 0.0, %v6624
          %v6626 = vpop.f32.mrb[0].mxu0
          %6627 = vmatprep.mubr.bf16.mxu0 0
          %6628 = vmatmul.mubr.bf16.gmra.mrb[0].mxu0 %v5291
          %v6629 = vpop.f32.mrb[0].mxu0
          %v6630 = vadd.f32 0.0, %v6629
          %v6631 = vpop.f32.mrb[0].mxu0
          %v6632 = vpop.f32.mrb[0].mxu0
          %v6633 = vadd.f32 0.0, %v6632
          %v6634 = vpop.f32.mrb[0].mxu0
          %6635 = vmatprep.mubr.bf16.mxu0 0
          %6636 = vmatmul.mubr.bf16.gmra.mrb[0].mxu0 %v5294
          %v6637 = vpop.f32.mrb[0].mxu0
          %v6638 = vadd.f32 0.0, %v6637
          %v6639 = vpop.f32.mrb[0].mxu0
          %v6640 = vpop.f32.mrb[0].mxu0
          %v6641 = vadd.f32 0.0, %v6640
          %v6642 = vpop.f32.mrb[0].mxu0
          %6643 = vmatprep.mubr.bf16.mxu0 0
          %6644 = vmatmul.mubr.bf16.gmra.mrb[0].mxu0 %v5297
          %v6645 = vpop.f32.mrb[0].mxu0
          %v6646 = vadd.f32 0.0, %v6645
          %v6647 = vpop.f32.mrb[0].mxu0
          %v6648 = vpop.f32.mrb[0].mxu0
          %v6649 = vadd.f32 0.0, %v6648
          %v6650 = vpop.f32.mrb[0].mxu0
          %6651 = vmatprep.mubr.bf16.mxu0 0
          %6652 = vmatmul.mubr.bf16.gmra.mrb[0].mxu0 %v5300
          %v6653 = vpop.f32.mrb[0].mxu0
          %v6654 = vadd.f32 0.0, %v6653
          %v6655 = vpop.f32.mrb[0].mxu0
          %v6656 = vpop.f32.mrb[0].mxu0
          %v6657 = vadd.f32 0.0, %v6656
          %v6658 = vpop.f32.mrb[0].mxu0
          %6659 = vdwg.mxu0
          %v6664 = vunpack.c.l.b16 %v5225
          %v6665 = vunpack.c.l.b16 %v5226
          %v6666 = vunpack.c.l.b16 %v5227
          %v6667 = vunpack.c.l.b16 %v5228
          %v6668 = vpack.c.b16 %v6665, %v6664
          %v6669 = vpack.c.b16 %v6667, %v6666
          %6672 = vmatprep.subr.bf16.mxu0 0
          %6673 = vmatpush1.bf16.msra.mxu0 %v6668
          %6674 = vmatprep.subr.bf16.mxu0 0
          %6675 = vmatpush1.bf16.msra.mxu0 %v6669
          %6676 = vmatprep.subr.bf16.mxu0 0
          %6677 = vmatpush1.bf16.msra.mxu0 0
          %6678 = vmatprep.subr.bf16.mxu0 0
          %6679 = vmatpush1.bf16.msra.mxu0 0
          %6680 = vmatprep.subr.bf16.mxu0 0
          %6681 = vmatpush1.bf16.msra.mxu0 0
          %6682 = vmatprep.subr.bf16.mxu0 0
          %6683 = vmatpush1.bf16.msra.mxu0 0
          %6684 = vmatprep.subr.bf16.mxu0 0
          %6685 = vmatpush1.bf16.msra.mxu0 0
          %6686 = vmatprep.subr.bf16.mxu0 0
          %6687 = vmatpush1.bf16.msra.mxu0 0
          %6688 = vmatprep.subr.bf16.mxu0 0
          %6689 = vmatpush1.bf16.msra.mxu0 0
          %6690 = vmatprep.subr.bf16.mxu0 0
          %6691 = vmatpush1.bf16.msra.mxu0 0
          %6692 = vmatprep.subr.bf16.mxu0 0
          %6693 = vmatpush1.bf16.msra.mxu0 0
          %6694 = vmatprep.subr.bf16.mxu0 0
          %6695 = vmatpush1.bf16.msra.mxu0 0
          %6696 = vmatprep.subr.bf16.mxu0 0
          %6697 = vmatpush1.bf16.msra.mxu0 0
          %6698 = vmatprep.subr.bf16.mxu0 0
          %6699 = vmatpush1.bf16.msra.mxu0 0
          %6700 = vmatprep.subr.bf16.mxu0 0
          %6701 = vmatpush1.bf16.msra.mxu0 0
          %6702 = vmatprep.subr.bf16.mxu0 0
          %6703 = vmatpush1.bf16.msra.mxu0 0
          %6704 = vmatprep.mubr.bf16.mxu0 0
          %6705 = vmatmul.mubr.bf16.gmra.mrb[0].mxu0 %v5412
          %v6706 = vpop.f32.mrb[0].mxu0
          %v6707 = vadd.f32 %v6598, %v6706
          %v6708 = vpop.f32.mrb[0].mxu0
          %v6709 = vpop.f32.mrb[0].mxu0
          %v6710 = vadd.f32 %v6601, %v6709
          %v6711 = vpop.f32.mrb[0].mxu0
          %6712 = vmatprep.mubr.bf16.mxu0 0
          %6713 = vmatmul.mubr.bf16.gmra.mrb[0].mxu0 %v5415
          %v6714 = vpop.f32.mrb[0].mxu0
          %v6715 = vadd.f32 %v6606, %v6714
          %v6716 = vpop.f32.mrb[0].mxu0
          %v6717 = vpop.f32.mrb[0].mxu0
          %v6718 = vadd.f32 %v6609, %v6717
          %v6719 = vpop.f32.mrb[0].mxu0
          %6720 = vmatprep.mubr.bf16.mxu0 0
          %6721 = vmatmul.mubr.bf16.gmra.mrb[0].mxu0 %v5418
          %v6722 = vpop.f32.mrb[0].mxu0
          %v6723 = vadd.f32 %v6614, %v6722
          %v6724 = vpop.f32.mrb[0].mxu0
          %v6725 = vpop.f32.mrb[0].mxu0
          %v6726 = vadd.f32 %v6617, %v6725
          %v6727 = vpop.f32.mrb[0].mxu0
          %6728 = vmatprep.mubr.bf16.mxu0 0
          %6729 = vmatmul.mubr.bf16.gmra.mrb[0].mxu0 %v5421
          %v6730 = vpop.f32.mrb[0].mxu0
          %v6731 = vadd.f32 %v6622, %v6730
          %v6732 = vpop.f32.mrb[0].mxu0
          %v6733 = vpop.f32.mrb[0].mxu0
          %v6734 = vadd.f32 %v6625, %v6733
          %v6735 = vpop.f32.mrb[0].mxu0
          %6736 = vmatprep.mubr.bf16.mxu0 0
          %6737 = vmatmul.mubr.bf16.gmra.mrb[0].mxu0 %v5424
          %v6738 = vpop.f32.mrb[0].mxu0
          %v6739 = vadd.f32 %v6630, %v6738
          %v6740 = vpop.f32.mrb[0].mxu0
          %v6741 = vpop.f32.mrb[0].mxu0
          %v6742 = vadd.f32 %v6633, %v6741
          %v6743 = vpop.f32.mrb[0].mxu0
          %6744 = vmatprep.mubr.bf16.mxu0 0
          %6745 = vmatmul.mubr.bf16.gmra.mrb[0].mxu0 %v5427
          %v6746 = vpop.f32.mrb[0].mxu0
          %v6747 = vadd.f32 %v6638, %v6746
          %v6748 = vpop.f32.mrb[0].mxu0
          %v6749 = vpop.f32.mrb[0].mxu0
          %v6750 = vadd.f32 %v6641, %v6749
          %v6751 = vpop.f32.mrb[0].mxu0
          %6752 = vmatprep.mubr.bf16.mxu0 0
          %6753 = vmatmul.mubr.bf16.gmra.mrb[0].mxu0 %v5430
          %v6754 = vpop.f32.mrb[0].mxu0
          %v6755 = vadd.f32 %v6646, %v6754
          %v6756 = vpop.f32.mrb[0].mxu0
          %v6757 = vpop.f32.mrb[0].mxu0
          %v6758 = vadd.f32 %v6649, %v6757
          %v6759 = vpop.f32.mrb[0].mxu0
          %6760 = vmatprep.mubr.bf16.mxu0 0
          %6761 = vmatmul.mubr.bf16.gmra.mrb[0].mxu0 %v5433
          %v6762 = vpop.f32.mrb[0].mxu0
          %v6763 = vadd.f32 %v6654, %v6762
          %v6764 = vpop.f32.mrb[0].mxu0
          %v6765 = vpop.f32.mrb[0].mxu0
          %v6766 = vadd.f32 %v6657, %v6765
          %v6767 = vpop.f32.mrb[0].mxu0
          %6768 = vdwg.mxu0
          %v6773 = vunpack.c.l.b16 %v5246
          %v6774 = vunpack.c.l.b16 %v5247
          %v6775 = vunpack.c.l.b16 %v5248
          %v6776 = vunpack.c.l.b16 %v5249
          %v6777 = vpack.c.b16 %v6774, %v6773
          %v6778 = vpack.c.b16 %v6776, %v6775
          %6781 = vmatprep.subr.bf16.mxu0 0
          %6782 = vmatpush1.bf16.msra.mxu0 %v6777
          %6783 = vmatprep.subr.bf16.mxu0 0
          %6784 = vmatpush1.bf16.msra.mxu0 %v6778
          %6785 = vmatprep.subr.bf16.mxu0 0
          %6786 = vmatpush1.bf16.msra.mxu0 0
          %6787 = vmatprep.subr.bf16.mxu0 0
          %6788 = vmatpush1.bf16.msra.mxu0 0
          %6789 = vmatprep.subr.bf16.mxu0 0
          %6790 = vmatpush1.bf16.msra.mxu0 0
          %6791 = vmatprep.subr.bf16.mxu0 0
          %6792 = vmatpush1.bf16.msra.mxu0 0
          %6793 = vmatprep.subr.bf16.mxu0 0
          %6794 = vmatpush1.bf16.msra.mxu0 0
          %6795 = vmatprep.subr.bf16.mxu0 0
          %6796 = vmatpush1.bf16.msra.mxu0 0
          %6797 = vmatprep.subr.bf16.mxu0 0
          %6798 = vmatpush1.bf16.msra.mxu0 0
          %6799 = vmatprep.subr.bf16.mxu0 0
          %6800 = vmatpush1.bf16.msra.mxu0 0
          %6801 = vmatprep.subr.bf16.mxu0 0
          %6802 = vmatpush1.bf16.msra.mxu0 0
          %6803 = vmatprep.subr.bf16.mxu0 0
          %6804 = vmatpush1.bf16.msra.mxu0 0
          %6805 = vmatprep.subr.bf16.mxu0 0
          %6806 = vmatpush1.bf16.msra.mxu0 0
          %6807 = vmatprep.subr.bf16.mxu0 0
          %6808 = vmatpush1.bf16.msra.mxu0 0
          %6809 = vmatprep.subr.bf16.mxu0 0
          %6810 = vmatpush1.bf16.msra.mxu0 0
          %6811 = vmatprep.subr.bf16.mxu0 0
          %6812 = vmatpush1.bf16.msra.mxu0 0
          %6813 = vmatprep.mubr.bf16.mxu0 0
          %6814 = vmatmul.mubr.bf16.gmra.mrb[0].mxu0 %v5279
          %v6815 = vpop.f32.mrb[0].mxu0
          %v6816 = vadd.f32 0.0, %v6815
          %v6817 = vpop.f32.mrb[0].mxu0
          %v6818 = vpop.f32.mrb[0].mxu0
          %v6819 = vadd.f32 0.0, %v6818
          %v6820 = vpop.f32.mrb[0].mxu0
          %6821 = vmatprep.mubr.bf16.mxu0 0
          %6822 = vmatmul.mubr.bf16.gmra.mrb[0].mxu0 %v5282
          %v6823 = vpop.f32.mrb[0].mxu0
          %v6824 = vadd.f32 0.0, %v6823
          %v6825 = vpop.f32.mrb[0].mxu0
          %v6826 = vpop.f32.mrb[0].mxu0
          %v6827 = vadd.f32 0.0, %v6826
          %v6828 = vpop.f32.mrb[0].mxu0
          %6829 = vmatprep.mubr.bf16.mxu0 0
          %6830 = vmatmul.mubr.bf16.gmra.mrb[0].mxu0 %v5285
          %v6831 = vpop.f32.mrb[0].mxu0
          %v6832 = vadd.f32 0.0, %v6831
          %v6833 = vpop.f32.mrb[0].mxu0
          %v6834 = vpop.f32.mrb[0].mxu0
          %v6835 = vadd.f32 0.0, %v6834
          %v6836 = vpop.f32.mrb[0].mxu0
          %6837 = vmatprep.mubr.bf16.mxu0 0
          %6838 = vmatmul.mubr.bf16.gmra.mrb[0].mxu0 %v5288
          %v6839 = vpop.f32.mrb[0].mxu0
          %v6840 = vadd.f32 0.0, %v6839
          %v6841 = vpop.f32.mrb[0].mxu0
          %v6842 = vpop.f32.mrb[0].mxu0
          %v6843 = vadd.f32 0.0, %v6842
          %v6844 = vpop.f32.mrb[0].mxu0
          %6845 = vmatprep.mubr.bf16.mxu0 0
          %6846 = vmatmul.mubr.bf16.gmra.mrb[0].mxu0 %v5291
          %v6847 = vpop.f32.mrb[0].mxu0
          %v6848 = vadd.f32 0.0, %v6847
          %v6849 = vpop.f32.mrb[0].mxu0
          %v6850 = vpop.f32.mrb[0].mxu0
          %v6851 = vadd.f32 0.0, %v6850
          %v6852 = vpop.f32.mrb[0].mxu0
          %6853 = vmatprep.mubr.bf16.mxu0 0
          %6854 = vmatmul.mubr.bf16.gmra.mrb[0].mxu0 %v5294
          %v6855 = vpop.f32.mrb[0].mxu0
          %v6856 = vadd.f32 0.0, %v6855
          %v6857 = vpop.f32.mrb[0].mxu0
          %v6858 = vpop.f32.mrb[0].mxu0
          %v6859 = vadd.f32 0.0, %v6858
          %v6860 = vpop.f32.mrb[0].mxu0
          %6861 = vmatprep.mubr.bf16.mxu0 0
          %6862 = vmatmul.mubr.bf16.gmra.mrb[0].mxu0 %v5297
          %v6863 = vpop.f32.mrb[0].mxu0
          %v6864 = vadd.f32 0.0, %v6863
          %v6865 = vpop.f32.mrb[0].mxu0
          %v6866 = vpop.f32.mrb[0].mxu0
          %v6867 = vadd.f32 0.0, %v6866
          %v6868 = vpop.f32.mrb[0].mxu0
          %6869 = vmatprep.mubr.bf16.mxu0 0
          %6870 = vmatmul.mubr.bf16.gmra.mrb[0].mxu0 %v5300
          %v6871 = vpop.f32.mrb[0].mxu0
          %v6872 = vadd.f32 0.0, %v6871
          %v6873 = vpop.f32.mrb[0].mxu0
          %v6874 = vpop.f32.mrb[0].mxu0
          %v6875 = vadd.f32 0.0, %v6874
          %v6876 = vpop.f32.mrb[0].mxu0
          %6877 = vdwg.mxu0
          %v6878 = vadd.f32 %v6707, %v6816
          %v6879 = vadd.f32 %v6710, %v6819
          %v6880 = vadd.f32 %v6715, %v6824
          %v6881 = vadd.f32 %v6718, %v6827
          %v6882 = vadd.f32 %v6723, %v6832
          %v6883 = vadd.f32 %v6726, %v6835
          %v6884 = vadd.f32 %v6731, %v6840
          %v6885 = vadd.f32 %v6734, %v6843
          %v6886 = vadd.f32 %v6739, %v6848
          %v6887 = vadd.f32 %v6742, %v6851
          %v6888 = vadd.f32 %v6747, %v6856
          %v6889 = vadd.f32 %v6750, %v6859
          %v6890 = vadd.f32 %v6755, %v6864
          %v6891 = vadd.f32 %v6758, %v6867
          %v6892 = vadd.f32 %v6763, %v6872
          %v6893 = vadd.f32 %v6766, %v6875
          %v6894 = vxor.u32 %v6878, 2147483648
          %v6895 = vxor.u32 %v6879, 2147483648
          %v6896 = vxor.u32 %v6880, 2147483648
          %v6897 = vxor.u32 %v6881, 2147483648
          %v6898 = vxor.u32 %v6882, 2147483648
          %v6899 = vxor.u32 %v6883, 2147483648
          %v6900 = vxor.u32 %v6884, 2147483648
          %v6901 = vxor.u32 %v6885, 2147483648
          %v6902 = vxor.u32 %v6886, 2147483648
          %v6903 = vxor.u32 %v6887, 2147483648
          %v6904 = vxor.u32 %v6888, 2147483648
          %v6905 = vxor.u32 %v6889, 2147483648
          %v6906 = vxor.u32 %v6890, 2147483648
          %v6907 = vxor.u32 %v6891, 2147483648
          %v6908 = vxor.u32 %v6892, 2147483648
          %v6909 = vxor.u32 %v6893, 2147483648
          %v6910 = vmul.f32 %v6894, 1.442695
          %v6911 = vpow.pop %v6910
          %v6912 = vmul.f32 %v6895, 1.442695
          %v6913 = vpow.pop %v6912
          %v6914 = vmul.f32 %v6896, 1.442695
          %v6915 = vpow.pop %v6914
          %v6916 = vmul.f32 %v6897, 1.442695
          %v6917 = vpow.pop %v6916
          %v6918 = vmul.f32 %v6898, 1.442695
          %v6919 = vpow.pop %v6918
          %v6920 = vmul.f32 %v6899, 1.442695
          %v6921 = vpow.pop %v6920
          %v6922 = vmul.f32 %v6900, 1.442695
          %v6923 = vpow.pop %v6922
          %v6924 = vmul.f32 %v6901, 1.442695
          %v6925 = vpow.pop %v6924
          %v6926 = vmul.f32 %v6902, 1.442695
          %v6927 = vpow.pop %v6926
          %v6928 = vmul.f32 %v6903, 1.442695
          %v6929 = vpow.pop %v6928
          %v6930 = vmul.f32 %v6904, 1.442695
          %v6931 = vpow.pop %v6930
          %v6932 = vmul.f32 %v6905, 1.442695
          %v6933 = vpow.pop %v6932
          %v6934 = vmul.f32 %v6906, 1.442695
          %v6935 = vpow.pop %v6934
          %v6936 = vmul.f32 %v6907, 1.442695
          %v6937 = vpow.pop %v6936
          %v6938 = vmul.f32 %v6908, 1.442695
          %v6939 = vpow.pop %v6938
          %v6940 = vmul.f32 %v6909, 1.442695
          %v6941 = vpow.pop %v6940
          %v6942 = vadd.f32 %v6911, 1.0
          %v6943 = vadd.f32 %v6913, 1.0
          %v6944 = vadd.f32 %v6915, 1.0
          %v6945 = vadd.f32 %v6917, 1.0
          %v6946 = vadd.f32 %v6919, 1.0
          %v6947 = vadd.f32 %v6921, 1.0
          %v6948 = vadd.f32 %v6923, 1.0
          %v6949 = vadd.f32 %v6925, 1.0
          %v6950 = vadd.f32 %v6927, 1.0
          %v6951 = vadd.f32 %v6929, 1.0
          %v6952 = vadd.f32 %v6931, 1.0
          %v6953 = vadd.f32 %v6933, 1.0
          %v6954 = vadd.f32 %v6935, 1.0
          %v6955 = vadd.f32 %v6937, 1.0
          %v6956 = vadd.f32 %v6939, 1.0
          %v6957 = vadd.f32 %v6941, 1.0
          %v6958 = vrcp.pop %v6942
          %v6959 = vmul.f32 1.0, %v6958
          %v6960 = vrcp.pop %v6943
          %v6961 = vmul.f32 1.0, %v6960
          %v6962 = vrcp.pop %v6944
          %v6963 = vmul.f32 1.0, %v6962
          %v6964 = vrcp.pop %v6945
          %v6965 = vmul.f32 1.0, %v6964
          %v6966 = vrcp.pop %v6946
          %v6967 = vmul.f32 1.0, %v6966
          %v6968 = vrcp.pop %v6947
          %v6969 = vmul.f32 1.0, %v6968
          %v6970 = vrcp.pop %v6948
          %v6971 = vmul.f32 1.0, %v6970
          %v6972 = vrcp.pop %v6949
          %v6973 = vmul.f32 1.0, %v6972
          %v6974 = vrcp.pop %v6950
          %v6975 = vmul.f32 1.0, %v6974
          %v6976 = vrcp.pop %v6951
          %v6977 = vmul.f32 1.0, %v6976
          %v6978 = vrcp.pop %v6952
          %v6979 = vmul.f32 1.0, %v6978
          %v6980 = vrcp.pop %v6953
          %v6981 = vmul.f32 1.0, %v6980
          %v6982 = vrcp.pop %v6954
          %v6983 = vmul.f32 1.0, %v6982
          %v6984 = vrcp.pop %v6955
          %v6985 = vmul.f32 1.0, %v6984
          %v6986 = vrcp.pop %v6956
          %v6987 = vmul.f32 1.0, %v6986
          %v6988 = vrcp.pop %v6957
          %v6989 = vmul.f32 1.0, %v6988
          %v6990 = vmul.f32 %v6161, %v4968
          %v6991 = vmul.f32 %v6163, %v4969
          %v6992 = vmul.f32 %v6165, %v4970
          %v6993 = vmul.f32 %v6167, %v4971
          %v6994 = vmul.f32 %v6169, %v4972
          %v6995 = vmul.f32 %v6171, %v4973
          %v6996 = vmul.f32 %v6173, %v4974
          %v6997 = vmul.f32 %v6175, %v4975
          %v6998 = vmul.f32 %v6177, %v4976
          %v6999 = vmul.f32 %v6179, %v4977
          %v7000 = vmul.f32 %v6181, %v4978
          %v7001 = vmul.f32 %v6183, %v4979
          %v7002 = vmul.f32 %v6185, %v4980
          %v7003 = vmul.f32 %v6187, %v4981
          %v7004 = vmul.f32 %v6189, %v4982
          %v7005 = vmul.f32 %v6191, %v4983
          %v7006 = vmul.f32 %v5722, %v6535
          %v7007 = vmul.f32 %v5724, %v6536
          %v7008 = vmul.f32 %v5726, %v6537
          %v7009 = vmul.f32 %v5728, %v6538
          %v7010 = vmul.f32 %v5730, %v6539
          %v7011 = vmul.f32 %v5732, %v6540
          %v7012 = vmul.f32 %v5734, %v6541
          %v7013 = vmul.f32 %v5736, %v6542
          %v7014 = vmul.f32 %v5738, %v6543
          %v7015 = vmul.f32 %v5740, %v6544
          %v7016 = vmul.f32 %v5742, %v6545
          %v7017 = vmul.f32 %v5744, %v6546
          %v7018 = vmul.f32 %v5746, %v6547
          %v7019 = vmul.f32 %v5748, %v6548
          %v7020 = vmul.f32 %v5750, %v6549
          %v7021 = vmul.f32 %v5752, %v6550
          %v7022 = vadd.f32 %v6990, %v7006
          %v7023 = vadd.f32 %v6991, %v7007
          %v7024 = vadd.f32 %v6992, %v7008
          %v7025 = vadd.f32 %v6993, %v7009
          %v7026 = vadd.f32 %v6994, %v7010
          %v7027 = vadd.f32 %v6995, %v7011
          %v7028 = vadd.f32 %v6996, %v7012
          %v7029 = vadd.f32 %v6997, %v7013
          %v7030 = vadd.f32 %v6998, %v7014
          %v7031 = vadd.f32 %v6999, %v7015
          %v7032 = vadd.f32 %v7000, %v7016
          %v7033 = vadd.f32 %v7001, %v7017
          %v7034 = vadd.f32 %v7002, %v7018
          %v7035 = vadd.f32 %v7003, %v7019
          %v7036 = vadd.f32 %v7004, %v7020
          %v7037 = vadd.f32 %v7005, %v7021
          %v7038 = vtanh.pop %v7022
          %v7039 = vtanh.pop %v7023
          %v7040 = vtanh.pop %v7024
          %v7041 = vtanh.pop %v7025
          %v7042 = vtanh.pop %v7026
          %v7043 = vtanh.pop %v7027
          %v7044 = vtanh.pop %v7028
          %v7045 = vtanh.pop %v7029
          %v7046 = vtanh.pop %v7030
          %v7047 = vtanh.pop %v7031
          %v7048 = vtanh.pop %v7032
          %v7049 = vtanh.pop %v7033
          %v7050 = vtanh.pop %v7034
          %v7051 = vtanh.pop %v7035
          %v7052 = vtanh.pop %v7036
          %v7053 = vtanh.pop %v7037
          %v7054 = vmul.f32 %v6959, %v7038
          %v7055 = vmul.f32 %v6961, %v7039
          %v7056 = vmul.f32 %v6963, %v7040
          %v7057 = vmul.f32 %v6965, %v7041
          %v7058 = vmul.f32 %v6967, %v7042
          %v7059 = vmul.f32 %v6969, %v7043
          %v7060 = vmul.f32 %v6971, %v7044
          %v7061 = vmul.f32 %v6973, %v7045
          %v7062 = vmul.f32 %v6975, %v7046
          %v7063 = vmul.f32 %v6977, %v7047
          %v7064 = vmul.f32 %v6979, %v7048
          %v7065 = vmul.f32 %v6981, %v7049
          %v7066 = vmul.f32 %v6983, %v7050
          %v7067 = vmul.f32 %v6985, %v7051
          %v7068 = vmul.f32 %v6987, %v7052
          %v7069 = vmul.f32 %v6989, %v7053
          %7070 = vst.msk [vmem:[%s495] sm:$0xff] %vm954, %v7054
          %7071 = vst.msk [vmem:[%s495 + $0x8] sm:$0xff] %vm954, %v7055
          %7072 = vst.msk [vmem:[%s495 + $0x10] sm:$0xff] %vm954, %v7056
          %7073 = vst.msk [vmem:[%s495 + $0x18] sm:$0xff] %vm954, %v7057
          %7074 = vst.msk [vmem:[%s495 + $0x20] sm:$0xff] %vm954, %v7058
          %7075 = vst.msk [vmem:[%s495 + $0x28] sm:$0xff] %vm954, %v7059
          %7076 = vst.msk [vmem:[%s495 + $0x30] sm:$0xff] %vm954, %v7060
          %7077 = vst.msk [vmem:[%s495 + $0x38] sm:$0xff] %vm954, %v7061
          %7078 = vst.msk [vmem:[%s495 + $0x40] sm:$0xff] %vm954, %v7062
          %7079 = vst.msk [vmem:[%s495 + $0x48] sm:$0xff] %vm954, %v7063
          %7080 = vst.msk [vmem:[%s495 + $0x50] sm:$0xff] %vm954, %v7064
          %7081 = vst.msk [vmem:[%s495 + $0x58] sm:$0xff] %vm954, %v7065
          %7082 = vst.msk [vmem:[%s495 + $0x60] sm:$0xff] %vm954, %v7066
          %7083 = vst.msk [vmem:[%s495 + $0x68] sm:$0xff] %vm954, %v7067
          %7084 = vst.msk [vmem:[%s495 + $0x70] sm:$0xff] %vm954, %v7068
          %7085 = vst.msk [vmem:[%s495 + $0x78] sm:$0xff] %vm954, %v7069
        $region105: #{pagnn_aggregation.3} parent=92 // pred_fallthru
          _
        %s7086 = smul.u32 16, %s24
        %p7087 = scmp.lt.s32.totalorder %s7086, 31
        %s7088 = scalar_select %p7087, %s7086, 31
        %s7089 = smul.addr %s7088, 8
        %s7090 = scalar_lea.vmem %s9, %s7089
        // Predicated region
        $region106: #{pagnn_aggregation.3} parent=92 // pred_check
          %p7091 = pneg %p256
        $region107: #{pagnn_aggregation.3} parent=92 // pred_check_branch
          %7093 = sbr.rel (%p7091) target = $region109
        $region108: #{pagnn_aggregation.3} parent=92 // pred_region
          %s7094 = smul.u32 16, %s24
        $region109: #{pagnn_aggregation.3} parent=92 // pred_fallthru
          _
      $region93: #{pagnn_aggregation.3} parent=5 // pred_fallthru
        _
      %p7095 = scmp.le.s32.totalorder 2, %s15
      // Predicated region
      $region110: #{pagnn_aggregation.3} parent=5 // pred_check
        %p7096 = pneg %p7095
      $region111: #{pagnn_aggregation.3} parent=5 // pred_check_branch
        %7098 = sbr.rel (%p7096) target = $region113
      $region112: #{pagnn_aggregation.3} parent=5 // pred_region
        %s7099 = ssub.s32 %s15, 2
        // Predicated region
        $region114: #{pagnn_aggregation.3} parent=112 // pred_check
          %p7100 = pneg %p262
        $region115: #{pagnn_aggregation.3} parent=112 // pred_check_branch
          %7102 = sbr.rel (%p7100) target = $region117
        $region116: #{pagnn_aggregation.3} parent=112 // pred_region
          %s7103 = smul.u32 16, %s26
          %p7104 = scmp.lt.s32.totalorder %s7103, 31
          %s7105 = scalar_select %p7104, %s7103, 31
          %s7106 = smul.addr %s7105, 8
          %s7107 = scalar_lea.vmem %s9, %s7106
        $region117: #{pagnn_aggregation.3} parent=112 // pred_fallthru
          _
      $region113: #{pagnn_aggregation.3} parent=5 // pred_fallthru
        _
    $region6: #{pagnn_aggregation.3} parent=1 // loop_footer
      %s19 = sadd.s32 1, %s15
    $region7: #{pagnn_aggregation.3} parent=1 // loop_footer_branch
      %14 = sbr.rel target = $region3
    $region8: #{pagnn_aggregation.3} parent=1 // loop_exit
      _

</llo_original>
